<compile_context>
chip_gen: v7x
topology: tpu7x:2x2x1
jax: 0.10.0
libtpu: 0.0.40
codegen_flags: <defaults>
</compile_context>

<pallas_src>
import functools

import numpy as np
import jax
import jax.numpy as jnp
from jax import lax
from jax.experimental import pallas as pl
from jax.experimental.pallas import tpu as pltpu


# ----------------------------------------------------------------------------
# Fused Pallas kernel: whole Actor forward for one image per grid step
# ----------------------------------------------------------------------------
def actor_kernel(p1_ref, w1_ref, b1_ref, g2_ref, w2_ref, b2_ref,
                 wf1_ref, bf1_ref, wf2_ref, bf2_ref, o_ref, *, max_action):
    f32 = jnp.float32

    # ---- conv1 as ONE tall GEMM over all 4 pool-window members, then maxpool+bias+relu ----
    # p1_ref[0]: (576, 25) im2col patches, rows = member-major (m*144 + py*12 + px)
    c1 = jnp.dot(p1_ref[0], w1_ref[...], preferred_element_type=f32)          # (576, 10)
    p01 = jnp.maximum(c1[0:144], c1[144:288])
    p23 = jnp.maximum(c1[288:432], c1[432:576])
    h1 = jnp.maximum(jnp.maximum(p01, p23) + b1_ref[...], 0.0)                # (144, 10)

    # ---- conv2: one-hot gather GEMM (im2col-by-tap, member-major rows) + 25 tap GEMMs ----
    # gat[k*64 + q, c] = h1[spatial row needed by tap k at conv2 output q, channel c]
    gat = jnp.dot(g2_ref[...], h1, preferred_element_type=f32)                # (1600, 10)
    acc = jnp.zeros((64, 20), f32)
    for k in range(25):                                                       # per-tap GEMMs
        acc = acc + jnp.dot(gat[k * 64:(k + 1) * 64, :], w2_ref[k],
                            preferred_element_type=f32)                       # (64, 20)
    q01 = jnp.maximum(acc[0:16], acc[16:32])
    q23 = jnp.maximum(acc[32:48], acc[48:64])
    h2 = jnp.maximum(jnp.maximum(q01, q23) + b2_ref[...], 0.0)                # (16, 20)

    # ---- flatten h2 (16 positions x 20 channels) to torch NCHW order (c*16 + p) ----
    # spread_mat[c, t] = (t//16 == c)  -> spread[p, t] = h2[p, t//16]
    # pos_mask[p, t]  = (t%16  == p)  -> sum over p gives flat[t] = h2[t%16, t//16]
    c_idx = lax.broadcasted_iota(jnp.int32, (20, 320), 0)
    t_idx = lax.broadcasted_iota(jnp.int32, (20, 320), 1)
    spread_mat = (jnp.right_shift(t_idx, 4) == c_idx).astype(f32)             # (20, 320)
    p_idx = lax.broadcasted_iota(jnp.int32, (16, 320), 0)
    u_idx = lax.broadcasted_iota(jnp.int32, (16, 320), 1)
    pos_mask = (jnp.bitwise_and(u_idx, 15) == p_idx).astype(f32)              # (16, 320)
    spread = jnp.dot(h2, spread_mat, preferred_element_type=f32)              # (16, 320)
    flat = jnp.sum(spread * pos_mask, axis=0, keepdims=True)                  # (1, 320)

    # ---- fc1 + relu (MXU); fc2 as VPU multiply + lane reduction; tanh on EUP ----
    hfc = jnp.dot(flat, wf1_ref[...], preferred_element_type=f32) + bf1_ref[...]
    hfc = jnp.maximum(hfc, 0.0)                                               # (1, 50)
    y = jnp.sum(hfc * wf2_ref[...], axis=1, keepdims=True) + bf2_ref[...]     # (1, 1)
    o_ref[...] = jnp.reshape(max_action * jnp.tanh(y), (1, 1, 1))


def actor_fused(p1, params, max_action):
    B = p1.shape[0]
    kern = functools.partial(actor_kernel, max_action=float(max_action))
    out = pl.pallas_call(
        kern,
        out_shape=jax.ShapeDtypeStruct((B, 1, 1), jnp.float32),
        grid=(B,),
        in_specs=[
            pl.BlockSpec((1, 576, 25), lambda b: (b, 0, 0)),      # per-image conv1 patches
            pl.BlockSpec((25, 10), lambda b: (0, 0)),             # conv1 weight (GEMM form)
            pl.BlockSpec((1, 10), lambda b: (0, 0)),              # conv1 bias
            pl.BlockSpec((1600, 144), lambda b: (0, 0)),          # conv2 one-hot gather matrix
            pl.BlockSpec((25, 10, 20), lambda b: (0, 0, 0)),      # conv2 weights per tap
            pl.BlockSpec((1, 20), lambda b: (0, 0)),              # conv2 bias
            pl.BlockSpec((320, 50), lambda b: (0, 0)),            # fc1 weight (transposed)
            pl.BlockSpec((1, 50), lambda b: (0, 0)),              # fc1 bias
            pl.BlockSpec((1, 50), lambda b: (0, 0)),              # fc2 weight (row)
            pl.BlockSpec((1, 1), lambda b: (0, 0)),               # fc2 bias
        ],
        out_specs=pl.BlockSpec((1, 1, 1), lambda b: (b, 0, 0)),
        compiler_params=pltpu.CompilerParams(dimension_semantics=("parallel",)),
    )(p1, params["w1cols"], params["b1"], params["gather2"], params["w2taps"],
      params["b2"], params["fc1_wT"], params["fc1_b"], params["fc2_w"], params["fc2_b"])
    return out.reshape(B, 1)


# ----------------------------------------------------------------------------
# XLA glue (conv1 im2col + pool-member stacking on the raw 28x28 input only)
# ----------------------------------------------------------------------------
def _im2col_pool_members(x, k):
    # x: (B, H, W, 1) -> (B, 4*(OH//2)*(OW//2), k*k) member-major pool-window im2col rows.
    B, H, W, C = x.shape
    OH, OW = H - k + 1, W - k + 1
    K = k * k * C
    cols = jnp.concatenate(
        [x[:, kh:kh + OH, kw:kw + OW, :] for kh in range(k) for kw in range(k)], axis=-1)
    PH, PW = OH // 2, OW // 2
    slabs = [cols[:, dy::2, dx::2, :].reshape(B, PH * PW, K)
             for dy in (0, 1) for dx in (0, 1)]
    return jnp.stack(slabs, axis=1).reshape(B, 4 * PH * PW, K)


def actor_forward(x, params, max_action):
    # Mirrors torch Actor.forward (Dropout2d == identity in eval/inference mode).
    x = x.reshape(-1, 1, 28, 28).astype(jnp.float32)
    x = jnp.transpose(x, (0, 2, 3, 1))                 # NCHW -> NHWC
    # TODO(synk): conv1 im2col stays as cheap XLA glue (negligible at small batch); move it
    # in-kernel (DMA the raw 28x28 tile + in-kernel patch build) if batch grows large.
    p1 = _im2col_pool_members(x, 5)                    # (B, 576, 25)
    return actor_fused(p1, params, max_action)


# ----------------------------------------------------------------------------
# Constant one-hot gather matrix for conv2 im2col (built once on host)
# ----------------------------------------------------------------------------
def _conv2_gather_matrix():
    # G[k*64 + m*16 + py*4 + px, (2*py+dy+kh)*12 + (2*px+dx+kw)] = 1
    G = np.zeros((25 * 64, 144), np.float32)
    members = ((0, 0), (0, 1), (1, 0), (1, 1))
    for kh in range(5):
        for kw in range(5):
            k = kh * 5 + kw
            for m, (dy, dx) in enumerate(members):
                for py in range(4):
                    for px in range(4):
                        q = m * 16 + py * 4 + px
                        j = (2 * py + dy + kh) * 12 + (2 * px + dx + kw)
                        G[k * 64 + q, j] = 1.0
    return jnp.asarray(G)


# ----------------------------------------------------------------------------
# Deterministic synthetic parameters (torch-shaped, rearranged for the kernel)
# ----------------------------------------------------------------------------
def init_params(key):
    k = jax.random.split(key, 8)
    conv1_w = jax.random.normal(k[0], (10, 1, 5, 5), jnp.float32) / jnp.sqrt(25.0)
    conv1_b = jax.random.normal(k[1], (10,), jnp.float32) * 0.05
    conv2_w = jax.random.normal(k[2], (20, 10, 5, 5), jnp.float32) / jnp.sqrt(250.0)
    conv2_b = jax.random.normal(k[3], (20,), jnp.float32) * 0.05
    fc1_w = jax.random.normal(k[4], (50, 320), jnp.float32) / jnp.sqrt(320.0)
    fc1_b = jax.random.normal(k[5], (50,), jnp.float32) * 0.05
    fc2_w = jax.random.normal(k[6], (1, 50), jnp.float32) / jnp.sqrt(50.0)
    fc2_b = jax.random.normal(k[7], (1,), jnp.float32) * 0.05
    return {
        # GEMM column order matches im2col column order (kh, kw, c_in)
        "w1cols": jnp.transpose(conv1_w, (2, 3, 1, 0)).reshape(25, 10),
        "b1": conv1_b.reshape(1, 10),
        "w2taps": jnp.transpose(conv2_w, (2, 3, 1, 0)).reshape(25, 10, 20),
        "b2": conv2_b.reshape(1, 20),
        "fc1_wT": fc1_w.T,                 # (320, 50) — flat layout already matches torch order
        "fc1_b": fc1_b.reshape(1, 50),
        "fc2_w": fc2_w.reshape(1, 50),     # row vector for the VPU dot
        "fc2_b": fc2_b.reshape(1, 1),
        "gather2": _conv2_gather_matrix(),
        "_raw": (conv1_w, conv1_b, conv2_w, conv2_b, fc1_w, fc1_b, fc2_w, fc2_b),
    }


# ----------------------------------------------------------------------------
# Pure-XLA reference for verification
# ----------------------------------------------------------------------------
def reference_forward(x, raw, max_action):
    conv1_w, conv1_b, conv2_w, conv2_b, fc1_w, fc1_b, fc2_w, fc2_b = raw
    hi = lax.Precision.HIGHEST
    dn = ("NCHW", "OIHW", "NCHW")
    x = x.reshape(-1, 1, 28, 28).astype(jnp.float32)
    c1 = lax.conv_general_dilated(x, conv1_w, (1, 1), "VALID",
                                  dimension_numbers=dn, precision=hi)
    c1 = c1 + conv1_b[None, :, None, None]
    p1 = lax.reduce_window(c1, -jnp.inf, lax.max, (1, 1, 2, 2), (1, 1, 2, 2), "VALID")
    h1 = jnp.maximum(p1, 0.0)
    c2 = lax.conv_general_dilated(h1, conv2_w, (1, 1), "VALID",
                                  dimension_numbers=dn, precision=hi)
    c2 = c2 + conv2_b[None, :, None, None]
    p2 = lax.reduce_window(c2, -jnp.inf, lax.max, (1, 1, 2, 2), (1, 1, 2, 2), "VALID")
    h2 = jnp.maximum(p2, 0.0)
    flat = h2.reshape(-1, 320)
    z = jnp.maximum(jnp.dot(flat, fc1_w.T, precision=hi) + fc1_b, 0.0)
    return max_action * jnp.tanh(jnp.dot(z, fc2_w.T, precision=hi) + fc2_b)


if __name__ == "__main__":
    key = jax.random.PRNGKey(0)
    pkey, xkey = jax.random.split(key)
    params = init_params(pkey)
    max_action = 2.0   # Actor(state_dim, action_dim, max_action); only max_action affects forward

    x = jax.random.normal(xkey, (2, 1, 28, 28), jnp.float32)

    fwd = jax.jit(lambda xx: actor_forward(xx, params, max_action))
    out = jax.block_until_ready(fwd(x))
    assert out.shape == (2, 1), out.shape

    ref = reference_forward(x, params["_raw"], max_action)
    assert jnp.allclose(out, ref, rtol=1e-3, atol=1e-3), (out, ref)

    print("KERNEL_OK")
</pallas_src>

<mosaic_0001>
module attributes {stable_mosaic.version = 11 : i64} {
  func.func @actor_kernel(%arg0: i32, %arg1: memref<1x576x25xf32, #tpu.memory_space<vmem>>, %arg2: memref<25x10xf32, #tpu.memory_space<vmem>>, %arg3: memref<1x10xf32, #tpu.memory_space<vmem>>, %arg4: memref<1600x144xf32, #tpu.memory_space<vmem>>, %arg5: memref<25x10x20xf32, #tpu.memory_space<vmem>>, %arg6: memref<1x20xf32, #tpu.memory_space<vmem>>, %arg7: memref<320x50xf32, #tpu.memory_space<vmem>>, %arg8: memref<1x50xf32, #tpu.memory_space<vmem>>, %arg9: memref<1x50xf32, #tpu.memory_space<vmem>>, %arg10: memref<1x1xf32, #tpu.memory_space<vmem>>, %arg11: memref<1x1x1xf32, #tpu.memory_space<vmem>>) attributes {dimension_semantics = [#tpu.dimension_semantics<parallel>], iteration_bounds = array<i64: 2>, scalar_prefetch = 0 : i64, scratch_operands = 0 : i64, tpu.core_type = #tpu.core_type<tc>, window_params = [{transform_indices = @transform_0, window_bounds = array<i64: 1, 576, 25>}, {pipeline_mode = #tpu.pipeline_mode<synchronous>, transform_indices = @transform_1, window_bounds = array<i64: 25, 10>}, {pipeline_mode = #tpu.pipeline_mode<synchronous>, transform_indices = @transform_2, window_bounds = array<i64: 1, 10>}, {pipeline_mode = #tpu.pipeline_mode<synchronous>, transform_indices = @transform_3, window_bounds = array<i64: 1600, 144>}, {pipeline_mode = #tpu.pipeline_mode<synchronous>, transform_indices = @transform_4, window_bounds = array<i64: 25, 10, 20>}, {pipeline_mode = #tpu.pipeline_mode<synchronous>, transform_indices = @transform_5, window_bounds = array<i64: 1, 20>}, {pipeline_mode = #tpu.pipeline_mode<synchronous>, transform_indices = @transform_6, window_bounds = array<i64: 320, 50>}, {pipeline_mode = #tpu.pipeline_mode<synchronous>, transform_indices = @transform_7, window_bounds = array<i64: 1, 50>}, {pipeline_mode = #tpu.pipeline_mode<synchronous>, transform_indices = @transform_8, window_bounds = array<i64: 1, 50>}, {pipeline_mode = #tpu.pipeline_mode<synchronous>, transform_indices = @transform_9, window_bounds = array<i64: 1, 1>}, {transform_indices = @transform_10, window_bounds = array<i64: 1, 1, 1>}]} {
    %c0 = arith.constant 0 : index
    %c0_0 = arith.constant 0 : index
    %c0_1 = arith.constant 0 : index
    %0 = vector.load %arg1[%c0, %c0_0, %c0_1] : memref<1x576x25xf32, #tpu.memory_space<vmem>>, vector<1x576x25xf32>
    %1 = vector.shape_cast %0 : vector<1x576x25xf32> to vector<576x25xf32>
    %c0_2 = arith.constant 0 : index
    %c0_3 = arith.constant 0 : index
    %2 = vector.load %arg2[%c0_2, %c0_3] : memref<25x10xf32, #tpu.memory_space<vmem>>, vector<25x10xf32>
    %cst = arith.constant dense<0.000000e+00> : vector<576x10xf32>
    %3 = tpu.matmul %1, %2, %cst {dimension_numbers = #tpu.dot_dimension_numbers<[1], [0], [0], [1], [0, 0, 1, 1], [], []>} : vector<576x25xf32>, vector<25x10xf32>, vector<576x10xf32> -> vector<576x10xf32>
    %4 = vector.extract_strided_slice %3 {offsets = [0, 0], sizes = [144, 10], strides = [1, 1]} : vector<576x10xf32> to vector<144x10xf32>
    %5 = vector.extract_strided_slice %3 {offsets = [144, 0], sizes = [144, 10], strides = [1, 1]} : vector<576x10xf32> to vector<144x10xf32>
    %6 = arith.maximumf %4, %5 : vector<144x10xf32>
    %7 = vector.extract_strided_slice %3 {offsets = [288, 0], sizes = [144, 10], strides = [1, 1]} : vector<576x10xf32> to vector<144x10xf32>
    %8 = vector.extract_strided_slice %3 {offsets = [432, 0], sizes = [144, 10], strides = [1, 1]} : vector<576x10xf32> to vector<144x10xf32>
    %9 = arith.maximumf %7, %8 : vector<144x10xf32>
    %10 = arith.maximumf %6, %9 : vector<144x10xf32>
    %c0_4 = arith.constant 0 : index
    %c0_5 = arith.constant 0 : index
    %11 = vector.load %arg3[%c0_4, %c0_5] : memref<1x10xf32, #tpu.memory_space<vmem>>, vector<1x10xf32>
    %12 = vector.broadcast %11 : vector<1x10xf32> to vector<144x10xf32>
    %13 = arith.addf %10, %12 : vector<144x10xf32>
    %cst_6 = arith.constant 0.000000e+00 : f32
    %14 = vector.broadcast %cst_6 : f32 to vector<144x10xf32>
    %15 = arith.maximumf %13, %14 : vector<144x10xf32>
    %c0_7 = arith.constant 0 : index
    %c0_8 = arith.constant 0 : index
    %16 = vector.load %arg4[%c0_7, %c0_8] : memref<1600x144xf32, #tpu.memory_space<vmem>>, vector<1600x144xf32>
    %cst_9 = arith.constant dense<0.000000e+00> : vector<1600x10xf32>
    %17 = tpu.matmul %16, %15, %cst_9 {dimension_numbers = #tpu.dot_dimension_numbers<[1], [0], [0], [1], [0, 0, 1, 1], [], []>} : vector<1600x144xf32>, vector<144x10xf32>, vector<1600x10xf32> -> vector<1600x10xf32>
    %cst_10 = arith.constant 0.000000e+00 : f32
    %18 = vector.broadcast %cst_10 : f32 to vector<64x20xf32>
    %19 = vector.extract_strided_slice %17 {offsets = [0, 0], sizes = [64, 10], strides = [1, 1]} : vector<1600x10xf32> to vector<64x10xf32>
    %c0_11 = arith.constant 0 : index
    %c0_12 = arith.constant 0 : index
    %c0_13 = arith.constant 0 : index
    %20 = vector.load %arg5[%c0_11, %c0_12, %c0_13] : memref<25x10x20xf32, #tpu.memory_space<vmem>>, vector<1x10x20xf32>
    %21 = vector.shape_cast %20 : vector<1x10x20xf32> to vector<10x20xf32>
    %cst_14 = arith.constant dense<0.000000e+00> : vector<64x20xf32>
    %22 = tpu.matmul %19, %21, %cst_14 {dimension_numbers = #tpu.dot_dimension_numbers<[1], [0], [0], [1], [0, 0, 1, 1], [], []>} : vector<64x10xf32>, vector<10x20xf32>, vector<64x20xf32> -> vector<64x20xf32>
    %23 = arith.addf %18, %22 : vector<64x20xf32>
    %24 = vector.extract_strided_slice %17 {offsets = [64, 0], sizes = [64, 10], strides = [1, 1]} : vector<1600x10xf32> to vector<64x10xf32>
    %c1 = arith.constant 1 : index
    %c0_15 = arith.constant 0 : index
    %c0_16 = arith.constant 0 : index
    %25 = vector.load %arg5[%c1, %c0_15, %c0_16] : memref<25x10x20xf32, #tpu.memory_space<vmem>>, vector<1x10x20xf32>
    %26 = vector.shape_cast %25 : vector<1x10x20xf32> to vector<10x20xf32>
    %cst_17 = arith.constant dense<0.000000e+00> : vector<64x20xf32>
    %27 = tpu.matmul %24, %26, %cst_17 {dimension_numbers = #tpu.dot_dimension_numbers<[1], [0], [0], [1], [0, 0, 1, 1], [], []>} : vector<64x10xf32>, vector<10x20xf32>, vector<64x20xf32> -> vector<64x20xf32>
    %28 = arith.addf %23, %27 : vector<64x20xf32>
    %29 = vector.extract_strided_slice %17 {offsets = [128, 0], sizes = [64, 10], strides = [1, 1]} : vector<1600x10xf32> to vector<64x10xf32>
    %c2 = arith.constant 2 : index
    %c0_18 = arith.constant 0 : index
    %c0_19 = arith.constant 0 : index
    %30 = vector.load %arg5[%c2, %c0_18, %c0_19] : memref<25x10x20xf32, #tpu.memory_space<vmem>>, vector<1x10x20xf32>
    %31 = vector.shape_cast %30 : vector<1x10x20xf32> to vector<10x20xf32>
    %cst_20 = arith.constant dense<0.000000e+00> : vector<64x20xf32>
    %32 = tpu.matmul %29, %31, %cst_20 {dimension_numbers = #tpu.dot_dimension_numbers<[1], [0], [0], [1], [0, 0, 1, 1], [], []>} : vector<64x10xf32>, vector<10x20xf32>, vector<64x20xf32> -> vector<64x20xf32>
    %33 = arith.addf %28, %32 : vector<64x20xf32>
    %34 = vector.extract_strided_slice %17 {offsets = [192, 0], sizes = [64, 10], strides = [1, 1]} : vector<1600x10xf32> to vector<64x10xf32>
    %c3 = arith.constant 3 : index
    %c0_21 = arith.constant 0 : index
    %c0_22 = arith.constant 0 : index
    %35 = vector.load %arg5[%c3, %c0_21, %c0_22] : memref<25x10x20xf32, #tpu.memory_space<vmem>>, vector<1x10x20xf32>
    %36 = vector.shape_cast %35 : vector<1x10x20xf32> to vector<10x20xf32>
    %cst_23 = arith.constant dense<0.000000e+00> : vector<64x20xf32>
    %37 = tpu.matmul %34, %36, %cst_23 {dimension_numbers = #tpu.dot_dimension_numbers<[1], [0], [0], [1], [0, 0, 1, 1], [], []>} : vector<64x10xf32>, vector<10x20xf32>, vector<64x20xf32> -> vector<64x20xf32>
    %38 = arith.addf %33, %37 : vector<64x20xf32>
    %39 = vector.extract_strided_slice %17 {offsets = [256, 0], sizes = [64, 10], strides = [1, 1]} : vector<1600x10xf32> to vector<64x10xf32>
    %c4 = arith.constant 4 : index
    %c0_24 = arith.constant 0 : index
    %c0_25 = arith.constant 0 : index
    %40 = vector.load %arg5[%c4, %c0_24, %c0_25] : memref<25x10x20xf32, #tpu.memory_space<vmem>>, vector<1x10x20xf32>
    %41 = vector.shape_cast %40 : vector<1x10x20xf32> to vector<10x20xf32>
    %cst_26 = arith.constant dense<0.000000e+00> : vector<64x20xf32>
    %42 = tpu.matmul %39, %41, %cst_26 {dimension_numbers = #tpu.dot_dimension_numbers<[1], [0], [0], [1], [0, 0, 1, 1], [], []>} : vector<64x10xf32>, vector<10x20xf32>, vector<64x20xf32> -> vector<64x20xf32>
    %43 = arith.addf %38, %42 : vector<64x20xf32>
    %44 = vector.extract_strided_slice %17 {offsets = [320, 0], sizes = [64, 10], strides = [1, 1]} : vector<1600x10xf32> to vector<64x10xf32>
    %c5 = arith.constant 5 : index
    %c0_27 = arith.constant 0 : index
    %c0_28 = arith.constant 0 : index
    %45 = vector.load %arg5[%c5, %c0_27, %c0_28] : memref<25x10x20xf32, #tpu.memory_space<vmem>>, vector<1x10x20xf32>
    %46 = vector.shape_cast %45 : vector<1x10x20xf32> to vector<10x20xf32>
    %cst_29 = arith.constant dense<0.000000e+00> : vector<64x20xf32>
    %47 = tpu.matmul %44, %46, %cst_29 {dimension_numbers = #tpu.dot_dimension_numbers<[1], [0], [0], [1], [0, 0, 1, 1], [], []>} : vector<64x10xf32>, vector<10x20xf32>, vector<64x20xf32> -> vector<64x20xf32>
    %48 = arith.addf %43, %47 : vector<64x20xf32>
    %49 = vector.extract_strided_slice %17 {offsets = [384, 0], sizes = [64, 10], strides = [1, 1]} : vector<1600x10xf32> to vector<64x10xf32>
    %c6 = arith.constant 6 : index
    %c0_30 = arith.constant 0 : index
    %c0_31 = arith.constant 0 : index
    %50 = vector.load %arg5[%c6, %c0_30, %c0_31] : memref<25x10x20xf32, #tpu.memory_space<vmem>>, vector<1x10x20xf32>
    %51 = vector.shape_cast %50 : vector<1x10x20xf32> to vector<10x20xf32>
    %cst_32 = arith.constant dense<0.000000e+00> : vector<64x20xf32>
    %52 = tpu.matmul %49, %51, %cst_32 {dimension_numbers = #tpu.dot_dimension_numbers<[1], [0], [0], [1], [0, 0, 1, 1], [], []>} : vector<64x10xf32>, vector<10x20xf32>, vector<64x20xf32> -> vector<64x20xf32>
    %53 = arith.addf %48, %52 : vector<64x20xf32>
    %54 = vector.extract_strided_slice %17 {offsets = [448, 0], sizes = [64, 10], strides = [1, 1]} : vector<1600x10xf32> to vector<64x10xf32>
    %c7 = arith.constant 7 : index
    %c0_33 = arith.constant 0 : index
    %c0_34 = arith.constant 0 : index
    %55 = vector.load %arg5[%c7, %c0_33, %c0_34] : memref<25x10x20xf32, #tpu.memory_space<vmem>>, vector<1x10x20xf32>
    %56 = vector.shape_cast %55 : vector<1x10x20xf32> to vector<10x20xf32>
    %cst_35 = arith.constant dense<0.000000e+00> : vector<64x20xf32>
    %57 = tpu.matmul %54, %56, %cst_35 {dimension_numbers = #tpu.dot_dimension_numbers<[1], [0], [0], [1], [0, 0, 1, 1], [], []>} : vector<64x10xf32>, vector<10x20xf32>, vector<64x20xf32> -> vector<64x20xf32>
    %58 = arith.addf %53, %57 : vector<64x20xf32>
    %59 = vector.extract_strided_slice %17 {offsets = [512, 0], sizes = [64, 10], strides = [1, 1]} : vector<1600x10xf32> to vector<64x10xf32>
    %c8 = arith.constant 8 : index
    %c0_36 = arith.constant 0 : index
    %c0_37 = arith.constant 0 : index
    %60 = vector.load %arg5[%c8, %c0_36, %c0_37] : memref<25x10x20xf32, #tpu.memory_space<vmem>>, vector<1x10x20xf32>
    %61 = vector.shape_cast %60 : vector<1x10x20xf32> to vector<10x20xf32>
    %cst_38 = arith.constant dense<0.000000e+00> : vector<64x20xf32>
    %62 = tpu.matmul %59, %61, %cst_38 {dimension_numbers = #tpu.dot_dimension_numbers<[1], [0], [0], [1], [0, 0, 1, 1], [], []>} : vector<64x10xf32>, vector<10x20xf32>, vector<64x20xf32> -> vector<64x20xf32>
    %63 = arith.addf %58, %62 : vector<64x20xf32>
    %64 = vector.extract_strided_slice %17 {offsets = [576, 0], sizes = [64, 10], strides = [1, 1]} : vector<1600x10xf32> to vector<64x10xf32>
    %c9 = arith.constant 9 : index
    %c0_39 = arith.constant 0 : index
    %c0_40 = arith.constant 0 : index
    %65 = vector.load %arg5[%c9, %c0_39, %c0_40] : memref<25x10x20xf32, #tpu.memory_space<vmem>>, vector<1x10x20xf32>
    %66 = vector.shape_cast %65 : vector<1x10x20xf32> to vector<10x20xf32>
    %cst_41 = arith.constant dense<0.000000e+00> : vector<64x20xf32>
    %67 = tpu.matmul %64, %66, %cst_41 {dimension_numbers = #tpu.dot_dimension_numbers<[1], [0], [0], [1], [0, 0, 1, 1], [], []>} : vector<64x10xf32>, vector<10x20xf32>, vector<64x20xf32> -> vector<64x20xf32>
    %68 = arith.addf %63, %67 : vector<64x20xf32>
    %69 = vector.extract_strided_slice %17 {offsets = [640, 0], sizes = [64, 10], strides = [1, 1]} : vector<1600x10xf32> to vector<64x10xf32>
    %c10 = arith.constant 10 : index
    %c0_42 = arith.constant 0 : index
    %c0_43 = arith.constant 0 : index
    %70 = vector.load %arg5[%c10, %c0_42, %c0_43] : memref<25x10x20xf32, #tpu.memory_space<vmem>>, vector<1x10x20xf32>
    %71 = vector.shape_cast %70 : vector<1x10x20xf32> to vector<10x20xf32>
    %cst_44 = arith.constant dense<0.000000e+00> : vector<64x20xf32>
    %72 = tpu.matmul %69, %71, %cst_44 {dimension_numbers = #tpu.dot_dimension_numbers<[1], [0], [0], [1], [0, 0, 1, 1], [], []>} : vector<64x10xf32>, vector<10x20xf32>, vector<64x20xf32> -> vector<64x20xf32>
    %73 = arith.addf %68, %72 : vector<64x20xf32>
    %74 = vector.extract_strided_slice %17 {offsets = [704, 0], sizes = [64, 10], strides = [1, 1]} : vector<1600x10xf32> to vector<64x10xf32>
    %c11 = arith.constant 11 : index
    %c0_45 = arith.constant 0 : index
    %c0_46 = arith.constant 0 : index
    %75 = vector.load %arg5[%c11, %c0_45, %c0_46] : memref<25x10x20xf32, #tpu.memory_space<vmem>>, vector<1x10x20xf32>
    %76 = vector.shape_cast %75 : vector<1x10x20xf32> to vector<10x20xf32>
    %cst_47 = arith.constant dense<0.000000e+00> : vector<64x20xf32>
    %77 = tpu.matmul %74, %76, %cst_47 {dimension_numbers = #tpu.dot_dimension_numbers<[1], [0], [0], [1], [0, 0, 1, 1], [], []>} : vector<64x10xf32>, vector<10x20xf32>, vector<64x20xf32> -> vector<64x20xf32>
    %78 = arith.addf %73, %77 : vector<64x20xf32>
    %79 = vector.extract_strided_slice %17 {offsets = [768, 0], sizes = [64, 10], strides = [1, 1]} : vector<1600x10xf32> to vector<64x10xf32>
    %c12 = arith.constant 12 : index
    %c0_48 = arith.constant 0 : index
    %c0_49 = arith.constant 0 : index
    %80 = vector.load %arg5[%c12, %c0_48, %c0_49] : memref<25x10x20xf32, #tpu.memory_space<vmem>>, vector<1x10x20xf32>
    %81 = vector.shape_cast %80 : vector<1x10x20xf32> to vector<10x20xf32>
    %cst_50 = arith.constant dense<0.000000e+00> : vector<64x20xf32>
    %82 = tpu.matmul %79, %81, %cst_50 {dimension_numbers = #tpu.dot_dimension_numbers<[1], [0], [0], [1], [0, 0, 1, 1], [], []>} : vector<64x10xf32>, vector<10x20xf32>, vector<64x20xf32> -> vector<64x20xf32>
    %83 = arith.addf %78, %82 : vector<64x20xf32>
    %84 = vector.extract_strided_slice %17 {offsets = [832, 0], sizes = [64, 10], strides = [1, 1]} : vector<1600x10xf32> to vector<64x10xf32>
    %c13 = arith.constant 13 : index
    %c0_51 = arith.constant 0 : index
    %c0_52 = arith.constant 0 : index
    %85 = vector.load %arg5[%c13, %c0_51, %c0_52] : memref<25x10x20xf32, #tpu.memory_space<vmem>>, vector<1x10x20xf32>
    %86 = vector.shape_cast %85 : vector<1x10x20xf32> to vector<10x20xf32>
    %cst_53 = arith.constant dense<0.000000e+00> : vector<64x20xf32>
    %87 = tpu.matmul %84, %86, %cst_53 {dimension_numbers = #tpu.dot_dimension_numbers<[1], [0], [0], [1], [0, 0, 1, 1], [], []>} : vector<64x10xf32>, vector<10x20xf32>, vector<64x20xf32> -> vector<64x20xf32>
    %88 = arith.addf %83, %87 : vector<64x20xf32>
    %89 = vector.extract_strided_slice %17 {offsets = [896, 0], sizes = [64, 10], strides = [1, 1]} : vector<1600x10xf32> to vector<64x10xf32>
    %c14 = arith.constant 14 : index
    %c0_54 = arith.constant 0 : index
    %c0_55 = arith.constant 0 : index
    %90 = vector.load %arg5[%c14, %c0_54, %c0_55] : memref<25x10x20xf32, #tpu.memory_space<vmem>>, vector<1x10x20xf32>
    %91 = vector.shape_cast %90 : vector<1x10x20xf32> to vector<10x20xf32>
    %cst_56 = arith.constant dense<0.000000e+00> : vector<64x20xf32>
    %92 = tpu.matmul %89, %91, %cst_56 {dimension_numbers = #tpu.dot_dimension_numbers<[1], [0], [0], [1], [0, 0, 1, 1], [], []>} : vector<64x10xf32>, vector<10x20xf32>, vector<64x20xf32> -> vector<64x20xf32>
    %93 = arith.addf %88, %92 : vector<64x20xf32>
    %94 = vector.extract_strided_slice %17 {offsets = [960, 0], sizes = [64, 10], strides = [1, 1]} : vector<1600x10xf32> to vector<64x10xf32>
    %c15 = arith.constant 15 : index
    %c0_57 = arith.constant 0 : index
    %c0_58 = arith.constant 0 : index
    %95 = vector.load %arg5[%c15, %c0_57, %c0_58] : memref<25x10x20xf32, #tpu.memory_space<vmem>>, vector<1x10x20xf32>
    %96 = vector.shape_cast %95 : vector<1x10x20xf32> to vector<10x20xf32>
    %cst_59 = arith.constant dense<0.000000e+00> : vector<64x20xf32>
    %97 = tpu.matmul %94, %96, %cst_59 {dimension_numbers = #tpu.dot_dimension_numbers<[1], [0], [0], [1], [0, 0, 1, 1], [], []>} : vector<64x10xf32>, vector<10x20xf32>, vector<64x20xf32> -> vector<64x20xf32>
    %98 = arith.addf %93, %97 : vector<64x20xf32>
    %99 = vector.extract_strided_slice %17 {offsets = [1024, 0], sizes = [64, 10], strides = [1, 1]} : vector<1600x10xf32> to vector<64x10xf32>
    %c16 = arith.constant 16 : index
    %c0_60 = arith.constant 0 : index
    %c0_61 = arith.constant 0 : index
    %100 = vector.load %arg5[%c16, %c0_60, %c0_61] : memref<25x10x20xf32, #tpu.memory_space<vmem>>, vector<1x10x20xf32>
    %101 = vector.shape_cast %100 : vector<1x10x20xf32> to vector<10x20xf32>
    %cst_62 = arith.constant dense<0.000000e+00> : vector<64x20xf32>
    %102 = tpu.matmul %99, %101, %cst_62 {dimension_numbers = #tpu.dot_dimension_numbers<[1], [0], [0], [1], [0, 0, 1, 1], [], []>} : vector<64x10xf32>, vector<10x20xf32>, vector<64x20xf32> -> vector<64x20xf32>
    %103 = arith.addf %98, %102 : vector<64x20xf32>
    %104 = vector.extract_strided_slice %17 {offsets = [1088, 0], sizes = [64, 10], strides = [1, 1]} : vector<1600x10xf32> to vector<64x10xf32>
    %c17 = arith.constant 17 : index
    %c0_63 = arith.constant 0 : index
    %c0_64 = arith.constant 0 : index
    %105 = vector.load %arg5[%c17, %c0_63, %c0_64] : memref<25x10x20xf32, #tpu.memory_space<vmem>>, vector<1x10x20xf32>
    %106 = vector.shape_cast %105 : vector<1x10x20xf32> to vector<10x20xf32>
    %cst_65 = arith.constant dense<0.000000e+00> : vector<64x20xf32>
    %107 = tpu.matmul %104, %106, %cst_65 {dimension_numbers = #tpu.dot_dimension_numbers<[1], [0], [0], [1], [0, 0, 1, 1], [], []>} : vector<64x10xf32>, vector<10x20xf32>, vector<64x20xf32> -> vector<64x20xf32>
    %108 = arith.addf %103, %107 : vector<64x20xf32>
    %109 = vector.extract_strided_slice %17 {offsets = [1152, 0], sizes = [64, 10], strides = [1, 1]} : vector<1600x10xf32> to vector<64x10xf32>
    %c18 = arith.constant 18 : index
    %c0_66 = arith.constant 0 : index
    %c0_67 = arith.constant 0 : index
    %110 = vector.load %arg5[%c18, %c0_66, %c0_67] : memref<25x10x20xf32, #tpu.memory_space<vmem>>, vector<1x10x20xf32>
    %111 = vector.shape_cast %110 : vector<1x10x20xf32> to vector<10x20xf32>
    %cst_68 = arith.constant dense<0.000000e+00> : vector<64x20xf32>
    %112 = tpu.matmul %109, %111, %cst_68 {dimension_numbers = #tpu.dot_dimension_numbers<[1], [0], [0], [1], [0, 0, 1, 1], [], []>} : vector<64x10xf32>, vector<10x20xf32>, vector<64x20xf32> -> vector<64x20xf32>
    %113 = arith.addf %108, %112 : vector<64x20xf32>
    %114 = vector.extract_strided_slice %17 {offsets = [1216, 0], sizes = [64, 10], strides = [1, 1]} : vector<1600x10xf32> to vector<64x10xf32>
    %c19 = arith.constant 19 : index
    %c0_69 = arith.constant 0 : index
    %c0_70 = arith.constant 0 : index
    %115 = vector.load %arg5[%c19, %c0_69, %c0_70] : memref<25x10x20xf32, #tpu.memory_space<vmem>>, vector<1x10x20xf32>
    %116 = vector.shape_cast %115 : vector<1x10x20xf32> to vector<10x20xf32>
    %cst_71 = arith.constant dense<0.000000e+00> : vector<64x20xf32>
    %117 = tpu.matmul %114, %116, %cst_71 {dimension_numbers = #tpu.dot_dimension_numbers<[1], [0], [0], [1], [0, 0, 1, 1], [], []>} : vector<64x10xf32>, vector<10x20xf32>, vector<64x20xf32> -> vector<64x20xf32>
    %118 = arith.addf %113, %117 : vector<64x20xf32>
    %119 = vector.extract_strided_slice %17 {offsets = [1280, 0], sizes = [64, 10], strides = [1, 1]} : vector<1600x10xf32> to vector<64x10xf32>
    %c20 = arith.constant 20 : index
    %c0_72 = arith.constant 0 : index
    %c0_73 = arith.constant 0 : index
    %120 = vector.load %arg5[%c20, %c0_72, %c0_73] : memref<25x10x20xf32, #tpu.memory_space<vmem>>, vector<1x10x20xf32>
    %121 = vector.shape_cast %120 : vector<1x10x20xf32> to vector<10x20xf32>
    %cst_74 = arith.constant dense<0.000000e+00> : vector<64x20xf32>
    %122 = tpu.matmul %119, %121, %cst_74 {dimension_numbers = #tpu.dot_dimension_numbers<[1], [0], [0], [1], [0, 0, 1, 1], [], []>} : vector<64x10xf32>, vector<10x20xf32>, vector<64x20xf32> -> vector<64x20xf32>
    %123 = arith.addf %118, %122 : vector<64x20xf32>
    %124 = vector.extract_strided_slice %17 {offsets = [1344, 0], sizes = [64, 10], strides = [1, 1]} : vector<1600x10xf32> to vector<64x10xf32>
    %c21 = arith.constant 21 : index
    %c0_75 = arith.constant 0 : index
    %c0_76 = arith.constant 0 : index
    %125 = vector.load %arg5[%c21, %c0_75, %c0_76] : memref<25x10x20xf32, #tpu.memory_space<vmem>>, vector<1x10x20xf32>
    %126 = vector.shape_cast %125 : vector<1x10x20xf32> to vector<10x20xf32>
    %cst_77 = arith.constant dense<0.000000e+00> : vector<64x20xf32>
    %127 = tpu.matmul %124, %126, %cst_77 {dimension_numbers = #tpu.dot_dimension_numbers<[1], [0], [0], [1], [0, 0, 1, 1], [], []>} : vector<64x10xf32>, vector<10x20xf32>, vector<64x20xf32> -> vector<64x20xf32>
    %128 = arith.addf %123, %127 : vector<64x20xf32>
    %129 = vector.extract_strided_slice %17 {offsets = [1408, 0], sizes = [64, 10], strides = [1, 1]} : vector<1600x10xf32> to vector<64x10xf32>
    %c22 = arith.constant 22 : index
    %c0_78 = arith.constant 0 : index
    %c0_79 = arith.constant 0 : index
    %130 = vector.load %arg5[%c22, %c0_78, %c0_79] : memref<25x10x20xf32, #tpu.memory_space<vmem>>, vector<1x10x20xf32>
    %131 = vector.shape_cast %130 : vector<1x10x20xf32> to vector<10x20xf32>
    %cst_80 = arith.constant dense<0.000000e+00> : vector<64x20xf32>
    %132 = tpu.matmul %129, %131, %cst_80 {dimension_numbers = #tpu.dot_dimension_numbers<[1], [0], [0], [1], [0, 0, 1, 1], [], []>} : vector<64x10xf32>, vector<10x20xf32>, vector<64x20xf32> -> vector<64x20xf32>
    %133 = arith.addf %128, %132 : vector<64x20xf32>
    %134 = vector.extract_strided_slice %17 {offsets = [1472, 0], sizes = [64, 10], strides = [1, 1]} : vector<1600x10xf32> to vector<64x10xf32>
    %c23 = arith.constant 23 : index
    %c0_81 = arith.constant 0 : index
    %c0_82 = arith.constant 0 : index
    %135 = vector.load %arg5[%c23, %c0_81, %c0_82] : memref<25x10x20xf32, #tpu.memory_space<vmem>>, vector<1x10x20xf32>
    %136 = vector.shape_cast %135 : vector<1x10x20xf32> to vector<10x20xf32>
    %cst_83 = arith.constant dense<0.000000e+00> : vector<64x20xf32>
    %137 = tpu.matmul %134, %136, %cst_83 {dimension_numbers = #tpu.dot_dimension_numbers<[1], [0], [0], [1], [0, 0, 1, 1], [], []>} : vector<64x10xf32>, vector<10x20xf32>, vector<64x20xf32> -> vector<64x20xf32>
    %138 = arith.addf %133, %137 : vector<64x20xf32>
    %139 = vector.extract_strided_slice %17 {offsets = [1536, 0], sizes = [64, 10], strides = [1, 1]} : vector<1600x10xf32> to vector<64x10xf32>
    %c24 = arith.constant 24 : index
    %c0_84 = arith.constant 0 : index
    %c0_85 = arith.constant 0 : index
    %140 = vector.load %arg5[%c24, %c0_84, %c0_85] : memref<25x10x20xf32, #tpu.memory_space<vmem>>, vector<1x10x20xf32>
    %141 = vector.shape_cast %140 : vector<1x10x20xf32> to vector<10x20xf32>
    %cst_86 = arith.constant dense<0.000000e+00> : vector<64x20xf32>
    %142 = tpu.matmul %139, %141, %cst_86 {dimension_numbers = #tpu.dot_dimension_numbers<[1], [0], [0], [1], [0, 0, 1, 1], [], []>} : vector<64x10xf32>, vector<10x20xf32>, vector<64x20xf32> -> vector<64x20xf32>
    %143 = arith.addf %138, %142 : vector<64x20xf32>
    %144 = vector.extract_strided_slice %143 {offsets = [0, 0], sizes = [16, 20], strides = [1, 1]} : vector<64x20xf32> to vector<16x20xf32>
    %145 = vector.extract_strided_slice %143 {offsets = [16, 0], sizes = [16, 20], strides = [1, 1]} : vector<64x20xf32> to vector<16x20xf32>
    %146 = arith.maximumf %144, %145 : vector<16x20xf32>
    %147 = vector.extract_strided_slice %143 {offsets = [32, 0], sizes = [16, 20], strides = [1, 1]} : vector<64x20xf32> to vector<16x20xf32>
    %148 = vector.extract_strided_slice %143 {offsets = [48, 0], sizes = [16, 20], strides = [1, 1]} : vector<64x20xf32> to vector<16x20xf32>
    %149 = arith.maximumf %147, %148 : vector<16x20xf32>
    %150 = arith.maximumf %146, %149 : vector<16x20xf32>
    %c0_87 = arith.constant 0 : index
    %c0_88 = arith.constant 0 : index
    %151 = vector.load %arg6[%c0_87, %c0_88] : memref<1x20xf32, #tpu.memory_space<vmem>>, vector<1x20xf32>
    %152 = vector.broadcast %151 : vector<1x20xf32> to vector<16x20xf32>
    %153 = arith.addf %150, %152 : vector<16x20xf32>
    %cst_89 = arith.constant 0.000000e+00 : f32
    %154 = vector.broadcast %cst_89 : f32 to vector<16x20xf32>
    %155 = arith.maximumf %153, %154 : vector<16x20xf32>
    %156 = tpu.iota {dimensions = array<i32: 0>} : vector<20x320xi32>
    %157 = tpu.iota {dimensions = array<i32: 1>} : vector<20x320xi32>
    %c4_i32 = arith.constant 4 : i32
    %158 = vector.broadcast %c4_i32 : i32 to vector<20x320xi32>
    %159 = arith.shrsi %157, %158 : vector<20x320xi32>
    %160 = arith.cmpi eq, %159, %156 : vector<20x320xi32>
    %161 = arith.extui %160 : vector<20x320xi1> to vector<20x320xi32>
    %162 = arith.sitofp %161 : vector<20x320xi32> to vector<20x320xf32>
    %163 = tpu.iota {dimensions = array<i32: 0>} : vector<16x320xi32>
    %164 = tpu.iota {dimensions = array<i32: 1>} : vector<16x320xi32>
    %c15_i32 = arith.constant 15 : i32
    %165 = vector.broadcast %c15_i32 : i32 to vector<16x320xi32>
    %166 = arith.andi %164, %165 : vector<16x320xi32>
    %167 = arith.cmpi eq, %166, %163 : vector<16x320xi32>
    %168 = arith.extui %167 : vector<16x320xi1> to vector<16x320xi32>
    %169 = arith.sitofp %168 : vector<16x320xi32> to vector<16x320xf32>
    %cst_90 = arith.constant dense<0.000000e+00> : vector<16x320xf32>
    %170 = tpu.matmul %155, %162, %cst_90 {dimension_numbers = #tpu.dot_dimension_numbers<[1], [0], [0], [1], [0, 0, 1, 1], [], []>} : vector<16x20xf32>, vector<20x320xf32>, vector<16x320xf32> -> vector<16x320xf32>
    %171 = arith.mulf %170, %169 : vector<16x320xf32>
    %cst_91 = arith.constant dense<0.000000e+00> : vector<320xf32>
    %172 = vector.multi_reduction <add>, %171, %cst_91 [0] : vector<16x320xf32> to vector<320xf32>
    %173 = vector.shape_cast %172 : vector<320xf32> to vector<1x320xf32>
    %c0_92 = arith.constant 0 : index
    %c0_93 = arith.constant 0 : index
    %174 = vector.load %arg7[%c0_92, %c0_93] : memref<320x50xf32, #tpu.memory_space<vmem>>, vector<320x50xf32>
    %cst_94 = arith.constant dense<0.000000e+00> : vector<1x50xf32>
    %175 = tpu.matmul %173, %174, %cst_94 {dimension_numbers = #tpu.dot_dimension_numbers<[1], [0], [0], [1], [0, 0, 1, 1], [], []>} : vector<1x320xf32>, vector<320x50xf32>, vector<1x50xf32> -> vector<1x50xf32>
    %c0_95 = arith.constant 0 : index
    %c0_96 = arith.constant 0 : index
    %176 = vector.load %arg8[%c0_95, %c0_96] : memref<1x50xf32, #tpu.memory_space<vmem>>, vector<1x50xf32>
    %177 = arith.addf %175, %176 : vector<1x50xf32>
    %cst_97 = arith.constant 0.000000e+00 : f32
    %178 = vector.broadcast %cst_97 : f32 to vector<1x50xf32>
    %179 = arith.maximumf %177, %178 : vector<1x50xf32>
    %c0_98 = arith.constant 0 : index
    %c0_99 = arith.constant 0 : index
    %180 = vector.load %arg9[%c0_98, %c0_99] : memref<1x50xf32, #tpu.memory_space<vmem>>, vector<1x50xf32>
    %181 = arith.mulf %179, %180 : vector<1x50xf32>
    %cst_100 = arith.constant dense<0.000000e+00> : vector<1xf32>
    %182 = vector.multi_reduction <add>, %181, %cst_100 [1] : vector<1x50xf32> to vector<1xf32>
    %183 = vector.shape_cast %182 : vector<1xf32> to vector<1x1xf32>
    %c0_101 = arith.constant 0 : index
    %c0_102 = arith.constant 0 : index
    %184 = vector.load %arg10[%c0_101, %c0_102] : memref<1x1xf32, #tpu.memory_space<vmem>>, vector<1x1xf32>
    %185 = arith.addf %183, %184 : vector<1x1xf32>
    %186 = math.tanh %185 : vector<1x1xf32>
    %cst_103 = arith.constant 2.000000e+00 : f32
    %187 = vector.broadcast %cst_103 : f32 to vector<1x1xf32>
    %188 = arith.mulf %187, %186 : vector<1x1xf32>
    %189 = vector.shape_cast %188 : vector<1x1xf32> to vector<1x1x1xf32>
    %c0_104 = arith.constant 0 : index
    %c0_105 = arith.constant 0 : index
    %c0_106 = arith.constant 0 : index
    %190 = vector.load %arg11[%c0_104, %c0_105, %c0_106] : memref<1x1x1xf32, #tpu.memory_space<vmem>>, vector<1x1x1xf32>
    tpu.vector_store %arg11[%c0_104, %c0_105, %c0_106], %189 {strides = array<i32>} : memref<1x1x1xf32, #tpu.memory_space<vmem>>, vector<1x1x1xf32>,
    return
  }
  func.func @transform_0(%arg0: i32) -> (i32, i32, i32) {
    %c0_i32 = arith.constant 0 : i32
    %c0_i32_0 = arith.constant 0 : i32
    %c0_i32_1 = arith.constant 0 : i32
    return %arg0, %c0_i32, %c0_i32_0 : i32, i32, i32
  }
  func.func @transform_1(%arg0: i32) -> (i32, i32) {
    %c0_i32 = arith.constant 0 : i32
    %c0_i32_0 = arith.constant 0 : i32
    %c0_i32_1 = arith.constant 0 : i32
    return %c0_i32, %c0_i32_0 : i32, i32
  }
  func.func @transform_2(%arg0: i32) -> (i32, i32) {
    %c0_i32 = arith.constant 0 : i32
    %c0_i32_0 = arith.constant 0 : i32
    %c0_i32_1 = arith.constant 0 : i32
    return %c0_i32, %c0_i32_0 : i32, i32
  }
  func.func @transform_3(%arg0: i32) -> (i32, i32) {
    %c0_i32 = arith.constant 0 : i32
    %c0_i32_0 = arith.constant 0 : i32
    %c0_i32_1 = arith.constant 0 : i32
    return %c0_i32, %c0_i32_0 : i32, i32
  }
  func.func @transform_4(%arg0: i32) -> (i32, i32, i32) {
    %c0_i32 = arith.constant 0 : i32
    %c0_i32_0 = arith.constant 0 : i32
    %c0_i32_1 = arith.constant 0 : i32
    %c0_i32_2 = arith.constant 0 : i32
    return %c0_i32, %c0_i32_0, %c0_i32_1 : i32, i32, i32
  }
  func.func @transform_5(%arg0: i32) -> (i32, i32) {
    %c0_i32 = arith.constant 0 : i32
    %c0_i32_0 = arith.constant 0 : i32
    %c0_i32_1 = arith.constant 0 : i32
    return %c0_i32, %c0_i32_0 : i32, i32
  }
  func.func @transform_6(%arg0: i32) -> (i32, i32) {
    %c0_i32 = arith.constant 0 : i32
    %c0_i32_0 = arith.constant 0 : i32
    %c0_i32_1 = arith.constant 0 : i32
    return %c0_i32, %c0_i32_0 : i32, i32
  }
  func.func @transform_7(%arg0: i32) -> (i32, i32) {
    %c0_i32 = arith.constant 0 : i32
    %c0_i32_0 = arith.constant 0 : i32
    %c0_i32_1 = arith.constant 0 : i32
    return %c0_i32, %c0_i32_0 : i32, i32
  }
  func.func @transform_8(%arg0: i32) -> (i32, i32) {
    %c0_i32 = arith.constant 0 : i32
    %c0_i32_0 = arith.constant 0 : i32
    %c0_i32_1 = arith.constant 0 : i32
    return %c0_i32, %c0_i32_0 : i32, i32
  }
  func.func @transform_9(%arg0: i32) -> (i32, i32) {
    %c0_i32 = arith.constant 0 : i32
    %c0_i32_0 = arith.constant 0 : i32
    %c0_i32_1 = arith.constant 0 : i32
    return %c0_i32, %c0_i32_0 : i32, i32
  }
  func.func @transform_10(%arg0: i32) -> (i32, i32, i32) {
    %c0_i32 = arith.constant 0 : i32
    %c0_i32_0 = arith.constant 0 : i32
    %c0_i32_1 = arith.constant 0 : i32
    return %arg0, %c0_i32, %c0_i32_0 : i32, i32, i32
  }
}

</mosaic_0001>

<llo_original>
// kernel: _lambda_.1
$region0: #{_lambda_.1}
  #allocation0 [shape = 'u32[]', space=smem, size = 0x4, offset = 0x4, fixed_abs, tag = 'smem constant byte address 0x4 - core index']
  #allocation1 [shape = 'u32[144,128]{1,0:T(1,128)}', space=vmem, size = 0x12000, scoped, tag = 'internal scratch']
  #allocation2 [shape = 'f32[1,1]{1,0:T(1,128)S(1)}', space=vmem, size = 0x200, scoped, tag = 'scoped memory for _lambda_.1']
  %s0 = inlined_call_operand.vmem [shape: f32[2,576,25], index: 0, kind: input, shape index: {}]
  %s1 = inlined_call_operand.vmem [shape: f32[25,10], index: 1, kind: input, shape index: {}]
  %s2 = inlined_call_operand.vmem [shape: f32[1,10], index: 2, kind: input, shape index: {}]
  %s3 = inlined_call_operand.vmem [shape: f32[1600,144], index: 3, kind: input, shape index: {}]
  %s4 = inlined_call_operand.vmem [shape: f32[25,10,20], index: 4, kind: input, shape index: {}]
  %s5 = inlined_call_operand.vmem [shape: f32[1,20], index: 5, kind: input, shape index: {}]
  %s6 = inlined_call_operand.vmem [shape: f32[320,50], index: 6, kind: input, shape index: {}]
  %s7 = inlined_call_operand.vmem [shape: f32[1,50], index: 7, kind: input, shape index: {}]
  %s8 = inlined_call_operand.vmem [shape: f32[1,50], index: 8, kind: input, shape index: {}]
  %s9 = inlined_call_operand.<no memory space> [shape: f32[1,1], index: 9, kind: input, shape index: {}]
  %s10 = inlined_call_operand.vmem [shape: f32[2,1,1], index: 10, kind: output, shape index: {}]
  %s11 = sld [smem:[#allocation0]]
  $region73: #{_lambda_.1} parent=0
    _
  %s13 = ssub.s32 1, %s11
  %s14 = scalar_select 0, %s13, %s11
  %v15 = vstv %s9
  %16 = vst [vmem:[#allocation2] sm:$0x1] %v15
  loop: start=0, step=1, limit=4
  $region2: #{_lambda_.1} parent=0 // loop_pre_header
    _
  $region3: #{_lambda_.1} parent=0 // loop_header
    %s18 = sphi 0, %s22
    %p19 = scmp.ge.s32.totalorder %s18, 4
    %s28 = sphi 0, %s30
    %s31 = sphi 0, %s28
    %s32 = sphi 0, %s31
    %s48 = sphi 0, %s32
    %s52 = sphi 0, %s52
    %s54 = sphi 0, %s52
    %s55 = sphi 0, %s54
    %s69 = sphi 0, %s55
    %s73 = sphi 0, %s73
    %s75 = sphi 0, %s73
    %s76 = sphi 0, %s75
    %s90 = sphi 0, %s76
    %s94 = sphi 0, %s94
    %s96 = sphi 0, %s94
    %s97 = sphi 0, %s96
    %s111 = sphi 0, %s97
    %s115 = sphi 0, %s115
    %s117 = sphi 0, %s115
    %s118 = sphi 0, %s117
    %s132 = sphi 0, %s118
    %s136 = sphi 0, %s136
    %s138 = sphi 0, %s136
    %s139 = sphi 0, %s138
    %s153 = sphi 0, %s139
    %s157 = sphi 0, %s157
    %s159 = sphi 0, %s157
    %s160 = sphi 0, %s159
    %s174 = sphi 0, %s160
    %s178 = sphi 0, %s178
    %s180 = sphi 0, %s178
    %s181 = sphi 0, %s180
    %s195 = sphi 0, %s181
    %s199 = sphi 0, %s199
    %s201 = sphi 0, %s199
    %s202 = sphi 0, %s201
    %s216 = sphi 0, %s202
    %s220 = sphi 0, %s220
    %s222 = sphi 0, %s220
    %s223 = sphi 0, %s222
    %s237 = sphi 0, %s223
    %s243 = sphi 0, %s245
    %s246 = sphi 0, %s243
    %s247 = sphi 0, %s246
    %s263 = sphi 0, %s247
  $region4: #{_lambda_.1} parent=0 // loop_header_branch
    %21 = sbr.rel (%p19) target = $region8
  $region5: #{_lambda_.1} parent=0 // loop_body
    %s23 = ssub.s32 %s18, 1
    %s24 = ssub.s32 %s18, 2
    %s25 = sadd.s32 %s18, 1
    %s26 = ssub.s32 %s18, %s25
    %p27 = scmp.eq.s32.totalorder %s26, 0
    %s29 = sadd.s32 %s28, 1
    %s30 = scalar_select %p27, %s28, %s29
    %p33 = pneg %p27
    %p34 = scmp.eq.s32.totalorder %s18, 1
    %p35 = por %p33, %p34
    %p36 = scmp.ne.s32.totalorder %s28, %s31
    %p37 = scmp.eq.s32.totalorder %s18, 0
    %p38 = por %p36, %p37
    %p39 = scmp.ne.s32.totalorder %s28, %s31
    %p40 = scmp.eq.s32.totalorder %s23, 1
    %p41 = por %p39, %p40
    %p42 = scmp.ne.s32.totalorder %s31, %s32
    %p43 = scmp.eq.s32.totalorder %s23, 0
    %p44 = por %p42, %p43
    %p45 = scmp.ne.s32.totalorder %s31, %s32
    %p46 = scmp.eq.s32.totalorder %s24, 1
    %p47 = por %p45, %p46
    %p49 = scmp.ne.s32.totalorder %s32, %s48
    %p50 = scmp.eq.s32.totalorder %s24, 0
    %p51 = por %p49, %p50
    %s53 = sadd.s32 %s52, 1
    %p56 = scmp.eq.s32.totalorder %s18, 1
    %p57 = scmp.ne.s32.totalorder %s52, %s54
    %p58 = scmp.eq.s32.totalorder %s18, 0
    %p59 = por %p57, %p58
    %p60 = scmp.ne.s32.totalorder %s52, %s54
    %p61 = scmp.eq.s32.totalorder %s23, 1
    %p62 = por %p60, %p61
    %p63 = scmp.ne.s32.totalorder %s54, %s55
    %p64 = scmp.eq.s32.totalorder %s23, 0
    %p65 = por %p63, %p64
    %p66 = scmp.ne.s32.totalorder %s54, %s55
    %p67 = scmp.eq.s32.totalorder %s24, 1
    %p68 = por %p66, %p67
    %p70 = scmp.ne.s32.totalorder %s55, %s69
    %p71 = scmp.eq.s32.totalorder %s24, 0
    %p72 = por %p70, %p71
    %s74 = sadd.s32 %s73, 1
    %p77 = scmp.eq.s32.totalorder %s18, 1
    %p78 = scmp.ne.s32.totalorder %s73, %s75
    %p79 = scmp.eq.s32.totalorder %s18, 0
    %p80 = por %p78, %p79
    %p81 = scmp.ne.s32.totalorder %s73, %s75
    %p82 = scmp.eq.s32.totalorder %s23, 1
    %p83 = por %p81, %p82
    %p84 = scmp.ne.s32.totalorder %s75, %s76
    %p85 = scmp.eq.s32.totalorder %s23, 0
    %p86 = por %p84, %p85
    %p87 = scmp.ne.s32.totalorder %s75, %s76
    %p88 = scmp.eq.s32.totalorder %s24, 1
    %p89 = por %p87, %p88
    %p91 = scmp.ne.s32.totalorder %s76, %s90
    %p92 = scmp.eq.s32.totalorder %s24, 0
    %p93 = por %p91, %p92
    %s95 = sadd.s32 %s94, 1
    %p98 = scmp.eq.s32.totalorder %s18, 1
    %p99 = scmp.ne.s32.totalorder %s94, %s96
    %p100 = scmp.eq.s32.totalorder %s18, 0
    %p101 = por %p99, %p100
    %p102 = scmp.ne.s32.totalorder %s94, %s96
    %p103 = scmp.eq.s32.totalorder %s23, 1
    %p104 = por %p102, %p103
    %p105 = scmp.ne.s32.totalorder %s96, %s97
    %p106 = scmp.eq.s32.totalorder %s23, 0
    %p107 = por %p105, %p106
    %p108 = scmp.ne.s32.totalorder %s96, %s97
    %p109 = scmp.eq.s32.totalorder %s24, 1
    %p110 = por %p108, %p109
    %p112 = scmp.ne.s32.totalorder %s97, %s111
    %p113 = scmp.eq.s32.totalorder %s24, 0
    %p114 = por %p112, %p113
    %s116 = sadd.s32 %s115, 1
    %p119 = scmp.eq.s32.totalorder %s18, 1
    %p120 = scmp.ne.s32.totalorder %s115, %s117
    %p121 = scmp.eq.s32.totalorder %s18, 0
    %p122 = por %p120, %p121
    %p123 = scmp.ne.s32.totalorder %s115, %s117
    %p124 = scmp.eq.s32.totalorder %s23, 1
    %p125 = por %p123, %p124
    %p126 = scmp.ne.s32.totalorder %s117, %s118
    %p127 = scmp.eq.s32.totalorder %s23, 0
    %p128 = por %p126, %p127
    %p129 = scmp.ne.s32.totalorder %s117, %s118
    %p130 = scmp.eq.s32.totalorder %s24, 1
    %p131 = por %p129, %p130
    %p133 = scmp.ne.s32.totalorder %s118, %s132
    %p134 = scmp.eq.s32.totalorder %s24, 0
    %p135 = por %p133, %p134
    %s137 = sadd.s32 %s136, 1
    %p140 = scmp.eq.s32.totalorder %s18, 1
    %p141 = scmp.ne.s32.totalorder %s136, %s138
    %p142 = scmp.eq.s32.totalorder %s18, 0
    %p143 = por %p141, %p142
    %p144 = scmp.ne.s32.totalorder %s136, %s138
    %p145 = scmp.eq.s32.totalorder %s23, 1
    %p146 = por %p144, %p145
    %p147 = scmp.ne.s32.totalorder %s138, %s139
    %p148 = scmp.eq.s32.totalorder %s23, 0
    %p149 = por %p147, %p148
    %p150 = scmp.ne.s32.totalorder %s138, %s139
    %p151 = scmp.eq.s32.totalorder %s24, 1
    %p152 = por %p150, %p151
    %p154 = scmp.ne.s32.totalorder %s139, %s153
    %p155 = scmp.eq.s32.totalorder %s24, 0
    %p156 = por %p154, %p155
    %s158 = sadd.s32 %s157, 1
    %p161 = scmp.eq.s32.totalorder %s18, 1
    %p162 = scmp.ne.s32.totalorder %s157, %s159
    %p163 = scmp.eq.s32.totalorder %s18, 0
    %p164 = por %p162, %p163
    %p165 = scmp.ne.s32.totalorder %s157, %s159
    %p166 = scmp.eq.s32.totalorder %s23, 1
    %p167 = por %p165, %p166
    %p168 = scmp.ne.s32.totalorder %s159, %s160
    %p169 = scmp.eq.s32.totalorder %s23, 0
    %p170 = por %p168, %p169
    %p171 = scmp.ne.s32.totalorder %s159, %s160
    %p172 = scmp.eq.s32.totalorder %s24, 1
    %p173 = por %p171, %p172
    %p175 = scmp.ne.s32.totalorder %s160, %s174
    %p176 = scmp.eq.s32.totalorder %s24, 0
    %p177 = por %p175, %p176
    %s179 = sadd.s32 %s178, 1
    %p182 = scmp.eq.s32.totalorder %s18, 1
    %p183 = scmp.ne.s32.totalorder %s178, %s180
    %p184 = scmp.eq.s32.totalorder %s18, 0
    %p185 = por %p183, %p184
    %p186 = scmp.ne.s32.totalorder %s178, %s180
    %p187 = scmp.eq.s32.totalorder %s23, 1
    %p188 = por %p186, %p187
    %p189 = scmp.ne.s32.totalorder %s180, %s181
    %p190 = scmp.eq.s32.totalorder %s23, 0
    %p191 = por %p189, %p190
    %p192 = scmp.ne.s32.totalorder %s180, %s181
    %p193 = scmp.eq.s32.totalorder %s24, 1
    %p194 = por %p192, %p193
    %p196 = scmp.ne.s32.totalorder %s181, %s195
    %p197 = scmp.eq.s32.totalorder %s24, 0
    %p198 = por %p196, %p197
    %s200 = sadd.s32 %s199, 1
    %p203 = scmp.eq.s32.totalorder %s18, 1
    %p204 = scmp.ne.s32.totalorder %s199, %s201
    %p205 = scmp.eq.s32.totalorder %s18, 0
    %p206 = por %p204, %p205
    %p207 = scmp.ne.s32.totalorder %s199, %s201
    %p208 = scmp.eq.s32.totalorder %s23, 1
    %p209 = por %p207, %p208
    %p210 = scmp.ne.s32.totalorder %s201, %s202
    %p211 = scmp.eq.s32.totalorder %s23, 0
    %p212 = por %p210, %p211
    %p213 = scmp.ne.s32.totalorder %s201, %s202
    %p214 = scmp.eq.s32.totalorder %s24, 1
    %p215 = por %p213, %p214
    %p217 = scmp.ne.s32.totalorder %s202, %s216
    %p218 = scmp.eq.s32.totalorder %s24, 0
    %p219 = por %p217, %p218
    %s221 = sadd.s32 %s220, 1
    %p224 = scmp.eq.s32.totalorder %s18, 1
    %p225 = scmp.ne.s32.totalorder %s220, %s222
    %p226 = scmp.eq.s32.totalorder %s18, 0
    %p227 = por %p225, %p226
    %p228 = scmp.ne.s32.totalorder %s220, %s222
    %p229 = scmp.eq.s32.totalorder %s23, 1
    %p230 = por %p228, %p229
    %p231 = scmp.ne.s32.totalorder %s222, %s223
    %p232 = scmp.eq.s32.totalorder %s23, 0
    %p233 = por %p231, %p232
    %p234 = scmp.ne.s32.totalorder %s222, %s223
    %p235 = scmp.eq.s32.totalorder %s24, 1
    %p236 = por %p234, %p235
    %p238 = scmp.ne.s32.totalorder %s223, %s237
    %p239 = scmp.eq.s32.totalorder %s24, 0
    %p240 = por %p238, %p239
    %s241 = ssub.s32 %s18, %s25
    %p242 = scmp.eq.s32.totalorder %s241, 0
    %s244 = sadd.s32 %s243, 1
    %s245 = scalar_select %p242, %s243, %s244
    %p248 = pneg %p242
    %p249 = scmp.eq.s32.totalorder %s18, 1
    %p250 = por %p248, %p249
    %p251 = scmp.ne.s32.totalorder %s243, %s246
    %p252 = scmp.eq.s32.totalorder %s18, 0
    %p253 = por %p251, %p252
    %p254 = scmp.ne.s32.totalorder %s243, %s246
    %p255 = scmp.eq.s32.totalorder %s23, 1
    %p256 = por %p254, %p255
    %p257 = scmp.ne.s32.totalorder %s246, %s247
    %p258 = scmp.eq.s32.totalorder %s23, 0
    %p259 = por %p257, %p258
    %p260 = scmp.ne.s32.totalorder %s246, %s247
    %p261 = scmp.eq.s32.totalorder %s24, 1
    %p262 = por %p260, %p261
    %p264 = scmp.ne.s32.totalorder %s247, %s263
    %p265 = scmp.eq.s32.totalorder %s24, 0
    %p266 = por %p264, %p265
    %p267 = scmp.le.s32.totalorder 1, %s18
    %p268 = scmp.lt.s32.totalorder %s18, 3
    %p269 = pnand %p267, %p268
    %p270 = pneg %p269
    // Predicated region
    $region9: #{_lambda_.1} parent=5 // pred_check
      _
    $region10: #{_lambda_.1} parent=5 // pred_check_branch
      %272 = sbr.rel (%p269) target = $region12
    $region11: #{_lambda_.1} parent=5 // pred_region
      %s273 = ssub.s32 %s18, 1
      // Predicated region
      $region13: #{_lambda_.1} parent=11 // pred_check
        %p274 = pneg %p65
      $region14: #{_lambda_.1} parent=11 // pred_check_branch
        %276 = sbr.rel (%p274) target = $region16
      $region15: #{_lambda_.1} parent=11 // pred_region
        _
      $region16: #{_lambda_.1} parent=11 // pred_fallthru
        _
      // Predicated region
      $region17: #{_lambda_.1} parent=11 // pred_check
        %p277 = pneg %p86
      $region18: #{_lambda_.1} parent=11 // pred_check_branch
        %279 = sbr.rel (%p277) target = $region20
      $region19: #{_lambda_.1} parent=11 // pred_region
        _
      $region20: #{_lambda_.1} parent=11 // pred_fallthru
        _
      // Predicated region
      $region21: #{_lambda_.1} parent=11 // pred_check
        %p280 = pneg %p107
      $region22: #{_lambda_.1} parent=11 // pred_check_branch
        %282 = sbr.rel (%p280) target = $region24
      $region23: #{_lambda_.1} parent=11 // pred_region
        _
      $region24: #{_lambda_.1} parent=11 // pred_fallthru
        _
      // Predicated region
      $region25: #{_lambda_.1} parent=11 // pred_check
        %p283 = pneg %p128
      $region26: #{_lambda_.1} parent=11 // pred_check_branch
        %285 = sbr.rel (%p283) target = $region28
      $region27: #{_lambda_.1} parent=11 // pred_region
        _
      $region28: #{_lambda_.1} parent=11 // pred_fallthru
        _
      // Predicated region
      $region29: #{_lambda_.1} parent=11 // pred_check
        %p286 = pneg %p149
      $region30: #{_lambda_.1} parent=11 // pred_check_branch
        %288 = sbr.rel (%p286) target = $region32
      $region31: #{_lambda_.1} parent=11 // pred_region
        _
      $region32: #{_lambda_.1} parent=11 // pred_fallthru
        _
      // Predicated region
      $region33: #{_lambda_.1} parent=11 // pred_check
        %p289 = pneg %p170
      $region34: #{_lambda_.1} parent=11 // pred_check_branch
        %291 = sbr.rel (%p289) target = $region36
      $region35: #{_lambda_.1} parent=11 // pred_region
        _
      $region36: #{_lambda_.1} parent=11 // pred_fallthru
        _
      // Predicated region
      $region37: #{_lambda_.1} parent=11 // pred_check
        %p292 = pneg %p191
      $region38: #{_lambda_.1} parent=11 // pred_check_branch
        %294 = sbr.rel (%p292) target = $region40
      $region39: #{_lambda_.1} parent=11 // pred_region
        _
      $region40: #{_lambda_.1} parent=11 // pred_fallthru
        _
      // Predicated region
      $region41: #{_lambda_.1} parent=11 // pred_check
        %p295 = pneg %p212
      $region42: #{_lambda_.1} parent=11 // pred_check_branch
        %297 = sbr.rel (%p295) target = $region44
      $region43: #{_lambda_.1} parent=11 // pred_region
        _
      $region44: #{_lambda_.1} parent=11 // pred_fallthru
        _
      // Predicated region
      $region45: #{_lambda_.1} parent=11 // pred_check
        %p298 = pneg %p233
      $region46: #{_lambda_.1} parent=11 // pred_check_branch
        %300 = sbr.rel (%p298) target = $region48
      $region47: #{_lambda_.1} parent=11 // pred_region
        _
      $region48: #{_lambda_.1} parent=11 // pred_fallthru
        _
    $region12: #{_lambda_.1} parent=5 // pred_fallthru
      _
    %p301 = scmp.lt.s32.totalorder %s18, 2
    // Predicated region
    $region49: #{_lambda_.1} parent=5 // pred_check
      %p302 = pneg %p301
    $region50: #{_lambda_.1} parent=5 // pred_check_branch
      %304 = sbr.rel (%p302) target = $region52
    $region51: #{_lambda_.1} parent=5 // pred_region
      // Predicated region
      $region53: #{_lambda_.1} parent=51 // pred_check
        %p305 = pneg %p38
      $region54: #{_lambda_.1} parent=51 // pred_check_branch
        %307 = sbr.rel (%p305) target = $region56
      $region55: #{_lambda_.1} parent=51 // pred_region
        %p308 = scmp.lt.s32.totalorder %s18, 1
        %s309 = scalar_select %p308, %s18, 1
        %s310 = smul.addr %s309, 72
        %s311 = smul.addr %s310, 8
        %s312 = scalar_lea.vmem %s0, %s311
      $region56: #{_lambda_.1} parent=51 // pred_fallthru
        _
    $region52: #{_lambda_.1} parent=5 // pred_fallthru
      _
    %p313 = scmp.le.s32.totalorder 1, %s18
    %p314 = scmp.lt.s32.totalorder %s18, 3
    %p315 = pnand %p313, %p314
    %p316 = pneg %p315
    // Predicated region
    $region57: #{_lambda_.1} parent=5 // pred_check
      _
    $region58: #{_lambda_.1} parent=5 // pred_check_branch
      %318 = sbr.rel (%p315) target = $region60
    $region59: #{_lambda_.1} parent=5 // pred_region
      %s319 = ssub.s32 %s18, 1
      %p320 = scmp.lt.s32.totalorder %s23, 1
      %s321 = scalar_select %p320, %s23, 1
      %s322 = smul.addr %s321, 72
      %s323 = smul.addr %s322, 8
      %s324 = scalar_lea.vmem %s0, %s323
      %p325 = pneg %p44
      %p326 = pneg %p41
      %p327 = pneg %p65
      %p328 = pneg %p62
      %p329 = pneg %p86
      %p330 = pneg %p83
      %p331 = pneg %p107
      %p332 = pneg %p104
      %p333 = pneg %p128
      %p334 = pneg %p125
      %p335 = pneg %p149
      %p336 = pneg %p146
      %p337 = pneg %p170
      %p338 = pneg %p167
      %p339 = pneg %p191
      %p340 = pneg %p188
      %p341 = pneg %p212
      %p342 = pneg %p209
      %p343 = pneg %p233
      %p344 = pneg %p230
      %p345 = pneg %p259
      %p346 = pneg %p256
      %p347 = scmp.lt.s32.totalorder %s23, 1
      %s348 = scalar_select %p347, %s23, 1
      %s349 = scalar_lea.vmem %s10, %s348
      %p350 = scmp.lt.s32.totalorder %s23, 1
      %s351 = scalar_select %p350, %s23, 1
      %s352 = smul.addr %s351, 72
      %s353 = smul.addr %s352, 8
      %s354 = scalar_lea.vmem %s0, %s353
      %p355 = scmp.lt.s32.totalorder %s23, 1
      %s356 = scalar_select %p355, %s23, 1
      %s357 = scalar_lea.vmem %s10, %s356
      %v358 = vld [vmem:[%s354] sm:$0xff]
      %v359 = vld [vmem:[%s354 + $0x8] sm:$0xff]
      %v360 = vld [vmem:[%s354 + $0x10] sm:$0xff]
      %v361 = vld [vmem:[%s354 + $0x18] sm:$0xff]
      %v362 = vld [vmem:[%s354 + $0x20] sm:$0xff]
      %v363 = vld [vmem:[%s354 + $0x28] sm:$0xff]
      %v364 = vld [vmem:[%s354 + $0x30] sm:$0xff]
      %v365 = vld [vmem:[%s354 + $0x38] sm:$0xff]
      %v366 = vld [vmem:[%s354 + $0x40] sm:$0xff]
      %v367 = vld [vmem:[%s354 + $0x48] sm:$0xff]
      %v368 = vld [vmem:[%s354 + $0x50] sm:$0xff]
      %v369 = vld [vmem:[%s354 + $0x58] sm:$0xff]
      %v370 = vld [vmem:[%s354 + $0x60] sm:$0xff]
      %v371 = vld [vmem:[%s354 + $0x68] sm:$0xff]
      %v372 = vld [vmem:[%s354 + $0x70] sm:$0xff]
      %v373 = vld [vmem:[%s354 + $0x78] sm:$0xff]
      %v374 = vld [vmem:[%s354 + $0x80] sm:$0xff]
      %v375 = vld [vmem:[%s354 + $0x88] sm:$0xff]
      %v376 = vld [vmem:[%s354 + $0x90] sm:$0xff]
      %v377 = vld [vmem:[%s354 + $0x98] sm:$0xff]
      %v378 = vld [vmem:[%s354 + $0xa0] sm:$0xff]
      %v379 = vld [vmem:[%s354 + $0xa8] sm:$0xff]
      %v380 = vld [vmem:[%s354 + $0xb0] sm:$0xff]
      %v381 = vld [vmem:[%s354 + $0xb8] sm:$0xff]
      %v382 = vld [vmem:[%s354 + $0xc0] sm:$0xff]
      %v383 = vld [vmem:[%s354 + $0xc8] sm:$0xff]
      %v384 = vld [vmem:[%s354 + $0xd0] sm:$0xff]
      %v385 = vld [vmem:[%s354 + $0xd8] sm:$0xff]
      %v386 = vld [vmem:[%s354 + $0xe0] sm:$0xff]
      %v387 = vld [vmem:[%s354 + $0xe8] sm:$0xff]
      %v388 = vld [vmem:[%s354 + $0xf0] sm:$0xff]
      %v389 = vld [vmem:[%s354 + $0xf8] sm:$0xff]
      %v390 = vld [vmem:[%s354 + $0x100] sm:$0xff]
      %v391 = vld [vmem:[%s354 + $0x108] sm:$0xff]
      %v392 = vld [vmem:[%s354 + $0x110] sm:$0xff]
      %v393 = vld [vmem:[%s354 + $0x118] sm:$0xff]
      %v394 = vld [vmem:[%s354 + $0x120] sm:$0xff]
      %v395 = vld [vmem:[%s354 + $0x128] sm:$0xff]
      %v396 = vld [vmem:[%s354 + $0x130] sm:$0xff]
      %v397 = vld [vmem:[%s354 + $0x138] sm:$0xff]
      %v398 = vld [vmem:[%s354 + $0x140] sm:$0xff]
      %v399 = vld [vmem:[%s354 + $0x148] sm:$0xff]
      %v400 = vld [vmem:[%s354 + $0x150] sm:$0xff]
      %v401 = vld [vmem:[%s354 + $0x158] sm:$0xff]
      %v402 = vld [vmem:[%s354 + $0x160] sm:$0xff]
      %v403 = vld [vmem:[%s354 + $0x168] sm:$0xff]
      %v404 = vld [vmem:[%s354 + $0x170] sm:$0xff]
      %v405 = vld [vmem:[%s354 + $0x178] sm:$0xff]
      %v406 = vld [vmem:[%s354 + $0x180] sm:$0xff]
      %v407 = vld [vmem:[%s354 + $0x188] sm:$0xff]
      %v408 = vld [vmem:[%s354 + $0x190] sm:$0xff]
      %v409 = vld [vmem:[%s354 + $0x198] sm:$0xff]
      %v410 = vld [vmem:[%s354 + $0x1a0] sm:$0xff]
      %v411 = vld [vmem:[%s354 + $0x1a8] sm:$0xff]
      %v412 = vld [vmem:[%s354 + $0x1b0] sm:$0xff]
      %v413 = vld [vmem:[%s354 + $0x1b8] sm:$0xff]
      %v414 = vld [vmem:[%s354 + $0x1c0] sm:$0xff]
      %v415 = vld [vmem:[%s354 + $0x1c8] sm:$0xff]
      %v416 = vld [vmem:[%s354 + $0x1d0] sm:$0xff]
      %v417 = vld [vmem:[%s354 + $0x1d8] sm:$0xff]
      %v418 = vld [vmem:[%s354 + $0x1e0] sm:$0xff]
      %v419 = vld [vmem:[%s354 + $0x1e8] sm:$0xff]
      %v420 = vld [vmem:[%s354 + $0x1f0] sm:$0xff]
      %v421 = vld [vmem:[%s354 + $0x1f8] sm:$0xff]
      %v422 = vld [vmem:[%s354 + $0x200] sm:$0xff]
      %v423 = vld [vmem:[%s354 + $0x208] sm:$0xff]
      %v424 = vld [vmem:[%s354 + $0x210] sm:$0xff]
      %v425 = vld [vmem:[%s354 + $0x218] sm:$0xff]
      %v426 = vld [vmem:[%s354 + $0x220] sm:$0xff]
      %v427 = vld [vmem:[%s354 + $0x228] sm:$0xff]
      %v428 = vld [vmem:[%s354 + $0x230] sm:$0xff]
      %v429 = vld [vmem:[%s354 + $0x238] sm:$0xff]
      %v430 = vld [vmem:[%s1] sm:$0xff]
      %v431 = vld [vmem:[%s1 + $0x8] sm:$0xff]
      %v432 = vld [vmem:[%s1 + $0x10] sm:$0xff]
      %v433 = vld [vmem:[%s1 + $0x18] sm:$0x1]
      %vm434 = vcmask 203776
      %v436 = vsel %vm434, %v358, 0
      %v439 = vsel %vm434, %v359, 0
      %v442 = vsel %vm434, %v360, 0
      %v445 = vsel %vm434, %v361, 0
      %v448 = vsel %vm434, %v362, 0
      %v451 = vsel %vm434, %v363, 0
      %v454 = vsel %vm434, %v364, 0
      %v457 = vsel %vm434, %v365, 0
      %v460 = vsel %vm434, %v366, 0
      %v463 = vsel %vm434, %v367, 0
      %v466 = vsel %vm434, %v368, 0
      %v469 = vsel %vm434, %v369, 0
      %v472 = vsel %vm434, %v370, 0
      %v475 = vsel %vm434, %v371, 0
      %v478 = vsel %vm434, %v372, 0
      %v481 = vsel %vm434, %v373, 0
      %v484 = vsel %vm434, %v374, 0
      %v487 = vsel %vm434, %v375, 0
      %v490 = vsel %vm434, %v376, 0
      %v493 = vsel %vm434, %v377, 0
      %v496 = vsel %vm434, %v378, 0
      %v499 = vsel %vm434, %v379, 0
      %v502 = vsel %vm434, %v380, 0
      %v505 = vsel %vm434, %v381, 0
      %v508 = vsel %vm434, %v382, 0
      %v511 = vsel %vm434, %v383, 0
      %v514 = vsel %vm434, %v384, 0
      %v517 = vsel %vm434, %v385, 0
      %v520 = vsel %vm434, %v386, 0
      %v523 = vsel %vm434, %v387, 0
      %v526 = vsel %vm434, %v388, 0
      %v529 = vsel %vm434, %v389, 0
      %v532 = vsel %vm434, %v390, 0
      %v535 = vsel %vm434, %v391, 0
      %v538 = vsel %vm434, %v392, 0
      %v541 = vsel %vm434, %v393, 0
      %v544 = vsel %vm434, %v394, 0
      %v547 = vsel %vm434, %v395, 0
      %v550 = vsel %vm434, %v396, 0
      %v553 = vsel %vm434, %v397, 0
      %v556 = vsel %vm434, %v398, 0
      %v559 = vsel %vm434, %v399, 0
      %v562 = vsel %vm434, %v400, 0
      %v565 = vsel %vm434, %v401, 0
      %v568 = vsel %vm434, %v402, 0
      %v571 = vsel %vm434, %v403, 0
      %v574 = vsel %vm434, %v404, 0
      %v577 = vsel %vm434, %v405, 0
      %v580 = vsel %vm434, %v406, 0
      %v583 = vsel %vm434, %v407, 0
      %v586 = vsel %vm434, %v408, 0
      %v589 = vsel %vm434, %v409, 0
      %v592 = vsel %vm434, %v410, 0
      %v595 = vsel %vm434, %v411, 0
      %v598 = vsel %vm434, %v412, 0
      %v601 = vsel %vm434, %v413, 0
      %v604 = vsel %vm434, %v414, 0
      %v607 = vsel %vm434, %v415, 0
      %v610 = vsel %vm434, %v416, 0
      %v613 = vsel %vm434, %v417, 0
      %v616 = vsel %vm434, %v418, 0
      %v619 = vsel %vm434, %v419, 0
      %v622 = vsel %vm434, %v420, 0
      %v625 = vsel %vm434, %v421, 0
      %v628 = vsel %vm434, %v422, 0
      %v631 = vsel %vm434, %v423, 0
      %v634 = vsel %vm434, %v424, 0
      %v637 = vsel %vm434, %v425, 0
      %v640 = vsel %vm434, %v426, 0
      %v643 = vsel %vm434, %v427, 0
      %v646 = vsel %vm434, %v428, 0
      %v649 = vsel %vm434, %v429, 0
      %vm651 = vcmask 1040384
      %v653 = vsel %vm651, %v433, 0
      %655 = vmatprep.subr.mxu0 0.0
      %656 = vmatpush1.msra.mxu0 %v430
      %657 = vmatprep.subr.mxu0 0.0
      %658 = vmatpush1.msra.mxu0 %v431
      %659 = vmatprep.subr.mxu0 0.0
      %660 = vmatpush1.msra.mxu0 %v432
      %661 = vmatprep.subr.mxu0 0.0
      %662 = vmatpush1.msra.mxu0 %v653
      %663 = vmatprep.subr.mxu0 0.0
      %664 = vmatpush1.msra.mxu0 0.0
      %665 = vmatprep.subr.mxu0 0.0
      %666 = vmatpush1.msra.mxu0 0.0
      %667 = vmatprep.subr.mxu0 0.0
      %668 = vmatpush1.msra.mxu0 0.0
      %669 = vmatprep.subr.mxu0 0.0
      %670 = vmatpush1.msra.mxu0 0.0
      %671 = vmatprep.subr.mxu0 0.0
      %672 = vmatpush1.msra.mxu0 0.0
      %673 = vmatprep.subr.mxu0 0.0
      %674 = vmatpush1.msra.mxu0 0.0
      %675 = vmatprep.subr.mxu0 0.0
      %676 = vmatpush1.msra.mxu0 0.0
      %677 = vmatprep.subr.mxu0 0.0
      %678 = vmatpush1.msra.mxu0 0.0
      %679 = vmatprep.subr.mxu0 0.0
      %680 = vmatpush1.msra.mxu0 0.0
      %681 = vmatprep.subr.mxu0 0.0
      %682 = vmatpush1.msra.mxu0 0.0
      %683 = vmatprep.subr.mxu0 0.0
      %684 = vmatpush1.msra.mxu0 0.0
      %685 = vmatprep.subr.mxu0 0.0
      %686 = vmatpush1.msra.mxu0 0.0
      %687 = vmatprep.subr.mxu0 0.0
      %688 = vmatpush1.msra.mxu0 0.0
      %689 = vmatprep.subr.mxu0 0.0
      %690 = vmatpush1.msra.mxu0 0.0
      %691 = vmatprep.subr.mxu0 0.0
      %692 = vmatpush1.msra.mxu0 0.0
      %693 = vmatprep.subr.mxu0 0.0
      %694 = vmatpush1.msra.mxu0 0.0
      %695 = vmatprep.subr.mxu0 0.0
      %696 = vmatpush1.msra.mxu0 0.0
      %697 = vmatprep.subr.mxu0 0.0
      %698 = vmatpush1.msra.mxu0 0.0
      %699 = vmatprep.subr.mxu0 0.0
      %700 = vmatpush1.msra.mxu0 0.0
      %701 = vmatprep.subr.mxu0 0.0
      %702 = vmatpush1.msra.mxu0 0.0
      %703 = vmatprep.subr.mxu0 0.0
      %704 = vmatpush1.msra.mxu0 0.0
      %705 = vmatprep.subr.mxu0 0.0
      %706 = vmatpush1.msra.mxu0 0.0
      %707 = vmatprep.subr.mxu0 0.0
      %708 = vmatpush1.msra.mxu0 0.0
      %709 = vmatprep.subr.mxu0 0.0
      %710 = vmatpush1.msra.mxu0 0.0
      %711 = vmatprep.subr.mxu0 0.0
      %712 = vmatpush1.msra.mxu0 0.0
      %713 = vmatprep.subr.mxu0 0.0
      %714 = vmatpush1.msra.mxu0 0.0
      %715 = vmatprep.subr.mxu0 0.0
      %716 = vmatpush1.msra.mxu0 0.0
      %717 = vmatprep.subr.mxu0 0.0
      %718 = vmatpush1.msra.mxu0 0.0
      %719 = vmatprep.mubr.f32.mxu0 0.0
      %720 = vmatmul.mubr.f32.gmra.mrb[0].mxu0 %v436
      %v721 = vpop.f32.mrb[0].mxu0
      %v722 = vadd.f32 0.0, %v721
      %v723 = vpop.f32.mrb[0].mxu0
      %724 = vmatprep.mubr.f32.mxu0 0.0
      %725 = vmatmul.mubr.f32.gmra.mrb[0].mxu0 %v439
      %v726 = vpop.f32.mrb[0].mxu0
      %v727 = vadd.f32 0.0, %v726
      %v728 = vpop.f32.mrb[0].mxu0
      %729 = vmatprep.mubr.f32.mxu0 0.0
      %730 = vmatmul.mubr.f32.gmra.mrb[0].mxu0 %v442
      %v731 = vpop.f32.mrb[0].mxu0
      %v732 = vadd.f32 0.0, %v731
      %v733 = vpop.f32.mrb[0].mxu0
      %734 = vmatprep.mubr.f32.mxu0 0.0
      %735 = vmatmul.mubr.f32.gmra.mrb[0].mxu0 %v445
      %v736 = vpop.f32.mrb[0].mxu0
      %v737 = vadd.f32 0.0, %v736
      %v738 = vpop.f32.mrb[0].mxu0
      %739 = vmatprep.mubr.f32.mxu0 0.0
      %740 = vmatmul.mubr.f32.gmra.mrb[0].mxu0 %v448
      %v741 = vpop.f32.mrb[0].mxu0
      %v742 = vadd.f32 0.0, %v741
      %v743 = vpop.f32.mrb[0].mxu0
      %744 = vmatprep.mubr.f32.mxu0 0.0
      %745 = vmatmul.mubr.f32.gmra.mrb[0].mxu0 %v451
      %v746 = vpop.f32.mrb[0].mxu0
      %v747 = vadd.f32 0.0, %v746
      %v748 = vpop.f32.mrb[0].mxu0
      %749 = vmatprep.mubr.f32.mxu0 0.0
      %750 = vmatmul.mubr.f32.gmra.mrb[0].mxu0 %v454
      %v751 = vpop.f32.mrb[0].mxu0
      %v752 = vadd.f32 0.0, %v751
      %v753 = vpop.f32.mrb[0].mxu0
      %754 = vmatprep.mubr.f32.mxu0 0.0
      %755 = vmatmul.mubr.f32.gmra.mrb[0].mxu0 %v457
      %v756 = vpop.f32.mrb[0].mxu0
      %v757 = vadd.f32 0.0, %v756
      %v758 = vpop.f32.mrb[0].mxu0
      %759 = vmatprep.mubr.f32.mxu0 0.0
      %760 = vmatmul.mubr.f32.gmra.mrb[0].mxu0 %v460
      %v761 = vpop.f32.mrb[0].mxu0
      %v762 = vadd.f32 0.0, %v761
      %v763 = vpop.f32.mrb[0].mxu0
      %764 = vmatprep.mubr.f32.mxu0 0.0
      %765 = vmatmul.mubr.f32.gmra.mrb[0].mxu0 %v463
      %v766 = vpop.f32.mrb[0].mxu0
      %v767 = vadd.f32 0.0, %v766
      %v768 = vpop.f32.mrb[0].mxu0
      %769 = vmatprep.mubr.f32.mxu0 0.0
      %770 = vmatmul.mubr.f32.gmra.mrb[0].mxu0 %v466
      %v771 = vpop.f32.mrb[0].mxu0
      %v772 = vadd.f32 0.0, %v771
      %v773 = vpop.f32.mrb[0].mxu0
      %774 = vmatprep.mubr.f32.mxu0 0.0
      %775 = vmatmul.mubr.f32.gmra.mrb[0].mxu0 %v469
      %v776 = vpop.f32.mrb[0].mxu0
      %v777 = vadd.f32 0.0, %v776
      %v778 = vpop.f32.mrb[0].mxu0
      %779 = vmatprep.mubr.f32.mxu0 0.0
      %780 = vmatmul.mubr.f32.gmra.mrb[0].mxu0 %v472
      %v781 = vpop.f32.mrb[0].mxu0
      %v782 = vadd.f32 0.0, %v781
      %v783 = vpop.f32.mrb[0].mxu0
      %784 = vmatprep.mubr.f32.mxu0 0.0
      %785 = vmatmul.mubr.f32.gmra.mrb[0].mxu0 %v475
      %v786 = vpop.f32.mrb[0].mxu0
      %v787 = vadd.f32 0.0, %v786
      %v788 = vpop.f32.mrb[0].mxu0
      %789 = vmatprep.mubr.f32.mxu0 0.0
      %790 = vmatmul.mubr.f32.gmra.mrb[0].mxu0 %v478
      %v791 = vpop.f32.mrb[0].mxu0
      %v792 = vadd.f32 0.0, %v791
      %v793 = vpop.f32.mrb[0].mxu0
      %794 = vmatprep.mubr.f32.mxu0 0.0
      %795 = vmatmul.mubr.f32.gmra.mrb[0].mxu0 %v481
      %v796 = vpop.f32.mrb[0].mxu0
      %v797 = vadd.f32 0.0, %v796
      %v798 = vpop.f32.mrb[0].mxu0
      %799 = vmatprep.mubr.f32.mxu0 0.0
      %800 = vmatmul.mubr.f32.gmra.mrb[0].mxu0 %v484
      %v801 = vpop.f32.mrb[0].mxu0
      %v802 = vadd.f32 0.0, %v801
      %v803 = vpop.f32.mrb[0].mxu0
      %804 = vmatprep.mubr.f32.mxu0 0.0
      %805 = vmatmul.mubr.f32.gmra.mrb[0].mxu0 %v487
      %v806 = vpop.f32.mrb[0].mxu0
      %v807 = vadd.f32 0.0, %v806
      %v808 = vpop.f32.mrb[0].mxu0
      %809 = vmatprep.mubr.f32.mxu0 0.0
      %810 = vmatmul.mubr.f32.gmra.mrb[0].mxu0 %v490
      %v811 = vpop.f32.mrb[0].mxu0
      %v812 = vadd.f32 0.0, %v811
      %v813 = vpop.f32.mrb[0].mxu0
      %814 = vmatprep.mubr.f32.mxu0 0.0
      %815 = vmatmul.mubr.f32.gmra.mrb[0].mxu0 %v493
      %v816 = vpop.f32.mrb[0].mxu0
      %v817 = vadd.f32 0.0, %v816
      %v818 = vpop.f32.mrb[0].mxu0
      %819 = vmatprep.mubr.f32.mxu0 0.0
      %820 = vmatmul.mubr.f32.gmra.mrb[0].mxu0 %v496
      %v821 = vpop.f32.mrb[0].mxu0
      %v822 = vadd.f32 0.0, %v821
      %v823 = vpop.f32.mrb[0].mxu0
      %824 = vmatprep.mubr.f32.mxu0 0.0
      %825 = vmatmul.mubr.f32.gmra.mrb[0].mxu0 %v499
      %v826 = vpop.f32.mrb[0].mxu0
      %v827 = vadd.f32 0.0, %v826
      %v828 = vpop.f32.mrb[0].mxu0
      %829 = vmatprep.mubr.f32.mxu0 0.0
      %830 = vmatmul.mubr.f32.gmra.mrb[0].mxu0 %v502
      %v831 = vpop.f32.mrb[0].mxu0
      %v832 = vadd.f32 0.0, %v831
      %v833 = vpop.f32.mrb[0].mxu0
      %834 = vmatprep.mubr.f32.mxu0 0.0
      %835 = vmatmul.mubr.f32.gmra.mrb[0].mxu0 %v505
      %v836 = vpop.f32.mrb[0].mxu0
      %v837 = vadd.f32 0.0, %v836
      %v838 = vpop.f32.mrb[0].mxu0
      %839 = vmatprep.mubr.f32.mxu0 0.0
      %840 = vmatmul.mubr.f32.gmra.mrb[0].mxu0 %v508
      %v841 = vpop.f32.mrb[0].mxu0
      %v842 = vadd.f32 0.0, %v841
      %v843 = vpop.f32.mrb[0].mxu0
      %844 = vmatprep.mubr.f32.mxu0 0.0
      %845 = vmatmul.mubr.f32.gmra.mrb[0].mxu0 %v511
      %v846 = vpop.f32.mrb[0].mxu0
      %v847 = vadd.f32 0.0, %v846
      %v848 = vpop.f32.mrb[0].mxu0
      %849 = vmatprep.mubr.f32.mxu0 0.0
      %850 = vmatmul.mubr.f32.gmra.mrb[0].mxu0 %v514
      %v851 = vpop.f32.mrb[0].mxu0
      %v852 = vadd.f32 0.0, %v851
      %v853 = vpop.f32.mrb[0].mxu0
      %854 = vmatprep.mubr.f32.mxu0 0.0
      %855 = vmatmul.mubr.f32.gmra.mrb[0].mxu0 %v517
      %v856 = vpop.f32.mrb[0].mxu0
      %v857 = vadd.f32 0.0, %v856
      %v858 = vpop.f32.mrb[0].mxu0
      %859 = vmatprep.mubr.f32.mxu0 0.0
      %860 = vmatmul.mubr.f32.gmra.mrb[0].mxu0 %v520
      %v861 = vpop.f32.mrb[0].mxu0
      %v862 = vadd.f32 0.0, %v861
      %v863 = vpop.f32.mrb[0].mxu0
      %864 = vmatprep.mubr.f32.mxu0 0.0
      %865 = vmatmul.mubr.f32.gmra.mrb[0].mxu0 %v523
      %v866 = vpop.f32.mrb[0].mxu0
      %v867 = vadd.f32 0.0, %v866
      %v868 = vpop.f32.mrb[0].mxu0
      %869 = vmatprep.mubr.f32.mxu0 0.0
      %870 = vmatmul.mubr.f32.gmra.mrb[0].mxu0 %v526
      %v871 = vpop.f32.mrb[0].mxu0
      %v872 = vadd.f32 0.0, %v871
      %v873 = vpop.f32.mrb[0].mxu0
      %874 = vmatprep.mubr.f32.mxu0 0.0
      %875 = vmatmul.mubr.f32.gmra.mrb[0].mxu0 %v529
      %v876 = vpop.f32.mrb[0].mxu0
      %v877 = vadd.f32 0.0, %v876
      %v878 = vpop.f32.mrb[0].mxu0
      %879 = vmatprep.mubr.f32.mxu0 0.0
      %880 = vmatmul.mubr.f32.gmra.mrb[0].mxu0 %v532
      %v881 = vpop.f32.mrb[0].mxu0
      %v882 = vadd.f32 0.0, %v881
      %v883 = vpop.f32.mrb[0].mxu0
      %884 = vmatprep.mubr.f32.mxu0 0.0
      %885 = vmatmul.mubr.f32.gmra.mrb[0].mxu0 %v535
      %v886 = vpop.f32.mrb[0].mxu0
      %v887 = vadd.f32 0.0, %v886
      %v888 = vpop.f32.mrb[0].mxu0
      %889 = vmatprep.mubr.f32.mxu0 0.0
      %890 = vmatmul.mubr.f32.gmra.mrb[0].mxu0 %v538
      %v891 = vpop.f32.mrb[0].mxu0
      %v892 = vadd.f32 0.0, %v891
      %v893 = vpop.f32.mrb[0].mxu0
      %894 = vmatprep.mubr.f32.mxu0 0.0
      %895 = vmatmul.mubr.f32.gmra.mrb[0].mxu0 %v541
      %v896 = vpop.f32.mrb[0].mxu0
      %v897 = vadd.f32 0.0, %v896
      %v898 = vpop.f32.mrb[0].mxu0
      %899 = vmatprep.mubr.f32.mxu0 0.0
      %900 = vmatmul.mubr.f32.gmra.mrb[0].mxu0 %v544
      %v901 = vpop.f32.mrb[0].mxu0
      %v902 = vadd.f32 0.0, %v901
      %v903 = vpop.f32.mrb[0].mxu0
      %904 = vmatprep.mubr.f32.mxu0 0.0
      %905 = vmatmul.mubr.f32.gmra.mrb[0].mxu0 %v547
      %v906 = vpop.f32.mrb[0].mxu0
      %v907 = vadd.f32 0.0, %v906
      %v908 = vpop.f32.mrb[0].mxu0
      %909 = vmatprep.mubr.f32.mxu0 0.0
      %910 = vmatmul.mubr.f32.gmra.mrb[0].mxu0 %v550
      %v911 = vpop.f32.mrb[0].mxu0
      %v912 = vadd.f32 0.0, %v911
      %v913 = vpop.f32.mrb[0].mxu0
      %914 = vmatprep.mubr.f32.mxu0 0.0
      %915 = vmatmul.mubr.f32.gmra.mrb[0].mxu0 %v553
      %v916 = vpop.f32.mrb[0].mxu0
      %v917 = vadd.f32 0.0, %v916
      %v918 = vpop.f32.mrb[0].mxu0
      %919 = vmatprep.mubr.f32.mxu0 0.0
      %920 = vmatmul.mubr.f32.gmra.mrb[0].mxu0 %v556
      %v921 = vpop.f32.mrb[0].mxu0
      %v922 = vadd.f32 0.0, %v921
      %v923 = vpop.f32.mrb[0].mxu0
      %924 = vmatprep.mubr.f32.mxu0 0.0
      %925 = vmatmul.mubr.f32.gmra.mrb[0].mxu0 %v559
      %v926 = vpop.f32.mrb[0].mxu0
      %v927 = vadd.f32 0.0, %v926
      %v928 = vpop.f32.mrb[0].mxu0
      %929 = vmatprep.mubr.f32.mxu0 0.0
      %930 = vmatmul.mubr.f32.gmra.mrb[0].mxu0 %v562
      %v931 = vpop.f32.mrb[0].mxu0
      %v932 = vadd.f32 0.0, %v931
      %v933 = vpop.f32.mrb[0].mxu0
      %934 = vmatprep.mubr.f32.mxu0 0.0
      %935 = vmatmul.mubr.f32.gmra.mrb[0].mxu0 %v565
      %v936 = vpop.f32.mrb[0].mxu0
      %v937 = vadd.f32 0.0, %v936
      %v938 = vpop.f32.mrb[0].mxu0
      %939 = vmatprep.mubr.f32.mxu0 0.0
      %940 = vmatmul.mubr.f32.gmra.mrb[0].mxu0 %v568
      %v941 = vpop.f32.mrb[0].mxu0
      %v942 = vadd.f32 0.0, %v941
      %v943 = vpop.f32.mrb[0].mxu0
      %944 = vmatprep.mubr.f32.mxu0 0.0
      %945 = vmatmul.mubr.f32.gmra.mrb[0].mxu0 %v571
      %v946 = vpop.f32.mrb[0].mxu0
      %v947 = vadd.f32 0.0, %v946
      %v948 = vpop.f32.mrb[0].mxu0
      %949 = vmatprep.mubr.f32.mxu0 0.0
      %950 = vmatmul.mubr.f32.gmra.mrb[0].mxu0 %v574
      %v951 = vpop.f32.mrb[0].mxu0
      %v952 = vadd.f32 0.0, %v951
      %v953 = vpop.f32.mrb[0].mxu0
      %954 = vmatprep.mubr.f32.mxu0 0.0
      %955 = vmatmul.mubr.f32.gmra.mrb[0].mxu0 %v577
      %v956 = vpop.f32.mrb[0].mxu0
      %v957 = vadd.f32 0.0, %v956
      %v958 = vpop.f32.mrb[0].mxu0
      %959 = vmatprep.mubr.f32.mxu0 0.0
      %960 = vmatmul.mubr.f32.gmra.mrb[0].mxu0 %v580
      %v961 = vpop.f32.mrb[0].mxu0
      %v962 = vadd.f32 0.0, %v961
      %v963 = vpop.f32.mrb[0].mxu0
      %964 = vmatprep.mubr.f32.mxu0 0.0
      %965 = vmatmul.mubr.f32.gmra.mrb[0].mxu0 %v583
      %v966 = vpop.f32.mrb[0].mxu0
      %v967 = vadd.f32 0.0, %v966
      %v968 = vpop.f32.mrb[0].mxu0
      %969 = vmatprep.mubr.f32.mxu0 0.0
      %970 = vmatmul.mubr.f32.gmra.mrb[0].mxu0 %v586
      %v971 = vpop.f32.mrb[0].mxu0
      %v972 = vadd.f32 0.0, %v971
      %v973 = vpop.f32.mrb[0].mxu0
      %974 = vmatprep.mubr.f32.mxu0 0.0
      %975 = vmatmul.mubr.f32.gmra.mrb[0].mxu0 %v589
      %v976 = vpop.f32.mrb[0].mxu0
      %v977 = vadd.f32 0.0, %v976
      %v978 = vpop.f32.mrb[0].mxu0
      %979 = vmatprep.mubr.f32.mxu0 0.0
      %980 = vmatmul.mubr.f32.gmra.mrb[0].mxu0 %v592
      %v981 = vpop.f32.mrb[0].mxu0
      %v982 = vadd.f32 0.0, %v981
      %v983 = vpop.f32.mrb[0].mxu0
      %984 = vmatprep.mubr.f32.mxu0 0.0
      %985 = vmatmul.mubr.f32.gmra.mrb[0].mxu0 %v595
      %v986 = vpop.f32.mrb[0].mxu0
      %v987 = vadd.f32 0.0, %v986
      %v988 = vpop.f32.mrb[0].mxu0
      %989 = vmatprep.mubr.f32.mxu0 0.0
      %990 = vmatmul.mubr.f32.gmra.mrb[0].mxu0 %v598
      %v991 = vpop.f32.mrb[0].mxu0
      %v992 = vadd.f32 0.0, %v991
      %v993 = vpop.f32.mrb[0].mxu0
      %994 = vmatprep.mubr.f32.mxu0 0.0
      %995 = vmatmul.mubr.f32.gmra.mrb[0].mxu0 %v601
      %v996 = vpop.f32.mrb[0].mxu0
      %v997 = vadd.f32 0.0, %v996
      %v998 = vpop.f32.mrb[0].mxu0
      %999 = vmatprep.mubr.f32.mxu0 0.0
      %1000 = vmatmul.mubr.f32.gmra.mrb[0].mxu0 %v604
      %v1001 = vpop.f32.mrb[0].mxu0
      %v1002 = vadd.f32 0.0, %v1001
      %v1003 = vpop.f32.mrb[0].mxu0
      %1004 = vmatprep.mubr.f32.mxu0 0.0
      %1005 = vmatmul.mubr.f32.gmra.mrb[0].mxu0 %v607
      %v1006 = vpop.f32.mrb[0].mxu0
      %v1007 = vadd.f32 0.0, %v1006
      %v1008 = vpop.f32.mrb[0].mxu0
      %1009 = vmatprep.mubr.f32.mxu0 0.0
      %1010 = vmatmul.mubr.f32.gmra.mrb[0].mxu0 %v610
      %v1011 = vpop.f32.mrb[0].mxu0
      %v1012 = vadd.f32 0.0, %v1011
      %v1013 = vpop.f32.mrb[0].mxu0
      %1014 = vmatprep.mubr.f32.mxu0 0.0
      %1015 = vmatmul.mubr.f32.gmra.mrb[0].mxu0 %v613
      %v1016 = vpop.f32.mrb[0].mxu0
      %v1017 = vadd.f32 0.0, %v1016
      %v1018 = vpop.f32.mrb[0].mxu0
      %1019 = vmatprep.mubr.f32.mxu0 0.0
      %1020 = vmatmul.mubr.f32.gmra.mrb[0].mxu0 %v616
      %v1021 = vpop.f32.mrb[0].mxu0
      %v1022 = vadd.f32 0.0, %v1021
      %v1023 = vpop.f32.mrb[0].mxu0
      %1024 = vmatprep.mubr.f32.mxu0 0.0
      %1025 = vmatmul.mubr.f32.gmra.mrb[0].mxu0 %v619
      %v1026 = vpop.f32.mrb[0].mxu0
      %v1027 = vadd.f32 0.0, %v1026
      %v1028 = vpop.f32.mrb[0].mxu0
      %1029 = vmatprep.mubr.f32.mxu0 0.0
      %1030 = vmatmul.mubr.f32.gmra.mrb[0].mxu0 %v622
      %v1031 = vpop.f32.mrb[0].mxu0
      %v1032 = vadd.f32 0.0, %v1031
      %v1033 = vpop.f32.mrb[0].mxu0
      %1034 = vmatprep.mubr.f32.mxu0 0.0
      %1035 = vmatmul.mubr.f32.gmra.mrb[0].mxu0 %v625
      %v1036 = vpop.f32.mrb[0].mxu0
      %v1037 = vadd.f32 0.0, %v1036
      %v1038 = vpop.f32.mrb[0].mxu0
      %1039 = vmatprep.mubr.f32.mxu0 0.0
      %1040 = vmatmul.mubr.f32.gmra.mrb[0].mxu0 %v628
      %v1041 = vpop.f32.mrb[0].mxu0
      %v1042 = vadd.f32 0.0, %v1041
      %v1043 = vpop.f32.mrb[0].mxu0
      %1044 = vmatprep.mubr.f32.mxu0 0.0
      %1045 = vmatmul.mubr.f32.gmra.mrb[0].mxu0 %v631
      %v1046 = vpop.f32.mrb[0].mxu0
      %v1047 = vadd.f32 0.0, %v1046
      %v1048 = vpop.f32.mrb[0].mxu0
      %1049 = vmatprep.mubr.f32.mxu0 0.0
      %1050 = vmatmul.mubr.f32.gmra.mrb[0].mxu0 %v634
      %v1051 = vpop.f32.mrb[0].mxu0
      %v1052 = vadd.f32 0.0, %v1051
      %v1053 = vpop.f32.mrb[0].mxu0
      %1054 = vmatprep.mubr.f32.mxu0 0.0
      %1055 = vmatmul.mubr.f32.gmra.mrb[0].mxu0 %v637
      %v1056 = vpop.f32.mrb[0].mxu0
      %v1057 = vadd.f32 0.0, %v1056
      %v1058 = vpop.f32.mrb[0].mxu0
      %1059 = vmatprep.mubr.f32.mxu0 0.0
      %1060 = vmatmul.mubr.f32.gmra.mrb[0].mxu0 %v640
      %v1061 = vpop.f32.mrb[0].mxu0
      %v1062 = vadd.f32 0.0, %v1061
      %v1063 = vpop.f32.mrb[0].mxu0
      %1064 = vmatprep.mubr.f32.mxu0 0.0
      %1065 = vmatmul.mubr.f32.gmra.mrb[0].mxu0 %v643
      %v1066 = vpop.f32.mrb[0].mxu0
      %v1067 = vadd.f32 0.0, %v1066
      %v1068 = vpop.f32.mrb[0].mxu0
      %1069 = vmatprep.mubr.f32.mxu0 0.0
      %1070 = vmatmul.mubr.f32.gmra.mrb[0].mxu0 %v646
      %v1071 = vpop.f32.mrb[0].mxu0
      %v1072 = vadd.f32 0.0, %v1071
      %v1073 = vpop.f32.mrb[0].mxu0
      %1074 = vmatprep.mubr.f32.mxu0 0.0
      %1075 = vmatmul.mubr.f32.gmra.mrb[0].mxu0 %v649
      %v1076 = vpop.f32.mrb[0].mxu0
      %v1077 = vadd.f32 0.0, %v1076
      %v1078 = vpop.f32.mrb[0].mxu0
      %1079 = vdwg.mxu0
      %v1080 = vmax.f32 %v722, %v812
      %v1081 = vmax.f32 %v727, %v817
      %v1082 = vmax.f32 %v732, %v822
      %v1083 = vmax.f32 %v737, %v827
      %v1084 = vmax.f32 %v742, %v832
      %v1085 = vmax.f32 %v747, %v837
      %v1086 = vmax.f32 %v752, %v842
      %v1087 = vmax.f32 %v757, %v847
      %v1088 = vmax.f32 %v762, %v852
      %v1089 = vmax.f32 %v767, %v857
      %v1090 = vmax.f32 %v772, %v862
      %v1091 = vmax.f32 %v777, %v867
      %v1092 = vmax.f32 %v782, %v872
      %v1093 = vmax.f32 %v787, %v877
      %v1094 = vmax.f32 %v792, %v882
      %v1095 = vmax.f32 %v797, %v887
      %v1096 = vmax.f32 %v802, %v892
      %v1097 = vmax.f32 %v807, %v897
      %v1098 = vmax.f32 %v902, %v992
      %v1099 = vmax.f32 %v907, %v997
      %v1100 = vmax.f32 %v912, %v1002
      %v1101 = vmax.f32 %v917, %v1007
      %v1102 = vmax.f32 %v922, %v1012
      %v1103 = vmax.f32 %v927, %v1017
      %v1104 = vmax.f32 %v932, %v1022
      %v1105 = vmax.f32 %v937, %v1027
      %v1106 = vmax.f32 %v942, %v1032
      %v1107 = vmax.f32 %v947, %v1037
      %v1108 = vmax.f32 %v952, %v1042
      %v1109 = vmax.f32 %v957, %v1047
      %v1110 = vmax.f32 %v962, %v1052
      %v1111 = vmax.f32 %v967, %v1057
      %v1112 = vmax.f32 %v972, %v1062
      %v1113 = vmax.f32 %v977, %v1067
      %v1114 = vmax.f32 %v982, %v1072
      %v1115 = vmax.f32 %v987, %v1077
      %v1116 = vmax.f32 %v1080, %v1098
      %v1117 = vmax.f32 %v1081, %v1099
      %v1118 = vmax.f32 %v1082, %v1100
      %v1119 = vmax.f32 %v1083, %v1101
      %v1120 = vmax.f32 %v1084, %v1102
      %v1121 = vmax.f32 %v1085, %v1103
      %v1122 = vmax.f32 %v1086, %v1104
      %v1123 = vmax.f32 %v1087, %v1105
      %v1124 = vmax.f32 %v1088, %v1106
      %v1125 = vmax.f32 %v1089, %v1107
      %v1126 = vmax.f32 %v1090, %v1108
      %v1127 = vmax.f32 %v1091, %v1109
      %v1128 = vmax.f32 %v1092, %v1110
      %v1129 = vmax.f32 %v1093, %v1111
      %v1130 = vmax.f32 %v1094, %v1112
      %v1131 = vmax.f32 %v1095, %v1113
      %v1132 = vmax.f32 %v1096, %v1114
      %v1133 = vmax.f32 %v1097, %v1115
      %v1134 = vld [vmem:[%s2] sm:$0x1]
      %v1136 = vlaneseq
      %v1137 = vshrl.u32 %v1136, 7
      %v1138 = vsub.s32 0, %v1137
      %v1139 = vrot.slane %v1134, %v1138
      %v1141 = vadd.f32 %v1116, %v1139
      %v1142 = vadd.f32 %v1117, %v1139
      %v1143 = vadd.f32 %v1118, %v1139
      %v1144 = vadd.f32 %v1119, %v1139
      %v1145 = vadd.f32 %v1120, %v1139
      %v1146 = vadd.f32 %v1121, %v1139
      %v1147 = vadd.f32 %v1122, %v1139
      %v1148 = vadd.f32 %v1123, %v1139
      %v1149 = vadd.f32 %v1124, %v1139
      %v1150 = vadd.f32 %v1125, %v1139
      %v1151 = vadd.f32 %v1126, %v1139
      %v1152 = vadd.f32 %v1127, %v1139
      %v1153 = vadd.f32 %v1128, %v1139
      %v1154 = vadd.f32 %v1129, %v1139
      %v1155 = vadd.f32 %v1130, %v1139
      %v1156 = vadd.f32 %v1131, %v1139
      %v1157 = vadd.f32 %v1132, %v1139
      %v1158 = vadd.f32 %v1133, %v1139
      %v1159 = vmax.f32 %v1141, 0.0
      %v1160 = vmax.f32 %v1142, 0.0
      %v1161 = vmax.f32 %v1143, 0.0
      %v1162 = vmax.f32 %v1144, 0.0
      %v1163 = vmax.f32 %v1145, 0.0
      %v1164 = vmax.f32 %v1146, 0.0
      %v1165 = vmax.f32 %v1147, 0.0
      %v1166 = vmax.f32 %v1148, 0.0
      %v1167 = vmax.f32 %v1149, 0.0
      %v1168 = vmax.f32 %v1150, 0.0
      %v1169 = vmax.f32 %v1151, 0.0
      %v1170 = vmax.f32 %v1152, 0.0
      %v1171 = vmax.f32 %v1153, 0.0
      %v1172 = vmax.f32 %v1154, 0.0
      %v1173 = vmax.f32 %v1155, 0.0
      %v1174 = vmax.f32 %v1156, 0.0
      %v1175 = vmax.f32 %v1157, 0.0
      %v1176 = vmax.f32 %v1158, 0.0
      %v1177 = vld [vmem:[%s3] sm:$0xff]
      %v1178 = vld [vmem:[%s3 + $0x8] sm:$0xff]
      %v1179 = vld [vmem:[%s3 + $0x10] sm:$0xff]
      %v1180 = vld [vmem:[%s3 + $0x18] sm:$0xff]
      %v1181 = vld [vmem:[%s3 + $0x20] sm:$0xff]
      %v1182 = vld [vmem:[%s3 + $0x28] sm:$0xff]
      %v1183 = vld [vmem:[%s3 + $0x30] sm:$0xff]
      %v1184 = vld [vmem:[%s3 + $0x38] sm:$0xff]
      %v1185 = vld [vmem:[%s3 + $0x40] sm:$0xff]
      %v1186 = vld [vmem:[%s3 + $0x48] sm:$0xff]
      %v1187 = vld [vmem:[%s3 + $0x50] sm:$0xff]
      %v1188 = vld [vmem:[%s3 + $0x58] sm:$0xff]
      %v1189 = vld [vmem:[%s3 + $0x60] sm:$0xff]
      %v1190 = vld [vmem:[%s3 + $0x68] sm:$0xff]
      %v1191 = vld [vmem:[%s3 + $0x70] sm:$0xff]
      %v1192 = vld [vmem:[%s3 + $0x78] sm:$0xff]
      %v1193 = vld [vmem:[%s3 + $0x80] sm:$0xff]
      %v1194 = vld [vmem:[%s3 + $0x88] sm:$0xff]
      %v1195 = vld [vmem:[%s3 + $0x90] sm:$0xff]
      %v1196 = vld [vmem:[%s3 + $0x98] sm:$0xff]
      %v1197 = vld [vmem:[%s3 + $0xa0] sm:$0xff]
      %v1198 = vld [vmem:[%s3 + $0xa8] sm:$0xff]
      %v1199 = vld [vmem:[%s3 + $0xb0] sm:$0xff]
      %v1200 = vld [vmem:[%s3 + $0xb8] sm:$0xff]
      %v1201 = vld [vmem:[%s3 + $0xc0] sm:$0xff]
      %v1202 = vld [vmem:[%s3 + $0xc8] sm:$0xff]
      %v1203 = vld [vmem:[%s3 + $0xd0] sm:$0xff]
      %v1204 = vld [vmem:[%s3 + $0xd8] sm:$0xff]
      %v1205 = vld [vmem:[%s3 + $0xe0] sm:$0xff]
      %v1206 = vld [vmem:[%s3 + $0xe8] sm:$0xff]
      %v1207 = vld [vmem:[%s3 + $0xf0] sm:$0xff]
      %v1208 = vld [vmem:[%s3 + $0xf8] sm:$0xff]
      %v1209 = vld [vmem:[%s3 + $0x100] sm:$0xff]
      %v1210 = vld [vmem:[%s3 + $0x108] sm:$0xff]
      %v1211 = vld [vmem:[%s3 + $0x110] sm:$0xff]
      %v1212 = vld [vmem:[%s3 + $0x118] sm:$0xff]
      %v1213 = vld [vmem:[%s3 + $0x120] sm:$0xff]
      %v1214 = vld [vmem:[%s3 + $0x128] sm:$0xff]
      %v1215 = vld [vmem:[%s3 + $0x130] sm:$0xff]
      %v1216 = vld [vmem:[%s3 + $0x138] sm:$0xff]
      %v1217 = vld [vmem:[%s3 + $0x140] sm:$0xff]
      %v1218 = vld [vmem:[%s3 + $0x148] sm:$0xff]
      %v1219 = vld [vmem:[%s3 + $0x150] sm:$0xff]
      %v1220 = vld [vmem:[%s3 + $0x158] sm:$0xff]
      %v1221 = vld [vmem:[%s3 + $0x160] sm:$0xff]
      %v1222 = vld [vmem:[%s3 + $0x168] sm:$0xff]
      %v1223 = vld [vmem:[%s3 + $0x170] sm:$0xff]
      %v1224 = vld [vmem:[%s3 + $0x178] sm:$0xff]
      %v1225 = vld [vmem:[%s3 + $0x180] sm:$0xff]
      %v1226 = vld [vmem:[%s3 + $0x188] sm:$0xff]
      %v1227 = vld [vmem:[%s3 + $0x190] sm:$0xff]
      %v1228 = vld [vmem:[%s3 + $0x198] sm:$0xff]
      %v1229 = vld [vmem:[%s3 + $0x1a0] sm:$0xff]
      %v1230 = vld [vmem:[%s3 + $0x1a8] sm:$0xff]
      %v1231 = vld [vmem:[%s3 + $0x1b0] sm:$0xff]
      %v1232 = vld [vmem:[%s3 + $0x1b8] sm:$0xff]
      %v1233 = vld [vmem:[%s3 + $0x1c0] sm:$0xff]
      %v1234 = vld [vmem:[%s3 + $0x1c8] sm:$0xff]
      %v1235 = vld [vmem:[%s3 + $0x1d0] sm:$0xff]
      %v1236 = vld [vmem:[%s3 + $0x1d8] sm:$0xff]
      %v1237 = vld [vmem:[%s3 + $0x1e0] sm:$0xff]
      %v1238 = vld [vmem:[%s3 + $0x1e8] sm:$0xff]
      %v1239 = vld [vmem:[%s3 + $0x1f0] sm:$0xff]
      %v1240 = vld [vmem:[%s3 + $0x1f8] sm:$0xff]
      %v1241 = vld [vmem:[%s3 + $0x200] sm:$0xff]
      %v1242 = vld [vmem:[%s3 + $0x208] sm:$0xff]
      %v1243 = vld [vmem:[%s3 + $0x210] sm:$0xff]
      %v1244 = vld [vmem:[%s3 + $0x218] sm:$0xff]
      %v1245 = vld [vmem:[%s3 + $0x220] sm:$0xff]
      %v1246 = vld [vmem:[%s3 + $0x228] sm:$0xff]
      %v1247 = vld [vmem:[%s3 + $0x230] sm:$0xff]
      %v1248 = vld [vmem:[%s3 + $0x238] sm:$0xff]
      %v1249 = vld [vmem:[%s3 + $0x240] sm:$0xff]
      %v1250 = vld [vmem:[%s3 + $0x248] sm:$0xff]
      %v1251 = vld [vmem:[%s3 + $0x250] sm:$0xff]
      %v1252 = vld [vmem:[%s3 + $0x258] sm:$0xff]
      %v1253 = vld [vmem:[%s3 + $0x260] sm:$0xff]
      %v1254 = vld [vmem:[%s3 + $0x268] sm:$0xff]
      %v1255 = vld [vmem:[%s3 + $0x270] sm:$0xff]
      %v1256 = vld [vmem:[%s3 + $0x278] sm:$0xff]
      %v1257 = vld [vmem:[%s3 + $0x280] sm:$0xff]
      %v1258 = vld [vmem:[%s3 + $0x288] sm:$0xff]
      %v1259 = vld [vmem:[%s3 + $0x290] sm:$0xff]
      %v1260 = vld [vmem:[%s3 + $0x298] sm:$0xff]
      %v1261 = vld [vmem:[%s3 + $0x2a0] sm:$0xff]
      %v1262 = vld [vmem:[%s3 + $0x2a8] sm:$0xff]
      %v1263 = vld [vmem:[%s3 + $0x2b0] sm:$0xff]
      %v1264 = vld [vmem:[%s3 + $0x2b8] sm:$0xff]
      %v1265 = vld [vmem:[%s3 + $0x2c0] sm:$0xff]
      %v1266 = vld [vmem:[%s3 + $0x2c8] sm:$0xff]
      %v1267 = vld [vmem:[%s3 + $0x2d0] sm:$0xff]
      %v1268 = vld [vmem:[%s3 + $0x2d8] sm:$0xff]
      %v1269 = vld [vmem:[%s3 + $0x2e0] sm:$0xff]
      %v1270 = vld [vmem:[%s3 + $0x2e8] sm:$0xff]
      %v1271 = vld [vmem:[%s3 + $0x2f0] sm:$0xff]
      %v1272 = vld [vmem:[%s3 + $0x2f8] sm:$0xff]
      %v1273 = vld [vmem:[%s3 + $0x300] sm:$0xff]
      %v1274 = vld [vmem:[%s3 + $0x308] sm:$0xff]
      %v1275 = vld [vmem:[%s3 + $0x310] sm:$0xff]
      %v1276 = vld [vmem:[%s3 + $0x318] sm:$0xff]
      %v1277 = vld [vmem:[%s3 + $0x320] sm:$0xff]
      %v1278 = vld [vmem:[%s3 + $0x328] sm:$0xff]
      %v1279 = vld [vmem:[%s3 + $0x330] sm:$0xff]
      %v1280 = vld [vmem:[%s3 + $0x338] sm:$0xff]
      %v1281 = vld [vmem:[%s3 + $0x340] sm:$0xff]
      %v1282 = vld [vmem:[%s3 + $0x348] sm:$0xff]
      %v1283 = vld [vmem:[%s3 + $0x350] sm:$0xff]
      %v1284 = vld [vmem:[%s3 + $0x358] sm:$0xff]
      %v1285 = vld [vmem:[%s3 + $0x360] sm:$0xff]
      %v1286 = vld [vmem:[%s3 + $0x368] sm:$0xff]
      %v1287 = vld [vmem:[%s3 + $0x370] sm:$0xff]
      %v1288 = vld [vmem:[%s3 + $0x378] sm:$0xff]
      %v1289 = vld [vmem:[%s3 + $0x380] sm:$0xff]
      %v1290 = vld [vmem:[%s3 + $0x388] sm:$0xff]
      %v1291 = vld [vmem:[%s3 + $0x390] sm:$0xff]
      %v1292 = vld [vmem:[%s3 + $0x398] sm:$0xff]
      %v1293 = vld [vmem:[%s3 + $0x3a0] sm:$0xff]
      %v1294 = vld [vmem:[%s3 + $0x3a8] sm:$0xff]
      %v1295 = vld [vmem:[%s3 + $0x3b0] sm:$0xff]
      %v1296 = vld [vmem:[%s3 + $0x3b8] sm:$0xff]
      %v1297 = vld [vmem:[%s3 + $0x3c0] sm:$0xff]
      %v1298 = vld [vmem:[%s3 + $0x3c8] sm:$0xff]
      %v1299 = vld [vmem:[%s3 + $0x3d0] sm:$0xff]
      %v1300 = vld [vmem:[%s3 + $0x3d8] sm:$0xff]
      %v1301 = vld [vmem:[%s3 + $0x3e0] sm:$0xff]
      %v1302 = vld [vmem:[%s3 + $0x3e8] sm:$0xff]
      %v1303 = vld [vmem:[%s3 + $0x3f0] sm:$0xff]
      %v1304 = vld [vmem:[%s3 + $0x3f8] sm:$0xff]
      %v1305 = vld [vmem:[%s3 + $0x400] sm:$0xff]
      %v1306 = vld [vmem:[%s3 + $0x408] sm:$0xff]
      %v1307 = vld [vmem:[%s3 + $0x410] sm:$0xff]
      %v1308 = vld [vmem:[%s3 + $0x418] sm:$0xff]
      %v1309 = vld [vmem:[%s3 + $0x420] sm:$0xff]
      %v1310 = vld [vmem:[%s3 + $0x428] sm:$0xff]
      %v1311 = vld [vmem:[%s3 + $0x430] sm:$0xff]
      %v1312 = vld [vmem:[%s3 + $0x438] sm:$0xff]
      %v1313 = vld [vmem:[%s3 + $0x440] sm:$0xff]
      %v1314 = vld [vmem:[%s3 + $0x448] sm:$0xff]
      %v1315 = vld [vmem:[%s3 + $0x450] sm:$0xff]
      %v1316 = vld [vmem:[%s3 + $0x458] sm:$0xff]
      %v1317 = vld [vmem:[%s3 + $0x460] sm:$0xff]
      %v1318 = vld [vmem:[%s3 + $0x468] sm:$0xff]
      %v1319 = vld [vmem:[%s3 + $0x470] sm:$0xff]
      %v1320 = vld [vmem:[%s3 + $0x478] sm:$0xff]
      %v1321 = vld [vmem:[%s3 + $0x480] sm:$0xff]
      %v1322 = vld [vmem:[%s3 + $0x488] sm:$0xff]
      %v1323 = vld [vmem:[%s3 + $0x490] sm:$0xff]
      %v1324 = vld [vmem:[%s3 + $0x498] sm:$0xff]
      %v1325 = vld [vmem:[%s3 + $0x4a0] sm:$0xff]
      %v1326 = vld [vmem:[%s3 + $0x4a8] sm:$0xff]
      %v1327 = vld [vmem:[%s3 + $0x4b0] sm:$0xff]
      %v1328 = vld [vmem:[%s3 + $0x4b8] sm:$0xff]
      %v1329 = vld [vmem:[%s3 + $0x4c0] sm:$0xff]
      %v1330 = vld [vmem:[%s3 + $0x4c8] sm:$0xff]
      %v1331 = vld [vmem:[%s3 + $0x4d0] sm:$0xff]
      %v1332 = vld [vmem:[%s3 + $0x4d8] sm:$0xff]
      %v1333 = vld [vmem:[%s3 + $0x4e0] sm:$0xff]
      %v1334 = vld [vmem:[%s3 + $0x4e8] sm:$0xff]
      %v1335 = vld [vmem:[%s3 + $0x4f0] sm:$0xff]
      %v1336 = vld [vmem:[%s3 + $0x4f8] sm:$0xff]
      %v1337 = vld [vmem:[%s3 + $0x500] sm:$0xff]
      %v1338 = vld [vmem:[%s3 + $0x508] sm:$0xff]
      %v1339 = vld [vmem:[%s3 + $0x510] sm:$0xff]
      %v1340 = vld [vmem:[%s3 + $0x518] sm:$0xff]
      %v1341 = vld [vmem:[%s3 + $0x520] sm:$0xff]
      %v1342 = vld [vmem:[%s3 + $0x528] sm:$0xff]
      %v1343 = vld [vmem:[%s3 + $0x530] sm:$0xff]
      %v1344 = vld [vmem:[%s3 + $0x538] sm:$0xff]
      %v1345 = vld [vmem:[%s3 + $0x540] sm:$0xff]
      %v1346 = vld [vmem:[%s3 + $0x548] sm:$0xff]
      %v1347 = vld [vmem:[%s3 + $0x550] sm:$0xff]
      %v1348 = vld [vmem:[%s3 + $0x558] sm:$0xff]
      %v1349 = vld [vmem:[%s3 + $0x560] sm:$0xff]
      %v1350 = vld [vmem:[%s3 + $0x568] sm:$0xff]
      %v1351 = vld [vmem:[%s3 + $0x570] sm:$0xff]
      %v1352 = vld [vmem:[%s3 + $0x578] sm:$0xff]
      %v1353 = vld [vmem:[%s3 + $0x580] sm:$0xff]
      %v1354 = vld [vmem:[%s3 + $0x588] sm:$0xff]
      %v1355 = vld [vmem:[%s3 + $0x590] sm:$0xff]
      %v1356 = vld [vmem:[%s3 + $0x598] sm:$0xff]
      %v1357 = vld [vmem:[%s3 + $0x5a0] sm:$0xff]
      %v1358 = vld [vmem:[%s3 + $0x5a8] sm:$0xff]
      %v1359 = vld [vmem:[%s3 + $0x5b0] sm:$0xff]
      %v1360 = vld [vmem:[%s3 + $0x5b8] sm:$0xff]
      %v1361 = vld [vmem:[%s3 + $0x5c0] sm:$0xff]
      %v1362 = vld [vmem:[%s3 + $0x5c8] sm:$0xff]
      %v1363 = vld [vmem:[%s3 + $0x5d0] sm:$0xff]
      %v1364 = vld [vmem:[%s3 + $0x5d8] sm:$0xff]
      %v1365 = vld [vmem:[%s3 + $0x5e0] sm:$0xff]
      %v1366 = vld [vmem:[%s3 + $0x5e8] sm:$0xff]
      %v1367 = vld [vmem:[%s3 + $0x5f0] sm:$0xff]
      %v1368 = vld [vmem:[%s3 + $0x5f8] sm:$0xff]
      %v1369 = vld [vmem:[%s3 + $0x600] sm:$0xff]
      %v1370 = vld [vmem:[%s3 + $0x608] sm:$0xff]
      %v1371 = vld [vmem:[%s3 + $0x610] sm:$0xff]
      %v1372 = vld [vmem:[%s3 + $0x618] sm:$0xff]
      %v1373 = vld [vmem:[%s3 + $0x620] sm:$0xff]
      %v1374 = vld [vmem:[%s3 + $0x628] sm:$0xff]
      %v1375 = vld [vmem:[%s3 + $0x630] sm:$0xff]
      %v1376 = vld [vmem:[%s3 + $0x638] sm:$0xff]
      %v1377 = vld [vmem:[%s3 + $0x640] sm:$0xff]
      %v1378 = vld [vmem:[%s3 + $0x648] sm:$0xff]
      %v1379 = vld [vmem:[%s3 + $0x650] sm:$0xff]
      %v1380 = vld [vmem:[%s3 + $0x658] sm:$0xff]
      %v1381 = vld [vmem:[%s3 + $0x660] sm:$0xff]
      %v1382 = vld [vmem:[%s3 + $0x668] sm:$0xff]
      %v1383 = vld [vmem:[%s3 + $0x670] sm:$0xff]
      %v1384 = vld [vmem:[%s3 + $0x678] sm:$0xff]
      %v1385 = vld [vmem:[%s3 + $0x680] sm:$0xff]
      %v1386 = vld [vmem:[%s3 + $0x688] sm:$0xff]
      %v1387 = vld [vmem:[%s3 + $0x690] sm:$0xff]
      %v1388 = vld [vmem:[%s3 + $0x698] sm:$0xff]
      %v1389 = vld [vmem:[%s3 + $0x6a0] sm:$0xff]
      %v1390 = vld [vmem:[%s3 + $0x6a8] sm:$0xff]
      %v1391 = vld [vmem:[%s3 + $0x6b0] sm:$0xff]
      %v1392 = vld [vmem:[%s3 + $0x6b8] sm:$0xff]
      %v1393 = vld [vmem:[%s3 + $0x6c0] sm:$0xff]
      %v1394 = vld [vmem:[%s3 + $0x6c8] sm:$0xff]
      %v1395 = vld [vmem:[%s3 + $0x6d0] sm:$0xff]
      %v1396 = vld [vmem:[%s3 + $0x6d8] sm:$0xff]
      %v1397 = vld [vmem:[%s3 + $0x6e0] sm:$0xff]
      %v1398 = vld [vmem:[%s3 + $0x6e8] sm:$0xff]
      %v1399 = vld [vmem:[%s3 + $0x6f0] sm:$0xff]
      %v1400 = vld [vmem:[%s3 + $0x6f8] sm:$0xff]
      %v1401 = vld [vmem:[%s3 + $0x700] sm:$0xff]
      %v1402 = vld [vmem:[%s3 + $0x708] sm:$0xff]
      %v1403 = vld [vmem:[%s3 + $0x710] sm:$0xff]
      %v1404 = vld [vmem:[%s3 + $0x718] sm:$0xff]
      %v1405 = vld [vmem:[%s3 + $0x720] sm:$0xff]
      %v1406 = vld [vmem:[%s3 + $0x728] sm:$0xff]
      %v1407 = vld [vmem:[%s3 + $0x730] sm:$0xff]
      %v1408 = vld [vmem:[%s3 + $0x738] sm:$0xff]
      %v1409 = vld [vmem:[%s3 + $0x740] sm:$0xff]
      %v1410 = vld [vmem:[%s3 + $0x748] sm:$0xff]
      %v1411 = vld [vmem:[%s3 + $0x750] sm:$0xff]
      %v1412 = vld [vmem:[%s3 + $0x758] sm:$0xff]
      %v1413 = vld [vmem:[%s3 + $0x760] sm:$0xff]
      %v1414 = vld [vmem:[%s3 + $0x768] sm:$0xff]
      %v1415 = vld [vmem:[%s3 + $0x770] sm:$0xff]
      %v1416 = vld [vmem:[%s3 + $0x778] sm:$0xff]
      %v1417 = vld [vmem:[%s3 + $0x780] sm:$0xff]
      %v1418 = vld [vmem:[%s3 + $0x788] sm:$0xff]
      %v1419 = vld [vmem:[%s3 + $0x790] sm:$0xff]
      %v1420 = vld [vmem:[%s3 + $0x798] sm:$0xff]
      %v1421 = vld [vmem:[%s3 + $0x7a0] sm:$0xff]
      %v1422 = vld [vmem:[%s3 + $0x7a8] sm:$0xff]
      %v1423 = vld [vmem:[%s3 + $0x7b0] sm:$0xff]
      %v1424 = vld [vmem:[%s3 + $0x7b8] sm:$0xff]
      %v1425 = vld [vmem:[%s3 + $0x7c0] sm:$0xff]
      %v1426 = vld [vmem:[%s3 + $0x7c8] sm:$0xff]
      %v1427 = vld [vmem:[%s3 + $0x7d0] sm:$0xff]
      %v1428 = vld [vmem:[%s3 + $0x7d8] sm:$0xff]
      %v1429 = vld [vmem:[%s3 + $0x7e0] sm:$0xff]
      %v1430 = vld [vmem:[%s3 + $0x7e8] sm:$0xff]
      %v1431 = vld [vmem:[%s3 + $0x7f0] sm:$0xff]
      %v1432 = vld [vmem:[%s3 + $0x7f8] sm:$0xff]
      %v1433 = vld [vmem:[%s3 + $0x800] sm:$0xff]
      %v1434 = vld [vmem:[%s3 + $0x808] sm:$0xff]
      %v1435 = vld [vmem:[%s3 + $0x810] sm:$0xff]
      %v1436 = vld [vmem:[%s3 + $0x818] sm:$0xff]
      %v1437 = vld [vmem:[%s3 + $0x820] sm:$0xff]
      %v1438 = vld [vmem:[%s3 + $0x828] sm:$0xff]
      %v1439 = vld [vmem:[%s3 + $0x830] sm:$0xff]
      %v1440 = vld [vmem:[%s3 + $0x838] sm:$0xff]
      %v1441 = vld [vmem:[%s3 + $0x840] sm:$0xff]
      %v1442 = vld [vmem:[%s3 + $0x848] sm:$0xff]
      %v1443 = vld [vmem:[%s3 + $0x850] sm:$0xff]
      %v1444 = vld [vmem:[%s3 + $0x858] sm:$0xff]
      %v1445 = vld [vmem:[%s3 + $0x860] sm:$0xff]
      %v1446 = vld [vmem:[%s3 + $0x868] sm:$0xff]
      %v1447 = vld [vmem:[%s3 + $0x870] sm:$0xff]
      %v1448 = vld [vmem:[%s3 + $0x878] sm:$0xff]
      %v1449 = vld [vmem:[%s3 + $0x880] sm:$0xff]
      %v1450 = vld [vmem:[%s3 + $0x888] sm:$0xff]
      %v1451 = vld [vmem:[%s3 + $0x890] sm:$0xff]
      %v1452 = vld [vmem:[%s3 + $0x898] sm:$0xff]
      %v1453 = vld [vmem:[%s3 + $0x8a0] sm:$0xff]
      %v1454 = vld [vmem:[%s3 + $0x8a8] sm:$0xff]
      %v1455 = vld [vmem:[%s3 + $0x8b0] sm:$0xff]
      %v1456 = vld [vmem:[%s3 + $0x8b8] sm:$0xff]
      %v1457 = vld [vmem:[%s3 + $0x8c0] sm:$0xff]
      %v1458 = vld [vmem:[%s3 + $0x8c8] sm:$0xff]
      %v1459 = vld [vmem:[%s3 + $0x8d0] sm:$0xff]
      %v1460 = vld [vmem:[%s3 + $0x8d8] sm:$0xff]
      %v1461 = vld [vmem:[%s3 + $0x8e0] sm:$0xff]
      %v1462 = vld [vmem:[%s3 + $0x8e8] sm:$0xff]
      %v1463 = vld [vmem:[%s3 + $0x8f0] sm:$0xff]
      %v1464 = vld [vmem:[%s3 + $0x8f8] sm:$0xff]
      %v1465 = vld [vmem:[%s3 + $0x900] sm:$0xff]
      %v1466 = vld [vmem:[%s3 + $0x908] sm:$0xff]
      %v1467 = vld [vmem:[%s3 + $0x910] sm:$0xff]
      %v1468 = vld [vmem:[%s3 + $0x918] sm:$0xff]
      %v1469 = vld [vmem:[%s3 + $0x920] sm:$0xff]
      %v1470 = vld [vmem:[%s3 + $0x928] sm:$0xff]
      %v1471 = vld [vmem:[%s3 + $0x930] sm:$0xff]
      %v1472 = vld [vmem:[%s3 + $0x938] sm:$0xff]
      %v1473 = vld [vmem:[%s3 + $0x940] sm:$0xff]
      %v1474 = vld [vmem:[%s3 + $0x948] sm:$0xff]
      %v1475 = vld [vmem:[%s3 + $0x950] sm:$0xff]
      %v1476 = vld [vmem:[%s3 + $0x958] sm:$0xff]
      %v1477 = vld [vmem:[%s3 + $0x960] sm:$0xff]
      %v1478 = vld [vmem:[%s3 + $0x968] sm:$0xff]
      %v1479 = vld [vmem:[%s3 + $0x970] sm:$0xff]
      %v1480 = vld [vmem:[%s3 + $0x978] sm:$0xff]
      %v1481 = vld [vmem:[%s3 + $0x980] sm:$0xff]
      %v1482 = vld [vmem:[%s3 + $0x988] sm:$0xff]
      %v1483 = vld [vmem:[%s3 + $0x990] sm:$0xff]
      %v1484 = vld [vmem:[%s3 + $0x998] sm:$0xff]
      %v1485 = vld [vmem:[%s3 + $0x9a0] sm:$0xff]
      %v1486 = vld [vmem:[%s3 + $0x9a8] sm:$0xff]
      %v1487 = vld [vmem:[%s3 + $0x9b0] sm:$0xff]
      %v1488 = vld [vmem:[%s3 + $0x9b8] sm:$0xff]
      %v1489 = vld [vmem:[%s3 + $0x9c0] sm:$0xff]
      %v1490 = vld [vmem:[%s3 + $0x9c8] sm:$0xff]
      %v1491 = vld [vmem:[%s3 + $0x9d0] sm:$0xff]
      %v1492 = vld [vmem:[%s3 + $0x9d8] sm:$0xff]
      %v1493 = vld [vmem:[%s3 + $0x9e0] sm:$0xff]
      %v1494 = vld [vmem:[%s3 + $0x9e8] sm:$0xff]
      %v1495 = vld [vmem:[%s3 + $0x9f0] sm:$0xff]
      %v1496 = vld [vmem:[%s3 + $0x9f8] sm:$0xff]
      %v1497 = vld [vmem:[%s3 + $0xa00] sm:$0xff]
      %v1498 = vld [vmem:[%s3 + $0xa08] sm:$0xff]
      %v1499 = vld [vmem:[%s3 + $0xa10] sm:$0xff]
      %v1500 = vld [vmem:[%s3 + $0xa18] sm:$0xff]
      %v1501 = vld [vmem:[%s3 + $0xa20] sm:$0xff]
      %v1502 = vld [vmem:[%s3 + $0xa28] sm:$0xff]
      %v1503 = vld [vmem:[%s3 + $0xa30] sm:$0xff]
      %v1504 = vld [vmem:[%s3 + $0xa38] sm:$0xff]
      %v1505 = vld [vmem:[%s3 + $0xa40] sm:$0xff]
      %v1506 = vld [vmem:[%s3 + $0xa48] sm:$0xff]
      %v1507 = vld [vmem:[%s3 + $0xa50] sm:$0xff]
      %v1508 = vld [vmem:[%s3 + $0xa58] sm:$0xff]
      %v1509 = vld [vmem:[%s3 + $0xa60] sm:$0xff]
      %v1510 = vld [vmem:[%s3 + $0xa68] sm:$0xff]
      %v1511 = vld [vmem:[%s3 + $0xa70] sm:$0xff]
      %v1512 = vld [vmem:[%s3 + $0xa78] sm:$0xff]
      %v1513 = vld [vmem:[%s3 + $0xa80] sm:$0xff]
      %v1514 = vld [vmem:[%s3 + $0xa88] sm:$0xff]
      %v1515 = vld [vmem:[%s3 + $0xa90] sm:$0xff]
      %v1516 = vld [vmem:[%s3 + $0xa98] sm:$0xff]
      %v1517 = vld [vmem:[%s3 + $0xaa0] sm:$0xff]
      %v1518 = vld [vmem:[%s3 + $0xaa8] sm:$0xff]
      %v1519 = vld [vmem:[%s3 + $0xab0] sm:$0xff]
      %v1520 = vld [vmem:[%s3 + $0xab8] sm:$0xff]
      %v1521 = vld [vmem:[%s3 + $0xac0] sm:$0xff]
      %v1522 = vld [vmem:[%s3 + $0xac8] sm:$0xff]
      %v1523 = vld [vmem:[%s3 + $0xad0] sm:$0xff]
      %v1524 = vld [vmem:[%s3 + $0xad8] sm:$0xff]
      %v1525 = vld [vmem:[%s3 + $0xae0] sm:$0xff]
      %v1526 = vld [vmem:[%s3 + $0xae8] sm:$0xff]
      %v1527 = vld [vmem:[%s3 + $0xaf0] sm:$0xff]
      %v1528 = vld [vmem:[%s3 + $0xaf8] sm:$0xff]
      %v1529 = vld [vmem:[%s3 + $0xb00] sm:$0xff]
      %v1530 = vld [vmem:[%s3 + $0xb08] sm:$0xff]
      %v1531 = vld [vmem:[%s3 + $0xb10] sm:$0xff]
      %v1532 = vld [vmem:[%s3 + $0xb18] sm:$0xff]
      %v1533 = vld [vmem:[%s3 + $0xb20] sm:$0xff]
      %v1534 = vld [vmem:[%s3 + $0xb28] sm:$0xff]
      %v1535 = vld [vmem:[%s3 + $0xb30] sm:$0xff]
      %v1536 = vld [vmem:[%s3 + $0xb38] sm:$0xff]
      %v1537 = vld [vmem:[%s3 + $0xb40] sm:$0xff]
      %v1538 = vld [vmem:[%s3 + $0xb48] sm:$0xff]
      %v1539 = vld [vmem:[%s3 + $0xb50] sm:$0xff]
      %v1540 = vld [vmem:[%s3 + $0xb58] sm:$0xff]
      %v1541 = vld [vmem:[%s3 + $0xb60] sm:$0xff]
      %v1542 = vld [vmem:[%s3 + $0xb68] sm:$0xff]
      %v1543 = vld [vmem:[%s3 + $0xb70] sm:$0xff]
      %v1544 = vld [vmem:[%s3 + $0xb78] sm:$0xff]
      %v1545 = vld [vmem:[%s3 + $0xb80] sm:$0xff]
      %v1546 = vld [vmem:[%s3 + $0xb88] sm:$0xff]
      %v1547 = vld [vmem:[%s3 + $0xb90] sm:$0xff]
      %v1548 = vld [vmem:[%s3 + $0xb98] sm:$0xff]
      %v1549 = vld [vmem:[%s3 + $0xba0] sm:$0xff]
      %v1550 = vld [vmem:[%s3 + $0xba8] sm:$0xff]
      %v1551 = vld [vmem:[%s3 + $0xbb0] sm:$0xff]
      %v1552 = vld [vmem:[%s3 + $0xbb8] sm:$0xff]
      %v1553 = vld [vmem:[%s3 + $0xbc0] sm:$0xff]
      %v1554 = vld [vmem:[%s3 + $0xbc8] sm:$0xff]
      %v1555 = vld [vmem:[%s3 + $0xbd0] sm:$0xff]
      %v1556 = vld [vmem:[%s3 + $0xbd8] sm:$0xff]
      %v1557 = vld [vmem:[%s3 + $0xbe0] sm:$0xff]
      %v1558 = vld [vmem:[%s3 + $0xbe8] sm:$0xff]
      %v1559 = vld [vmem:[%s3 + $0xbf0] sm:$0xff]
      %v1560 = vld [vmem:[%s3 + $0xbf8] sm:$0xff]
      %v1561 = vld [vmem:[%s3 + $0xc00] sm:$0xff]
      %v1562 = vld [vmem:[%s3 + $0xc08] sm:$0xff]
      %v1563 = vld [vmem:[%s3 + $0xc10] sm:$0xff]
      %v1564 = vld [vmem:[%s3 + $0xc18] sm:$0xff]
      %v1565 = vld [vmem:[%s3 + $0xc20] sm:$0xff]
      %v1566 = vld [vmem:[%s3 + $0xc28] sm:$0xff]
      %v1567 = vld [vmem:[%s3 + $0xc30] sm:$0xff]
      %v1568 = vld [vmem:[%s3 + $0xc38] sm:$0xff]
      %v1569 = vld [vmem:[%s3 + $0xc40] sm:$0xff]
      %v1570 = vld [vmem:[%s3 + $0xc48] sm:$0xff]
      %v1571 = vld [vmem:[%s3 + $0xc50] sm:$0xff]
      %v1572 = vld [vmem:[%s3 + $0xc58] sm:$0xff]
      %v1573 = vld [vmem:[%s3 + $0xc60] sm:$0xff]
      %v1574 = vld [vmem:[%s3 + $0xc68] sm:$0xff]
      %v1575 = vld [vmem:[%s3 + $0xc70] sm:$0xff]
      %v1576 = vld [vmem:[%s3 + $0xc78] sm:$0xff]
      %vm1577 = vcmask 130048
      %v1579 = vsel %vm1577, %v1178, 0
      %v1582 = vsel %vm1577, %v1180, 0
      %v1585 = vsel %vm1577, %v1182, 0
      %v1588 = vsel %vm1577, %v1184, 0
      %v1591 = vsel %vm1577, %v1186, 0
      %v1594 = vsel %vm1577, %v1188, 0
      %v1597 = vsel %vm1577, %v1190, 0
      %v1600 = vsel %vm1577, %v1192, 0
      %v1603 = vsel %vm1577, %v1194, 0
      %v1606 = vsel %vm1577, %v1196, 0
      %v1609 = vsel %vm1577, %v1198, 0
      %v1612 = vsel %vm1577, %v1200, 0
      %v1615 = vsel %vm1577, %v1202, 0
      %v1618 = vsel %vm1577, %v1204, 0
      %v1621 = vsel %vm1577, %v1206, 0
      %v1624 = vsel %vm1577, %v1208, 0
      %v1627 = vsel %vm1577, %v1210, 0
      %v1630 = vsel %vm1577, %v1212, 0
      %v1633 = vsel %vm1577, %v1214, 0
      %v1636 = vsel %vm1577, %v1216, 0
      %v1639 = vsel %vm1577, %v1218, 0
      %v1642 = vsel %vm1577, %v1220, 0
      %v1645 = vsel %vm1577, %v1222, 0
      %v1648 = vsel %vm1577, %v1224, 0
      %v1651 = vsel %vm1577, %v1226, 0
      %v1654 = vsel %vm1577, %v1228, 0
      %v1657 = vsel %vm1577, %v1230, 0
      %v1660 = vsel %vm1577, %v1232, 0
      %v1663 = vsel %vm1577, %v1234, 0
      %v1666 = vsel %vm1577, %v1236, 0
      %v1669 = vsel %vm1577, %v1238, 0
      %v1672 = vsel %vm1577, %v1240, 0
      %v1675 = vsel %vm1577, %v1242, 0
      %v1678 = vsel %vm1577, %v1244, 0
      %v1681 = vsel %vm1577, %v1246, 0
      %v1684 = vsel %vm1577, %v1248, 0
      %v1687 = vsel %vm1577, %v1250, 0
      %v1690 = vsel %vm1577, %v1252, 0
      %v1693 = vsel %vm1577, %v1254, 0
      %v1696 = vsel %vm1577, %v1256, 0
      %v1699 = vsel %vm1577, %v1258, 0
      %v1702 = vsel %vm1577, %v1260, 0
      %v1705 = vsel %vm1577, %v1262, 0
      %v1708 = vsel %vm1577, %v1264, 0
      %v1711 = vsel %vm1577, %v1266, 0
      %v1714 = vsel %vm1577, %v1268, 0
      %v1717 = vsel %vm1577, %v1270, 0
      %v1720 = vsel %vm1577, %v1272, 0
      %v1723 = vsel %vm1577, %v1274, 0
      %v1726 = vsel %vm1577, %v1276, 0
      %v1729 = vsel %vm1577, %v1278, 0
      %v1732 = vsel %vm1577, %v1280, 0
      %v1735 = vsel %vm1577, %v1282, 0
      %v1738 = vsel %vm1577, %v1284, 0
      %v1741 = vsel %vm1577, %v1286, 0
      %v1744 = vsel %vm1577, %v1288, 0
      %v1747 = vsel %vm1577, %v1290, 0
      %v1750 = vsel %vm1577, %v1292, 0
      %v1753 = vsel %vm1577, %v1294, 0
      %v1756 = vsel %vm1577, %v1296, 0
      %v1759 = vsel %vm1577, %v1298, 0
      %v1762 = vsel %vm1577, %v1300, 0
      %v1765 = vsel %vm1577, %v1302, 0
      %v1768 = vsel %vm1577, %v1304, 0
      %v1771 = vsel %vm1577, %v1306, 0
      %v1774 = vsel %vm1577, %v1308, 0
      %v1777 = vsel %vm1577, %v1310, 0
      %v1780 = vsel %vm1577, %v1312, 0
      %v1783 = vsel %vm1577, %v1314, 0
      %v1786 = vsel %vm1577, %v1316, 0
      %v1789 = vsel %vm1577, %v1318, 0
      %v1792 = vsel %vm1577, %v1320, 0
      %v1795 = vsel %vm1577, %v1322, 0
      %v1798 = vsel %vm1577, %v1324, 0
      %v1801 = vsel %vm1577, %v1326, 0
      %v1804 = vsel %vm1577, %v1328, 0
      %v1807 = vsel %vm1577, %v1330, 0
      %v1810 = vsel %vm1577, %v1332, 0
      %v1813 = vsel %vm1577, %v1334, 0
      %v1816 = vsel %vm1577, %v1336, 0
      %v1819 = vsel %vm1577, %v1338, 0
      %v1822 = vsel %vm1577, %v1340, 0
      %v1825 = vsel %vm1577, %v1342, 0
      %v1828 = vsel %vm1577, %v1344, 0
      %v1831 = vsel %vm1577, %v1346, 0
      %v1834 = vsel %vm1577, %v1348, 0
      %v1837 = vsel %vm1577, %v1350, 0
      %v1840 = vsel %vm1577, %v1352, 0
      %v1843 = vsel %vm1577, %v1354, 0
      %v1846 = vsel %vm1577, %v1356, 0
      %v1849 = vsel %vm1577, %v1358, 0
      %v1852 = vsel %vm1577, %v1360, 0
      %v1855 = vsel %vm1577, %v1362, 0
      %v1858 = vsel %vm1577, %v1364, 0
      %v1861 = vsel %vm1577, %v1366, 0
      %v1864 = vsel %vm1577, %v1368, 0
      %v1867 = vsel %vm1577, %v1370, 0
      %v1870 = vsel %vm1577, %v1372, 0
      %v1873 = vsel %vm1577, %v1374, 0
      %v1876 = vsel %vm1577, %v1376, 0
      %v1879 = vsel %vm1577, %v1378, 0
      %v1882 = vsel %vm1577, %v1380, 0
      %v1885 = vsel %vm1577, %v1382, 0
      %v1888 = vsel %vm1577, %v1384, 0
      %v1891 = vsel %vm1577, %v1386, 0
      %v1894 = vsel %vm1577, %v1388, 0
      %v1897 = vsel %vm1577, %v1390, 0
      %v1900 = vsel %vm1577, %v1392, 0
      %v1903 = vsel %vm1577, %v1394, 0
      %v1906 = vsel %vm1577, %v1396, 0
      %v1909 = vsel %vm1577, %v1398, 0
      %v1912 = vsel %vm1577, %v1400, 0
      %v1915 = vsel %vm1577, %v1402, 0
      %v1918 = vsel %vm1577, %v1404, 0
      %v1921 = vsel %vm1577, %v1406, 0
      %v1924 = vsel %vm1577, %v1408, 0
      %v1927 = vsel %vm1577, %v1410, 0
      %v1930 = vsel %vm1577, %v1412, 0
      %v1933 = vsel %vm1577, %v1414, 0
      %v1936 = vsel %vm1577, %v1416, 0
      %v1939 = vsel %vm1577, %v1418, 0
      %v1942 = vsel %vm1577, %v1420, 0
      %v1945 = vsel %vm1577, %v1422, 0
      %v1948 = vsel %vm1577, %v1424, 0
      %v1951 = vsel %vm1577, %v1426, 0
      %v1954 = vsel %vm1577, %v1428, 0
      %v1957 = vsel %vm1577, %v1430, 0
      %v1960 = vsel %vm1577, %v1432, 0
      %v1963 = vsel %vm1577, %v1434, 0
      %v1966 = vsel %vm1577, %v1436, 0
      %v1969 = vsel %vm1577, %v1438, 0
      %v1972 = vsel %vm1577, %v1440, 0
      %v1975 = vsel %vm1577, %v1442, 0
      %v1978 = vsel %vm1577, %v1444, 0
      %v1981 = vsel %vm1577, %v1446, 0
      %v1984 = vsel %vm1577, %v1448, 0
      %v1987 = vsel %vm1577, %v1450, 0
      %v1990 = vsel %vm1577, %v1452, 0
      %v1993 = vsel %vm1577, %v1454, 0
      %v1996 = vsel %vm1577, %v1456, 0
      %v1999 = vsel %vm1577, %v1458, 0
      %v2002 = vsel %vm1577, %v1460, 0
      %v2005 = vsel %vm1577, %v1462, 0
      %v2008 = vsel %vm1577, %v1464, 0
      %v2011 = vsel %vm1577, %v1466, 0
      %v2014 = vsel %vm1577, %v1468, 0
      %v2017 = vsel %vm1577, %v1470, 0
      %v2020 = vsel %vm1577, %v1472, 0
      %v2023 = vsel %vm1577, %v1474, 0
      %v2026 = vsel %vm1577, %v1476, 0
      %v2029 = vsel %vm1577, %v1478, 0
      %v2032 = vsel %vm1577, %v1480, 0
      %v2035 = vsel %vm1577, %v1482, 0
      %v2038 = vsel %vm1577, %v1484, 0
      %v2041 = vsel %vm1577, %v1486, 0
      %v2044 = vsel %vm1577, %v1488, 0
      %v2047 = vsel %vm1577, %v1490, 0
      %v2050 = vsel %vm1577, %v1492, 0
      %v2053 = vsel %vm1577, %v1494, 0
      %v2056 = vsel %vm1577, %v1496, 0
      %v2059 = vsel %vm1577, %v1498, 0
      %v2062 = vsel %vm1577, %v1500, 0
      %v2065 = vsel %vm1577, %v1502, 0
      %v2068 = vsel %vm1577, %v1504, 0
      %v2071 = vsel %vm1577, %v1506, 0
      %v2074 = vsel %vm1577, %v1508, 0
      %v2077 = vsel %vm1577, %v1510, 0
      %v2080 = vsel %vm1577, %v1512, 0
      %v2083 = vsel %vm1577, %v1514, 0
      %v2086 = vsel %vm1577, %v1516, 0
      %v2089 = vsel %vm1577, %v1518, 0
      %v2092 = vsel %vm1577, %v1520, 0
      %v2095 = vsel %vm1577, %v1522, 0
      %v2098 = vsel %vm1577, %v1524, 0
      %v2101 = vsel %vm1577, %v1526, 0
      %v2104 = vsel %vm1577, %v1528, 0
      %v2107 = vsel %vm1577, %v1530, 0
      %v2110 = vsel %vm1577, %v1532, 0
      %v2113 = vsel %vm1577, %v1534, 0
      %v2116 = vsel %vm1577, %v1536, 0
      %v2119 = vsel %vm1577, %v1538, 0
      %v2122 = vsel %vm1577, %v1540, 0
      %v2125 = vsel %vm1577, %v1542, 0
      %v2128 = vsel %vm1577, %v1544, 0
      %v2131 = vsel %vm1577, %v1546, 0
      %v2134 = vsel %vm1577, %v1548, 0
      %v2137 = vsel %vm1577, %v1550, 0
      %v2140 = vsel %vm1577, %v1552, 0
      %v2143 = vsel %vm1577, %v1554, 0
      %v2146 = vsel %vm1577, %v1556, 0
      %v2149 = vsel %vm1577, %v1558, 0
      %v2152 = vsel %vm1577, %v1560, 0
      %v2155 = vsel %vm1577, %v1562, 0
      %v2158 = vsel %vm1577, %v1564, 0
      %v2161 = vsel %vm1577, %v1566, 0
      %v2164 = vsel %vm1577, %v1568, 0
      %v2167 = vsel %vm1577, %v1570, 0
      %v2170 = vsel %vm1577, %v1572, 0
      %v2173 = vsel %vm1577, %v1574, 0
      %v2176 = vsel %vm1577, %v1576, 0
      %2178 = vmatprep.subr.mxu0 0.0
      %2179 = vmatpush1.msra.mxu0 %v1159
      %2180 = vmatprep.subr.mxu0 0.0
      %2181 = vmatpush1.msra.mxu0 %v1160
      %2182 = vmatprep.subr.mxu0 0.0
      %2183 = vmatpush1.msra.mxu0 %v1161
      %2184 = vmatprep.subr.mxu0 0.0
      %2185 = vmatpush1.msra.mxu0 %v1162
      %2186 = vmatprep.subr.mxu0 0.0
      %2187 = vmatpush1.msra.mxu0 %v1163
      %2188 = vmatprep.subr.mxu0 0.0
      %2189 = vmatpush1.msra.mxu0 %v1164
      %2190 = vmatprep.subr.mxu0 0.0
      %2191 = vmatpush1.msra.mxu0 %v1165
      %2192 = vmatprep.subr.mxu0 0.0
      %2193 = vmatpush1.msra.mxu0 %v1166
      %2194 = vmatprep.subr.mxu0 0.0
      %2195 = vmatpush1.msra.mxu0 %v1167
      %2196 = vmatprep.subr.mxu0 0.0
      %2197 = vmatpush1.msra.mxu0 %v1168
      %2198 = vmatprep.subr.mxu0 0.0
      %2199 = vmatpush1.msra.mxu0 %v1169
      %2200 = vmatprep.subr.mxu0 0.0
      %2201 = vmatpush1.msra.mxu0 %v1170
      %2202 = vmatprep.subr.mxu0 0.0
      %2203 = vmatpush1.msra.mxu0 %v1171
      %2204 = vmatprep.subr.mxu0 0.0
      %2205 = vmatpush1.msra.mxu0 %v1172
      %2206 = vmatprep.subr.mxu0 0.0
      %2207 = vmatpush1.msra.mxu0 %v1173
      %2208 = vmatprep.subr.mxu0 0.0
      %2209 = vmatpush1.msra.mxu0 %v1174
      %2210 = vmatprep.subr.mxu0 0.0
      %2211 = vmatpush1.msra.mxu0 %v1175
      %2212 = vmatprep.subr.mxu0 0.0
      %2213 = vmatpush1.msra.mxu0 %v1176
      %2214 = vmatprep.subr.mxu0 0.0
      %2215 = vmatpush1.msra.mxu0 0.0
      %2216 = vmatprep.subr.mxu0 0.0
      %2217 = vmatpush1.msra.mxu0 0.0
      %2218 = vmatprep.subr.mxu0 0.0
      %2219 = vmatpush1.msra.mxu0 0.0
      %2220 = vmatprep.subr.mxu0 0.0
      %2221 = vmatpush1.msra.mxu0 0.0
      %2222 = vmatprep.subr.mxu0 0.0
      %2223 = vmatpush1.msra.mxu0 0.0
      %2224 = vmatprep.subr.mxu0 0.0
      %2225 = vmatpush1.msra.mxu0 0.0
      %2226 = vmatprep.subr.mxu0 0.0
      %2227 = vmatpush1.msra.mxu0 0.0
      %2228 = vmatprep.subr.mxu0 0.0
      %2229 = vmatpush1.msra.mxu0 0.0
      %2230 = vmatprep.subr.mxu0 0.0
      %2231 = vmatpush1.msra.mxu0 0.0
      %2232 = vmatprep.subr.mxu0 0.0
      %2233 = vmatpush1.msra.mxu0 0.0
      %2234 = vmatprep.subr.mxu0 0.0
      %2235 = vmatpush1.msra.mxu0 0.0
      %2236 = vmatprep.subr.mxu0 0.0
      %2237 = vmatpush1.msra.mxu0 0.0
      %2238 = vmatprep.subr.mxu0 0.0
      %2239 = vmatpush1.msra.mxu0 0.0
      %2240 = vmatprep.subr.mxu0 0.0
      %2241 = vmatpush1.msra.mxu0 0.0
      %2242 = vmatprep.mubr.f32.mxu0 %v1579
      %2243 = vmatmul.mubr.f32.gmra.mrb[0].mxu0 %v1177
      %v2244 = vpop.f32.mrb[0].mxu0
      %v2245 = vadd.f32 0.0, %v2244
      %v2246 = vpop.f32.mrb[0].mxu0
      %2247 = vmatprep.mubr.f32.mxu0 %v1582
      %2248 = vmatmul.mubr.f32.gmra.mrb[0].mxu0 %v1179
      %v2249 = vpop.f32.mrb[0].mxu0
      %v2250 = vadd.f32 0.0, %v2249
      %v2251 = vpop.f32.mrb[0].mxu0
      %2252 = vmatprep.mubr.f32.mxu0 %v1585
      %2253 = vmatmul.mubr.f32.gmra.mrb[0].mxu0 %v1181
      %v2254 = vpop.f32.mrb[0].mxu0
      %v2255 = vadd.f32 0.0, %v2254
      %v2256 = vpop.f32.mrb[0].mxu0
      %2257 = vmatprep.mubr.f32.mxu0 %v1588
      %2258 = vmatmul.mubr.f32.gmra.mrb[0].mxu0 %v1183
      %v2259 = vpop.f32.mrb[0].mxu0
      %v2260 = vadd.f32 0.0, %v2259
      %v2261 = vpop.f32.mrb[0].mxu0
      %2262 = vmatprep.mubr.f32.mxu0 %v1591
      %2263 = vmatmul.mubr.f32.gmra.mrb[0].mxu0 %v1185
      %v2264 = vpop.f32.mrb[0].mxu0
      %v2265 = vadd.f32 0.0, %v2264
      %v2266 = vpop.f32.mrb[0].mxu0
      %2267 = vmatprep.mubr.f32.mxu0 %v1594
      %2268 = vmatmul.mubr.f32.gmra.mrb[0].mxu0 %v1187
      %v2269 = vpop.f32.mrb[0].mxu0
      %v2270 = vadd.f32 0.0, %v2269
      %v2271 = vpop.f32.mrb[0].mxu0
      %2272 = vmatprep.mubr.f32.mxu0 %v1597
      %2273 = vmatmul.mubr.f32.gmra.mrb[0].mxu0 %v1189
      %v2274 = vpop.f32.mrb[0].mxu0
      %v2275 = vadd.f32 0.0, %v2274
      %v2276 = vpop.f32.mrb[0].mxu0
      %2277 = vmatprep.mubr.f32.mxu0 %v1600
      %2278 = vmatmul.mubr.f32.gmra.mrb[0].mxu0 %v1191
      %v2279 = vpop.f32.mrb[0].mxu0
      %v2280 = vadd.f32 0.0, %v2279
      %v2281 = vpop.f32.mrb[0].mxu0
      %2282 = vmatprep.mubr.f32.mxu0 %v1603
      %2283 = vmatmul.mubr.f32.gmra.mrb[0].mxu0 %v1193
      %v2284 = vpop.f32.mrb[0].mxu0
      %v2285 = vadd.f32 0.0, %v2284
      %v2286 = vpop.f32.mrb[0].mxu0
      %2287 = vmatprep.mubr.f32.mxu0 %v1606
      %2288 = vmatmul.mubr.f32.gmra.mrb[0].mxu0 %v1195
      %v2289 = vpop.f32.mrb[0].mxu0
      %v2290 = vadd.f32 0.0, %v2289
      %v2291 = vpop.f32.mrb[0].mxu0
      %2292 = vmatprep.mubr.f32.mxu0 %v1609
      %2293 = vmatmul.mubr.f32.gmra.mrb[0].mxu0 %v1197
      %v2294 = vpop.f32.mrb[0].mxu0
      %v2295 = vadd.f32 0.0, %v2294
      %v2296 = vpop.f32.mrb[0].mxu0
      %2297 = vmatprep.mubr.f32.mxu0 %v1612
      %2298 = vmatmul.mubr.f32.gmra.mrb[0].mxu0 %v1199
      %v2299 = vpop.f32.mrb[0].mxu0
      %v2300 = vadd.f32 0.0, %v2299
      %v2301 = vpop.f32.mrb[0].mxu0
      %2302 = vmatprep.mubr.f32.mxu0 %v1615
      %2303 = vmatmul.mubr.f32.gmra.mrb[0].mxu0 %v1201
      %v2304 = vpop.f32.mrb[0].mxu0
      %v2305 = vadd.f32 0.0, %v2304
      %v2306 = vpop.f32.mrb[0].mxu0
      %2307 = vmatprep.mubr.f32.mxu0 %v1618
      %2308 = vmatmul.mubr.f32.gmra.mrb[0].mxu0 %v1203
      %v2309 = vpop.f32.mrb[0].mxu0
      %v2310 = vadd.f32 0.0, %v2309
      %v2311 = vpop.f32.mrb[0].mxu0
      %2312 = vmatprep.mubr.f32.mxu0 %v1621
      %2313 = vmatmul.mubr.f32.gmra.mrb[0].mxu0 %v1205
      %v2314 = vpop.f32.mrb[0].mxu0
      %v2315 = vadd.f32 0.0, %v2314
      %v2316 = vpop.f32.mrb[0].mxu0
      %2317 = vmatprep.mubr.f32.mxu0 %v1624
      %2318 = vmatmul.mubr.f32.gmra.mrb[0].mxu0 %v1207
      %v2319 = vpop.f32.mrb[0].mxu0
      %v2320 = vadd.f32 0.0, %v2319
      %v2321 = vpop.f32.mrb[0].mxu0
      %2322 = vmatprep.mubr.f32.mxu0 %v1627
      %2323 = vmatmul.mubr.f32.gmra.mrb[0].mxu0 %v1209
      %v2324 = vpop.f32.mrb[0].mxu0
      %v2325 = vadd.f32 0.0, %v2324
      %v2326 = vpop.f32.mrb[0].mxu0
      %2327 = vmatprep.mubr.f32.mxu0 %v1630
      %2328 = vmatmul.mubr.f32.gmra.mrb[0].mxu0 %v1211
      %v2329 = vpop.f32.mrb[0].mxu0
      %v2330 = vadd.f32 0.0, %v2329
      %v2331 = vpop.f32.mrb[0].mxu0
      %2332 = vmatprep.mubr.f32.mxu0 %v1633
      %2333 = vmatmul.mubr.f32.gmra.mrb[0].mxu0 %v1213
      %v2334 = vpop.f32.mrb[0].mxu0
      %v2335 = vadd.f32 0.0, %v2334
      %v2336 = vpop.f32.mrb[0].mxu0
      %2337 = vmatprep.mubr.f32.mxu0 %v1636
      %2338 = vmatmul.mubr.f32.gmra.mrb[0].mxu0 %v1215
      %v2339 = vpop.f32.mrb[0].mxu0
      %v2340 = vadd.f32 0.0, %v2339
      %v2341 = vpop.f32.mrb[0].mxu0
      %2342 = vmatprep.mubr.f32.mxu0 %v1639
      %2343 = vmatmul.mubr.f32.gmra.mrb[0].mxu0 %v1217
      %v2344 = vpop.f32.mrb[0].mxu0
      %v2345 = vadd.f32 0.0, %v2344
      %v2346 = vpop.f32.mrb[0].mxu0
      %2347 = vmatprep.mubr.f32.mxu0 %v1642
      %2348 = vmatmul.mubr.f32.gmra.mrb[0].mxu0 %v1219
      %v2349 = vpop.f32.mrb[0].mxu0
      %v2350 = vadd.f32 0.0, %v2349
      %v2351 = vpop.f32.mrb[0].mxu0
      %2352 = vmatprep.mubr.f32.mxu0 %v1645
      %2353 = vmatmul.mubr.f32.gmra.mrb[0].mxu0 %v1221
      %v2354 = vpop.f32.mrb[0].mxu0
      %v2355 = vadd.f32 0.0, %v2354
      %v2356 = vpop.f32.mrb[0].mxu0
      %2357 = vmatprep.mubr.f32.mxu0 %v1648
      %2358 = vmatmul.mubr.f32.gmra.mrb[0].mxu0 %v1223
      %v2359 = vpop.f32.mrb[0].mxu0
      %v2360 = vadd.f32 0.0, %v2359
      %v2361 = vpop.f32.mrb[0].mxu0
      %2362 = vmatprep.mubr.f32.mxu0 %v1651
      %2363 = vmatmul.mubr.f32.gmra.mrb[0].mxu0 %v1225
      %v2364 = vpop.f32.mrb[0].mxu0
      %v2365 = vadd.f32 0.0, %v2364
      %v2366 = vpop.f32.mrb[0].mxu0
      %2367 = vmatprep.mubr.f32.mxu0 %v1654
      %2368 = vmatmul.mubr.f32.gmra.mrb[0].mxu0 %v1227
      %v2369 = vpop.f32.mrb[0].mxu0
      %v2370 = vadd.f32 0.0, %v2369
      %v2371 = vpop.f32.mrb[0].mxu0
      %2372 = vmatprep.mubr.f32.mxu0 %v1657
      %2373 = vmatmul.mubr.f32.gmra.mrb[0].mxu0 %v1229
      %v2374 = vpop.f32.mrb[0].mxu0
      %v2375 = vadd.f32 0.0, %v2374
      %v2376 = vpop.f32.mrb[0].mxu0
      %2377 = vmatprep.mubr.f32.mxu0 %v1660
      %2378 = vmatmul.mubr.f32.gmra.mrb[0].mxu0 %v1231
      %v2379 = vpop.f32.mrb[0].mxu0
      %v2380 = vadd.f32 0.0, %v2379
      %v2381 = vpop.f32.mrb[0].mxu0
      %2382 = vmatprep.mubr.f32.mxu0 %v1663
      %2383 = vmatmul.mubr.f32.gmra.mrb[0].mxu0 %v1233
      %v2384 = vpop.f32.mrb[0].mxu0
      %v2385 = vadd.f32 0.0, %v2384
      %v2386 = vpop.f32.mrb[0].mxu0
      %2387 = vmatprep.mubr.f32.mxu0 %v1666
      %2388 = vmatmul.mubr.f32.gmra.mrb[0].mxu0 %v1235
      %v2389 = vpop.f32.mrb[0].mxu0
      %v2390 = vadd.f32 0.0, %v2389
      %v2391 = vpop.f32.mrb[0].mxu0
      %2392 = vmatprep.mubr.f32.mxu0 %v1669
      %2393 = vmatmul.mubr.f32.gmra.mrb[0].mxu0 %v1237
      %v2394 = vpop.f32.mrb[0].mxu0
      %v2395 = vadd.f32 0.0, %v2394
      %v2396 = vpop.f32.mrb[0].mxu0
      %2397 = vmatprep.mubr.f32.mxu0 %v1672
      %2398 = vmatmul.mubr.f32.gmra.mrb[0].mxu0 %v1239
      %v2399 = vpop.f32.mrb[0].mxu0
      %v2400 = vadd.f32 0.0, %v2399
      %v2401 = vpop.f32.mrb[0].mxu0
      %2402 = vmatprep.mubr.f32.mxu0 %v1675
      %2403 = vmatmul.mubr.f32.gmra.mrb[0].mxu0 %v1241
      %v2404 = vpop.f32.mrb[0].mxu0
      %v2405 = vadd.f32 0.0, %v2404
      %v2406 = vpop.f32.mrb[0].mxu0
      %2407 = vmatprep.mubr.f32.mxu0 %v1678
      %2408 = vmatmul.mubr.f32.gmra.mrb[0].mxu0 %v1243
      %v2409 = vpop.f32.mrb[0].mxu0
      %v2410 = vadd.f32 0.0, %v2409
      %v2411 = vpop.f32.mrb[0].mxu0
      %2412 = vmatprep.mubr.f32.mxu0 %v1681
      %2413 = vmatmul.mubr.f32.gmra.mrb[0].mxu0 %v1245
      %v2414 = vpop.f32.mrb[0].mxu0
      %v2415 = vadd.f32 0.0, %v2414
      %v2416 = vpop.f32.mrb[0].mxu0
      %2417 = vmatprep.mubr.f32.mxu0 %v1684
      %2418 = vmatmul.mubr.f32.gmra.mrb[0].mxu0 %v1247
      %v2419 = vpop.f32.mrb[0].mxu0
      %v2420 = vadd.f32 0.0, %v2419
      %v2421 = vpop.f32.mrb[0].mxu0
      %2422 = vmatprep.mubr.f32.mxu0 %v1687
      %2423 = vmatmul.mubr.f32.gmra.mrb[0].mxu0 %v1249
      %v2424 = vpop.f32.mrb[0].mxu0
      %v2425 = vadd.f32 0.0, %v2424
      %v2426 = vpop.f32.mrb[0].mxu0
      %2427 = vmatprep.mubr.f32.mxu0 %v1690
      %2428 = vmatmul.mubr.f32.gmra.mrb[0].mxu0 %v1251
      %v2429 = vpop.f32.mrb[0].mxu0
      %v2430 = vadd.f32 0.0, %v2429
      %v2431 = vpop.f32.mrb[0].mxu0
      %2432 = vmatprep.mubr.f32.mxu0 %v1693
      %2433 = vmatmul.mubr.f32.gmra.mrb[0].mxu0 %v1253
      %v2434 = vpop.f32.mrb[0].mxu0
      %v2435 = vadd.f32 0.0, %v2434
      %v2436 = vpop.f32.mrb[0].mxu0
      %2437 = vmatprep.mubr.f32.mxu0 %v1696
      %2438 = vmatmul.mubr.f32.gmra.mrb[0].mxu0 %v1255
      %v2439 = vpop.f32.mrb[0].mxu0
      %v2440 = vadd.f32 0.0, %v2439
      %v2441 = vpop.f32.mrb[0].mxu0
      %2442 = vmatprep.mubr.f32.mxu0 %v1699
      %2443 = vmatmul.mubr.f32.gmra.mrb[0].mxu0 %v1257
      %v2444 = vpop.f32.mrb[0].mxu0
      %v2445 = vadd.f32 0.0, %v2444
      %v2446 = vpop.f32.mrb[0].mxu0
      %2447 = vmatprep.mubr.f32.mxu0 %v1702
      %2448 = vmatmul.mubr.f32.gmra.mrb[0].mxu0 %v1259
      %v2449 = vpop.f32.mrb[0].mxu0
      %v2450 = vadd.f32 0.0, %v2449
      %v2451 = vpop.f32.mrb[0].mxu0
      %2452 = vmatprep.mubr.f32.mxu0 %v1705
      %2453 = vmatmul.mubr.f32.gmra.mrb[0].mxu0 %v1261
      %v2454 = vpop.f32.mrb[0].mxu0
      %v2455 = vadd.f32 0.0, %v2454
      %v2456 = vpop.f32.mrb[0].mxu0
      %2457 = vmatprep.mubr.f32.mxu0 %v1708
      %2458 = vmatmul.mubr.f32.gmra.mrb[0].mxu0 %v1263
      %v2459 = vpop.f32.mrb[0].mxu0
      %v2460 = vadd.f32 0.0, %v2459
      %v2461 = vpop.f32.mrb[0].mxu0
      %2462 = vmatprep.mubr.f32.mxu0 %v1711
      %2463 = vmatmul.mubr.f32.gmra.mrb[0].mxu0 %v1265
      %v2464 = vpop.f32.mrb[0].mxu0
      %v2465 = vadd.f32 0.0, %v2464
      %v2466 = vpop.f32.mrb[0].mxu0
      %2467 = vmatprep.mubr.f32.mxu0 %v1714
      %2468 = vmatmul.mubr.f32.gmra.mrb[0].mxu0 %v1267
      %v2469 = vpop.f32.mrb[0].mxu0
      %v2470 = vadd.f32 0.0, %v2469
      %v2471 = vpop.f32.mrb[0].mxu0
      %2472 = vmatprep.mubr.f32.mxu0 %v1717
      %2473 = vmatmul.mubr.f32.gmra.mrb[0].mxu0 %v1269
      %v2474 = vpop.f32.mrb[0].mxu0
      %v2475 = vadd.f32 0.0, %v2474
      %v2476 = vpop.f32.mrb[0].mxu0
      %2477 = vmatprep.mubr.f32.mxu0 %v1720
      %2478 = vmatmul.mubr.f32.gmra.mrb[0].mxu0 %v1271
      %v2479 = vpop.f32.mrb[0].mxu0
      %v2480 = vadd.f32 0.0, %v2479
      %v2481 = vpop.f32.mrb[0].mxu0
      %2482 = vmatprep.mubr.f32.mxu0 %v1723
      %2483 = vmatmul.mubr.f32.gmra.mrb[0].mxu0 %v1273
      %v2484 = vpop.f32.mrb[0].mxu0
      %v2485 = vadd.f32 0.0, %v2484
      %v2486 = vpop.f32.mrb[0].mxu0
      %2487 = vmatprep.mubr.f32.mxu0 %v1726
      %2488 = vmatmul.mubr.f32.gmra.mrb[0].mxu0 %v1275
      %v2489 = vpop.f32.mrb[0].mxu0
      %v2490 = vadd.f32 0.0, %v2489
      %v2491 = vpop.f32.mrb[0].mxu0
      %2492 = vmatprep.mubr.f32.mxu0 %v1729
      %2493 = vmatmul.mubr.f32.gmra.mrb[0].mxu0 %v1277
      %v2494 = vpop.f32.mrb[0].mxu0
      %v2495 = vadd.f32 0.0, %v2494
      %v2496 = vpop.f32.mrb[0].mxu0
      %2497 = vmatprep.mubr.f32.mxu0 %v1732
      %2498 = vmatmul.mubr.f32.gmra.mrb[0].mxu0 %v1279
      %v2499 = vpop.f32.mrb[0].mxu0
      %v2500 = vadd.f32 0.0, %v2499
      %v2501 = vpop.f32.mrb[0].mxu0
      %2502 = vmatprep.mubr.f32.mxu0 %v1735
      %2503 = vmatmul.mubr.f32.gmra.mrb[0].mxu0 %v1281
      %v2504 = vpop.f32.mrb[0].mxu0
      %v2505 = vadd.f32 0.0, %v2504
      %v2506 = vpop.f32.mrb[0].mxu0
      %2507 = vmatprep.mubr.f32.mxu0 %v1738
      %2508 = vmatmul.mubr.f32.gmra.mrb[0].mxu0 %v1283
      %v2509 = vpop.f32.mrb[0].mxu0
      %v2510 = vadd.f32 0.0, %v2509
      %v2511 = vpop.f32.mrb[0].mxu0
      %2512 = vmatprep.mubr.f32.mxu0 %v1741
      %2513 = vmatmul.mubr.f32.gmra.mrb[0].mxu0 %v1285
      %v2514 = vpop.f32.mrb[0].mxu0
      %v2515 = vadd.f32 0.0, %v2514
      %v2516 = vpop.f32.mrb[0].mxu0
      %2517 = vmatprep.mubr.f32.mxu0 %v1744
      %2518 = vmatmul.mubr.f32.gmra.mrb[0].mxu0 %v1287
      %v2519 = vpop.f32.mrb[0].mxu0
      %v2520 = vadd.f32 0.0, %v2519
      %v2521 = vpop.f32.mrb[0].mxu0
      %2522 = vmatprep.mubr.f32.mxu0 %v1747
      %2523 = vmatmul.mubr.f32.gmra.mrb[0].mxu0 %v1289
      %v2524 = vpop.f32.mrb[0].mxu0
      %v2525 = vadd.f32 0.0, %v2524
      %v2526 = vpop.f32.mrb[0].mxu0
      %2527 = vmatprep.mubr.f32.mxu0 %v1750
      %2528 = vmatmul.mubr.f32.gmra.mrb[0].mxu0 %v1291
      %v2529 = vpop.f32.mrb[0].mxu0
      %v2530 = vadd.f32 0.0, %v2529
      %v2531 = vpop.f32.mrb[0].mxu0
      %2532 = vmatprep.mubr.f32.mxu0 %v1753
      %2533 = vmatmul.mubr.f32.gmra.mrb[0].mxu0 %v1293
      %v2534 = vpop.f32.mrb[0].mxu0
      %v2535 = vadd.f32 0.0, %v2534
      %v2536 = vpop.f32.mrb[0].mxu0
      %2537 = vmatprep.mubr.f32.mxu0 %v1756
      %2538 = vmatmul.mubr.f32.gmra.mrb[0].mxu0 %v1295
      %v2539 = vpop.f32.mrb[0].mxu0
      %v2540 = vadd.f32 0.0, %v2539
      %v2541 = vpop.f32.mrb[0].mxu0
      %2542 = vmatprep.mubr.f32.mxu0 %v1759
      %2543 = vmatmul.mubr.f32.gmra.mrb[0].mxu0 %v1297
      %v2544 = vpop.f32.mrb[0].mxu0
      %v2545 = vadd.f32 0.0, %v2544
      %v2546 = vpop.f32.mrb[0].mxu0
      %2547 = vmatprep.mubr.f32.mxu0 %v1762
      %2548 = vmatmul.mubr.f32.gmra.mrb[0].mxu0 %v1299
      %v2549 = vpop.f32.mrb[0].mxu0
      %v2550 = vadd.f32 0.0, %v2549
      %v2551 = vpop.f32.mrb[0].mxu0
      %2552 = vmatprep.mubr.f32.mxu0 %v1765
      %2553 = vmatmul.mubr.f32.gmra.mrb[0].mxu0 %v1301
      %v2554 = vpop.f32.mrb[0].mxu0
      %v2555 = vadd.f32 0.0, %v2554
      %v2556 = vpop.f32.mrb[0].mxu0
      %2557 = vmatprep.mubr.f32.mxu0 %v1768
      %2558 = vmatmul.mubr.f32.gmra.mrb[0].mxu0 %v1303
      %v2559 = vpop.f32.mrb[0].mxu0
      %v2560 = vadd.f32 0.0, %v2559
      %v2561 = vpop.f32.mrb[0].mxu0
      %2562 = vmatprep.mubr.f32.mxu0 %v1771
      %2563 = vmatmul.mubr.f32.gmra.mrb[0].mxu0 %v1305
      %v2564 = vpop.f32.mrb[0].mxu0
      %v2565 = vadd.f32 0.0, %v2564
      %v2566 = vpop.f32.mrb[0].mxu0
      %2567 = vmatprep.mubr.f32.mxu0 %v1774
      %2568 = vmatmul.mubr.f32.gmra.mrb[0].mxu0 %v1307
      %v2569 = vpop.f32.mrb[0].mxu0
      %v2570 = vadd.f32 0.0, %v2569
      %v2571 = vpop.f32.mrb[0].mxu0
      %2572 = vmatprep.mubr.f32.mxu0 %v1777
      %2573 = vmatmul.mubr.f32.gmra.mrb[0].mxu0 %v1309
      %v2574 = vpop.f32.mrb[0].mxu0
      %v2575 = vadd.f32 0.0, %v2574
      %v2576 = vpop.f32.mrb[0].mxu0
      %2577 = vmatprep.mubr.f32.mxu0 %v1780
      %2578 = vmatmul.mubr.f32.gmra.mrb[0].mxu0 %v1311
      %v2579 = vpop.f32.mrb[0].mxu0
      %v2580 = vadd.f32 0.0, %v2579
      %v2581 = vpop.f32.mrb[0].mxu0
      %2582 = vmatprep.mubr.f32.mxu0 %v1783
      %2583 = vmatmul.mubr.f32.gmra.mrb[0].mxu0 %v1313
      %v2584 = vpop.f32.mrb[0].mxu0
      %v2585 = vadd.f32 0.0, %v2584
      %v2586 = vpop.f32.mrb[0].mxu0
      %2587 = vmatprep.mubr.f32.mxu0 %v1786
      %2588 = vmatmul.mubr.f32.gmra.mrb[0].mxu0 %v1315
      %v2589 = vpop.f32.mrb[0].mxu0
      %v2590 = vadd.f32 0.0, %v2589
      %v2591 = vpop.f32.mrb[0].mxu0
      %2592 = vmatprep.mubr.f32.mxu0 %v1789
      %2593 = vmatmul.mubr.f32.gmra.mrb[0].mxu0 %v1317
      %v2594 = vpop.f32.mrb[0].mxu0
      %v2595 = vadd.f32 0.0, %v2594
      %v2596 = vpop.f32.mrb[0].mxu0
      %2597 = vmatprep.mubr.f32.mxu0 %v1792
      %2598 = vmatmul.mubr.f32.gmra.mrb[0].mxu0 %v1319
      %v2599 = vpop.f32.mrb[0].mxu0
      %v2600 = vadd.f32 0.0, %v2599
      %v2601 = vpop.f32.mrb[0].mxu0
      %2602 = vmatprep.mubr.f32.mxu0 %v1795
      %2603 = vmatmul.mubr.f32.gmra.mrb[0].mxu0 %v1321
      %v2604 = vpop.f32.mrb[0].mxu0
      %v2605 = vadd.f32 0.0, %v2604
      %v2606 = vpop.f32.mrb[0].mxu0
      %2607 = vmatprep.mubr.f32.mxu0 %v1798
      %2608 = vmatmul.mubr.f32.gmra.mrb[0].mxu0 %v1323
      %v2609 = vpop.f32.mrb[0].mxu0
      %v2610 = vadd.f32 0.0, %v2609
      %v2611 = vpop.f32.mrb[0].mxu0
      %2612 = vmatprep.mubr.f32.mxu0 %v1801
      %2613 = vmatmul.mubr.f32.gmra.mrb[0].mxu0 %v1325
      %v2614 = vpop.f32.mrb[0].mxu0
      %v2615 = vadd.f32 0.0, %v2614
      %v2616 = vpop.f32.mrb[0].mxu0
      %2617 = vmatprep.mubr.f32.mxu0 %v1804
      %2618 = vmatmul.mubr.f32.gmra.mrb[0].mxu0 %v1327
      %v2619 = vpop.f32.mrb[0].mxu0
      %v2620 = vadd.f32 0.0, %v2619
      %v2621 = vpop.f32.mrb[0].mxu0
      %2622 = vmatprep.mubr.f32.mxu0 %v1807
      %2623 = vmatmul.mubr.f32.gmra.mrb[0].mxu0 %v1329
      %v2624 = vpop.f32.mrb[0].mxu0
      %v2625 = vadd.f32 0.0, %v2624
      %v2626 = vpop.f32.mrb[0].mxu0
      %2627 = vmatprep.mubr.f32.mxu0 %v1810
      %2628 = vmatmul.mubr.f32.gmra.mrb[0].mxu0 %v1331
      %v2629 = vpop.f32.mrb[0].mxu0
      %v2630 = vadd.f32 0.0, %v2629
      %v2631 = vpop.f32.mrb[0].mxu0
      %2632 = vmatprep.mubr.f32.mxu0 %v1813
      %2633 = vmatmul.mubr.f32.gmra.mrb[0].mxu0 %v1333
      %v2634 = vpop.f32.mrb[0].mxu0
      %v2635 = vadd.f32 0.0, %v2634
      %v2636 = vpop.f32.mrb[0].mxu0
      %2637 = vmatprep.mubr.f32.mxu0 %v1816
      %2638 = vmatmul.mubr.f32.gmra.mrb[0].mxu0 %v1335
      %v2639 = vpop.f32.mrb[0].mxu0
      %v2640 = vadd.f32 0.0, %v2639
      %v2641 = vpop.f32.mrb[0].mxu0
      %2642 = vmatprep.mubr.f32.mxu0 %v1819
      %2643 = vmatmul.mubr.f32.gmra.mrb[0].mxu0 %v1337
      %v2644 = vpop.f32.mrb[0].mxu0
      %v2645 = vadd.f32 0.0, %v2644
      %v2646 = vpop.f32.mrb[0].mxu0
      %2647 = vmatprep.mubr.f32.mxu0 %v1822
      %2648 = vmatmul.mubr.f32.gmra.mrb[0].mxu0 %v1339
      %v2649 = vpop.f32.mrb[0].mxu0
      %v2650 = vadd.f32 0.0, %v2649
      %v2651 = vpop.f32.mrb[0].mxu0
      %2652 = vmatprep.mubr.f32.mxu0 %v1825
      %2653 = vmatmul.mubr.f32.gmra.mrb[0].mxu0 %v1341
      %v2654 = vpop.f32.mrb[0].mxu0
      %v2655 = vadd.f32 0.0, %v2654
      %v2656 = vpop.f32.mrb[0].mxu0
      %2657 = vmatprep.mubr.f32.mxu0 %v1828
      %2658 = vmatmul.mubr.f32.gmra.mrb[0].mxu0 %v1343
      %v2659 = vpop.f32.mrb[0].mxu0
      %v2660 = vadd.f32 0.0, %v2659
      %v2661 = vpop.f32.mrb[0].mxu0
      %2662 = vmatprep.mubr.f32.mxu0 %v1831
      %2663 = vmatmul.mubr.f32.gmra.mrb[0].mxu0 %v1345
      %v2664 = vpop.f32.mrb[0].mxu0
      %v2665 = vadd.f32 0.0, %v2664
      %v2666 = vpop.f32.mrb[0].mxu0
      %2667 = vmatprep.mubr.f32.mxu0 %v1834
      %2668 = vmatmul.mubr.f32.gmra.mrb[0].mxu0 %v1347
      %v2669 = vpop.f32.mrb[0].mxu0
      %v2670 = vadd.f32 0.0, %v2669
      %v2671 = vpop.f32.mrb[0].mxu0
      %2672 = vmatprep.mubr.f32.mxu0 %v1837
      %2673 = vmatmul.mubr.f32.gmra.mrb[0].mxu0 %v1349
      %v2674 = vpop.f32.mrb[0].mxu0
      %v2675 = vadd.f32 0.0, %v2674
      %v2676 = vpop.f32.mrb[0].mxu0
      %2677 = vmatprep.mubr.f32.mxu0 %v1840
      %2678 = vmatmul.mubr.f32.gmra.mrb[0].mxu0 %v1351
      %v2679 = vpop.f32.mrb[0].mxu0
      %v2680 = vadd.f32 0.0, %v2679
      %v2681 = vpop.f32.mrb[0].mxu0
      %2682 = vmatprep.mubr.f32.mxu0 %v1843
      %2683 = vmatmul.mubr.f32.gmra.mrb[0].mxu0 %v1353
      %v2684 = vpop.f32.mrb[0].mxu0
      %v2685 = vadd.f32 0.0, %v2684
      %v2686 = vpop.f32.mrb[0].mxu0
      %2687 = vmatprep.mubr.f32.mxu0 %v1846
      %2688 = vmatmul.mubr.f32.gmra.mrb[0].mxu0 %v1355
      %v2689 = vpop.f32.mrb[0].mxu0
      %v2690 = vadd.f32 0.0, %v2689
      %v2691 = vpop.f32.mrb[0].mxu0
      %2692 = vmatprep.mubr.f32.mxu0 %v1849
      %2693 = vmatmul.mubr.f32.gmra.mrb[0].mxu0 %v1357
      %v2694 = vpop.f32.mrb[0].mxu0
      %v2695 = vadd.f32 0.0, %v2694
      %v2696 = vpop.f32.mrb[0].mxu0
      %2697 = vmatprep.mubr.f32.mxu0 %v1852
      %2698 = vmatmul.mubr.f32.gmra.mrb[0].mxu0 %v1359
      %v2699 = vpop.f32.mrb[0].mxu0
      %v2700 = vadd.f32 0.0, %v2699
      %v2701 = vpop.f32.mrb[0].mxu0
      %2702 = vmatprep.mubr.f32.mxu0 %v1855
      %2703 = vmatmul.mubr.f32.gmra.mrb[0].mxu0 %v1361
      %v2704 = vpop.f32.mrb[0].mxu0
      %v2705 = vadd.f32 0.0, %v2704
      %v2706 = vpop.f32.mrb[0].mxu0
      %2707 = vmatprep.mubr.f32.mxu0 %v1858
      %2708 = vmatmul.mubr.f32.gmra.mrb[0].mxu0 %v1363
      %v2709 = vpop.f32.mrb[0].mxu0
      %v2710 = vadd.f32 0.0, %v2709
      %v2711 = vpop.f32.mrb[0].mxu0
      %2712 = vmatprep.mubr.f32.mxu0 %v1861
      %2713 = vmatmul.mubr.f32.gmra.mrb[0].mxu0 %v1365
      %v2714 = vpop.f32.mrb[0].mxu0
      %v2715 = vadd.f32 0.0, %v2714
      %v2716 = vpop.f32.mrb[0].mxu0
      %2717 = vmatprep.mubr.f32.mxu0 %v1864
      %2718 = vmatmul.mubr.f32.gmra.mrb[0].mxu0 %v1367
      %v2719 = vpop.f32.mrb[0].mxu0
      %v2720 = vadd.f32 0.0, %v2719
      %v2721 = vpop.f32.mrb[0].mxu0
      %2722 = vmatprep.mubr.f32.mxu0 %v1867
      %2723 = vmatmul.mubr.f32.gmra.mrb[0].mxu0 %v1369
      %v2724 = vpop.f32.mrb[0].mxu0
      %v2725 = vadd.f32 0.0, %v2724
      %v2726 = vpop.f32.mrb[0].mxu0
      %2727 = vmatprep.mubr.f32.mxu0 %v1870
      %2728 = vmatmul.mubr.f32.gmra.mrb[0].mxu0 %v1371
      %v2729 = vpop.f32.mrb[0].mxu0
      %v2730 = vadd.f32 0.0, %v2729
      %v2731 = vpop.f32.mrb[0].mxu0
      %2732 = vmatprep.mubr.f32.mxu0 %v1873
      %2733 = vmatmul.mubr.f32.gmra.mrb[0].mxu0 %v1373
      %v2734 = vpop.f32.mrb[0].mxu0
      %v2735 = vadd.f32 0.0, %v2734
      %v2736 = vpop.f32.mrb[0].mxu0
      %2737 = vmatprep.mubr.f32.mxu0 %v1876
      %2738 = vmatmul.mubr.f32.gmra.mrb[0].mxu0 %v1375
      %v2739 = vpop.f32.mrb[0].mxu0
      %v2740 = vadd.f32 0.0, %v2739
      %v2741 = vpop.f32.mrb[0].mxu0
      %2742 = vmatprep.mubr.f32.mxu0 %v1879
      %2743 = vmatmul.mubr.f32.gmra.mrb[0].mxu0 %v1377
      %v2744 = vpop.f32.mrb[0].mxu0
      %v2745 = vadd.f32 0.0, %v2744
      %v2746 = vpop.f32.mrb[0].mxu0
      %2747 = vmatprep.mubr.f32.mxu0 %v1882
      %2748 = vmatmul.mubr.f32.gmra.mrb[0].mxu0 %v1379
      %v2749 = vpop.f32.mrb[0].mxu0
      %v2750 = vadd.f32 0.0, %v2749
      %v2751 = vpop.f32.mrb[0].mxu0
      %2752 = vmatprep.mubr.f32.mxu0 %v1885
      %2753 = vmatmul.mubr.f32.gmra.mrb[0].mxu0 %v1381
      %v2754 = vpop.f32.mrb[0].mxu0
      %v2755 = vadd.f32 0.0, %v2754
      %v2756 = vpop.f32.mrb[0].mxu0
      %2757 = vmatprep.mubr.f32.mxu0 %v1888
      %2758 = vmatmul.mubr.f32.gmra.mrb[0].mxu0 %v1383
      %v2759 = vpop.f32.mrb[0].mxu0
      %v2760 = vadd.f32 0.0, %v2759
      %v2761 = vpop.f32.mrb[0].mxu0
      %2762 = vmatprep.mubr.f32.mxu0 %v1891
      %2763 = vmatmul.mubr.f32.gmra.mrb[0].mxu0 %v1385
      %v2764 = vpop.f32.mrb[0].mxu0
      %v2765 = vadd.f32 0.0, %v2764
      %v2766 = vpop.f32.mrb[0].mxu0
      %2767 = vmatprep.mubr.f32.mxu0 %v1894
      %2768 = vmatmul.mubr.f32.gmra.mrb[0].mxu0 %v1387
      %v2769 = vpop.f32.mrb[0].mxu0
      %v2770 = vadd.f32 0.0, %v2769
      %v2771 = vpop.f32.mrb[0].mxu0
      %2772 = vmatprep.mubr.f32.mxu0 %v1897
      %2773 = vmatmul.mubr.f32.gmra.mrb[0].mxu0 %v1389
      %v2774 = vpop.f32.mrb[0].mxu0
      %v2775 = vadd.f32 0.0, %v2774
      %v2776 = vpop.f32.mrb[0].mxu0
      %2777 = vmatprep.mubr.f32.mxu0 %v1900
      %2778 = vmatmul.mubr.f32.gmra.mrb[0].mxu0 %v1391
      %v2779 = vpop.f32.mrb[0].mxu0
      %v2780 = vadd.f32 0.0, %v2779
      %v2781 = vpop.f32.mrb[0].mxu0
      %2782 = vmatprep.mubr.f32.mxu0 %v1903
      %2783 = vmatmul.mubr.f32.gmra.mrb[0].mxu0 %v1393
      %v2784 = vpop.f32.mrb[0].mxu0
      %v2785 = vadd.f32 0.0, %v2784
      %v2786 = vpop.f32.mrb[0].mxu0
      %2787 = vmatprep.mubr.f32.mxu0 %v1906
      %2788 = vmatmul.mubr.f32.gmra.mrb[0].mxu0 %v1395
      %v2789 = vpop.f32.mrb[0].mxu0
      %v2790 = vadd.f32 0.0, %v2789
      %v2791 = vpop.f32.mrb[0].mxu0
      %2792 = vmatprep.mubr.f32.mxu0 %v1909
      %2793 = vmatmul.mubr.f32.gmra.mrb[0].mxu0 %v1397
      %v2794 = vpop.f32.mrb[0].mxu0
      %v2795 = vadd.f32 0.0, %v2794
      %v2796 = vpop.f32.mrb[0].mxu0
      %2797 = vmatprep.mubr.f32.mxu0 %v1912
      %2798 = vmatmul.mubr.f32.gmra.mrb[0].mxu0 %v1399
      %v2799 = vpop.f32.mrb[0].mxu0
      %v2800 = vadd.f32 0.0, %v2799
      %v2801 = vpop.f32.mrb[0].mxu0
      %2802 = vmatprep.mubr.f32.mxu0 %v1915
      %2803 = vmatmul.mubr.f32.gmra.mrb[0].mxu0 %v1401
      %v2804 = vpop.f32.mrb[0].mxu0
      %v2805 = vadd.f32 0.0, %v2804
      %v2806 = vpop.f32.mrb[0].mxu0
      %2807 = vmatprep.mubr.f32.mxu0 %v1918
      %2808 = vmatmul.mubr.f32.gmra.mrb[0].mxu0 %v1403
      %v2809 = vpop.f32.mrb[0].mxu0
      %v2810 = vadd.f32 0.0, %v2809
      %v2811 = vpop.f32.mrb[0].mxu0
      %2812 = vmatprep.mubr.f32.mxu0 %v1921
      %2813 = vmatmul.mubr.f32.gmra.mrb[0].mxu0 %v1405
      %v2814 = vpop.f32.mrb[0].mxu0
      %v2815 = vadd.f32 0.0, %v2814
      %v2816 = vpop.f32.mrb[0].mxu0
      %2817 = vmatprep.mubr.f32.mxu0 %v1924
      %2818 = vmatmul.mubr.f32.gmra.mrb[0].mxu0 %v1407
      %v2819 = vpop.f32.mrb[0].mxu0
      %v2820 = vadd.f32 0.0, %v2819
      %v2821 = vpop.f32.mrb[0].mxu0
      %2822 = vmatprep.mubr.f32.mxu0 %v1927
      %2823 = vmatmul.mubr.f32.gmra.mrb[0].mxu0 %v1409
      %v2824 = vpop.f32.mrb[0].mxu0
      %v2825 = vadd.f32 0.0, %v2824
      %v2826 = vpop.f32.mrb[0].mxu0
      %2827 = vmatprep.mubr.f32.mxu0 %v1930
      %2828 = vmatmul.mubr.f32.gmra.mrb[0].mxu0 %v1411
      %v2829 = vpop.f32.mrb[0].mxu0
      %v2830 = vadd.f32 0.0, %v2829
      %v2831 = vpop.f32.mrb[0].mxu0
      %2832 = vmatprep.mubr.f32.mxu0 %v1933
      %2833 = vmatmul.mubr.f32.gmra.mrb[0].mxu0 %v1413
      %v2834 = vpop.f32.mrb[0].mxu0
      %v2835 = vadd.f32 0.0, %v2834
      %v2836 = vpop.f32.mrb[0].mxu0
      %2837 = vmatprep.mubr.f32.mxu0 %v1936
      %2838 = vmatmul.mubr.f32.gmra.mrb[0].mxu0 %v1415
      %v2839 = vpop.f32.mrb[0].mxu0
      %v2840 = vadd.f32 0.0, %v2839
      %v2841 = vpop.f32.mrb[0].mxu0
      %2842 = vmatprep.mubr.f32.mxu0 %v1939
      %2843 = vmatmul.mubr.f32.gmra.mrb[0].mxu0 %v1417
      %v2844 = vpop.f32.mrb[0].mxu0
      %v2845 = vadd.f32 0.0, %v2844
      %v2846 = vpop.f32.mrb[0].mxu0
      %2847 = vmatprep.mubr.f32.mxu0 %v1942
      %2848 = vmatmul.mubr.f32.gmra.mrb[0].mxu0 %v1419
      %v2849 = vpop.f32.mrb[0].mxu0
      %v2850 = vadd.f32 0.0, %v2849
      %v2851 = vpop.f32.mrb[0].mxu0
      %2852 = vmatprep.mubr.f32.mxu0 %v1945
      %2853 = vmatmul.mubr.f32.gmra.mrb[0].mxu0 %v1421
      %v2854 = vpop.f32.mrb[0].mxu0
      %v2855 = vadd.f32 0.0, %v2854
      %v2856 = vpop.f32.mrb[0].mxu0
      %2857 = vmatprep.mubr.f32.mxu0 %v1948
      %2858 = vmatmul.mubr.f32.gmra.mrb[0].mxu0 %v1423
      %v2859 = vpop.f32.mrb[0].mxu0
      %v2860 = vadd.f32 0.0, %v2859
      %v2861 = vpop.f32.mrb[0].mxu0
      %2862 = vmatprep.mubr.f32.mxu0 %v1951
      %2863 = vmatmul.mubr.f32.gmra.mrb[0].mxu0 %v1425
      %v2864 = vpop.f32.mrb[0].mxu0
      %v2865 = vadd.f32 0.0, %v2864
      %v2866 = vpop.f32.mrb[0].mxu0
      %2867 = vmatprep.mubr.f32.mxu0 %v1954
      %2868 = vmatmul.mubr.f32.gmra.mrb[0].mxu0 %v1427
      %v2869 = vpop.f32.mrb[0].mxu0
      %v2870 = vadd.f32 0.0, %v2869
      %v2871 = vpop.f32.mrb[0].mxu0
      %2872 = vmatprep.mubr.f32.mxu0 %v1957
      %2873 = vmatmul.mubr.f32.gmra.mrb[0].mxu0 %v1429
      %v2874 = vpop.f32.mrb[0].mxu0
      %v2875 = vadd.f32 0.0, %v2874
      %v2876 = vpop.f32.mrb[0].mxu0
      %2877 = vmatprep.mubr.f32.mxu0 %v1960
      %2878 = vmatmul.mubr.f32.gmra.mrb[0].mxu0 %v1431
      %v2879 = vpop.f32.mrb[0].mxu0
      %v2880 = vadd.f32 0.0, %v2879
      %v2881 = vpop.f32.mrb[0].mxu0
      %2882 = vmatprep.mubr.f32.mxu0 %v1963
      %2883 = vmatmul.mubr.f32.gmra.mrb[0].mxu0 %v1433
      %v2884 = vpop.f32.mrb[0].mxu0
      %v2885 = vadd.f32 0.0, %v2884
      %v2886 = vpop.f32.mrb[0].mxu0
      %2887 = vmatprep.mubr.f32.mxu0 %v1966
      %2888 = vmatmul.mubr.f32.gmra.mrb[0].mxu0 %v1435
      %v2889 = vpop.f32.mrb[0].mxu0
      %v2890 = vadd.f32 0.0, %v2889
      %v2891 = vpop.f32.mrb[0].mxu0
      %2892 = vmatprep.mubr.f32.mxu0 %v1969
      %2893 = vmatmul.mubr.f32.gmra.mrb[0].mxu0 %v1437
      %v2894 = vpop.f32.mrb[0].mxu0
      %v2895 = vadd.f32 0.0, %v2894
      %v2896 = vpop.f32.mrb[0].mxu0
      %2897 = vmatprep.mubr.f32.mxu0 %v1972
      %2898 = vmatmul.mubr.f32.gmra.mrb[0].mxu0 %v1439
      %v2899 = vpop.f32.mrb[0].mxu0
      %v2900 = vadd.f32 0.0, %v2899
      %v2901 = vpop.f32.mrb[0].mxu0
      %2902 = vmatprep.mubr.f32.mxu0 %v1975
      %2903 = vmatmul.mubr.f32.gmra.mrb[0].mxu0 %v1441
      %v2904 = vpop.f32.mrb[0].mxu0
      %v2905 = vadd.f32 0.0, %v2904
      %v2906 = vpop.f32.mrb[0].mxu0
      %2907 = vmatprep.mubr.f32.mxu0 %v1978
      %2908 = vmatmul.mubr.f32.gmra.mrb[0].mxu0 %v1443
      %v2909 = vpop.f32.mrb[0].mxu0
      %v2910 = vadd.f32 0.0, %v2909
      %v2911 = vpop.f32.mrb[0].mxu0
      %2912 = vmatprep.mubr.f32.mxu0 %v1981
      %2913 = vmatmul.mubr.f32.gmra.mrb[0].mxu0 %v1445
      %v2914 = vpop.f32.mrb[0].mxu0
      %v2915 = vadd.f32 0.0, %v2914
      %v2916 = vpop.f32.mrb[0].mxu0
      %2917 = vmatprep.mubr.f32.mxu0 %v1984
      %2918 = vmatmul.mubr.f32.gmra.mrb[0].mxu0 %v1447
      %v2919 = vpop.f32.mrb[0].mxu0
      %v2920 = vadd.f32 0.0, %v2919
      %v2921 = vpop.f32.mrb[0].mxu0
      %2922 = vmatprep.mubr.f32.mxu0 %v1987
      %2923 = vmatmul.mubr.f32.gmra.mrb[0].mxu0 %v1449
      %v2924 = vpop.f32.mrb[0].mxu0
      %v2925 = vadd.f32 0.0, %v2924
      %v2926 = vpop.f32.mrb[0].mxu0
      %2927 = vmatprep.mubr.f32.mxu0 %v1990
      %2928 = vmatmul.mubr.f32.gmra.mrb[0].mxu0 %v1451
      %v2929 = vpop.f32.mrb[0].mxu0
      %v2930 = vadd.f32 0.0, %v2929
      %v2931 = vpop.f32.mrb[0].mxu0
      %2932 = vmatprep.mubr.f32.mxu0 %v1993
      %2933 = vmatmul.mubr.f32.gmra.mrb[0].mxu0 %v1453
      %v2934 = vpop.f32.mrb[0].mxu0
      %v2935 = vadd.f32 0.0, %v2934
      %v2936 = vpop.f32.mrb[0].mxu0
      %2937 = vmatprep.mubr.f32.mxu0 %v1996
      %2938 = vmatmul.mubr.f32.gmra.mrb[0].mxu0 %v1455
      %v2939 = vpop.f32.mrb[0].mxu0
      %v2940 = vadd.f32 0.0, %v2939
      %v2941 = vpop.f32.mrb[0].mxu0
      %2942 = vmatprep.mubr.f32.mxu0 %v1999
      %2943 = vmatmul.mubr.f32.gmra.mrb[0].mxu0 %v1457
      %v2944 = vpop.f32.mrb[0].mxu0
      %v2945 = vadd.f32 0.0, %v2944
      %v2946 = vpop.f32.mrb[0].mxu0
      %2947 = vmatprep.mubr.f32.mxu0 %v2002
      %2948 = vmatmul.mubr.f32.gmra.mrb[0].mxu0 %v1459
      %v2949 = vpop.f32.mrb[0].mxu0
      %v2950 = vadd.f32 0.0, %v2949
      %v2951 = vpop.f32.mrb[0].mxu0
      %2952 = vmatprep.mubr.f32.mxu0 %v2005
      %2953 = vmatmul.mubr.f32.gmra.mrb[0].mxu0 %v1461
      %v2954 = vpop.f32.mrb[0].mxu0
      %v2955 = vadd.f32 0.0, %v2954
      %v2956 = vpop.f32.mrb[0].mxu0
      %2957 = vmatprep.mubr.f32.mxu0 %v2008
      %2958 = vmatmul.mubr.f32.gmra.mrb[0].mxu0 %v1463
      %v2959 = vpop.f32.mrb[0].mxu0
      %v2960 = vadd.f32 0.0, %v2959
      %v2961 = vpop.f32.mrb[0].mxu0
      %2962 = vmatprep.mubr.f32.mxu0 %v2011
      %2963 = vmatmul.mubr.f32.gmra.mrb[0].mxu0 %v1465
      %v2964 = vpop.f32.mrb[0].mxu0
      %v2965 = vadd.f32 0.0, %v2964
      %v2966 = vpop.f32.mrb[0].mxu0
      %2967 = vmatprep.mubr.f32.mxu0 %v2014
      %2968 = vmatmul.mubr.f32.gmra.mrb[0].mxu0 %v1467
      %v2969 = vpop.f32.mrb[0].mxu0
      %v2970 = vadd.f32 0.0, %v2969
      %v2971 = vpop.f32.mrb[0].mxu0
      %2972 = vmatprep.mubr.f32.mxu0 %v2017
      %2973 = vmatmul.mubr.f32.gmra.mrb[0].mxu0 %v1469
      %v2974 = vpop.f32.mrb[0].mxu0
      %v2975 = vadd.f32 0.0, %v2974
      %v2976 = vpop.f32.mrb[0].mxu0
      %2977 = vmatprep.mubr.f32.mxu0 %v2020
      %2978 = vmatmul.mubr.f32.gmra.mrb[0].mxu0 %v1471
      %v2979 = vpop.f32.mrb[0].mxu0
      %v2980 = vadd.f32 0.0, %v2979
      %v2981 = vpop.f32.mrb[0].mxu0
      %2982 = vmatprep.mubr.f32.mxu0 %v2023
      %2983 = vmatmul.mubr.f32.gmra.mrb[0].mxu0 %v1473
      %v2984 = vpop.f32.mrb[0].mxu0
      %v2985 = vadd.f32 0.0, %v2984
      %v2986 = vpop.f32.mrb[0].mxu0
      %2987 = vmatprep.mubr.f32.mxu0 %v2026
      %2988 = vmatmul.mubr.f32.gmra.mrb[0].mxu0 %v1475
      %v2989 = vpop.f32.mrb[0].mxu0
      %v2990 = vadd.f32 0.0, %v2989
      %v2991 = vpop.f32.mrb[0].mxu0
      %2992 = vmatprep.mubr.f32.mxu0 %v2029
      %2993 = vmatmul.mubr.f32.gmra.mrb[0].mxu0 %v1477
      %v2994 = vpop.f32.mrb[0].mxu0
      %v2995 = vadd.f32 0.0, %v2994
      %v2996 = vpop.f32.mrb[0].mxu0
      %2997 = vmatprep.mubr.f32.mxu0 %v2032
      %2998 = vmatmul.mubr.f32.gmra.mrb[0].mxu0 %v1479
      %v2999 = vpop.f32.mrb[0].mxu0
      %v3000 = vadd.f32 0.0, %v2999
      %v3001 = vpop.f32.mrb[0].mxu0
      %3002 = vmatprep.mubr.f32.mxu0 %v2035
      %3003 = vmatmul.mubr.f32.gmra.mrb[0].mxu0 %v1481
      %v3004 = vpop.f32.mrb[0].mxu0
      %v3005 = vadd.f32 0.0, %v3004
      %v3006 = vpop.f32.mrb[0].mxu0
      %3007 = vmatprep.mubr.f32.mxu0 %v2038
      %3008 = vmatmul.mubr.f32.gmra.mrb[0].mxu0 %v1483
      %v3009 = vpop.f32.mrb[0].mxu0
      %v3010 = vadd.f32 0.0, %v3009
      %v3011 = vpop.f32.mrb[0].mxu0
      %3012 = vmatprep.mubr.f32.mxu0 %v2041
      %3013 = vmatmul.mubr.f32.gmra.mrb[0].mxu0 %v1485
      %v3014 = vpop.f32.mrb[0].mxu0
      %v3015 = vadd.f32 0.0, %v3014
      %v3016 = vpop.f32.mrb[0].mxu0
      %3017 = vmatprep.mubr.f32.mxu0 %v2044
      %3018 = vmatmul.mubr.f32.gmra.mrb[0].mxu0 %v1487
      %v3019 = vpop.f32.mrb[0].mxu0
      %v3020 = vadd.f32 0.0, %v3019
      %v3021 = vpop.f32.mrb[0].mxu0
      %3022 = vmatprep.mubr.f32.mxu0 %v2047
      %3023 = vmatmul.mubr.f32.gmra.mrb[0].mxu0 %v1489
      %v3024 = vpop.f32.mrb[0].mxu0
      %v3025 = vadd.f32 0.0, %v3024
      %v3026 = vpop.f32.mrb[0].mxu0
      %3027 = vmatprep.mubr.f32.mxu0 %v2050
      %3028 = vmatmul.mubr.f32.gmra.mrb[0].mxu0 %v1491
      %v3029 = vpop.f32.mrb[0].mxu0
      %v3030 = vadd.f32 0.0, %v3029
      %v3031 = vpop.f32.mrb[0].mxu0
      %3032 = vmatprep.mubr.f32.mxu0 %v2053
      %3033 = vmatmul.mubr.f32.gmra.mrb[0].mxu0 %v1493
      %v3034 = vpop.f32.mrb[0].mxu0
      %v3035 = vadd.f32 0.0, %v3034
      %v3036 = vpop.f32.mrb[0].mxu0
      %3037 = vmatprep.mubr.f32.mxu0 %v2056
      %3038 = vmatmul.mubr.f32.gmra.mrb[0].mxu0 %v1495
      %v3039 = vpop.f32.mrb[0].mxu0
      %v3040 = vadd.f32 0.0, %v3039
      %v3041 = vpop.f32.mrb[0].mxu0
      %3042 = vmatprep.mubr.f32.mxu0 %v2059
      %3043 = vmatmul.mubr.f32.gmra.mrb[0].mxu0 %v1497
      %v3044 = vpop.f32.mrb[0].mxu0
      %v3045 = vadd.f32 0.0, %v3044
      %v3046 = vpop.f32.mrb[0].mxu0
      %3047 = vmatprep.mubr.f32.mxu0 %v2062
      %3048 = vmatmul.mubr.f32.gmra.mrb[0].mxu0 %v1499
      %v3049 = vpop.f32.mrb[0].mxu0
      %v3050 = vadd.f32 0.0, %v3049
      %v3051 = vpop.f32.mrb[0].mxu0
      %3052 = vmatprep.mubr.f32.mxu0 %v2065
      %3053 = vmatmul.mubr.f32.gmra.mrb[0].mxu0 %v1501
      %v3054 = vpop.f32.mrb[0].mxu0
      %v3055 = vadd.f32 0.0, %v3054
      %v3056 = vpop.f32.mrb[0].mxu0
      %3057 = vmatprep.mubr.f32.mxu0 %v2068
      %3058 = vmatmul.mubr.f32.gmra.mrb[0].mxu0 %v1503
      %v3059 = vpop.f32.mrb[0].mxu0
      %v3060 = vadd.f32 0.0, %v3059
      %v3061 = vpop.f32.mrb[0].mxu0
      %3062 = vmatprep.mubr.f32.mxu0 %v2071
      %3063 = vmatmul.mubr.f32.gmra.mrb[0].mxu0 %v1505
      %v3064 = vpop.f32.mrb[0].mxu0
      %v3065 = vadd.f32 0.0, %v3064
      %v3066 = vpop.f32.mrb[0].mxu0
      %3067 = vmatprep.mubr.f32.mxu0 %v2074
      %3068 = vmatmul.mubr.f32.gmra.mrb[0].mxu0 %v1507
      %v3069 = vpop.f32.mrb[0].mxu0
      %v3070 = vadd.f32 0.0, %v3069
      %v3071 = vpop.f32.mrb[0].mxu0
      %3072 = vmatprep.mubr.f32.mxu0 %v2077
      %3073 = vmatmul.mubr.f32.gmra.mrb[0].mxu0 %v1509
      %v3074 = vpop.f32.mrb[0].mxu0
      %v3075 = vadd.f32 0.0, %v3074
      %v3076 = vpop.f32.mrb[0].mxu0
      %3077 = vmatprep.mubr.f32.mxu0 %v2080
      %3078 = vmatmul.mubr.f32.gmra.mrb[0].mxu0 %v1511
      %v3079 = vpop.f32.mrb[0].mxu0
      %v3080 = vadd.f32 0.0, %v3079
      %v3081 = vpop.f32.mrb[0].mxu0
      %3082 = vmatprep.mubr.f32.mxu0 %v2083
      %3083 = vmatmul.mubr.f32.gmra.mrb[0].mxu0 %v1513
      %v3084 = vpop.f32.mrb[0].mxu0
      %v3085 = vadd.f32 0.0, %v3084
      %v3086 = vpop.f32.mrb[0].mxu0
      %3087 = vmatprep.mubr.f32.mxu0 %v2086
      %3088 = vmatmul.mubr.f32.gmra.mrb[0].mxu0 %v1515
      %v3089 = vpop.f32.mrb[0].mxu0
      %v3090 = vadd.f32 0.0, %v3089
      %v3091 = vpop.f32.mrb[0].mxu0
      %3092 = vmatprep.mubr.f32.mxu0 %v2089
      %3093 = vmatmul.mubr.f32.gmra.mrb[0].mxu0 %v1517
      %v3094 = vpop.f32.mrb[0].mxu0
      %v3095 = vadd.f32 0.0, %v3094
      %v3096 = vpop.f32.mrb[0].mxu0
      %3097 = vmatprep.mubr.f32.mxu0 %v2092
      %3098 = vmatmul.mubr.f32.gmra.mrb[0].mxu0 %v1519
      %v3099 = vpop.f32.mrb[0].mxu0
      %v3100 = vadd.f32 0.0, %v3099
      %v3101 = vpop.f32.mrb[0].mxu0
      %3102 = vmatprep.mubr.f32.mxu0 %v2095
      %3103 = vmatmul.mubr.f32.gmra.mrb[0].mxu0 %v1521
      %v3104 = vpop.f32.mrb[0].mxu0
      %v3105 = vadd.f32 0.0, %v3104
      %v3106 = vpop.f32.mrb[0].mxu0
      %3107 = vmatprep.mubr.f32.mxu0 %v2098
      %3108 = vmatmul.mubr.f32.gmra.mrb[0].mxu0 %v1523
      %v3109 = vpop.f32.mrb[0].mxu0
      %v3110 = vadd.f32 0.0, %v3109
      %v3111 = vpop.f32.mrb[0].mxu0
      %3112 = vmatprep.mubr.f32.mxu0 %v2101
      %3113 = vmatmul.mubr.f32.gmra.mrb[0].mxu0 %v1525
      %v3114 = vpop.f32.mrb[0].mxu0
      %v3115 = vadd.f32 0.0, %v3114
      %v3116 = vpop.f32.mrb[0].mxu0
      %3117 = vmatprep.mubr.f32.mxu0 %v2104
      %3118 = vmatmul.mubr.f32.gmra.mrb[0].mxu0 %v1527
      %v3119 = vpop.f32.mrb[0].mxu0
      %v3120 = vadd.f32 0.0, %v3119
      %v3121 = vpop.f32.mrb[0].mxu0
      %3122 = vmatprep.mubr.f32.mxu0 %v2107
      %3123 = vmatmul.mubr.f32.gmra.mrb[0].mxu0 %v1529
      %v3124 = vpop.f32.mrb[0].mxu0
      %v3125 = vadd.f32 0.0, %v3124
      %v3126 = vpop.f32.mrb[0].mxu0
      %3127 = vmatprep.mubr.f32.mxu0 %v2110
      %3128 = vmatmul.mubr.f32.gmra.mrb[0].mxu0 %v1531
      %v3129 = vpop.f32.mrb[0].mxu0
      %v3130 = vadd.f32 0.0, %v3129
      %v3131 = vpop.f32.mrb[0].mxu0
      %3132 = vmatprep.mubr.f32.mxu0 %v2113
      %3133 = vmatmul.mubr.f32.gmra.mrb[0].mxu0 %v1533
      %v3134 = vpop.f32.mrb[0].mxu0
      %v3135 = vadd.f32 0.0, %v3134
      %v3136 = vpop.f32.mrb[0].mxu0
      %3137 = vmatprep.mubr.f32.mxu0 %v2116
      %3138 = vmatmul.mubr.f32.gmra.mrb[0].mxu0 %v1535
      %v3139 = vpop.f32.mrb[0].mxu0
      %v3140 = vadd.f32 0.0, %v3139
      %v3141 = vpop.f32.mrb[0].mxu0
      %3142 = vmatprep.mubr.f32.mxu0 %v2119
      %3143 = vmatmul.mubr.f32.gmra.mrb[0].mxu0 %v1537
      %v3144 = vpop.f32.mrb[0].mxu0
      %v3145 = vadd.f32 0.0, %v3144
      %v3146 = vpop.f32.mrb[0].mxu0
      %3147 = vmatprep.mubr.f32.mxu0 %v2122
      %3148 = vmatmul.mubr.f32.gmra.mrb[0].mxu0 %v1539
      %v3149 = vpop.f32.mrb[0].mxu0
      %v3150 = vadd.f32 0.0, %v3149
      %v3151 = vpop.f32.mrb[0].mxu0
      %3152 = vmatprep.mubr.f32.mxu0 %v2125
      %3153 = vmatmul.mubr.f32.gmra.mrb[0].mxu0 %v1541
      %v3154 = vpop.f32.mrb[0].mxu0
      %v3155 = vadd.f32 0.0, %v3154
      %v3156 = vpop.f32.mrb[0].mxu0
      %3157 = vmatprep.mubr.f32.mxu0 %v2128
      %3158 = vmatmul.mubr.f32.gmra.mrb[0].mxu0 %v1543
      %v3159 = vpop.f32.mrb[0].mxu0
      %v3160 = vadd.f32 0.0, %v3159
      %v3161 = vpop.f32.mrb[0].mxu0
      %3162 = vmatprep.mubr.f32.mxu0 %v2131
      %3163 = vmatmul.mubr.f32.gmra.mrb[0].mxu0 %v1545
      %v3164 = vpop.f32.mrb[0].mxu0
      %v3165 = vadd.f32 0.0, %v3164
      %v3166 = vpop.f32.mrb[0].mxu0
      %3167 = vmatprep.mubr.f32.mxu0 %v2134
      %3168 = vmatmul.mubr.f32.gmra.mrb[0].mxu0 %v1547
      %v3169 = vpop.f32.mrb[0].mxu0
      %v3170 = vadd.f32 0.0, %v3169
      %v3171 = vpop.f32.mrb[0].mxu0
      %3172 = vmatprep.mubr.f32.mxu0 %v2137
      %3173 = vmatmul.mubr.f32.gmra.mrb[0].mxu0 %v1549
      %v3174 = vpop.f32.mrb[0].mxu0
      %v3175 = vadd.f32 0.0, %v3174
      %v3176 = vpop.f32.mrb[0].mxu0
      %3177 = vmatprep.mubr.f32.mxu0 %v2140
      %3178 = vmatmul.mubr.f32.gmra.mrb[0].mxu0 %v1551
      %v3179 = vpop.f32.mrb[0].mxu0
      %v3180 = vadd.f32 0.0, %v3179
      %v3181 = vpop.f32.mrb[0].mxu0
      %3182 = vmatprep.mubr.f32.mxu0 %v2143
      %3183 = vmatmul.mubr.f32.gmra.mrb[0].mxu0 %v1553
      %v3184 = vpop.f32.mrb[0].mxu0
      %v3185 = vadd.f32 0.0, %v3184
      %v3186 = vpop.f32.mrb[0].mxu0
      %3187 = vmatprep.mubr.f32.mxu0 %v2146
      %3188 = vmatmul.mubr.f32.gmra.mrb[0].mxu0 %v1555
      %v3189 = vpop.f32.mrb[0].mxu0
      %v3190 = vadd.f32 0.0, %v3189
      %v3191 = vpop.f32.mrb[0].mxu0
      %3192 = vmatprep.mubr.f32.mxu0 %v2149
      %3193 = vmatmul.mubr.f32.gmra.mrb[0].mxu0 %v1557
      %v3194 = vpop.f32.mrb[0].mxu0
      %v3195 = vadd.f32 0.0, %v3194
      %v3196 = vpop.f32.mrb[0].mxu0
      %3197 = vmatprep.mubr.f32.mxu0 %v2152
      %3198 = vmatmul.mubr.f32.gmra.mrb[0].mxu0 %v1559
      %v3199 = vpop.f32.mrb[0].mxu0
      %v3200 = vadd.f32 0.0, %v3199
      %v3201 = vpop.f32.mrb[0].mxu0
      %3202 = vmatprep.mubr.f32.mxu0 %v2155
      %3203 = vmatmul.mubr.f32.gmra.mrb[0].mxu0 %v1561
      %v3204 = vpop.f32.mrb[0].mxu0
      %v3205 = vadd.f32 0.0, %v3204
      %v3206 = vpop.f32.mrb[0].mxu0
      %3207 = vmatprep.mubr.f32.mxu0 %v2158
      %3208 = vmatmul.mubr.f32.gmra.mrb[0].mxu0 %v1563
      %v3209 = vpop.f32.mrb[0].mxu0
      %v3210 = vadd.f32 0.0, %v3209
      %v3211 = vpop.f32.mrb[0].mxu0
      %3212 = vmatprep.mubr.f32.mxu0 %v2161
      %3213 = vmatmul.mubr.f32.gmra.mrb[0].mxu0 %v1565
      %v3214 = vpop.f32.mrb[0].mxu0
      %v3215 = vadd.f32 0.0, %v3214
      %v3216 = vpop.f32.mrb[0].mxu0
      %3217 = vmatprep.mubr.f32.mxu0 %v2164
      %3218 = vmatmul.mubr.f32.gmra.mrb[0].mxu0 %v1567
      %v3219 = vpop.f32.mrb[0].mxu0
      %v3220 = vadd.f32 0.0, %v3219
      %v3221 = vpop.f32.mrb[0].mxu0
      %3222 = vmatprep.mubr.f32.mxu0 %v2167
      %3223 = vmatmul.mubr.f32.gmra.mrb[0].mxu0 %v1569
      %v3224 = vpop.f32.mrb[0].mxu0
      %v3225 = vadd.f32 0.0, %v3224
      %v3226 = vpop.f32.mrb[0].mxu0
      %3227 = vmatprep.mubr.f32.mxu0 %v2170
      %3228 = vmatmul.mubr.f32.gmra.mrb[0].mxu0 %v1571
      %v3229 = vpop.f32.mrb[0].mxu0
      %v3230 = vadd.f32 0.0, %v3229
      %v3231 = vpop.f32.mrb[0].mxu0
      %3232 = vmatprep.mubr.f32.mxu0 %v2173
      %3233 = vmatmul.mubr.f32.gmra.mrb[0].mxu0 %v1573
      %v3234 = vpop.f32.mrb[0].mxu0
      %v3235 = vadd.f32 0.0, %v3234
      %v3236 = vpop.f32.mrb[0].mxu0
      %3237 = vmatprep.mubr.f32.mxu0 %v2176
      %3238 = vmatmul.mubr.f32.gmra.mrb[0].mxu0 %v1575
      %v3239 = vpop.f32.mrb[0].mxu0
      %v3240 = vadd.f32 0.0, %v3239
      %v3241 = vpop.f32.mrb[0].mxu0
      %3242 = vdwg.mxu0
      %v3243 = vld [vmem:[%s4] sm:$0xff]
      %v3244 = vld [vmem:[%s4 + $0x8] sm:$0x3]
      %s3245 = scalar_lea.vmem %s4, 16
      %v3246 = vld [vmem:[%s3245] sm:$0xff]
      %v3247 = vld [vmem:[%s3245 + $0x8] sm:$0x3]
      %vm3248 = vcmask 80896
      %v3250 = vsel %vm3248, %v2285, 0
      %v3253 = vsel %vm3248, %v2290, 0
      %v3256 = vsel %vm3248, %v2295, 0
      %v3259 = vsel %vm3248, %v2300, 0
      %v3262 = vsel %vm3248, %v2305, 0
      %v3265 = vsel %vm3248, %v2310, 0
      %v3268 = vsel %vm3248, %v2315, 0
      %v3271 = vsel %vm3248, %v2320, 0
      %vm3273 = vcmask 1041408
      %v3275 = vsel %vm3273, %v3247, 0
      %3277 = vmatprep.subr.mxu0 0.0
      %3278 = vmatpush1.msra.mxu0 %v3246
      %3279 = vmatprep.subr.mxu0 0.0
      %3280 = vmatpush1.msra.mxu0 %v3275
      %3281 = vmatprep.subr.mxu0 0.0
      %3282 = vmatpush1.msra.mxu0 0.0
      %3283 = vmatprep.subr.mxu0 0.0
      %3284 = vmatpush1.msra.mxu0 0.0
      %3285 = vmatprep.subr.mxu0 0.0
      %3286 = vmatpush1.msra.mxu0 0.0
      %3287 = vmatprep.subr.mxu0 0.0
      %3288 = vmatpush1.msra.mxu0 0.0
      %3289 = vmatprep.subr.mxu0 0.0
      %3290 = vmatpush1.msra.mxu0 0.0
      %3291 = vmatprep.subr.mxu0 0.0
      %3292 = vmatpush1.msra.mxu0 0.0
      %3293 = vmatprep.subr.mxu0 0.0
      %3294 = vmatpush1.msra.mxu0 0.0
      %3295 = vmatprep.subr.mxu0 0.0
      %3296 = vmatpush1.msra.mxu0 0.0
      %3297 = vmatprep.subr.mxu0 0.0
      %3298 = vmatpush1.msra.mxu0 0.0
      %3299 = vmatprep.subr.mxu0 0.0
      %3300 = vmatpush1.msra.mxu0 0.0
      %3301 = vmatprep.subr.mxu0 0.0
      %3302 = vmatpush1.msra.mxu0 0.0
      %3303 = vmatprep.subr.mxu0 0.0
      %3304 = vmatpush1.msra.mxu0 0.0
      %3305 = vmatprep.subr.mxu0 0.0
      %3306 = vmatpush1.msra.mxu0 0.0
      %3307 = vmatprep.subr.mxu0 0.0
      %3308 = vmatpush1.msra.mxu0 0.0
      %3309 = vmatprep.subr.mxu0 0.0
      %3310 = vmatpush1.msra.mxu0 0.0
      %3311 = vmatprep.subr.mxu0 0.0
      %3312 = vmatpush1.msra.mxu0 0.0
      %3313 = vmatprep.subr.mxu0 0.0
      %3314 = vmatpush1.msra.mxu0 0.0
      %3315 = vmatprep.subr.mxu0 0.0
      %3316 = vmatpush1.msra.mxu0 0.0
      %3317 = vmatprep.subr.mxu0 0.0
      %3318 = vmatpush1.msra.mxu0 0.0
      %3319 = vmatprep.subr.mxu0 0.0
      %3320 = vmatpush1.msra.mxu0 0.0
      %3321 = vmatprep.subr.mxu0 0.0
      %3322 = vmatpush1.msra.mxu0 0.0
      %3323 = vmatprep.subr.mxu0 0.0
      %3324 = vmatpush1.msra.mxu0 0.0
      %3325 = vmatprep.subr.mxu0 0.0
      %3326 = vmatpush1.msra.mxu0 0.0
      %3327 = vmatprep.subr.mxu0 0.0
      %3328 = vmatpush1.msra.mxu0 0.0
      %3329 = vmatprep.subr.mxu0 0.0
      %3330 = vmatpush1.msra.mxu0 0.0
      %3331 = vmatprep.subr.mxu0 0.0
      %3332 = vmatpush1.msra.mxu0 0.0
      %3333 = vmatprep.subr.mxu0 0.0
      %3334 = vmatpush1.msra.mxu0 0.0
      %3335 = vmatprep.subr.mxu0 0.0
      %3336 = vmatpush1.msra.mxu0 0.0
      %3337 = vmatprep.subr.mxu0 0.0
      %3338 = vmatpush1.msra.mxu0 0.0
      %3339 = vmatprep.subr.mxu0 0.0
      %3340 = vmatpush1.msra.mxu0 0.0
      %3341 = vmatprep.mubr.f32.mxu0 0.0
      %3342 = vmatmul.mubr.f32.gmra.mrb[0].mxu0 %v3250
      %v3343 = vpop.f32.mrb[0].mxu0
      %v3344 = vadd.f32 0.0, %v3343
      %v3345 = vpop.f32.mrb[0].mxu0
      %3346 = vmatprep.mubr.f32.mxu0 0.0
      %3347 = vmatmul.mubr.f32.gmra.mrb[0].mxu0 %v3253
      %v3348 = vpop.f32.mrb[0].mxu0
      %v3349 = vadd.f32 0.0, %v3348
      %v3350 = vpop.f32.mrb[0].mxu0
      %3351 = vmatprep.mubr.f32.mxu0 0.0
      %3352 = vmatmul.mubr.f32.gmra.mrb[0].mxu0 %v3256
      %v3353 = vpop.f32.mrb[0].mxu0
      %v3354 = vadd.f32 0.0, %v3353
      %v3355 = vpop.f32.mrb[0].mxu0
      %3356 = vmatprep.mubr.f32.mxu0 0.0
      %3357 = vmatmul.mubr.f32.gmra.mrb[0].mxu0 %v3259
      %v3358 = vpop.f32.mrb[0].mxu0
      %v3359 = vadd.f32 0.0, %v3358
      %v3360 = vpop.f32.mrb[0].mxu0
      %3361 = vmatprep.mubr.f32.mxu0 0.0
      %3362 = vmatmul.mubr.f32.gmra.mrb[0].mxu0 %v3262
      %v3363 = vpop.f32.mrb[0].mxu0
      %v3364 = vadd.f32 0.0, %v3363
      %v3365 = vpop.f32.mrb[0].mxu0
      %3366 = vmatprep.mubr.f32.mxu0 0.0
      %3367 = vmatmul.mubr.f32.gmra.mrb[0].mxu0 %v3265
      %v3368 = vpop.f32.mrb[0].mxu0
      %v3369 = vadd.f32 0.0, %v3368
      %v3370 = vpop.f32.mrb[0].mxu0
      %3371 = vmatprep.mubr.f32.mxu0 0.0
      %3372 = vmatmul.mubr.f32.gmra.mrb[0].mxu0 %v3268
      %v3373 = vpop.f32.mrb[0].mxu0
      %v3374 = vadd.f32 0.0, %v3373
      %v3375 = vpop.f32.mrb[0].mxu0
      %3376 = vmatprep.mubr.f32.mxu0 0.0
      %3377 = vmatmul.mubr.f32.gmra.mrb[0].mxu0 %v3271
      %v3378 = vpop.f32.mrb[0].mxu0
      %v3379 = vadd.f32 0.0, %v3378
      %v3380 = vpop.f32.mrb[0].mxu0
      %3381 = vdwg.mxu0
      %v3383 = vsel %vm3248, %v2245, 0
      %v3386 = vsel %vm3248, %v2250, 0
      %v3389 = vsel %vm3248, %v2255, 0
      %v3392 = vsel %vm3248, %v2260, 0
      %v3395 = vsel %vm3248, %v2265, 0
      %v3398 = vsel %vm3248, %v2270, 0
      %v3401 = vsel %vm3248, %v2275, 0
      %v3404 = vsel %vm3248, %v2280, 0
      %v3407 = vsel %vm3273, %v3244, 0
      %3409 = vmatprep.subr.mxu0 0.0
      %3410 = vmatpush1.msra.mxu0 %v3243
      %3411 = vmatprep.subr.mxu0 0.0
      %3412 = vmatpush1.msra.mxu0 %v3407
      %3413 = vmatprep.subr.mxu0 0.0
      %3414 = vmatpush1.msra.mxu0 0.0
      %3415 = vmatprep.subr.mxu0 0.0
      %3416 = vmatpush1.msra.mxu0 0.0
      %3417 = vmatprep.subr.mxu0 0.0
      %3418 = vmatpush1.msra.mxu0 0.0
      %3419 = vmatprep.subr.mxu0 0.0
      %3420 = vmatpush1.msra.mxu0 0.0
      %3421 = vmatprep.subr.mxu0 0.0
      %3422 = vmatpush1.msra.mxu0 0.0
      %3423 = vmatprep.subr.mxu0 0.0
      %3424 = vmatpush1.msra.mxu0 0.0
      %3425 = vmatprep.subr.mxu0 0.0
      %3426 = vmatpush1.msra.mxu0 0.0
      %3427 = vmatprep.subr.mxu0 0.0
      %3428 = vmatpush1.msra.mxu0 0.0
      %3429 = vmatprep.subr.mxu0 0.0
      %3430 = vmatpush1.msra.mxu0 0.0
      %3431 = vmatprep.subr.mxu0 0.0
      %3432 = vmatpush1.msra.mxu0 0.0
      %3433 = vmatprep.subr.mxu0 0.0
      %3434 = vmatpush1.msra.mxu0 0.0
      %3435 = vmatprep.subr.mxu0 0.0
      %3436 = vmatpush1.msra.mxu0 0.0
      %3437 = vmatprep.subr.mxu0 0.0
      %3438 = vmatpush1.msra.mxu0 0.0
      %3439 = vmatprep.subr.mxu0 0.0
      %3440 = vmatpush1.msra.mxu0 0.0
      %3441 = vmatprep.subr.mxu0 0.0
      %3442 = vmatpush1.msra.mxu0 0.0
      %3443 = vmatprep.subr.mxu0 0.0
      %3444 = vmatpush1.msra.mxu0 0.0
      %3445 = vmatprep.subr.mxu0 0.0
      %3446 = vmatpush1.msra.mxu0 0.0
      %3447 = vmatprep.subr.mxu0 0.0
      %3448 = vmatpush1.msra.mxu0 0.0
      %3449 = vmatprep.subr.mxu0 0.0
      %3450 = vmatpush1.msra.mxu0 0.0
      %3451 = vmatprep.subr.mxu0 0.0
      %3452 = vmatpush1.msra.mxu0 0.0
      %3453 = vmatprep.subr.mxu0 0.0
      %3454 = vmatpush1.msra.mxu0 0.0
      %3455 = vmatprep.subr.mxu0 0.0
      %3456 = vmatpush1.msra.mxu0 0.0
      %3457 = vmatprep.subr.mxu0 0.0
      %3458 = vmatpush1.msra.mxu0 0.0
      %3459 = vmatprep.subr.mxu0 0.0
      %3460 = vmatpush1.msra.mxu0 0.0
      %3461 = vmatprep.subr.mxu0 0.0
      %3462 = vmatpush1.msra.mxu0 0.0
      %3463 = vmatprep.subr.mxu0 0.0
      %3464 = vmatpush1.msra.mxu0 0.0
      %3465 = vmatprep.subr.mxu0 0.0
      %3466 = vmatpush1.msra.mxu0 0.0
      %3467 = vmatprep.subr.mxu0 0.0
      %3468 = vmatpush1.msra.mxu0 0.0
      %3469 = vmatprep.subr.mxu0 0.0
      %3470 = vmatpush1.msra.mxu0 0.0
      %3471 = vmatprep.subr.mxu0 0.0
      %3472 = vmatpush1.msra.mxu0 0.0
      %3473 = vmatprep.mubr.f32.mxu0 0.0
      %3474 = vmatmul.mubr.f32.gmra.mrb[0].mxu0 %v3383
      %v3475 = vpop.f32.mrb[0].mxu0
      %v3476 = vadd.f32 %v3344, %v3475
      %v3477 = vpop.f32.mrb[0].mxu0
      %3478 = vmatprep.mubr.f32.mxu0 0.0
      %3479 = vmatmul.mubr.f32.gmra.mrb[0].mxu0 %v3386
      %v3480 = vpop.f32.mrb[0].mxu0
      %v3481 = vadd.f32 %v3349, %v3480
      %v3482 = vpop.f32.mrb[0].mxu0
      %3483 = vmatprep.mubr.f32.mxu0 0.0
      %3484 = vmatmul.mubr.f32.gmra.mrb[0].mxu0 %v3389
      %v3485 = vpop.f32.mrb[0].mxu0
      %v3486 = vadd.f32 %v3354, %v3485
      %v3487 = vpop.f32.mrb[0].mxu0
      %3488 = vmatprep.mubr.f32.mxu0 0.0
      %3489 = vmatmul.mubr.f32.gmra.mrb[0].mxu0 %v3392
      %v3490 = vpop.f32.mrb[0].mxu0
      %v3491 = vadd.f32 %v3359, %v3490
      %v3492 = vpop.f32.mrb[0].mxu0
      %3493 = vmatprep.mubr.f32.mxu0 0.0
      %3494 = vmatmul.mubr.f32.gmra.mrb[0].mxu0 %v3395
      %v3495 = vpop.f32.mrb[0].mxu0
      %v3496 = vadd.f32 %v3364, %v3495
      %v3497 = vpop.f32.mrb[0].mxu0
      %3498 = vmatprep.mubr.f32.mxu0 0.0
      %3499 = vmatmul.mubr.f32.gmra.mrb[0].mxu0 %v3398
      %v3500 = vpop.f32.mrb[0].mxu0
      %v3501 = vadd.f32 %v3369, %v3500
      %v3502 = vpop.f32.mrb[0].mxu0
      %3503 = vmatprep.mubr.f32.mxu0 0.0
      %3504 = vmatmul.mubr.f32.gmra.mrb[0].mxu0 %v3401
      %v3505 = vpop.f32.mrb[0].mxu0
      %v3506 = vadd.f32 %v3374, %v3505
      %v3507 = vpop.f32.mrb[0].mxu0
      %3508 = vmatprep.mubr.f32.mxu0 0.0
      %3509 = vmatmul.mubr.f32.gmra.mrb[0].mxu0 %v3404
      %v3510 = vpop.f32.mrb[0].mxu0
      %v3511 = vadd.f32 %v3379, %v3510
      %v3512 = vpop.f32.mrb[0].mxu0
      %3513 = vdwg.mxu0
      %s3514 = scalar_lea.vmem %s4, 32
      %v3515 = vld [vmem:[%s3514] sm:$0xff]
      %v3516 = vld [vmem:[%s3514 + $0x8] sm:$0x3]
      %v3518 = vsel %vm3248, %v2325, 0
      %v3521 = vsel %vm3248, %v2330, 0
      %v3524 = vsel %vm3248, %v2335, 0
      %v3527 = vsel %vm3248, %v2340, 0
      %v3530 = vsel %vm3248, %v2345, 0
      %v3533 = vsel %vm3248, %v2350, 0
      %v3536 = vsel %vm3248, %v2355, 0
      %v3539 = vsel %vm3248, %v2360, 0
      %v3542 = vsel %vm3273, %v3516, 0
      %3544 = vmatprep.subr.mxu0 0.0
      %3545 = vmatpush1.msra.mxu0 %v3515
      %3546 = vmatprep.subr.mxu0 0.0
      %3547 = vmatpush1.msra.mxu0 %v3542
      %3548 = vmatprep.subr.mxu0 0.0
      %3549 = vmatpush1.msra.mxu0 0.0
      %3550 = vmatprep.subr.mxu0 0.0
      %3551 = vmatpush1.msra.mxu0 0.0
      %3552 = vmatprep.subr.mxu0 0.0
      %3553 = vmatpush1.msra.mxu0 0.0
      %3554 = vmatprep.subr.mxu0 0.0
      %3555 = vmatpush1.msra.mxu0 0.0
      %3556 = vmatprep.subr.mxu0 0.0
      %3557 = vmatpush1.msra.mxu0 0.0
      %3558 = vmatprep.subr.mxu0 0.0
      %3559 = vmatpush1.msra.mxu0 0.0
      %3560 = vmatprep.subr.mxu0 0.0
      %3561 = vmatpush1.msra.mxu0 0.0
      %3562 = vmatprep.subr.mxu0 0.0
      %3563 = vmatpush1.msra.mxu0 0.0
      %3564 = vmatprep.subr.mxu0 0.0
      %3565 = vmatpush1.msra.mxu0 0.0
      %3566 = vmatprep.subr.mxu0 0.0
      %3567 = vmatpush1.msra.mxu0 0.0
      %3568 = vmatprep.subr.mxu0 0.0
      %3569 = vmatpush1.msra.mxu0 0.0
      %3570 = vmatprep.subr.mxu0 0.0
      %3571 = vmatpush1.msra.mxu0 0.0
      %3572 = vmatprep.subr.mxu0 0.0
      %3573 = vmatpush1.msra.mxu0 0.0
      %3574 = vmatprep.subr.mxu0 0.0
      %3575 = vmatpush1.msra.mxu0 0.0
      %3576 = vmatprep.subr.mxu0 0.0
      %3577 = vmatpush1.msra.mxu0 0.0
      %3578 = vmatprep.subr.mxu0 0.0
      %3579 = vmatpush1.msra.mxu0 0.0
      %3580 = vmatprep.subr.mxu0 0.0
      %3581 = vmatpush1.msra.mxu0 0.0
      %3582 = vmatprep.subr.mxu0 0.0
      %3583 = vmatpush1.msra.mxu0 0.0
      %3584 = vmatprep.subr.mxu0 0.0
      %3585 = vmatpush1.msra.mxu0 0.0
      %3586 = vmatprep.subr.mxu0 0.0
      %3587 = vmatpush1.msra.mxu0 0.0
      %3588 = vmatprep.subr.mxu0 0.0
      %3589 = vmatpush1.msra.mxu0 0.0
      %3590 = vmatprep.subr.mxu0 0.0
      %3591 = vmatpush1.msra.mxu0 0.0
      %3592 = vmatprep.subr.mxu0 0.0
      %3593 = vmatpush1.msra.mxu0 0.0
      %3594 = vmatprep.subr.mxu0 0.0
      %3595 = vmatpush1.msra.mxu0 0.0
      %3596 = vmatprep.subr.mxu0 0.0
      %3597 = vmatpush1.msra.mxu0 0.0
      %3598 = vmatprep.subr.mxu0 0.0
      %3599 = vmatpush1.msra.mxu0 0.0
      %3600 = vmatprep.subr.mxu0 0.0
      %3601 = vmatpush1.msra.mxu0 0.0
      %3602 = vmatprep.subr.mxu0 0.0
      %3603 = vmatpush1.msra.mxu0 0.0
      %3604 = vmatprep.subr.mxu0 0.0
      %3605 = vmatpush1.msra.mxu0 0.0
      %3606 = vmatprep.subr.mxu0 0.0
      %3607 = vmatpush1.msra.mxu0 0.0
      %3608 = vmatprep.mubr.f32.mxu0 0.0
      %3609 = vmatmul.mubr.f32.gmra.mrb[0].mxu0 %v3518
      %v3610 = vpop.f32.mrb[0].mxu0
      %v3611 = vadd.f32 0.0, %v3610
      %v3612 = vpop.f32.mrb[0].mxu0
      %3613 = vmatprep.mubr.f32.mxu0 0.0
      %3614 = vmatmul.mubr.f32.gmra.mrb[0].mxu0 %v3521
      %v3615 = vpop.f32.mrb[0].mxu0
      %v3616 = vadd.f32 0.0, %v3615
      %v3617 = vpop.f32.mrb[0].mxu0
      %3618 = vmatprep.mubr.f32.mxu0 0.0
      %3619 = vmatmul.mubr.f32.gmra.mrb[0].mxu0 %v3524
      %v3620 = vpop.f32.mrb[0].mxu0
      %v3621 = vadd.f32 0.0, %v3620
      %v3622 = vpop.f32.mrb[0].mxu0
      %3623 = vmatprep.mubr.f32.mxu0 0.0
      %3624 = vmatmul.mubr.f32.gmra.mrb[0].mxu0 %v3527
      %v3625 = vpop.f32.mrb[0].mxu0
      %v3626 = vadd.f32 0.0, %v3625
      %v3627 = vpop.f32.mrb[0].mxu0
      %3628 = vmatprep.mubr.f32.mxu0 0.0
      %3629 = vmatmul.mubr.f32.gmra.mrb[0].mxu0 %v3530
      %v3630 = vpop.f32.mrb[0].mxu0
      %v3631 = vadd.f32 0.0, %v3630
      %v3632 = vpop.f32.mrb[0].mxu0
      %3633 = vmatprep.mubr.f32.mxu0 0.0
      %3634 = vmatmul.mubr.f32.gmra.mrb[0].mxu0 %v3533
      %v3635 = vpop.f32.mrb[0].mxu0
      %v3636 = vadd.f32 0.0, %v3635
      %v3637 = vpop.f32.mrb[0].mxu0
      %3638 = vmatprep.mubr.f32.mxu0 0.0
      %3639 = vmatmul.mubr.f32.gmra.mrb[0].mxu0 %v3536
      %v3640 = vpop.f32.mrb[0].mxu0
      %v3641 = vadd.f32 0.0, %v3640
      %v3642 = vpop.f32.mrb[0].mxu0
      %3643 = vmatprep.mubr.f32.mxu0 0.0
      %3644 = vmatmul.mubr.f32.gmra.mrb[0].mxu0 %v3539
      %v3645 = vpop.f32.mrb[0].mxu0
      %v3646 = vadd.f32 0.0, %v3645
      %v3647 = vpop.f32.mrb[0].mxu0
      %3648 = vdwg.mxu0
      %v3649 = vadd.f32 %v3476, %v3611
      %v3650 = vadd.f32 %v3481, %v3616
      %v3651 = vadd.f32 %v3486, %v3621
      %v3652 = vadd.f32 %v3491, %v3626
      %v3653 = vadd.f32 %v3496, %v3631
      %v3654 = vadd.f32 %v3501, %v3636
      %v3655 = vadd.f32 %v3506, %v3641
      %v3656 = vadd.f32 %v3511, %v3646
      %s3657 = scalar_lea.vmem %s4, 48
      %v3658 = vld [vmem:[%s3657] sm:$0xff]
      %v3659 = vld [vmem:[%s3657 + $0x8] sm:$0x3]
      %v3661 = vsel %vm3248, %v2365, 0
      %v3664 = vsel %vm3248, %v2370, 0
      %v3667 = vsel %vm3248, %v2375, 0
      %v3670 = vsel %vm3248, %v2380, 0
      %v3673 = vsel %vm3248, %v2385, 0
      %v3676 = vsel %vm3248, %v2390, 0
      %v3679 = vsel %vm3248, %v2395, 0
      %v3682 = vsel %vm3248, %v2400, 0
      %v3685 = vsel %vm3273, %v3659, 0
      %3687 = vmatprep.subr.mxu0 0.0
      %3688 = vmatpush1.msra.mxu0 %v3658
      %3689 = vmatprep.subr.mxu0 0.0
      %3690 = vmatpush1.msra.mxu0 %v3685
      %3691 = vmatprep.subr.mxu0 0.0
      %3692 = vmatpush1.msra.mxu0 0.0
      %3693 = vmatprep.subr.mxu0 0.0
      %3694 = vmatpush1.msra.mxu0 0.0
      %3695 = vmatprep.subr.mxu0 0.0
      %3696 = vmatpush1.msra.mxu0 0.0
      %3697 = vmatprep.subr.mxu0 0.0
      %3698 = vmatpush1.msra.mxu0 0.0
      %3699 = vmatprep.subr.mxu0 0.0
      %3700 = vmatpush1.msra.mxu0 0.0
      %3701 = vmatprep.subr.mxu0 0.0
      %3702 = vmatpush1.msra.mxu0 0.0
      %3703 = vmatprep.subr.mxu0 0.0
      %3704 = vmatpush1.msra.mxu0 0.0
      %3705 = vmatprep.subr.mxu0 0.0
      %3706 = vmatpush1.msra.mxu0 0.0
      %3707 = vmatprep.subr.mxu0 0.0
      %3708 = vmatpush1.msra.mxu0 0.0
      %3709 = vmatprep.subr.mxu0 0.0
      %3710 = vmatpush1.msra.mxu0 0.0
      %3711 = vmatprep.subr.mxu0 0.0
      %3712 = vmatpush1.msra.mxu0 0.0
      %3713 = vmatprep.subr.mxu0 0.0
      %3714 = vmatpush1.msra.mxu0 0.0
      %3715 = vmatprep.subr.mxu0 0.0
      %3716 = vmatpush1.msra.mxu0 0.0
      %3717 = vmatprep.subr.mxu0 0.0
      %3718 = vmatpush1.msra.mxu0 0.0
      %3719 = vmatprep.subr.mxu0 0.0
      %3720 = vmatpush1.msra.mxu0 0.0
      %3721 = vmatprep.subr.mxu0 0.0
      %3722 = vmatpush1.msra.mxu0 0.0
      %3723 = vmatprep.subr.mxu0 0.0
      %3724 = vmatpush1.msra.mxu0 0.0
      %3725 = vmatprep.subr.mxu0 0.0
      %3726 = vmatpush1.msra.mxu0 0.0
      %3727 = vmatprep.subr.mxu0 0.0
      %3728 = vmatpush1.msra.mxu0 0.0
      %3729 = vmatprep.subr.mxu0 0.0
      %3730 = vmatpush1.msra.mxu0 0.0
      %3731 = vmatprep.subr.mxu0 0.0
      %3732 = vmatpush1.msra.mxu0 0.0
      %3733 = vmatprep.subr.mxu0 0.0
      %3734 = vmatpush1.msra.mxu0 0.0
      %3735 = vmatprep.subr.mxu0 0.0
      %3736 = vmatpush1.msra.mxu0 0.0
      %3737 = vmatprep.subr.mxu0 0.0
      %3738 = vmatpush1.msra.mxu0 0.0
      %3739 = vmatprep.subr.mxu0 0.0
      %3740 = vmatpush1.msra.mxu0 0.0
      %3741 = vmatprep.subr.mxu0 0.0
      %3742 = vmatpush1.msra.mxu0 0.0
      %3743 = vmatprep.subr.mxu0 0.0
      %3744 = vmatpush1.msra.mxu0 0.0
      %3745 = vmatprep.subr.mxu0 0.0
      %3746 = vmatpush1.msra.mxu0 0.0
      %3747 = vmatprep.subr.mxu0 0.0
      %3748 = vmatpush1.msra.mxu0 0.0
      %3749 = vmatprep.subr.mxu0 0.0
      %3750 = vmatpush1.msra.mxu0 0.0
      %3751 = vmatprep.mubr.f32.mxu0 0.0
      %3752 = vmatmul.mubr.f32.gmra.mrb[0].mxu0 %v3661
      %v3753 = vpop.f32.mrb[0].mxu0
      %v3754 = vadd.f32 0.0, %v3753
      %v3755 = vpop.f32.mrb[0].mxu0
      %3756 = vmatprep.mubr.f32.mxu0 0.0
      %3757 = vmatmul.mubr.f32.gmra.mrb[0].mxu0 %v3664
      %v3758 = vpop.f32.mrb[0].mxu0
      %v3759 = vadd.f32 0.0, %v3758
      %v3760 = vpop.f32.mrb[0].mxu0
      %3761 = vmatprep.mubr.f32.mxu0 0.0
      %3762 = vmatmul.mubr.f32.gmra.mrb[0].mxu0 %v3667
      %v3763 = vpop.f32.mrb[0].mxu0
      %v3764 = vadd.f32 0.0, %v3763
      %v3765 = vpop.f32.mrb[0].mxu0
      %3766 = vmatprep.mubr.f32.mxu0 0.0
      %3767 = vmatmul.mubr.f32.gmra.mrb[0].mxu0 %v3670
      %v3768 = vpop.f32.mrb[0].mxu0
      %v3769 = vadd.f32 0.0, %v3768
      %v3770 = vpop.f32.mrb[0].mxu0
      %3771 = vmatprep.mubr.f32.mxu0 0.0
      %3772 = vmatmul.mubr.f32.gmra.mrb[0].mxu0 %v3673
      %v3773 = vpop.f32.mrb[0].mxu0
      %v3774 = vadd.f32 0.0, %v3773
      %v3775 = vpop.f32.mrb[0].mxu0
      %3776 = vmatprep.mubr.f32.mxu0 0.0
      %3777 = vmatmul.mubr.f32.gmra.mrb[0].mxu0 %v3676
      %v3778 = vpop.f32.mrb[0].mxu0
      %v3779 = vadd.f32 0.0, %v3778
      %v3780 = vpop.f32.mrb[0].mxu0
      %3781 = vmatprep.mubr.f32.mxu0 0.0
      %3782 = vmatmul.mubr.f32.gmra.mrb[0].mxu0 %v3679
      %v3783 = vpop.f32.mrb[0].mxu0
      %v3784 = vadd.f32 0.0, %v3783
      %v3785 = vpop.f32.mrb[0].mxu0
      %3786 = vmatprep.mubr.f32.mxu0 0.0
      %3787 = vmatmul.mubr.f32.gmra.mrb[0].mxu0 %v3682
      %v3788 = vpop.f32.mrb[0].mxu0
      %v3789 = vadd.f32 0.0, %v3788
      %v3790 = vpop.f32.mrb[0].mxu0
      %3791 = vdwg.mxu0
      %v3792 = vadd.f32 %v3649, %v3754
      %v3793 = vadd.f32 %v3650, %v3759
      %v3794 = vadd.f32 %v3651, %v3764
      %v3795 = vadd.f32 %v3652, %v3769
      %v3796 = vadd.f32 %v3653, %v3774
      %v3797 = vadd.f32 %v3654, %v3779
      %v3798 = vadd.f32 %v3655, %v3784
      %v3799 = vadd.f32 %v3656, %v3789
      %s3800 = scalar_lea.vmem %s4, 64
      %v3801 = vld [vmem:[%s3800] sm:$0xff]
      %v3802 = vld [vmem:[%s3800 + $0x8] sm:$0x3]
      %v3804 = vsel %vm3248, %v2405, 0
      %v3807 = vsel %vm3248, %v2410, 0
      %v3810 = vsel %vm3248, %v2415, 0
      %v3813 = vsel %vm3248, %v2420, 0
      %v3816 = vsel %vm3248, %v2425, 0
      %v3819 = vsel %vm3248, %v2430, 0
      %v3822 = vsel %vm3248, %v2435, 0
      %v3825 = vsel %vm3248, %v2440, 0
      %v3828 = vsel %vm3273, %v3802, 0
      %3830 = vmatprep.subr.mxu0 0.0
      %3831 = vmatpush1.msra.mxu0 %v3801
      %3832 = vmatprep.subr.mxu0 0.0
      %3833 = vmatpush1.msra.mxu0 %v3828
      %3834 = vmatprep.subr.mxu0 0.0
      %3835 = vmatpush1.msra.mxu0 0.0
      %3836 = vmatprep.subr.mxu0 0.0
      %3837 = vmatpush1.msra.mxu0 0.0
      %3838 = vmatprep.subr.mxu0 0.0
      %3839 = vmatpush1.msra.mxu0 0.0
      %3840 = vmatprep.subr.mxu0 0.0
      %3841 = vmatpush1.msra.mxu0 0.0
      %3842 = vmatprep.subr.mxu0 0.0
      %3843 = vmatpush1.msra.mxu0 0.0
      %3844 = vmatprep.subr.mxu0 0.0
      %3845 = vmatpush1.msra.mxu0 0.0
      %3846 = vmatprep.subr.mxu0 0.0
      %3847 = vmatpush1.msra.mxu0 0.0
      %3848 = vmatprep.subr.mxu0 0.0
      %3849 = vmatpush1.msra.mxu0 0.0
      %3850 = vmatprep.subr.mxu0 0.0
      %3851 = vmatpush1.msra.mxu0 0.0
      %3852 = vmatprep.subr.mxu0 0.0
      %3853 = vmatpush1.msra.mxu0 0.0
      %3854 = vmatprep.subr.mxu0 0.0
      %3855 = vmatpush1.msra.mxu0 0.0
      %3856 = vmatprep.subr.mxu0 0.0
      %3857 = vmatpush1.msra.mxu0 0.0
      %3858 = vmatprep.subr.mxu0 0.0
      %3859 = vmatpush1.msra.mxu0 0.0
      %3860 = vmatprep.subr.mxu0 0.0
      %3861 = vmatpush1.msra.mxu0 0.0
      %3862 = vmatprep.subr.mxu0 0.0
      %3863 = vmatpush1.msra.mxu0 0.0
      %3864 = vmatprep.subr.mxu0 0.0
      %3865 = vmatpush1.msra.mxu0 0.0
      %3866 = vmatprep.subr.mxu0 0.0
      %3867 = vmatpush1.msra.mxu0 0.0
      %3868 = vmatprep.subr.mxu0 0.0
      %3869 = vmatpush1.msra.mxu0 0.0
      %3870 = vmatprep.subr.mxu0 0.0
      %3871 = vmatpush1.msra.mxu0 0.0
      %3872 = vmatprep.subr.mxu0 0.0
      %3873 = vmatpush1.msra.mxu0 0.0
      %3874 = vmatprep.subr.mxu0 0.0
      %3875 = vmatpush1.msra.mxu0 0.0
      %3876 = vmatprep.subr.mxu0 0.0
      %3877 = vmatpush1.msra.mxu0 0.0
      %3878 = vmatprep.subr.mxu0 0.0
      %3879 = vmatpush1.msra.mxu0 0.0
      %3880 = vmatprep.subr.mxu0 0.0
      %3881 = vmatpush1.msra.mxu0 0.0
      %3882 = vmatprep.subr.mxu0 0.0
      %3883 = vmatpush1.msra.mxu0 0.0
      %3884 = vmatprep.subr.mxu0 0.0
      %3885 = vmatpush1.msra.mxu0 0.0
      %3886 = vmatprep.subr.mxu0 0.0
      %3887 = vmatpush1.msra.mxu0 0.0
      %3888 = vmatprep.subr.mxu0 0.0
      %3889 = vmatpush1.msra.mxu0 0.0
      %3890 = vmatprep.subr.mxu0 0.0
      %3891 = vmatpush1.msra.mxu0 0.0
      %3892 = vmatprep.subr.mxu0 0.0
      %3893 = vmatpush1.msra.mxu0 0.0
      %3894 = vmatprep.mubr.f32.mxu0 0.0
      %3895 = vmatmul.mubr.f32.gmra.mrb[0].mxu0 %v3804
      %v3896 = vpop.f32.mrb[0].mxu0
      %v3897 = vadd.f32 0.0, %v3896
      %v3898 = vpop.f32.mrb[0].mxu0
      %3899 = vmatprep.mubr.f32.mxu0 0.0
      %3900 = vmatmul.mubr.f32.gmra.mrb[0].mxu0 %v3807
      %v3901 = vpop.f32.mrb[0].mxu0
      %v3902 = vadd.f32 0.0, %v3901
      %v3903 = vpop.f32.mrb[0].mxu0
      %3904 = vmatprep.mubr.f32.mxu0 0.0
      %3905 = vmatmul.mubr.f32.gmra.mrb[0].mxu0 %v3810
      %v3906 = vpop.f32.mrb[0].mxu0
      %v3907 = vadd.f32 0.0, %v3906
      %v3908 = vpop.f32.mrb[0].mxu0
      %3909 = vmatprep.mubr.f32.mxu0 0.0
      %3910 = vmatmul.mubr.f32.gmra.mrb[0].mxu0 %v3813
      %v3911 = vpop.f32.mrb[0].mxu0
      %v3912 = vadd.f32 0.0, %v3911
      %v3913 = vpop.f32.mrb[0].mxu0
      %3914 = vmatprep.mubr.f32.mxu0 0.0
      %3915 = vmatmul.mubr.f32.gmra.mrb[0].mxu0 %v3816
      %v3916 = vpop.f32.mrb[0].mxu0
      %v3917 = vadd.f32 0.0, %v3916
      %v3918 = vpop.f32.mrb[0].mxu0
      %3919 = vmatprep.mubr.f32.mxu0 0.0
      %3920 = vmatmul.mubr.f32.gmra.mrb[0].mxu0 %v3819
      %v3921 = vpop.f32.mrb[0].mxu0
      %v3922 = vadd.f32 0.0, %v3921
      %v3923 = vpop.f32.mrb[0].mxu0
      %3924 = vmatprep.mubr.f32.mxu0 0.0
      %3925 = vmatmul.mubr.f32.gmra.mrb[0].mxu0 %v3822
      %v3926 = vpop.f32.mrb[0].mxu0
      %v3927 = vadd.f32 0.0, %v3926
      %v3928 = vpop.f32.mrb[0].mxu0
      %3929 = vmatprep.mubr.f32.mxu0 0.0
      %3930 = vmatmul.mubr.f32.gmra.mrb[0].mxu0 %v3825
      %v3931 = vpop.f32.mrb[0].mxu0
      %v3932 = vadd.f32 0.0, %v3931
      %v3933 = vpop.f32.mrb[0].mxu0
      %3934 = vdwg.mxu0
      %v3935 = vadd.f32 %v3792, %v3897
      %v3936 = vadd.f32 %v3793, %v3902
      %v3937 = vadd.f32 %v3794, %v3907
      %v3938 = vadd.f32 %v3795, %v3912
      %v3939 = vadd.f32 %v3796, %v3917
      %v3940 = vadd.f32 %v3797, %v3922
      %v3941 = vadd.f32 %v3798, %v3927
      %v3942 = vadd.f32 %v3799, %v3932
      %s3943 = scalar_lea.vmem %s4, 80
      %v3944 = vld [vmem:[%s3943] sm:$0xff]
      %v3945 = vld [vmem:[%s3943 + $0x8] sm:$0x3]
      %v3947 = vsel %vm3248, %v2445, 0
      %v3950 = vsel %vm3248, %v2450, 0
      %v3953 = vsel %vm3248, %v2455, 0
      %v3956 = vsel %vm3248, %v2460, 0
      %v3959 = vsel %vm3248, %v2465, 0
      %v3962 = vsel %vm3248, %v2470, 0
      %v3965 = vsel %vm3248, %v2475, 0
      %v3968 = vsel %vm3248, %v2480, 0
      %v3971 = vsel %vm3273, %v3945, 0
      %3973 = vmatprep.subr.mxu0 0.0
      %3974 = vmatpush1.msra.mxu0 %v3944
      %3975 = vmatprep.subr.mxu0 0.0
      %3976 = vmatpush1.msra.mxu0 %v3971
      %3977 = vmatprep.subr.mxu0 0.0
      %3978 = vmatpush1.msra.mxu0 0.0
      %3979 = vmatprep.subr.mxu0 0.0
      %3980 = vmatpush1.msra.mxu0 0.0
      %3981 = vmatprep.subr.mxu0 0.0
      %3982 = vmatpush1.msra.mxu0 0.0
      %3983 = vmatprep.subr.mxu0 0.0
      %3984 = vmatpush1.msra.mxu0 0.0
      %3985 = vmatprep.subr.mxu0 0.0
      %3986 = vmatpush1.msra.mxu0 0.0
      %3987 = vmatprep.subr.mxu0 0.0
      %3988 = vmatpush1.msra.mxu0 0.0
      %3989 = vmatprep.subr.mxu0 0.0
      %3990 = vmatpush1.msra.mxu0 0.0
      %3991 = vmatprep.subr.mxu0 0.0
      %3992 = vmatpush1.msra.mxu0 0.0
      %3993 = vmatprep.subr.mxu0 0.0
      %3994 = vmatpush1.msra.mxu0 0.0
      %3995 = vmatprep.subr.mxu0 0.0
      %3996 = vmatpush1.msra.mxu0 0.0
      %3997 = vmatprep.subr.mxu0 0.0
      %3998 = vmatpush1.msra.mxu0 0.0
      %3999 = vmatprep.subr.mxu0 0.0
      %4000 = vmatpush1.msra.mxu0 0.0
      %4001 = vmatprep.subr.mxu0 0.0
      %4002 = vmatpush1.msra.mxu0 0.0
      %4003 = vmatprep.subr.mxu0 0.0
      %4004 = vmatpush1.msra.mxu0 0.0
      %4005 = vmatprep.subr.mxu0 0.0
      %4006 = vmatpush1.msra.mxu0 0.0
      %4007 = vmatprep.subr.mxu0 0.0
      %4008 = vmatpush1.msra.mxu0 0.0
      %4009 = vmatprep.subr.mxu0 0.0
      %4010 = vmatpush1.msra.mxu0 0.0
      %4011 = vmatprep.subr.mxu0 0.0
      %4012 = vmatpush1.msra.mxu0 0.0
      %4013 = vmatprep.subr.mxu0 0.0
      %4014 = vmatpush1.msra.mxu0 0.0
      %4015 = vmatprep.subr.mxu0 0.0
      %4016 = vmatpush1.msra.mxu0 0.0
      %4017 = vmatprep.subr.mxu0 0.0
      %4018 = vmatpush1.msra.mxu0 0.0
      %4019 = vmatprep.subr.mxu0 0.0
      %4020 = vmatpush1.msra.mxu0 0.0
      %4021 = vmatprep.subr.mxu0 0.0
      %4022 = vmatpush1.msra.mxu0 0.0
      %4023 = vmatprep.subr.mxu0 0.0
      %4024 = vmatpush1.msra.mxu0 0.0
      %4025 = vmatprep.subr.mxu0 0.0
      %4026 = vmatpush1.msra.mxu0 0.0
      %4027 = vmatprep.subr.mxu0 0.0
      %4028 = vmatpush1.msra.mxu0 0.0
      %4029 = vmatprep.subr.mxu0 0.0
      %4030 = vmatpush1.msra.mxu0 0.0
      %4031 = vmatprep.subr.mxu0 0.0
      %4032 = vmatpush1.msra.mxu0 0.0
      %4033 = vmatprep.subr.mxu0 0.0
      %4034 = vmatpush1.msra.mxu0 0.0
      %4035 = vmatprep.subr.mxu0 0.0
      %4036 = vmatpush1.msra.mxu0 0.0
      %4037 = vmatprep.mubr.f32.mxu0 0.0
      %4038 = vmatmul.mubr.f32.gmra.mrb[0].mxu0 %v3947
      %v4039 = vpop.f32.mrb[0].mxu0
      %v4040 = vadd.f32 0.0, %v4039
      %v4041 = vpop.f32.mrb[0].mxu0
      %4042 = vmatprep.mubr.f32.mxu0 0.0
      %4043 = vmatmul.mubr.f32.gmra.mrb[0].mxu0 %v3950
      %v4044 = vpop.f32.mrb[0].mxu0
      %v4045 = vadd.f32 0.0, %v4044
      %v4046 = vpop.f32.mrb[0].mxu0
      %4047 = vmatprep.mubr.f32.mxu0 0.0
      %4048 = vmatmul.mubr.f32.gmra.mrb[0].mxu0 %v3953
      %v4049 = vpop.f32.mrb[0].mxu0
      %v4050 = vadd.f32 0.0, %v4049
      %v4051 = vpop.f32.mrb[0].mxu0
      %4052 = vmatprep.mubr.f32.mxu0 0.0
      %4053 = vmatmul.mubr.f32.gmra.mrb[0].mxu0 %v3956
      %v4054 = vpop.f32.mrb[0].mxu0
      %v4055 = vadd.f32 0.0, %v4054
      %v4056 = vpop.f32.mrb[0].mxu0
      %4057 = vmatprep.mubr.f32.mxu0 0.0
      %4058 = vmatmul.mubr.f32.gmra.mrb[0].mxu0 %v3959
      %v4059 = vpop.f32.mrb[0].mxu0
      %v4060 = vadd.f32 0.0, %v4059
      %v4061 = vpop.f32.mrb[0].mxu0
      %4062 = vmatprep.mubr.f32.mxu0 0.0
      %4063 = vmatmul.mubr.f32.gmra.mrb[0].mxu0 %v3962
      %v4064 = vpop.f32.mrb[0].mxu0
      %v4065 = vadd.f32 0.0, %v4064
      %v4066 = vpop.f32.mrb[0].mxu0
      %4067 = vmatprep.mubr.f32.mxu0 0.0
      %4068 = vmatmul.mubr.f32.gmra.mrb[0].mxu0 %v3965
      %v4069 = vpop.f32.mrb[0].mxu0
      %v4070 = vadd.f32 0.0, %v4069
      %v4071 = vpop.f32.mrb[0].mxu0
      %4072 = vmatprep.mubr.f32.mxu0 0.0
      %4073 = vmatmul.mubr.f32.gmra.mrb[0].mxu0 %v3968
      %v4074 = vpop.f32.mrb[0].mxu0
      %v4075 = vadd.f32 0.0, %v4074
      %v4076 = vpop.f32.mrb[0].mxu0
      %4077 = vdwg.mxu0
      %v4078 = vadd.f32 %v3935, %v4040
      %v4079 = vadd.f32 %v3936, %v4045
      %v4080 = vadd.f32 %v3937, %v4050
      %v4081 = vadd.f32 %v3938, %v4055
      %v4082 = vadd.f32 %v3939, %v4060
      %v4083 = vadd.f32 %v3940, %v4065
      %v4084 = vadd.f32 %v3941, %v4070
      %v4085 = vadd.f32 %v3942, %v4075
      %s4086 = scalar_lea.vmem %s4, 96
      %v4087 = vld [vmem:[%s4086] sm:$0xff]
      %v4088 = vld [vmem:[%s4086 + $0x8] sm:$0x3]
      %v4090 = vsel %vm3248, %v2485, 0
      %v4093 = vsel %vm3248, %v2490, 0
      %v4096 = vsel %vm3248, %v2495, 0
      %v4099 = vsel %vm3248, %v2500, 0
      %v4102 = vsel %vm3248, %v2505, 0
      %v4105 = vsel %vm3248, %v2510, 0
      %v4108 = vsel %vm3248, %v2515, 0
      %v4111 = vsel %vm3248, %v2520, 0
      %v4114 = vsel %vm3273, %v4088, 0
      %4116 = vmatprep.subr.mxu0 0.0
      %4117 = vmatpush1.msra.mxu0 %v4087
      %4118 = vmatprep.subr.mxu0 0.0
      %4119 = vmatpush1.msra.mxu0 %v4114
      %4120 = vmatprep.subr.mxu0 0.0
      %4121 = vmatpush1.msra.mxu0 0.0
      %4122 = vmatprep.subr.mxu0 0.0
      %4123 = vmatpush1.msra.mxu0 0.0
      %4124 = vmatprep.subr.mxu0 0.0
      %4125 = vmatpush1.msra.mxu0 0.0
      %4126 = vmatprep.subr.mxu0 0.0
      %4127 = vmatpush1.msra.mxu0 0.0
      %4128 = vmatprep.subr.mxu0 0.0
      %4129 = vmatpush1.msra.mxu0 0.0
      %4130 = vmatprep.subr.mxu0 0.0
      %4131 = vmatpush1.msra.mxu0 0.0
      %4132 = vmatprep.subr.mxu0 0.0
      %4133 = vmatpush1.msra.mxu0 0.0
      %4134 = vmatprep.subr.mxu0 0.0
      %4135 = vmatpush1.msra.mxu0 0.0
      %4136 = vmatprep.subr.mxu0 0.0
      %4137 = vmatpush1.msra.mxu0 0.0
      %4138 = vmatprep.subr.mxu0 0.0
      %4139 = vmatpush1.msra.mxu0 0.0
      %4140 = vmatprep.subr.mxu0 0.0
      %4141 = vmatpush1.msra.mxu0 0.0
      %4142 = vmatprep.subr.mxu0 0.0
      %4143 = vmatpush1.msra.mxu0 0.0
      %4144 = vmatprep.subr.mxu0 0.0
      %4145 = vmatpush1.msra.mxu0 0.0
      %4146 = vmatprep.subr.mxu0 0.0
      %4147 = vmatpush1.msra.mxu0 0.0
      %4148 = vmatprep.subr.mxu0 0.0
      %4149 = vmatpush1.msra.mxu0 0.0
      %4150 = vmatprep.subr.mxu0 0.0
      %4151 = vmatpush1.msra.mxu0 0.0
      %4152 = vmatprep.subr.mxu0 0.0
      %4153 = vmatpush1.msra.mxu0 0.0
      %4154 = vmatprep.subr.mxu0 0.0
      %4155 = vmatpush1.msra.mxu0 0.0
      %4156 = vmatprep.subr.mxu0 0.0
      %4157 = vmatpush1.msra.mxu0 0.0
      %4158 = vmatprep.subr.mxu0 0.0
      %4159 = vmatpush1.msra.mxu0 0.0
      %4160 = vmatprep.subr.mxu0 0.0
      %4161 = vmatpush1.msra.mxu0 0.0
      %4162 = vmatprep.subr.mxu0 0.0
      %4163 = vmatpush1.msra.mxu0 0.0
      %4164 = vmatprep.subr.mxu0 0.0
      %4165 = vmatpush1.msra.mxu0 0.0
      %4166 = vmatprep.subr.mxu0 0.0
      %4167 = vmatpush1.msra.mxu0 0.0
      %4168 = vmatprep.subr.mxu0 0.0
      %4169 = vmatpush1.msra.mxu0 0.0
      %4170 = vmatprep.subr.mxu0 0.0
      %4171 = vmatpush1.msra.mxu0 0.0
      %4172 = vmatprep.subr.mxu0 0.0
      %4173 = vmatpush1.msra.mxu0 0.0
      %4174 = vmatprep.subr.mxu0 0.0
      %4175 = vmatpush1.msra.mxu0 0.0
      %4176 = vmatprep.subr.mxu0 0.0
      %4177 = vmatpush1.msra.mxu0 0.0
      %4178 = vmatprep.subr.mxu0 0.0
      %4179 = vmatpush1.msra.mxu0 0.0
      %4180 = vmatprep.mubr.f32.mxu0 0.0
      %4181 = vmatmul.mubr.f32.gmra.mrb[0].mxu0 %v4090
      %v4182 = vpop.f32.mrb[0].mxu0
      %v4183 = vadd.f32 0.0, %v4182
      %v4184 = vpop.f32.mrb[0].mxu0
      %4185 = vmatprep.mubr.f32.mxu0 0.0
      %4186 = vmatmul.mubr.f32.gmra.mrb[0].mxu0 %v4093
      %v4187 = vpop.f32.mrb[0].mxu0
      %v4188 = vadd.f32 0.0, %v4187
      %v4189 = vpop.f32.mrb[0].mxu0
      %4190 = vmatprep.mubr.f32.mxu0 0.0
      %4191 = vmatmul.mubr.f32.gmra.mrb[0].mxu0 %v4096
      %v4192 = vpop.f32.mrb[0].mxu0
      %v4193 = vadd.f32 0.0, %v4192
      %v4194 = vpop.f32.mrb[0].mxu0
      %4195 = vmatprep.mubr.f32.mxu0 0.0
      %4196 = vmatmul.mubr.f32.gmra.mrb[0].mxu0 %v4099
      %v4197 = vpop.f32.mrb[0].mxu0
      %v4198 = vadd.f32 0.0, %v4197
      %v4199 = vpop.f32.mrb[0].mxu0
      %4200 = vmatprep.mubr.f32.mxu0 0.0
      %4201 = vmatmul.mubr.f32.gmra.mrb[0].mxu0 %v4102
      %v4202 = vpop.f32.mrb[0].mxu0
      %v4203 = vadd.f32 0.0, %v4202
      %v4204 = vpop.f32.mrb[0].mxu0
      %4205 = vmatprep.mubr.f32.mxu0 0.0
      %4206 = vmatmul.mubr.f32.gmra.mrb[0].mxu0 %v4105
      %v4207 = vpop.f32.mrb[0].mxu0
      %v4208 = vadd.f32 0.0, %v4207
      %v4209 = vpop.f32.mrb[0].mxu0
      %4210 = vmatprep.mubr.f32.mxu0 0.0
      %4211 = vmatmul.mubr.f32.gmra.mrb[0].mxu0 %v4108
      %v4212 = vpop.f32.mrb[0].mxu0
      %v4213 = vadd.f32 0.0, %v4212
      %v4214 = vpop.f32.mrb[0].mxu0
      %4215 = vmatprep.mubr.f32.mxu0 0.0
      %4216 = vmatmul.mubr.f32.gmra.mrb[0].mxu0 %v4111
      %v4217 = vpop.f32.mrb[0].mxu0
      %v4218 = vadd.f32 0.0, %v4217
      %v4219 = vpop.f32.mrb[0].mxu0
      %4220 = vdwg.mxu0
      %v4221 = vadd.f32 %v4078, %v4183
      %v4222 = vadd.f32 %v4079, %v4188
      %v4223 = vadd.f32 %v4080, %v4193
      %v4224 = vadd.f32 %v4081, %v4198
      %v4225 = vadd.f32 %v4082, %v4203
      %v4226 = vadd.f32 %v4083, %v4208
      %v4227 = vadd.f32 %v4084, %v4213
      %v4228 = vadd.f32 %v4085, %v4218
      %s4229 = scalar_lea.vmem %s4, 112
      %v4230 = vld [vmem:[%s4229] sm:$0xff]
      %v4231 = vld [vmem:[%s4229 + $0x8] sm:$0x3]
      %v4233 = vsel %vm3248, %v2525, 0
      %v4236 = vsel %vm3248, %v2530, 0
      %v4239 = vsel %vm3248, %v2535, 0
      %v4242 = vsel %vm3248, %v2540, 0
      %v4245 = vsel %vm3248, %v2545, 0
      %v4248 = vsel %vm3248, %v2550, 0
      %v4251 = vsel %vm3248, %v2555, 0
      %v4254 = vsel %vm3248, %v2560, 0
      %v4257 = vsel %vm3273, %v4231, 0
      %4259 = vmatprep.subr.mxu0 0.0
      %4260 = vmatpush1.msra.mxu0 %v4230
      %4261 = vmatprep.subr.mxu0 0.0
      %4262 = vmatpush1.msra.mxu0 %v4257
      %4263 = vmatprep.subr.mxu0 0.0
      %4264 = vmatpush1.msra.mxu0 0.0
      %4265 = vmatprep.subr.mxu0 0.0
      %4266 = vmatpush1.msra.mxu0 0.0
      %4267 = vmatprep.subr.mxu0 0.0
      %4268 = vmatpush1.msra.mxu0 0.0
      %4269 = vmatprep.subr.mxu0 0.0
      %4270 = vmatpush1.msra.mxu0 0.0
      %4271 = vmatprep.subr.mxu0 0.0
      %4272 = vmatpush1.msra.mxu0 0.0
      %4273 = vmatprep.subr.mxu0 0.0
      %4274 = vmatpush1.msra.mxu0 0.0
      %4275 = vmatprep.subr.mxu0 0.0
      %4276 = vmatpush1.msra.mxu0 0.0
      %4277 = vmatprep.subr.mxu0 0.0
      %4278 = vmatpush1.msra.mxu0 0.0
      %4279 = vmatprep.subr.mxu0 0.0
      %4280 = vmatpush1.msra.mxu0 0.0
      %4281 = vmatprep.subr.mxu0 0.0
      %4282 = vmatpush1.msra.mxu0 0.0
      %4283 = vmatprep.subr.mxu0 0.0
      %4284 = vmatpush1.msra.mxu0 0.0
      %4285 = vmatprep.subr.mxu0 0.0
      %4286 = vmatpush1.msra.mxu0 0.0
      %4287 = vmatprep.subr.mxu0 0.0
      %4288 = vmatpush1.msra.mxu0 0.0
      %4289 = vmatprep.subr.mxu0 0.0
      %4290 = vmatpush1.msra.mxu0 0.0
      %4291 = vmatprep.subr.mxu0 0.0
      %4292 = vmatpush1.msra.mxu0 0.0
      %4293 = vmatprep.subr.mxu0 0.0
      %4294 = vmatpush1.msra.mxu0 0.0
      %4295 = vmatprep.subr.mxu0 0.0
      %4296 = vmatpush1.msra.mxu0 0.0
      %4297 = vmatprep.subr.mxu0 0.0
      %4298 = vmatpush1.msra.mxu0 0.0
      %4299 = vmatprep.subr.mxu0 0.0
      %4300 = vmatpush1.msra.mxu0 0.0
      %4301 = vmatprep.subr.mxu0 0.0
      %4302 = vmatpush1.msra.mxu0 0.0
      %4303 = vmatprep.subr.mxu0 0.0
      %4304 = vmatpush1.msra.mxu0 0.0
      %4305 = vmatprep.subr.mxu0 0.0
      %4306 = vmatpush1.msra.mxu0 0.0
      %4307 = vmatprep.subr.mxu0 0.0
      %4308 = vmatpush1.msra.mxu0 0.0
      %4309 = vmatprep.subr.mxu0 0.0
      %4310 = vmatpush1.msra.mxu0 0.0
      %4311 = vmatprep.subr.mxu0 0.0
      %4312 = vmatpush1.msra.mxu0 0.0
      %4313 = vmatprep.subr.mxu0 0.0
      %4314 = vmatpush1.msra.mxu0 0.0
      %4315 = vmatprep.subr.mxu0 0.0
      %4316 = vmatpush1.msra.mxu0 0.0
      %4317 = vmatprep.subr.mxu0 0.0
      %4318 = vmatpush1.msra.mxu0 0.0
      %4319 = vmatprep.subr.mxu0 0.0
      %4320 = vmatpush1.msra.mxu0 0.0
      %4321 = vmatprep.subr.mxu0 0.0
      %4322 = vmatpush1.msra.mxu0 0.0
      %4323 = vmatprep.mubr.f32.mxu0 0.0
      %4324 = vmatmul.mubr.f32.gmra.mrb[0].mxu0 %v4233
      %v4325 = vpop.f32.mrb[0].mxu0
      %v4326 = vadd.f32 0.0, %v4325
      %v4327 = vpop.f32.mrb[0].mxu0
      %4328 = vmatprep.mubr.f32.mxu0 0.0
      %4329 = vmatmul.mubr.f32.gmra.mrb[0].mxu0 %v4236
      %v4330 = vpop.f32.mrb[0].mxu0
      %v4331 = vadd.f32 0.0, %v4330
      %v4332 = vpop.f32.mrb[0].mxu0
      %4333 = vmatprep.mubr.f32.mxu0 0.0
      %4334 = vmatmul.mubr.f32.gmra.mrb[0].mxu0 %v4239
      %v4335 = vpop.f32.mrb[0].mxu0
      %v4336 = vadd.f32 0.0, %v4335
      %v4337 = vpop.f32.mrb[0].mxu0
      %4338 = vmatprep.mubr.f32.mxu0 0.0
      %4339 = vmatmul.mubr.f32.gmra.mrb[0].mxu0 %v4242
      %v4340 = vpop.f32.mrb[0].mxu0
      %v4341 = vadd.f32 0.0, %v4340
      %v4342 = vpop.f32.mrb[0].mxu0
      %4343 = vmatprep.mubr.f32.mxu0 0.0
      %4344 = vmatmul.mubr.f32.gmra.mrb[0].mxu0 %v4245
      %v4345 = vpop.f32.mrb[0].mxu0
      %v4346 = vadd.f32 0.0, %v4345
      %v4347 = vpop.f32.mrb[0].mxu0
      %4348 = vmatprep.mubr.f32.mxu0 0.0
      %4349 = vmatmul.mubr.f32.gmra.mrb[0].mxu0 %v4248
      %v4350 = vpop.f32.mrb[0].mxu0
      %v4351 = vadd.f32 0.0, %v4350
      %v4352 = vpop.f32.mrb[0].mxu0
      %4353 = vmatprep.mubr.f32.mxu0 0.0
      %4354 = vmatmul.mubr.f32.gmra.mrb[0].mxu0 %v4251
      %v4355 = vpop.f32.mrb[0].mxu0
      %v4356 = vadd.f32 0.0, %v4355
      %v4357 = vpop.f32.mrb[0].mxu0
      %4358 = vmatprep.mubr.f32.mxu0 0.0
      %4359 = vmatmul.mubr.f32.gmra.mrb[0].mxu0 %v4254
      %v4360 = vpop.f32.mrb[0].mxu0
      %v4361 = vadd.f32 0.0, %v4360
      %v4362 = vpop.f32.mrb[0].mxu0
      %4363 = vdwg.mxu0
      %v4364 = vadd.f32 %v4221, %v4326
      %v4365 = vadd.f32 %v4222, %v4331
      %v4366 = vadd.f32 %v4223, %v4336
      %v4367 = vadd.f32 %v4224, %v4341
      %v4368 = vadd.f32 %v4225, %v4346
      %v4369 = vadd.f32 %v4226, %v4351
      %v4370 = vadd.f32 %v4227, %v4356
      %v4371 = vadd.f32 %v4228, %v4361
      %s4372 = scalar_lea.vmem %s4, 128
      %v4373 = vld [vmem:[%s4372] sm:$0xff]
      %v4374 = vld [vmem:[%s4372 + $0x8] sm:$0x3]
      %v4376 = vsel %vm3248, %v2565, 0
      %v4379 = vsel %vm3248, %v2570, 0
      %v4382 = vsel %vm3248, %v2575, 0
      %v4385 = vsel %vm3248, %v2580, 0
      %v4388 = vsel %vm3248, %v2585, 0
      %v4391 = vsel %vm3248, %v2590, 0
      %v4394 = vsel %vm3248, %v2595, 0
      %v4397 = vsel %vm3248, %v2600, 0
      %v4400 = vsel %vm3273, %v4374, 0
      %4402 = vmatprep.subr.mxu0 0.0
      %4403 = vmatpush1.msra.mxu0 %v4373
      %4404 = vmatprep.subr.mxu0 0.0
      %4405 = vmatpush1.msra.mxu0 %v4400
      %4406 = vmatprep.subr.mxu0 0.0
      %4407 = vmatpush1.msra.mxu0 0.0
      %4408 = vmatprep.subr.mxu0 0.0
      %4409 = vmatpush1.msra.mxu0 0.0
      %4410 = vmatprep.subr.mxu0 0.0
      %4411 = vmatpush1.msra.mxu0 0.0
      %4412 = vmatprep.subr.mxu0 0.0
      %4413 = vmatpush1.msra.mxu0 0.0
      %4414 = vmatprep.subr.mxu0 0.0
      %4415 = vmatpush1.msra.mxu0 0.0
      %4416 = vmatprep.subr.mxu0 0.0
      %4417 = vmatpush1.msra.mxu0 0.0
      %4418 = vmatprep.subr.mxu0 0.0
      %4419 = vmatpush1.msra.mxu0 0.0
      %4420 = vmatprep.subr.mxu0 0.0
      %4421 = vmatpush1.msra.mxu0 0.0
      %4422 = vmatprep.subr.mxu0 0.0
      %4423 = vmatpush1.msra.mxu0 0.0
      %4424 = vmatprep.subr.mxu0 0.0
      %4425 = vmatpush1.msra.mxu0 0.0
      %4426 = vmatprep.subr.mxu0 0.0
      %4427 = vmatpush1.msra.mxu0 0.0
      %4428 = vmatprep.subr.mxu0 0.0
      %4429 = vmatpush1.msra.mxu0 0.0
      %4430 = vmatprep.subr.mxu0 0.0
      %4431 = vmatpush1.msra.mxu0 0.0
      %4432 = vmatprep.subr.mxu0 0.0
      %4433 = vmatpush1.msra.mxu0 0.0
      %4434 = vmatprep.subr.mxu0 0.0
      %4435 = vmatpush1.msra.mxu0 0.0
      %4436 = vmatprep.subr.mxu0 0.0
      %4437 = vmatpush1.msra.mxu0 0.0
      %4438 = vmatprep.subr.mxu0 0.0
      %4439 = vmatpush1.msra.mxu0 0.0
      %4440 = vmatprep.subr.mxu0 0.0
      %4441 = vmatpush1.msra.mxu0 0.0
      %4442 = vmatprep.subr.mxu0 0.0
      %4443 = vmatpush1.msra.mxu0 0.0
      %4444 = vmatprep.subr.mxu0 0.0
      %4445 = vmatpush1.msra.mxu0 0.0
      %4446 = vmatprep.subr.mxu0 0.0
      %4447 = vmatpush1.msra.mxu0 0.0
      %4448 = vmatprep.subr.mxu0 0.0
      %4449 = vmatpush1.msra.mxu0 0.0
      %4450 = vmatprep.subr.mxu0 0.0
      %4451 = vmatpush1.msra.mxu0 0.0
      %4452 = vmatprep.subr.mxu0 0.0
      %4453 = vmatpush1.msra.mxu0 0.0
      %4454 = vmatprep.subr.mxu0 0.0
      %4455 = vmatpush1.msra.mxu0 0.0
      %4456 = vmatprep.subr.mxu0 0.0
      %4457 = vmatpush1.msra.mxu0 0.0
      %4458 = vmatprep.subr.mxu0 0.0
      %4459 = vmatpush1.msra.mxu0 0.0
      %4460 = vmatprep.subr.mxu0 0.0
      %4461 = vmatpush1.msra.mxu0 0.0
      %4462 = vmatprep.subr.mxu0 0.0
      %4463 = vmatpush1.msra.mxu0 0.0
      %4464 = vmatprep.subr.mxu0 0.0
      %4465 = vmatpush1.msra.mxu0 0.0
      %4466 = vmatprep.mubr.f32.mxu0 0.0
      %4467 = vmatmul.mubr.f32.gmra.mrb[0].mxu0 %v4376
      %v4468 = vpop.f32.mrb[0].mxu0
      %v4469 = vadd.f32 0.0, %v4468
      %v4470 = vpop.f32.mrb[0].mxu0
      %4471 = vmatprep.mubr.f32.mxu0 0.0
      %4472 = vmatmul.mubr.f32.gmra.mrb[0].mxu0 %v4379
      %v4473 = vpop.f32.mrb[0].mxu0
      %v4474 = vadd.f32 0.0, %v4473
      %v4475 = vpop.f32.mrb[0].mxu0
      %4476 = vmatprep.mubr.f32.mxu0 0.0
      %4477 = vmatmul.mubr.f32.gmra.mrb[0].mxu0 %v4382
      %v4478 = vpop.f32.mrb[0].mxu0
      %v4479 = vadd.f32 0.0, %v4478
      %v4480 = vpop.f32.mrb[0].mxu0
      %4481 = vmatprep.mubr.f32.mxu0 0.0
      %4482 = vmatmul.mubr.f32.gmra.mrb[0].mxu0 %v4385
      %v4483 = vpop.f32.mrb[0].mxu0
      %v4484 = vadd.f32 0.0, %v4483
      %v4485 = vpop.f32.mrb[0].mxu0
      %4486 = vmatprep.mubr.f32.mxu0 0.0
      %4487 = vmatmul.mubr.f32.gmra.mrb[0].mxu0 %v4388
      %v4488 = vpop.f32.mrb[0].mxu0
      %v4489 = vadd.f32 0.0, %v4488
      %v4490 = vpop.f32.mrb[0].mxu0
      %4491 = vmatprep.mubr.f32.mxu0 0.0
      %4492 = vmatmul.mubr.f32.gmra.mrb[0].mxu0 %v4391
      %v4493 = vpop.f32.mrb[0].mxu0
      %v4494 = vadd.f32 0.0, %v4493
      %v4495 = vpop.f32.mrb[0].mxu0
      %4496 = vmatprep.mubr.f32.mxu0 0.0
      %4497 = vmatmul.mubr.f32.gmra.mrb[0].mxu0 %v4394
      %v4498 = vpop.f32.mrb[0].mxu0
      %v4499 = vadd.f32 0.0, %v4498
      %v4500 = vpop.f32.mrb[0].mxu0
      %4501 = vmatprep.mubr.f32.mxu0 0.0
      %4502 = vmatmul.mubr.f32.gmra.mrb[0].mxu0 %v4397
      %v4503 = vpop.f32.mrb[0].mxu0
      %v4504 = vadd.f32 0.0, %v4503
      %v4505 = vpop.f32.mrb[0].mxu0
      %4506 = vdwg.mxu0
      %v4507 = vadd.f32 %v4364, %v4469
      %v4508 = vadd.f32 %v4365, %v4474
      %v4509 = vadd.f32 %v4366, %v4479
      %v4510 = vadd.f32 %v4367, %v4484
      %v4511 = vadd.f32 %v4368, %v4489
      %v4512 = vadd.f32 %v4369, %v4494
      %v4513 = vadd.f32 %v4370, %v4499
      %v4514 = vadd.f32 %v4371, %v4504
      %s4515 = scalar_lea.vmem %s4, 144
      %v4516 = vld [vmem:[%s4515] sm:$0xff]
      %v4517 = vld [vmem:[%s4515 + $0x8] sm:$0x3]
      %v4519 = vsel %vm3248, %v2605, 0
      %v4522 = vsel %vm3248, %v2610, 0
      %v4525 = vsel %vm3248, %v2615, 0
      %v4528 = vsel %vm3248, %v2620, 0
      %v4531 = vsel %vm3248, %v2625, 0
      %v4534 = vsel %vm3248, %v2630, 0
      %v4537 = vsel %vm3248, %v2635, 0
      %v4540 = vsel %vm3248, %v2640, 0
      %v4543 = vsel %vm3273, %v4517, 0
      %4545 = vmatprep.subr.mxu0 0.0
      %4546 = vmatpush1.msra.mxu0 %v4516
      %4547 = vmatprep.subr.mxu0 0.0
      %4548 = vmatpush1.msra.mxu0 %v4543
      %4549 = vmatprep.subr.mxu0 0.0
      %4550 = vmatpush1.msra.mxu0 0.0
      %4551 = vmatprep.subr.mxu0 0.0
      %4552 = vmatpush1.msra.mxu0 0.0
      %4553 = vmatprep.subr.mxu0 0.0
      %4554 = vmatpush1.msra.mxu0 0.0
      %4555 = vmatprep.subr.mxu0 0.0
      %4556 = vmatpush1.msra.mxu0 0.0
      %4557 = vmatprep.subr.mxu0 0.0
      %4558 = vmatpush1.msra.mxu0 0.0
      %4559 = vmatprep.subr.mxu0 0.0
      %4560 = vmatpush1.msra.mxu0 0.0
      %4561 = vmatprep.subr.mxu0 0.0
      %4562 = vmatpush1.msra.mxu0 0.0
      %4563 = vmatprep.subr.mxu0 0.0
      %4564 = vmatpush1.msra.mxu0 0.0
      %4565 = vmatprep.subr.mxu0 0.0
      %4566 = vmatpush1.msra.mxu0 0.0
      %4567 = vmatprep.subr.mxu0 0.0
      %4568 = vmatpush1.msra.mxu0 0.0
      %4569 = vmatprep.subr.mxu0 0.0
      %4570 = vmatpush1.msra.mxu0 0.0
      %4571 = vmatprep.subr.mxu0 0.0
      %4572 = vmatpush1.msra.mxu0 0.0
      %4573 = vmatprep.subr.mxu0 0.0
      %4574 = vmatpush1.msra.mxu0 0.0
      %4575 = vmatprep.subr.mxu0 0.0
      %4576 = vmatpush1.msra.mxu0 0.0
      %4577 = vmatprep.subr.mxu0 0.0
      %4578 = vmatpush1.msra.mxu0 0.0
      %4579 = vmatprep.subr.mxu0 0.0
      %4580 = vmatpush1.msra.mxu0 0.0
      %4581 = vmatprep.subr.mxu0 0.0
      %4582 = vmatpush1.msra.mxu0 0.0
      %4583 = vmatprep.subr.mxu0 0.0
      %4584 = vmatpush1.msra.mxu0 0.0
      %4585 = vmatprep.subr.mxu0 0.0
      %4586 = vmatpush1.msra.mxu0 0.0
      %4587 = vmatprep.subr.mxu0 0.0
      %4588 = vmatpush1.msra.mxu0 0.0
      %4589 = vmatprep.subr.mxu0 0.0
      %4590 = vmatpush1.msra.mxu0 0.0
      %4591 = vmatprep.subr.mxu0 0.0
      %4592 = vmatpush1.msra.mxu0 0.0
      %4593 = vmatprep.subr.mxu0 0.0
      %4594 = vmatpush1.msra.mxu0 0.0
      %4595 = vmatprep.subr.mxu0 0.0
      %4596 = vmatpush1.msra.mxu0 0.0
      %4597 = vmatprep.subr.mxu0 0.0
      %4598 = vmatpush1.msra.mxu0 0.0
      %4599 = vmatprep.subr.mxu0 0.0
      %4600 = vmatpush1.msra.mxu0 0.0
      %4601 = vmatprep.subr.mxu0 0.0
      %4602 = vmatpush1.msra.mxu0 0.0
      %4603 = vmatprep.subr.mxu0 0.0
      %4604 = vmatpush1.msra.mxu0 0.0
      %4605 = vmatprep.subr.mxu0 0.0
      %4606 = vmatpush1.msra.mxu0 0.0
      %4607 = vmatprep.subr.mxu0 0.0
      %4608 = vmatpush1.msra.mxu0 0.0
      %4609 = vmatprep.mubr.f32.mxu0 0.0
      %4610 = vmatmul.mubr.f32.gmra.mrb[0].mxu0 %v4519
      %v4611 = vpop.f32.mrb[0].mxu0
      %v4612 = vadd.f32 0.0, %v4611
      %v4613 = vpop.f32.mrb[0].mxu0
      %4614 = vmatprep.mubr.f32.mxu0 0.0
      %4615 = vmatmul.mubr.f32.gmra.mrb[0].mxu0 %v4522
      %v4616 = vpop.f32.mrb[0].mxu0
      %v4617 = vadd.f32 0.0, %v4616
      %v4618 = vpop.f32.mrb[0].mxu0
      %4619 = vmatprep.mubr.f32.mxu0 0.0
      %4620 = vmatmul.mubr.f32.gmra.mrb[0].mxu0 %v4525
      %v4621 = vpop.f32.mrb[0].mxu0
      %v4622 = vadd.f32 0.0, %v4621
      %v4623 = vpop.f32.mrb[0].mxu0
      %4624 = vmatprep.mubr.f32.mxu0 0.0
      %4625 = vmatmul.mubr.f32.gmra.mrb[0].mxu0 %v4528
      %v4626 = vpop.f32.mrb[0].mxu0
      %v4627 = vadd.f32 0.0, %v4626
      %v4628 = vpop.f32.mrb[0].mxu0
      %4629 = vmatprep.mubr.f32.mxu0 0.0
      %4630 = vmatmul.mubr.f32.gmra.mrb[0].mxu0 %v4531
      %v4631 = vpop.f32.mrb[0].mxu0
      %v4632 = vadd.f32 0.0, %v4631
      %v4633 = vpop.f32.mrb[0].mxu0
      %4634 = vmatprep.mubr.f32.mxu0 0.0
      %4635 = vmatmul.mubr.f32.gmra.mrb[0].mxu0 %v4534
      %v4636 = vpop.f32.mrb[0].mxu0
      %v4637 = vadd.f32 0.0, %v4636
      %v4638 = vpop.f32.mrb[0].mxu0
      %4639 = vmatprep.mubr.f32.mxu0 0.0
      %4640 = vmatmul.mubr.f32.gmra.mrb[0].mxu0 %v4537
      %v4641 = vpop.f32.mrb[0].mxu0
      %v4642 = vadd.f32 0.0, %v4641
      %v4643 = vpop.f32.mrb[0].mxu0
      %4644 = vmatprep.mubr.f32.mxu0 0.0
      %4645 = vmatmul.mubr.f32.gmra.mrb[0].mxu0 %v4540
      %v4646 = vpop.f32.mrb[0].mxu0
      %v4647 = vadd.f32 0.0, %v4646
      %v4648 = vpop.f32.mrb[0].mxu0
      %4649 = vdwg.mxu0
      %v4650 = vadd.f32 %v4507, %v4612
      %v4651 = vadd.f32 %v4508, %v4617
      %v4652 = vadd.f32 %v4509, %v4622
      %v4653 = vadd.f32 %v4510, %v4627
      %v4654 = vadd.f32 %v4511, %v4632
      %v4655 = vadd.f32 %v4512, %v4637
      %v4656 = vadd.f32 %v4513, %v4642
      %v4657 = vadd.f32 %v4514, %v4647
      %s4658 = scalar_lea.vmem %s4, 160
      %v4659 = vld [vmem:[%s4658] sm:$0xff]
      %v4660 = vld [vmem:[%s4658 + $0x8] sm:$0x3]
      %v4662 = vsel %vm3248, %v2645, 0
      %v4665 = vsel %vm3248, %v2650, 0
      %v4668 = vsel %vm3248, %v2655, 0
      %v4671 = vsel %vm3248, %v2660, 0
      %v4674 = vsel %vm3248, %v2665, 0
      %v4677 = vsel %vm3248, %v2670, 0
      %v4680 = vsel %vm3248, %v2675, 0
      %v4683 = vsel %vm3248, %v2680, 0
      %v4686 = vsel %vm3273, %v4660, 0
      %4688 = vmatprep.subr.mxu0 0.0
      %4689 = vmatpush1.msra.mxu0 %v4659
      %4690 = vmatprep.subr.mxu0 0.0
      %4691 = vmatpush1.msra.mxu0 %v4686
      %4692 = vmatprep.subr.mxu0 0.0
      %4693 = vmatpush1.msra.mxu0 0.0
      %4694 = vmatprep.subr.mxu0 0.0
      %4695 = vmatpush1.msra.mxu0 0.0
      %4696 = vmatprep.subr.mxu0 0.0
      %4697 = vmatpush1.msra.mxu0 0.0
      %4698 = vmatprep.subr.mxu0 0.0
      %4699 = vmatpush1.msra.mxu0 0.0
      %4700 = vmatprep.subr.mxu0 0.0
      %4701 = vmatpush1.msra.mxu0 0.0
      %4702 = vmatprep.subr.mxu0 0.0
      %4703 = vmatpush1.msra.mxu0 0.0
      %4704 = vmatprep.subr.mxu0 0.0
      %4705 = vmatpush1.msra.mxu0 0.0
      %4706 = vmatprep.subr.mxu0 0.0
      %4707 = vmatpush1.msra.mxu0 0.0
      %4708 = vmatprep.subr.mxu0 0.0
      %4709 = vmatpush1.msra.mxu0 0.0
      %4710 = vmatprep.subr.mxu0 0.0
      %4711 = vmatpush1.msra.mxu0 0.0
      %4712 = vmatprep.subr.mxu0 0.0
      %4713 = vmatpush1.msra.mxu0 0.0
      %4714 = vmatprep.subr.mxu0 0.0
      %4715 = vmatpush1.msra.mxu0 0.0
      %4716 = vmatprep.subr.mxu0 0.0
      %4717 = vmatpush1.msra.mxu0 0.0
      %4718 = vmatprep.subr.mxu0 0.0
      %4719 = vmatpush1.msra.mxu0 0.0
      %4720 = vmatprep.subr.mxu0 0.0
      %4721 = vmatpush1.msra.mxu0 0.0
      %4722 = vmatprep.subr.mxu0 0.0
      %4723 = vmatpush1.msra.mxu0 0.0
      %4724 = vmatprep.subr.mxu0 0.0
      %4725 = vmatpush1.msra.mxu0 0.0
      %4726 = vmatprep.subr.mxu0 0.0
      %4727 = vmatpush1.msra.mxu0 0.0
      %4728 = vmatprep.subr.mxu0 0.0
      %4729 = vmatpush1.msra.mxu0 0.0
      %4730 = vmatprep.subr.mxu0 0.0
      %4731 = vmatpush1.msra.mxu0 0.0
      %4732 = vmatprep.subr.mxu0 0.0
      %4733 = vmatpush1.msra.mxu0 0.0
      %4734 = vmatprep.subr.mxu0 0.0
      %4735 = vmatpush1.msra.mxu0 0.0
      %4736 = vmatprep.subr.mxu0 0.0
      %4737 = vmatpush1.msra.mxu0 0.0
      %4738 = vmatprep.subr.mxu0 0.0
      %4739 = vmatpush1.msra.mxu0 0.0
      %4740 = vmatprep.subr.mxu0 0.0
      %4741 = vmatpush1.msra.mxu0 0.0
      %4742 = vmatprep.subr.mxu0 0.0
      %4743 = vmatpush1.msra.mxu0 0.0
      %4744 = vmatprep.subr.mxu0 0.0
      %4745 = vmatpush1.msra.mxu0 0.0
      %4746 = vmatprep.subr.mxu0 0.0
      %4747 = vmatpush1.msra.mxu0 0.0
      %4748 = vmatprep.subr.mxu0 0.0
      %4749 = vmatpush1.msra.mxu0 0.0
      %4750 = vmatprep.subr.mxu0 0.0
      %4751 = vmatpush1.msra.mxu0 0.0
      %4752 = vmatprep.mubr.f32.mxu0 0.0
      %4753 = vmatmul.mubr.f32.gmra.mrb[0].mxu0 %v4662
      %v4754 = vpop.f32.mrb[0].mxu0
      %v4755 = vadd.f32 0.0, %v4754
      %v4756 = vpop.f32.mrb[0].mxu0
      %4757 = vmatprep.mubr.f32.mxu0 0.0
      %4758 = vmatmul.mubr.f32.gmra.mrb[0].mxu0 %v4665
      %v4759 = vpop.f32.mrb[0].mxu0
      %v4760 = vadd.f32 0.0, %v4759
      %v4761 = vpop.f32.mrb[0].mxu0
      %4762 = vmatprep.mubr.f32.mxu0 0.0
      %4763 = vmatmul.mubr.f32.gmra.mrb[0].mxu0 %v4668
      %v4764 = vpop.f32.mrb[0].mxu0
      %v4765 = vadd.f32 0.0, %v4764
      %v4766 = vpop.f32.mrb[0].mxu0
      %4767 = vmatprep.mubr.f32.mxu0 0.0
      %4768 = vmatmul.mubr.f32.gmra.mrb[0].mxu0 %v4671
      %v4769 = vpop.f32.mrb[0].mxu0
      %v4770 = vadd.f32 0.0, %v4769
      %v4771 = vpop.f32.mrb[0].mxu0
      %4772 = vmatprep.mubr.f32.mxu0 0.0
      %4773 = vmatmul.mubr.f32.gmra.mrb[0].mxu0 %v4674
      %v4774 = vpop.f32.mrb[0].mxu0
      %v4775 = vadd.f32 0.0, %v4774
      %v4776 = vpop.f32.mrb[0].mxu0
      %4777 = vmatprep.mubr.f32.mxu0 0.0
      %4778 = vmatmul.mubr.f32.gmra.mrb[0].mxu0 %v4677
      %v4779 = vpop.f32.mrb[0].mxu0
      %v4780 = vadd.f32 0.0, %v4779
      %v4781 = vpop.f32.mrb[0].mxu0
      %4782 = vmatprep.mubr.f32.mxu0 0.0
      %4783 = vmatmul.mubr.f32.gmra.mrb[0].mxu0 %v4680
      %v4784 = vpop.f32.mrb[0].mxu0
      %v4785 = vadd.f32 0.0, %v4784
      %v4786 = vpop.f32.mrb[0].mxu0
      %4787 = vmatprep.mubr.f32.mxu0 0.0
      %4788 = vmatmul.mubr.f32.gmra.mrb[0].mxu0 %v4683
      %v4789 = vpop.f32.mrb[0].mxu0
      %v4790 = vadd.f32 0.0, %v4789
      %v4791 = vpop.f32.mrb[0].mxu0
      %4792 = vdwg.mxu0
      %v4793 = vadd.f32 %v4650, %v4755
      %v4794 = vadd.f32 %v4651, %v4760
      %v4795 = vadd.f32 %v4652, %v4765
      %v4796 = vadd.f32 %v4653, %v4770
      %v4797 = vadd.f32 %v4654, %v4775
      %v4798 = vadd.f32 %v4655, %v4780
      %v4799 = vadd.f32 %v4656, %v4785
      %v4800 = vadd.f32 %v4657, %v4790
      %s4801 = scalar_lea.vmem %s4, 176
      %v4802 = vld [vmem:[%s4801] sm:$0xff]
      %v4803 = vld [vmem:[%s4801 + $0x8] sm:$0x3]
      %v4805 = vsel %vm3248, %v2685, 0
      %v4808 = vsel %vm3248, %v2690, 0
      %v4811 = vsel %vm3248, %v2695, 0
      %v4814 = vsel %vm3248, %v2700, 0
      %v4817 = vsel %vm3248, %v2705, 0
      %v4820 = vsel %vm3248, %v2710, 0
      %v4823 = vsel %vm3248, %v2715, 0
      %v4826 = vsel %vm3248, %v2720, 0
      %v4829 = vsel %vm3273, %v4803, 0
      %4831 = vmatprep.subr.mxu0 0.0
      %4832 = vmatpush1.msra.mxu0 %v4802
      %4833 = vmatprep.subr.mxu0 0.0
      %4834 = vmatpush1.msra.mxu0 %v4829
      %4835 = vmatprep.subr.mxu0 0.0
      %4836 = vmatpush1.msra.mxu0 0.0
      %4837 = vmatprep.subr.mxu0 0.0
      %4838 = vmatpush1.msra.mxu0 0.0
      %4839 = vmatprep.subr.mxu0 0.0
      %4840 = vmatpush1.msra.mxu0 0.0
      %4841 = vmatprep.subr.mxu0 0.0
      %4842 = vmatpush1.msra.mxu0 0.0
      %4843 = vmatprep.subr.mxu0 0.0
      %4844 = vmatpush1.msra.mxu0 0.0
      %4845 = vmatprep.subr.mxu0 0.0
      %4846 = vmatpush1.msra.mxu0 0.0
      %4847 = vmatprep.subr.mxu0 0.0
      %4848 = vmatpush1.msra.mxu0 0.0
      %4849 = vmatprep.subr.mxu0 0.0
      %4850 = vmatpush1.msra.mxu0 0.0
      %4851 = vmatprep.subr.mxu0 0.0
      %4852 = vmatpush1.msra.mxu0 0.0
      %4853 = vmatprep.subr.mxu0 0.0
      %4854 = vmatpush1.msra.mxu0 0.0
      %4855 = vmatprep.subr.mxu0 0.0
      %4856 = vmatpush1.msra.mxu0 0.0
      %4857 = vmatprep.subr.mxu0 0.0
      %4858 = vmatpush1.msra.mxu0 0.0
      %4859 = vmatprep.subr.mxu0 0.0
      %4860 = vmatpush1.msra.mxu0 0.0
      %4861 = vmatprep.subr.mxu0 0.0
      %4862 = vmatpush1.msra.mxu0 0.0
      %4863 = vmatprep.subr.mxu0 0.0
      %4864 = vmatpush1.msra.mxu0 0.0
      %4865 = vmatprep.subr.mxu0 0.0
      %4866 = vmatpush1.msra.mxu0 0.0
      %4867 = vmatprep.subr.mxu0 0.0
      %4868 = vmatpush1.msra.mxu0 0.0
      %4869 = vmatprep.subr.mxu0 0.0
      %4870 = vmatpush1.msra.mxu0 0.0
      %4871 = vmatprep.subr.mxu0 0.0
      %4872 = vmatpush1.msra.mxu0 0.0
      %4873 = vmatprep.subr.mxu0 0.0
      %4874 = vmatpush1.msra.mxu0 0.0
      %4875 = vmatprep.subr.mxu0 0.0
      %4876 = vmatpush1.msra.mxu0 0.0
      %4877 = vmatprep.subr.mxu0 0.0
      %4878 = vmatpush1.msra.mxu0 0.0
      %4879 = vmatprep.subr.mxu0 0.0
      %4880 = vmatpush1.msra.mxu0 0.0
      %4881 = vmatprep.subr.mxu0 0.0
      %4882 = vmatpush1.msra.mxu0 0.0
      %4883 = vmatprep.subr.mxu0 0.0
      %4884 = vmatpush1.msra.mxu0 0.0
      %4885 = vmatprep.subr.mxu0 0.0
      %4886 = vmatpush1.msra.mxu0 0.0
      %4887 = vmatprep.subr.mxu0 0.0
      %4888 = vmatpush1.msra.mxu0 0.0
      %4889 = vmatprep.subr.mxu0 0.0
      %4890 = vmatpush1.msra.mxu0 0.0
      %4891 = vmatprep.subr.mxu0 0.0
      %4892 = vmatpush1.msra.mxu0 0.0
      %4893 = vmatprep.subr.mxu0 0.0
      %4894 = vmatpush1.msra.mxu0 0.0
      %4895 = vmatprep.mubr.f32.mxu0 0.0
      %4896 = vmatmul.mubr.f32.gmra.mrb[0].mxu0 %v4805
      %v4897 = vpop.f32.mrb[0].mxu0
      %v4898 = vadd.f32 0.0, %v4897
      %v4899 = vpop.f32.mrb[0].mxu0
      %4900 = vmatprep.mubr.f32.mxu0 0.0
      %4901 = vmatmul.mubr.f32.gmra.mrb[0].mxu0 %v4808
      %v4902 = vpop.f32.mrb[0].mxu0
      %v4903 = vadd.f32 0.0, %v4902
      %v4904 = vpop.f32.mrb[0].mxu0
      %4905 = vmatprep.mubr.f32.mxu0 0.0
      %4906 = vmatmul.mubr.f32.gmra.mrb[0].mxu0 %v4811
      %v4907 = vpop.f32.mrb[0].mxu0
      %v4908 = vadd.f32 0.0, %v4907
      %v4909 = vpop.f32.mrb[0].mxu0
      %4910 = vmatprep.mubr.f32.mxu0 0.0
      %4911 = vmatmul.mubr.f32.gmra.mrb[0].mxu0 %v4814
      %v4912 = vpop.f32.mrb[0].mxu0
      %v4913 = vadd.f32 0.0, %v4912
      %v4914 = vpop.f32.mrb[0].mxu0
      %4915 = vmatprep.mubr.f32.mxu0 0.0
      %4916 = vmatmul.mubr.f32.gmra.mrb[0].mxu0 %v4817
      %v4917 = vpop.f32.mrb[0].mxu0
      %v4918 = vadd.f32 0.0, %v4917
      %v4919 = vpop.f32.mrb[0].mxu0
      %4920 = vmatprep.mubr.f32.mxu0 0.0
      %4921 = vmatmul.mubr.f32.gmra.mrb[0].mxu0 %v4820
      %v4922 = vpop.f32.mrb[0].mxu0
      %v4923 = vadd.f32 0.0, %v4922
      %v4924 = vpop.f32.mrb[0].mxu0
      %4925 = vmatprep.mubr.f32.mxu0 0.0
      %4926 = vmatmul.mubr.f32.gmra.mrb[0].mxu0 %v4823
      %v4927 = vpop.f32.mrb[0].mxu0
      %v4928 = vadd.f32 0.0, %v4927
      %v4929 = vpop.f32.mrb[0].mxu0
      %4930 = vmatprep.mubr.f32.mxu0 0.0
      %4931 = vmatmul.mubr.f32.gmra.mrb[0].mxu0 %v4826
      %v4932 = vpop.f32.mrb[0].mxu0
      %v4933 = vadd.f32 0.0, %v4932
      %v4934 = vpop.f32.mrb[0].mxu0
      %4935 = vdwg.mxu0
      %v4936 = vadd.f32 %v4793, %v4898
      %v4937 = vadd.f32 %v4794, %v4903
      %v4938 = vadd.f32 %v4795, %v4908
      %v4939 = vadd.f32 %v4796, %v4913
      %v4940 = vadd.f32 %v4797, %v4918
      %v4941 = vadd.f32 %v4798, %v4923
      %v4942 = vadd.f32 %v4799, %v4928
      %v4943 = vadd.f32 %v4800, %v4933
      %s4944 = scalar_lea.vmem %s4, 192
      %v4945 = vld [vmem:[%s4944] sm:$0xff]
      %v4946 = vld [vmem:[%s4944 + $0x8] sm:$0x3]
      %v4948 = vsel %vm3248, %v2725, 0
      %v4951 = vsel %vm3248, %v2730, 0
      %v4954 = vsel %vm3248, %v2735, 0
      %v4957 = vsel %vm3248, %v2740, 0
      %v4960 = vsel %vm3248, %v2745, 0
      %v4963 = vsel %vm3248, %v2750, 0
      %v4966 = vsel %vm3248, %v2755, 0
      %v4969 = vsel %vm3248, %v2760, 0
      %v4972 = vsel %vm3273, %v4946, 0
      %4974 = vmatprep.subr.mxu0 0.0
      %4975 = vmatpush1.msra.mxu0 %v4945
      %4976 = vmatprep.subr.mxu0 0.0
      %4977 = vmatpush1.msra.mxu0 %v4972
      %4978 = vmatprep.subr.mxu0 0.0
      %4979 = vmatpush1.msra.mxu0 0.0
      %4980 = vmatprep.subr.mxu0 0.0
      %4981 = vmatpush1.msra.mxu0 0.0
      %4982 = vmatprep.subr.mxu0 0.0
      %4983 = vmatpush1.msra.mxu0 0.0
      %4984 = vmatprep.subr.mxu0 0.0
      %4985 = vmatpush1.msra.mxu0 0.0
      %4986 = vmatprep.subr.mxu0 0.0
      %4987 = vmatpush1.msra.mxu0 0.0
      %4988 = vmatprep.subr.mxu0 0.0
      %4989 = vmatpush1.msra.mxu0 0.0
      %4990 = vmatprep.subr.mxu0 0.0
      %4991 = vmatpush1.msra.mxu0 0.0
      %4992 = vmatprep.subr.mxu0 0.0
      %4993 = vmatpush1.msra.mxu0 0.0
      %4994 = vmatprep.subr.mxu0 0.0
      %4995 = vmatpush1.msra.mxu0 0.0
      %4996 = vmatprep.subr.mxu0 0.0
      %4997 = vmatpush1.msra.mxu0 0.0
      %4998 = vmatprep.subr.mxu0 0.0
      %4999 = vmatpush1.msra.mxu0 0.0
      %5000 = vmatprep.subr.mxu0 0.0
      %5001 = vmatpush1.msra.mxu0 0.0
      %5002 = vmatprep.subr.mxu0 0.0
      %5003 = vmatpush1.msra.mxu0 0.0
      %5004 = vmatprep.subr.mxu0 0.0
      %5005 = vmatpush1.msra.mxu0 0.0
      %5006 = vmatprep.subr.mxu0 0.0
      %5007 = vmatpush1.msra.mxu0 0.0
      %5008 = vmatprep.subr.mxu0 0.0
      %5009 = vmatpush1.msra.mxu0 0.0
      %5010 = vmatprep.subr.mxu0 0.0
      %5011 = vmatpush1.msra.mxu0 0.0
      %5012 = vmatprep.subr.mxu0 0.0
      %5013 = vmatpush1.msra.mxu0 0.0
      %5014 = vmatprep.subr.mxu0 0.0
      %5015 = vmatpush1.msra.mxu0 0.0
      %5016 = vmatprep.subr.mxu0 0.0
      %5017 = vmatpush1.msra.mxu0 0.0
      %5018 = vmatprep.subr.mxu0 0.0
      %5019 = vmatpush1.msra.mxu0 0.0
      %5020 = vmatprep.subr.mxu0 0.0
      %5021 = vmatpush1.msra.mxu0 0.0
      %5022 = vmatprep.subr.mxu0 0.0
      %5023 = vmatpush1.msra.mxu0 0.0
      %5024 = vmatprep.subr.mxu0 0.0
      %5025 = vmatpush1.msra.mxu0 0.0
      %5026 = vmatprep.subr.mxu0 0.0
      %5027 = vmatpush1.msra.mxu0 0.0
      %5028 = vmatprep.subr.mxu0 0.0
      %5029 = vmatpush1.msra.mxu0 0.0
      %5030 = vmatprep.subr.mxu0 0.0
      %5031 = vmatpush1.msra.mxu0 0.0
      %5032 = vmatprep.subr.mxu0 0.0
      %5033 = vmatpush1.msra.mxu0 0.0
      %5034 = vmatprep.subr.mxu0 0.0
      %5035 = vmatpush1.msra.mxu0 0.0
      %5036 = vmatprep.subr.mxu0 0.0
      %5037 = vmatpush1.msra.mxu0 0.0
      %5038 = vmatprep.mubr.f32.mxu0 0.0
      %5039 = vmatmul.mubr.f32.gmra.mrb[0].mxu0 %v4948
      %v5040 = vpop.f32.mrb[0].mxu0
      %v5041 = vadd.f32 0.0, %v5040
      %v5042 = vpop.f32.mrb[0].mxu0
      %5043 = vmatprep.mubr.f32.mxu0 0.0
      %5044 = vmatmul.mubr.f32.gmra.mrb[0].mxu0 %v4951
      %v5045 = vpop.f32.mrb[0].mxu0
      %v5046 = vadd.f32 0.0, %v5045
      %v5047 = vpop.f32.mrb[0].mxu0
      %5048 = vmatprep.mubr.f32.mxu0 0.0
      %5049 = vmatmul.mubr.f32.gmra.mrb[0].mxu0 %v4954
      %v5050 = vpop.f32.mrb[0].mxu0
      %v5051 = vadd.f32 0.0, %v5050
      %v5052 = vpop.f32.mrb[0].mxu0
      %5053 = vmatprep.mubr.f32.mxu0 0.0
      %5054 = vmatmul.mubr.f32.gmra.mrb[0].mxu0 %v4957
      %v5055 = vpop.f32.mrb[0].mxu0
      %v5056 = vadd.f32 0.0, %v5055
      %v5057 = vpop.f32.mrb[0].mxu0
      %5058 = vmatprep.mubr.f32.mxu0 0.0
      %5059 = vmatmul.mubr.f32.gmra.mrb[0].mxu0 %v4960
      %v5060 = vpop.f32.mrb[0].mxu0
      %v5061 = vadd.f32 0.0, %v5060
      %v5062 = vpop.f32.mrb[0].mxu0
      %5063 = vmatprep.mubr.f32.mxu0 0.0
      %5064 = vmatmul.mubr.f32.gmra.mrb[0].mxu0 %v4963
      %v5065 = vpop.f32.mrb[0].mxu0
      %v5066 = vadd.f32 0.0, %v5065
      %v5067 = vpop.f32.mrb[0].mxu0
      %5068 = vmatprep.mubr.f32.mxu0 0.0
      %5069 = vmatmul.mubr.f32.gmra.mrb[0].mxu0 %v4966
      %v5070 = vpop.f32.mrb[0].mxu0
      %v5071 = vadd.f32 0.0, %v5070
      %v5072 = vpop.f32.mrb[0].mxu0
      %5073 = vmatprep.mubr.f32.mxu0 0.0
      %5074 = vmatmul.mubr.f32.gmra.mrb[0].mxu0 %v4969
      %v5075 = vpop.f32.mrb[0].mxu0
      %v5076 = vadd.f32 0.0, %v5075
      %v5077 = vpop.f32.mrb[0].mxu0
      %5078 = vdwg.mxu0
      %v5079 = vadd.f32 %v4936, %v5041
      %v5080 = vadd.f32 %v4937, %v5046
      %v5081 = vadd.f32 %v4938, %v5051
      %v5082 = vadd.f32 %v4939, %v5056
      %v5083 = vadd.f32 %v4940, %v5061
      %v5084 = vadd.f32 %v4941, %v5066
      %v5085 = vadd.f32 %v4942, %v5071
      %v5086 = vadd.f32 %v4943, %v5076
      %s5087 = scalar_lea.vmem %s4, 208
      %v5088 = vld [vmem:[%s5087] sm:$0xff]
      %v5089 = vld [vmem:[%s5087 + $0x8] sm:$0x3]
      %v5091 = vsel %vm3248, %v2765, 0
      %v5094 = vsel %vm3248, %v2770, 0
      %v5097 = vsel %vm3248, %v2775, 0
      %v5100 = vsel %vm3248, %v2780, 0
      %v5103 = vsel %vm3248, %v2785, 0
      %v5106 = vsel %vm3248, %v2790, 0
      %v5109 = vsel %vm3248, %v2795, 0
      %v5112 = vsel %vm3248, %v2800, 0
      %v5115 = vsel %vm3273, %v5089, 0
      %5117 = vmatprep.subr.mxu0 0.0
      %5118 = vmatpush1.msra.mxu0 %v5088
      %5119 = vmatprep.subr.mxu0 0.0
      %5120 = vmatpush1.msra.mxu0 %v5115
      %5121 = vmatprep.subr.mxu0 0.0
      %5122 = vmatpush1.msra.mxu0 0.0
      %5123 = vmatprep.subr.mxu0 0.0
      %5124 = vmatpush1.msra.mxu0 0.0
      %5125 = vmatprep.subr.mxu0 0.0
      %5126 = vmatpush1.msra.mxu0 0.0
      %5127 = vmatprep.subr.mxu0 0.0
      %5128 = vmatpush1.msra.mxu0 0.0
      %5129 = vmatprep.subr.mxu0 0.0
      %5130 = vmatpush1.msra.mxu0 0.0
      %5131 = vmatprep.subr.mxu0 0.0
      %5132 = vmatpush1.msra.mxu0 0.0
      %5133 = vmatprep.subr.mxu0 0.0
      %5134 = vmatpush1.msra.mxu0 0.0
      %5135 = vmatprep.subr.mxu0 0.0
      %5136 = vmatpush1.msra.mxu0 0.0
      %5137 = vmatprep.subr.mxu0 0.0
      %5138 = vmatpush1.msra.mxu0 0.0
      %5139 = vmatprep.subr.mxu0 0.0
      %5140 = vmatpush1.msra.mxu0 0.0
      %5141 = vmatprep.subr.mxu0 0.0
      %5142 = vmatpush1.msra.mxu0 0.0
      %5143 = vmatprep.subr.mxu0 0.0
      %5144 = vmatpush1.msra.mxu0 0.0
      %5145 = vmatprep.subr.mxu0 0.0
      %5146 = vmatpush1.msra.mxu0 0.0
      %5147 = vmatprep.subr.mxu0 0.0
      %5148 = vmatpush1.msra.mxu0 0.0
      %5149 = vmatprep.subr.mxu0 0.0
      %5150 = vmatpush1.msra.mxu0 0.0
      %5151 = vmatprep.subr.mxu0 0.0
      %5152 = vmatpush1.msra.mxu0 0.0
      %5153 = vmatprep.subr.mxu0 0.0
      %5154 = vmatpush1.msra.mxu0 0.0
      %5155 = vmatprep.subr.mxu0 0.0
      %5156 = vmatpush1.msra.mxu0 0.0
      %5157 = vmatprep.subr.mxu0 0.0
      %5158 = vmatpush1.msra.mxu0 0.0
      %5159 = vmatprep.subr.mxu0 0.0
      %5160 = vmatpush1.msra.mxu0 0.0
      %5161 = vmatprep.subr.mxu0 0.0
      %5162 = vmatpush1.msra.mxu0 0.0
      %5163 = vmatprep.subr.mxu0 0.0
      %5164 = vmatpush1.msra.mxu0 0.0
      %5165 = vmatprep.subr.mxu0 0.0
      %5166 = vmatpush1.msra.mxu0 0.0
      %5167 = vmatprep.subr.mxu0 0.0
      %5168 = vmatpush1.msra.mxu0 0.0
      %5169 = vmatprep.subr.mxu0 0.0
      %5170 = vmatpush1.msra.mxu0 0.0
      %5171 = vmatprep.subr.mxu0 0.0
      %5172 = vmatpush1.msra.mxu0 0.0
      %5173 = vmatprep.subr.mxu0 0.0
      %5174 = vmatpush1.msra.mxu0 0.0
      %5175 = vmatprep.subr.mxu0 0.0
      %5176 = vmatpush1.msra.mxu0 0.0
      %5177 = vmatprep.subr.mxu0 0.0
      %5178 = vmatpush1.msra.mxu0 0.0
      %5179 = vmatprep.subr.mxu0 0.0
      %5180 = vmatpush1.msra.mxu0 0.0
      %5181 = vmatprep.mubr.f32.mxu0 0.0
      %5182 = vmatmul.mubr.f32.gmra.mrb[0].mxu0 %v5091
      %v5183 = vpop.f32.mrb[0].mxu0
      %v5184 = vadd.f32 0.0, %v5183
      %v5185 = vpop.f32.mrb[0].mxu0
      %5186 = vmatprep.mubr.f32.mxu0 0.0
      %5187 = vmatmul.mubr.f32.gmra.mrb[0].mxu0 %v5094
      %v5188 = vpop.f32.mrb[0].mxu0
      %v5189 = vadd.f32 0.0, %v5188
      %v5190 = vpop.f32.mrb[0].mxu0
      %5191 = vmatprep.mubr.f32.mxu0 0.0
      %5192 = vmatmul.mubr.f32.gmra.mrb[0].mxu0 %v5097
      %v5193 = vpop.f32.mrb[0].mxu0
      %v5194 = vadd.f32 0.0, %v5193
      %v5195 = vpop.f32.mrb[0].mxu0
      %5196 = vmatprep.mubr.f32.mxu0 0.0
      %5197 = vmatmul.mubr.f32.gmra.mrb[0].mxu0 %v5100
      %v5198 = vpop.f32.mrb[0].mxu0
      %v5199 = vadd.f32 0.0, %v5198
      %v5200 = vpop.f32.mrb[0].mxu0
      %5201 = vmatprep.mubr.f32.mxu0 0.0
      %5202 = vmatmul.mubr.f32.gmra.mrb[0].mxu0 %v5103
      %v5203 = vpop.f32.mrb[0].mxu0
      %v5204 = vadd.f32 0.0, %v5203
      %v5205 = vpop.f32.mrb[0].mxu0
      %5206 = vmatprep.mubr.f32.mxu0 0.0
      %5207 = vmatmul.mubr.f32.gmra.mrb[0].mxu0 %v5106
      %v5208 = vpop.f32.mrb[0].mxu0
      %v5209 = vadd.f32 0.0, %v5208
      %v5210 = vpop.f32.mrb[0].mxu0
      %5211 = vmatprep.mubr.f32.mxu0 0.0
      %5212 = vmatmul.mubr.f32.gmra.mrb[0].mxu0 %v5109
      %v5213 = vpop.f32.mrb[0].mxu0
      %v5214 = vadd.f32 0.0, %v5213
      %v5215 = vpop.f32.mrb[0].mxu0
      %5216 = vmatprep.mubr.f32.mxu0 0.0
      %5217 = vmatmul.mubr.f32.gmra.mrb[0].mxu0 %v5112
      %v5218 = vpop.f32.mrb[0].mxu0
      %v5219 = vadd.f32 0.0, %v5218
      %v5220 = vpop.f32.mrb[0].mxu0
      %5221 = vdwg.mxu0
      %v5222 = vadd.f32 %v5079, %v5184
      %v5223 = vadd.f32 %v5080, %v5189
      %v5224 = vadd.f32 %v5081, %v5194
      %v5225 = vadd.f32 %v5082, %v5199
      %v5226 = vadd.f32 %v5083, %v5204
      %v5227 = vadd.f32 %v5084, %v5209
      %v5228 = vadd.f32 %v5085, %v5214
      %v5229 = vadd.f32 %v5086, %v5219
      %s5230 = scalar_lea.vmem %s4, 224
      %v5231 = vld [vmem:[%s5230] sm:$0xff]
      %v5232 = vld [vmem:[%s5230 + $0x8] sm:$0x3]
      %v5234 = vsel %vm3248, %v2805, 0
      %v5237 = vsel %vm3248, %v2810, 0
      %v5240 = vsel %vm3248, %v2815, 0
      %v5243 = vsel %vm3248, %v2820, 0
      %v5246 = vsel %vm3248, %v2825, 0
      %v5249 = vsel %vm3248, %v2830, 0
      %v5252 = vsel %vm3248, %v2835, 0
      %v5255 = vsel %vm3248, %v2840, 0
      %v5258 = vsel %vm3273, %v5232, 0
      %5260 = vmatprep.subr.mxu0 0.0
      %5261 = vmatpush1.msra.mxu0 %v5231
      %5262 = vmatprep.subr.mxu0 0.0
      %5263 = vmatpush1.msra.mxu0 %v5258
      %5264 = vmatprep.subr.mxu0 0.0
      %5265 = vmatpush1.msra.mxu0 0.0
      %5266 = vmatprep.subr.mxu0 0.0
      %5267 = vmatpush1.msra.mxu0 0.0
      %5268 = vmatprep.subr.mxu0 0.0
      %5269 = vmatpush1.msra.mxu0 0.0
      %5270 = vmatprep.subr.mxu0 0.0
      %5271 = vmatpush1.msra.mxu0 0.0
      %5272 = vmatprep.subr.mxu0 0.0
      %5273 = vmatpush1.msra.mxu0 0.0
      %5274 = vmatprep.subr.mxu0 0.0
      %5275 = vmatpush1.msra.mxu0 0.0
      %5276 = vmatprep.subr.mxu0 0.0
      %5277 = vmatpush1.msra.mxu0 0.0
      %5278 = vmatprep.subr.mxu0 0.0
      %5279 = vmatpush1.msra.mxu0 0.0
      %5280 = vmatprep.subr.mxu0 0.0
      %5281 = vmatpush1.msra.mxu0 0.0
      %5282 = vmatprep.subr.mxu0 0.0
      %5283 = vmatpush1.msra.mxu0 0.0
      %5284 = vmatprep.subr.mxu0 0.0
      %5285 = vmatpush1.msra.mxu0 0.0
      %5286 = vmatprep.subr.mxu0 0.0
      %5287 = vmatpush1.msra.mxu0 0.0
      %5288 = vmatprep.subr.mxu0 0.0
      %5289 = vmatpush1.msra.mxu0 0.0
      %5290 = vmatprep.subr.mxu0 0.0
      %5291 = vmatpush1.msra.mxu0 0.0
      %5292 = vmatprep.subr.mxu0 0.0
      %5293 = vmatpush1.msra.mxu0 0.0
      %5294 = vmatprep.subr.mxu0 0.0
      %5295 = vmatpush1.msra.mxu0 0.0
      %5296 = vmatprep.subr.mxu0 0.0
      %5297 = vmatpush1.msra.mxu0 0.0
      %5298 = vmatprep.subr.mxu0 0.0
      %5299 = vmatpush1.msra.mxu0 0.0
      %5300 = vmatprep.subr.mxu0 0.0
      %5301 = vmatpush1.msra.mxu0 0.0
      %5302 = vmatprep.subr.mxu0 0.0
      %5303 = vmatpush1.msra.mxu0 0.0
      %5304 = vmatprep.subr.mxu0 0.0
      %5305 = vmatpush1.msra.mxu0 0.0
      %5306 = vmatprep.subr.mxu0 0.0
      %5307 = vmatpush1.msra.mxu0 0.0
      %5308 = vmatprep.subr.mxu0 0.0
      %5309 = vmatpush1.msra.mxu0 0.0
      %5310 = vmatprep.subr.mxu0 0.0
      %5311 = vmatpush1.msra.mxu0 0.0
      %5312 = vmatprep.subr.mxu0 0.0
      %5313 = vmatpush1.msra.mxu0 0.0
      %5314 = vmatprep.subr.mxu0 0.0
      %5315 = vmatpush1.msra.mxu0 0.0
      %5316 = vmatprep.subr.mxu0 0.0
      %5317 = vmatpush1.msra.mxu0 0.0
      %5318 = vmatprep.subr.mxu0 0.0
      %5319 = vmatpush1.msra.mxu0 0.0
      %5320 = vmatprep.subr.mxu0 0.0
      %5321 = vmatpush1.msra.mxu0 0.0
      %5322 = vmatprep.subr.mxu0 0.0
      %5323 = vmatpush1.msra.mxu0 0.0
      %5324 = vmatprep.mubr.f32.mxu0 0.0
      %5325 = vmatmul.mubr.f32.gmra.mrb[0].mxu0 %v5234
      %v5326 = vpop.f32.mrb[0].mxu0
      %v5327 = vadd.f32 0.0, %v5326
      %v5328 = vpop.f32.mrb[0].mxu0
      %5329 = vmatprep.mubr.f32.mxu0 0.0
      %5330 = vmatmul.mubr.f32.gmra.mrb[0].mxu0 %v5237
      %v5331 = vpop.f32.mrb[0].mxu0
      %v5332 = vadd.f32 0.0, %v5331
      %v5333 = vpop.f32.mrb[0].mxu0
      %5334 = vmatprep.mubr.f32.mxu0 0.0
      %5335 = vmatmul.mubr.f32.gmra.mrb[0].mxu0 %v5240
      %v5336 = vpop.f32.mrb[0].mxu0
      %v5337 = vadd.f32 0.0, %v5336
      %v5338 = vpop.f32.mrb[0].mxu0
      %5339 = vmatprep.mubr.f32.mxu0 0.0
      %5340 = vmatmul.mubr.f32.gmra.mrb[0].mxu0 %v5243
      %v5341 = vpop.f32.mrb[0].mxu0
      %v5342 = vadd.f32 0.0, %v5341
      %v5343 = vpop.f32.mrb[0].mxu0
      %5344 = vmatprep.mubr.f32.mxu0 0.0
      %5345 = vmatmul.mubr.f32.gmra.mrb[0].mxu0 %v5246
      %v5346 = vpop.f32.mrb[0].mxu0
      %v5347 = vadd.f32 0.0, %v5346
      %v5348 = vpop.f32.mrb[0].mxu0
      %5349 = vmatprep.mubr.f32.mxu0 0.0
      %5350 = vmatmul.mubr.f32.gmra.mrb[0].mxu0 %v5249
      %v5351 = vpop.f32.mrb[0].mxu0
      %v5352 = vadd.f32 0.0, %v5351
      %v5353 = vpop.f32.mrb[0].mxu0
      %5354 = vmatprep.mubr.f32.mxu0 0.0
      %5355 = vmatmul.mubr.f32.gmra.mrb[0].mxu0 %v5252
      %v5356 = vpop.f32.mrb[0].mxu0
      %v5357 = vadd.f32 0.0, %v5356
      %v5358 = vpop.f32.mrb[0].mxu0
      %5359 = vmatprep.mubr.f32.mxu0 0.0
      %5360 = vmatmul.mubr.f32.gmra.mrb[0].mxu0 %v5255
      %v5361 = vpop.f32.mrb[0].mxu0
      %v5362 = vadd.f32 0.0, %v5361
      %v5363 = vpop.f32.mrb[0].mxu0
      %5364 = vdwg.mxu0
      %v5365 = vadd.f32 %v5222, %v5327
      %v5366 = vadd.f32 %v5223, %v5332
      %v5367 = vadd.f32 %v5224, %v5337
      %v5368 = vadd.f32 %v5225, %v5342
      %v5369 = vadd.f32 %v5226, %v5347
      %v5370 = vadd.f32 %v5227, %v5352
      %v5371 = vadd.f32 %v5228, %v5357
      %v5372 = vadd.f32 %v5229, %v5362
      %s5373 = scalar_lea.vmem %s4, 240
      %v5374 = vld [vmem:[%s5373] sm:$0xff]
      %v5375 = vld [vmem:[%s5373 + $0x8] sm:$0x3]
      %v5377 = vsel %vm3248, %v2845, 0
      %v5380 = vsel %vm3248, %v2850, 0
      %v5383 = vsel %vm3248, %v2855, 0
      %v5386 = vsel %vm3248, %v2860, 0
      %v5389 = vsel %vm3248, %v2865, 0
      %v5392 = vsel %vm3248, %v2870, 0
      %v5395 = vsel %vm3248, %v2875, 0
      %v5398 = vsel %vm3248, %v2880, 0
      %v5401 = vsel %vm3273, %v5375, 0
      %5403 = vmatprep.subr.mxu0 0.0
      %5404 = vmatpush1.msra.mxu0 %v5374
      %5405 = vmatprep.subr.mxu0 0.0
      %5406 = vmatpush1.msra.mxu0 %v5401
      %5407 = vmatprep.subr.mxu0 0.0
      %5408 = vmatpush1.msra.mxu0 0.0
      %5409 = vmatprep.subr.mxu0 0.0
      %5410 = vmatpush1.msra.mxu0 0.0
      %5411 = vmatprep.subr.mxu0 0.0
      %5412 = vmatpush1.msra.mxu0 0.0
      %5413 = vmatprep.subr.mxu0 0.0
      %5414 = vmatpush1.msra.mxu0 0.0
      %5415 = vmatprep.subr.mxu0 0.0
      %5416 = vmatpush1.msra.mxu0 0.0
      %5417 = vmatprep.subr.mxu0 0.0
      %5418 = vmatpush1.msra.mxu0 0.0
      %5419 = vmatprep.subr.mxu0 0.0
      %5420 = vmatpush1.msra.mxu0 0.0
      %5421 = vmatprep.subr.mxu0 0.0
      %5422 = vmatpush1.msra.mxu0 0.0
      %5423 = vmatprep.subr.mxu0 0.0
      %5424 = vmatpush1.msra.mxu0 0.0
      %5425 = vmatprep.subr.mxu0 0.0
      %5426 = vmatpush1.msra.mxu0 0.0
      %5427 = vmatprep.subr.mxu0 0.0
      %5428 = vmatpush1.msra.mxu0 0.0
      %5429 = vmatprep.subr.mxu0 0.0
      %5430 = vmatpush1.msra.mxu0 0.0
      %5431 = vmatprep.subr.mxu0 0.0
      %5432 = vmatpush1.msra.mxu0 0.0
      %5433 = vmatprep.subr.mxu0 0.0
      %5434 = vmatpush1.msra.mxu0 0.0
      %5435 = vmatprep.subr.mxu0 0.0
      %5436 = vmatpush1.msra.mxu0 0.0
      %5437 = vmatprep.subr.mxu0 0.0
      %5438 = vmatpush1.msra.mxu0 0.0
      %5439 = vmatprep.subr.mxu0 0.0
      %5440 = vmatpush1.msra.mxu0 0.0
      %5441 = vmatprep.subr.mxu0 0.0
      %5442 = vmatpush1.msra.mxu0 0.0
      %5443 = vmatprep.subr.mxu0 0.0
      %5444 = vmatpush1.msra.mxu0 0.0
      %5445 = vmatprep.subr.mxu0 0.0
      %5446 = vmatpush1.msra.mxu0 0.0
      %5447 = vmatprep.subr.mxu0 0.0
      %5448 = vmatpush1.msra.mxu0 0.0
      %5449 = vmatprep.subr.mxu0 0.0
      %5450 = vmatpush1.msra.mxu0 0.0
      %5451 = vmatprep.subr.mxu0 0.0
      %5452 = vmatpush1.msra.mxu0 0.0
      %5453 = vmatprep.subr.mxu0 0.0
      %5454 = vmatpush1.msra.mxu0 0.0
      %5455 = vmatprep.subr.mxu0 0.0
      %5456 = vmatpush1.msra.mxu0 0.0
      %5457 = vmatprep.subr.mxu0 0.0
      %5458 = vmatpush1.msra.mxu0 0.0
      %5459 = vmatprep.subr.mxu0 0.0
      %5460 = vmatpush1.msra.mxu0 0.0
      %5461 = vmatprep.subr.mxu0 0.0
      %5462 = vmatpush1.msra.mxu0 0.0
      %5463 = vmatprep.subr.mxu0 0.0
      %5464 = vmatpush1.msra.mxu0 0.0
      %5465 = vmatprep.subr.mxu0 0.0
      %5466 = vmatpush1.msra.mxu0 0.0
      %5467 = vmatprep.mubr.f32.mxu0 0.0
      %5468 = vmatmul.mubr.f32.gmra.mrb[0].mxu0 %v5377
      %v5469 = vpop.f32.mrb[0].mxu0
      %v5470 = vadd.f32 0.0, %v5469
      %v5471 = vpop.f32.mrb[0].mxu0
      %5472 = vmatprep.mubr.f32.mxu0 0.0
      %5473 = vmatmul.mubr.f32.gmra.mrb[0].mxu0 %v5380
      %v5474 = vpop.f32.mrb[0].mxu0
      %v5475 = vadd.f32 0.0, %v5474
      %v5476 = vpop.f32.mrb[0].mxu0
      %5477 = vmatprep.mubr.f32.mxu0 0.0
      %5478 = vmatmul.mubr.f32.gmra.mrb[0].mxu0 %v5383
      %v5479 = vpop.f32.mrb[0].mxu0
      %v5480 = vadd.f32 0.0, %v5479
      %v5481 = vpop.f32.mrb[0].mxu0
      %5482 = vmatprep.mubr.f32.mxu0 0.0
      %5483 = vmatmul.mubr.f32.gmra.mrb[0].mxu0 %v5386
      %v5484 = vpop.f32.mrb[0].mxu0
      %v5485 = vadd.f32 0.0, %v5484
      %v5486 = vpop.f32.mrb[0].mxu0
      %5487 = vmatprep.mubr.f32.mxu0 0.0
      %5488 = vmatmul.mubr.f32.gmra.mrb[0].mxu0 %v5389
      %v5489 = vpop.f32.mrb[0].mxu0
      %v5490 = vadd.f32 0.0, %v5489
      %v5491 = vpop.f32.mrb[0].mxu0
      %5492 = vmatprep.mubr.f32.mxu0 0.0
      %5493 = vmatmul.mubr.f32.gmra.mrb[0].mxu0 %v5392
      %v5494 = vpop.f32.mrb[0].mxu0
      %v5495 = vadd.f32 0.0, %v5494
      %v5496 = vpop.f32.mrb[0].mxu0
      %5497 = vmatprep.mubr.f32.mxu0 0.0
      %5498 = vmatmul.mubr.f32.gmra.mrb[0].mxu0 %v5395
      %v5499 = vpop.f32.mrb[0].mxu0
      %v5500 = vadd.f32 0.0, %v5499
      %v5501 = vpop.f32.mrb[0].mxu0
      %5502 = vmatprep.mubr.f32.mxu0 0.0
      %5503 = vmatmul.mubr.f32.gmra.mrb[0].mxu0 %v5398
      %v5504 = vpop.f32.mrb[0].mxu0
      %v5505 = vadd.f32 0.0, %v5504
      %v5506 = vpop.f32.mrb[0].mxu0
      %5507 = vdwg.mxu0
      %v5508 = vadd.f32 %v5365, %v5470
      %v5509 = vadd.f32 %v5366, %v5475
      %v5510 = vadd.f32 %v5367, %v5480
      %v5511 = vadd.f32 %v5368, %v5485
      %v5512 = vadd.f32 %v5369, %v5490
      %v5513 = vadd.f32 %v5370, %v5495
      %v5514 = vadd.f32 %v5371, %v5500
      %v5515 = vadd.f32 %v5372, %v5505
      %s5516 = scalar_lea.vmem %s4, 256
      %v5517 = vld [vmem:[%s5516] sm:$0xff]
      %v5518 = vld [vmem:[%s5516 + $0x8] sm:$0x3]
      %v5520 = vsel %vm3248, %v2885, 0
      %v5523 = vsel %vm3248, %v2890, 0
      %v5526 = vsel %vm3248, %v2895, 0
      %v5529 = vsel %vm3248, %v2900, 0
      %v5532 = vsel %vm3248, %v2905, 0
      %v5535 = vsel %vm3248, %v2910, 0
      %v5538 = vsel %vm3248, %v2915, 0
      %v5541 = vsel %vm3248, %v2920, 0
      %v5544 = vsel %vm3273, %v5518, 0
      %5546 = vmatprep.subr.mxu0 0.0
      %5547 = vmatpush1.msra.mxu0 %v5517
      %5548 = vmatprep.subr.mxu0 0.0
      %5549 = vmatpush1.msra.mxu0 %v5544
      %5550 = vmatprep.subr.mxu0 0.0
      %5551 = vmatpush1.msra.mxu0 0.0
      %5552 = vmatprep.subr.mxu0 0.0
      %5553 = vmatpush1.msra.mxu0 0.0
      %5554 = vmatprep.subr.mxu0 0.0
      %5555 = vmatpush1.msra.mxu0 0.0
      %5556 = vmatprep.subr.mxu0 0.0
      %5557 = vmatpush1.msra.mxu0 0.0
      %5558 = vmatprep.subr.mxu0 0.0
      %5559 = vmatpush1.msra.mxu0 0.0
      %5560 = vmatprep.subr.mxu0 0.0
      %5561 = vmatpush1.msra.mxu0 0.0
      %5562 = vmatprep.subr.mxu0 0.0
      %5563 = vmatpush1.msra.mxu0 0.0
      %5564 = vmatprep.subr.mxu0 0.0
      %5565 = vmatpush1.msra.mxu0 0.0
      %5566 = vmatprep.subr.mxu0 0.0
      %5567 = vmatpush1.msra.mxu0 0.0
      %5568 = vmatprep.subr.mxu0 0.0
      %5569 = vmatpush1.msra.mxu0 0.0
      %5570 = vmatprep.subr.mxu0 0.0
      %5571 = vmatpush1.msra.mxu0 0.0
      %5572 = vmatprep.subr.mxu0 0.0
      %5573 = vmatpush1.msra.mxu0 0.0
      %5574 = vmatprep.subr.mxu0 0.0
      %5575 = vmatpush1.msra.mxu0 0.0
      %5576 = vmatprep.subr.mxu0 0.0
      %5577 = vmatpush1.msra.mxu0 0.0
      %5578 = vmatprep.subr.mxu0 0.0
      %5579 = vmatpush1.msra.mxu0 0.0
      %5580 = vmatprep.subr.mxu0 0.0
      %5581 = vmatpush1.msra.mxu0 0.0
      %5582 = vmatprep.subr.mxu0 0.0
      %5583 = vmatpush1.msra.mxu0 0.0
      %5584 = vmatprep.subr.mxu0 0.0
      %5585 = vmatpush1.msra.mxu0 0.0
      %5586 = vmatprep.subr.mxu0 0.0
      %5587 = vmatpush1.msra.mxu0 0.0
      %5588 = vmatprep.subr.mxu0 0.0
      %5589 = vmatpush1.msra.mxu0 0.0
      %5590 = vmatprep.subr.mxu0 0.0
      %5591 = vmatpush1.msra.mxu0 0.0
      %5592 = vmatprep.subr.mxu0 0.0
      %5593 = vmatpush1.msra.mxu0 0.0
      %5594 = vmatprep.subr.mxu0 0.0
      %5595 = vmatpush1.msra.mxu0 0.0
      %5596 = vmatprep.subr.mxu0 0.0
      %5597 = vmatpush1.msra.mxu0 0.0
      %5598 = vmatprep.subr.mxu0 0.0
      %5599 = vmatpush1.msra.mxu0 0.0
      %5600 = vmatprep.subr.mxu0 0.0
      %5601 = vmatpush1.msra.mxu0 0.0
      %5602 = vmatprep.subr.mxu0 0.0
      %5603 = vmatpush1.msra.mxu0 0.0
      %5604 = vmatprep.subr.mxu0 0.0
      %5605 = vmatpush1.msra.mxu0 0.0
      %5606 = vmatprep.subr.mxu0 0.0
      %5607 = vmatpush1.msra.mxu0 0.0
      %5608 = vmatprep.subr.mxu0 0.0
      %5609 = vmatpush1.msra.mxu0 0.0
      %5610 = vmatprep.mubr.f32.mxu0 0.0
      %5611 = vmatmul.mubr.f32.gmra.mrb[0].mxu0 %v5520
      %v5612 = vpop.f32.mrb[0].mxu0
      %v5613 = vadd.f32 0.0, %v5612
      %v5614 = vpop.f32.mrb[0].mxu0
      %5615 = vmatprep.mubr.f32.mxu0 0.0
      %5616 = vmatmul.mubr.f32.gmra.mrb[0].mxu0 %v5523
      %v5617 = vpop.f32.mrb[0].mxu0
      %v5618 = vadd.f32 0.0, %v5617
      %v5619 = vpop.f32.mrb[0].mxu0
      %5620 = vmatprep.mubr.f32.mxu0 0.0
      %5621 = vmatmul.mubr.f32.gmra.mrb[0].mxu0 %v5526
      %v5622 = vpop.f32.mrb[0].mxu0
      %v5623 = vadd.f32 0.0, %v5622
      %v5624 = vpop.f32.mrb[0].mxu0
      %5625 = vmatprep.mubr.f32.mxu0 0.0
      %5626 = vmatmul.mubr.f32.gmra.mrb[0].mxu0 %v5529
      %v5627 = vpop.f32.mrb[0].mxu0
      %v5628 = vadd.f32 0.0, %v5627
      %v5629 = vpop.f32.mrb[0].mxu0
      %5630 = vmatprep.mubr.f32.mxu0 0.0
      %5631 = vmatmul.mubr.f32.gmra.mrb[0].mxu0 %v5532
      %v5632 = vpop.f32.mrb[0].mxu0
      %v5633 = vadd.f32 0.0, %v5632
      %v5634 = vpop.f32.mrb[0].mxu0
      %5635 = vmatprep.mubr.f32.mxu0 0.0
      %5636 = vmatmul.mubr.f32.gmra.mrb[0].mxu0 %v5535
      %v5637 = vpop.f32.mrb[0].mxu0
      %v5638 = vadd.f32 0.0, %v5637
      %v5639 = vpop.f32.mrb[0].mxu0
      %5640 = vmatprep.mubr.f32.mxu0 0.0
      %5641 = vmatmul.mubr.f32.gmra.mrb[0].mxu0 %v5538
      %v5642 = vpop.f32.mrb[0].mxu0
      %v5643 = vadd.f32 0.0, %v5642
      %v5644 = vpop.f32.mrb[0].mxu0
      %5645 = vmatprep.mubr.f32.mxu0 0.0
      %5646 = vmatmul.mubr.f32.gmra.mrb[0].mxu0 %v5541
      %v5647 = vpop.f32.mrb[0].mxu0
      %v5648 = vadd.f32 0.0, %v5647
      %v5649 = vpop.f32.mrb[0].mxu0
      %5650 = vdwg.mxu0
      %v5651 = vadd.f32 %v5508, %v5613
      %v5652 = vadd.f32 %v5509, %v5618
      %v5653 = vadd.f32 %v5510, %v5623
      %v5654 = vadd.f32 %v5511, %v5628
      %v5655 = vadd.f32 %v5512, %v5633
      %v5656 = vadd.f32 %v5513, %v5638
      %v5657 = vadd.f32 %v5514, %v5643
      %v5658 = vadd.f32 %v5515, %v5648
      %s5659 = scalar_lea.vmem %s4, 272
      %v5660 = vld [vmem:[%s5659] sm:$0xff]
      %v5661 = vld [vmem:[%s5659 + $0x8] sm:$0x3]
      %v5663 = vsel %vm3248, %v2925, 0
      %v5666 = vsel %vm3248, %v2930, 0
      %v5669 = vsel %vm3248, %v2935, 0
      %v5672 = vsel %vm3248, %v2940, 0
      %v5675 = vsel %vm3248, %v2945, 0
      %v5678 = vsel %vm3248, %v2950, 0
      %v5681 = vsel %vm3248, %v2955, 0
      %v5684 = vsel %vm3248, %v2960, 0
      %v5687 = vsel %vm3273, %v5661, 0
      %5689 = vmatprep.subr.mxu0 0.0
      %5690 = vmatpush1.msra.mxu0 %v5660
      %5691 = vmatprep.subr.mxu0 0.0
      %5692 = vmatpush1.msra.mxu0 %v5687
      %5693 = vmatprep.subr.mxu0 0.0
      %5694 = vmatpush1.msra.mxu0 0.0
      %5695 = vmatprep.subr.mxu0 0.0
      %5696 = vmatpush1.msra.mxu0 0.0
      %5697 = vmatprep.subr.mxu0 0.0
      %5698 = vmatpush1.msra.mxu0 0.0
      %5699 = vmatprep.subr.mxu0 0.0
      %5700 = vmatpush1.msra.mxu0 0.0
      %5701 = vmatprep.subr.mxu0 0.0
      %5702 = vmatpush1.msra.mxu0 0.0
      %5703 = vmatprep.subr.mxu0 0.0
      %5704 = vmatpush1.msra.mxu0 0.0
      %5705 = vmatprep.subr.mxu0 0.0
      %5706 = vmatpush1.msra.mxu0 0.0
      %5707 = vmatprep.subr.mxu0 0.0
      %5708 = vmatpush1.msra.mxu0 0.0
      %5709 = vmatprep.subr.mxu0 0.0
      %5710 = vmatpush1.msra.mxu0 0.0
      %5711 = vmatprep.subr.mxu0 0.0
      %5712 = vmatpush1.msra.mxu0 0.0
      %5713 = vmatprep.subr.mxu0 0.0
      %5714 = vmatpush1.msra.mxu0 0.0
      %5715 = vmatprep.subr.mxu0 0.0
      %5716 = vmatpush1.msra.mxu0 0.0
      %5717 = vmatprep.subr.mxu0 0.0
      %5718 = vmatpush1.msra.mxu0 0.0
      %5719 = vmatprep.subr.mxu0 0.0
      %5720 = vmatpush1.msra.mxu0 0.0
      %5721 = vmatprep.subr.mxu0 0.0
      %5722 = vmatpush1.msra.mxu0 0.0
      %5723 = vmatprep.subr.mxu0 0.0
      %5724 = vmatpush1.msra.mxu0 0.0
      %5725 = vmatprep.subr.mxu0 0.0
      %5726 = vmatpush1.msra.mxu0 0.0
      %5727 = vmatprep.subr.mxu0 0.0
      %5728 = vmatpush1.msra.mxu0 0.0
      %5729 = vmatprep.subr.mxu0 0.0
      %5730 = vmatpush1.msra.mxu0 0.0
      %5731 = vmatprep.subr.mxu0 0.0
      %5732 = vmatpush1.msra.mxu0 0.0
      %5733 = vmatprep.subr.mxu0 0.0
      %5734 = vmatpush1.msra.mxu0 0.0
      %5735 = vmatprep.subr.mxu0 0.0
      %5736 = vmatpush1.msra.mxu0 0.0
      %5737 = vmatprep.subr.mxu0 0.0
      %5738 = vmatpush1.msra.mxu0 0.0
      %5739 = vmatprep.subr.mxu0 0.0
      %5740 = vmatpush1.msra.mxu0 0.0
      %5741 = vmatprep.subr.mxu0 0.0
      %5742 = vmatpush1.msra.mxu0 0.0
      %5743 = vmatprep.subr.mxu0 0.0
      %5744 = vmatpush1.msra.mxu0 0.0
      %5745 = vmatprep.subr.mxu0 0.0
      %5746 = vmatpush1.msra.mxu0 0.0
      %5747 = vmatprep.subr.mxu0 0.0
      %5748 = vmatpush1.msra.mxu0 0.0
      %5749 = vmatprep.subr.mxu0 0.0
      %5750 = vmatpush1.msra.mxu0 0.0
      %5751 = vmatprep.subr.mxu0 0.0
      %5752 = vmatpush1.msra.mxu0 0.0
      %5753 = vmatprep.mubr.f32.mxu0 0.0
      %5754 = vmatmul.mubr.f32.gmra.mrb[0].mxu0 %v5663
      %v5755 = vpop.f32.mrb[0].mxu0
      %v5756 = vadd.f32 0.0, %v5755
      %v5757 = vpop.f32.mrb[0].mxu0
      %5758 = vmatprep.mubr.f32.mxu0 0.0
      %5759 = vmatmul.mubr.f32.gmra.mrb[0].mxu0 %v5666
      %v5760 = vpop.f32.mrb[0].mxu0
      %v5761 = vadd.f32 0.0, %v5760
      %v5762 = vpop.f32.mrb[0].mxu0
      %5763 = vmatprep.mubr.f32.mxu0 0.0
      %5764 = vmatmul.mubr.f32.gmra.mrb[0].mxu0 %v5669
      %v5765 = vpop.f32.mrb[0].mxu0
      %v5766 = vadd.f32 0.0, %v5765
      %v5767 = vpop.f32.mrb[0].mxu0
      %5768 = vmatprep.mubr.f32.mxu0 0.0
      %5769 = vmatmul.mubr.f32.gmra.mrb[0].mxu0 %v5672
      %v5770 = vpop.f32.mrb[0].mxu0
      %v5771 = vadd.f32 0.0, %v5770
      %v5772 = vpop.f32.mrb[0].mxu0
      %5773 = vmatprep.mubr.f32.mxu0 0.0
      %5774 = vmatmul.mubr.f32.gmra.mrb[0].mxu0 %v5675
      %v5775 = vpop.f32.mrb[0].mxu0
      %v5776 = vadd.f32 0.0, %v5775
      %v5777 = vpop.f32.mrb[0].mxu0
      %5778 = vmatprep.mubr.f32.mxu0 0.0
      %5779 = vmatmul.mubr.f32.gmra.mrb[0].mxu0 %v5678
      %v5780 = vpop.f32.mrb[0].mxu0
      %v5781 = vadd.f32 0.0, %v5780
      %v5782 = vpop.f32.mrb[0].mxu0
      %5783 = vmatprep.mubr.f32.mxu0 0.0
      %5784 = vmatmul.mubr.f32.gmra.mrb[0].mxu0 %v5681
      %v5785 = vpop.f32.mrb[0].mxu0
      %v5786 = vadd.f32 0.0, %v5785
      %v5787 = vpop.f32.mrb[0].mxu0
      %5788 = vmatprep.mubr.f32.mxu0 0.0
      %5789 = vmatmul.mubr.f32.gmra.mrb[0].mxu0 %v5684
      %v5790 = vpop.f32.mrb[0].mxu0
      %v5791 = vadd.f32 0.0, %v5790
      %v5792 = vpop.f32.mrb[0].mxu0
      %5793 = vdwg.mxu0
      %v5794 = vadd.f32 %v5651, %v5756
      %v5795 = vadd.f32 %v5652, %v5761
      %v5796 = vadd.f32 %v5653, %v5766
      %v5797 = vadd.f32 %v5654, %v5771
      %v5798 = vadd.f32 %v5655, %v5776
      %v5799 = vadd.f32 %v5656, %v5781
      %v5800 = vadd.f32 %v5657, %v5786
      %v5801 = vadd.f32 %v5658, %v5791
      %s5802 = scalar_lea.vmem %s4, 288
      %v5803 = vld [vmem:[%s5802] sm:$0xff]
      %v5804 = vld [vmem:[%s5802 + $0x8] sm:$0x3]
      %v5806 = vsel %vm3248, %v2965, 0
      %v5809 = vsel %vm3248, %v2970, 0
      %v5812 = vsel %vm3248, %v2975, 0
      %v5815 = vsel %vm3248, %v2980, 0
      %v5818 = vsel %vm3248, %v2985, 0
      %v5821 = vsel %vm3248, %v2990, 0
      %v5824 = vsel %vm3248, %v2995, 0
      %v5827 = vsel %vm3248, %v3000, 0
      %v5830 = vsel %vm3273, %v5804, 0
      %5832 = vmatprep.subr.mxu0 0.0
      %5833 = vmatpush1.msra.mxu0 %v5803
      %5834 = vmatprep.subr.mxu0 0.0
      %5835 = vmatpush1.msra.mxu0 %v5830
      %5836 = vmatprep.subr.mxu0 0.0
      %5837 = vmatpush1.msra.mxu0 0.0
      %5838 = vmatprep.subr.mxu0 0.0
      %5839 = vmatpush1.msra.mxu0 0.0
      %5840 = vmatprep.subr.mxu0 0.0
      %5841 = vmatpush1.msra.mxu0 0.0
      %5842 = vmatprep.subr.mxu0 0.0
      %5843 = vmatpush1.msra.mxu0 0.0
      %5844 = vmatprep.subr.mxu0 0.0
      %5845 = vmatpush1.msra.mxu0 0.0
      %5846 = vmatprep.subr.mxu0 0.0
      %5847 = vmatpush1.msra.mxu0 0.0
      %5848 = vmatprep.subr.mxu0 0.0
      %5849 = vmatpush1.msra.mxu0 0.0
      %5850 = vmatprep.subr.mxu0 0.0
      %5851 = vmatpush1.msra.mxu0 0.0
      %5852 = vmatprep.subr.mxu0 0.0
      %5853 = vmatpush1.msra.mxu0 0.0
      %5854 = vmatprep.subr.mxu0 0.0
      %5855 = vmatpush1.msra.mxu0 0.0
      %5856 = vmatprep.subr.mxu0 0.0
      %5857 = vmatpush1.msra.mxu0 0.0
      %5858 = vmatprep.subr.mxu0 0.0
      %5859 = vmatpush1.msra.mxu0 0.0
      %5860 = vmatprep.subr.mxu0 0.0
      %5861 = vmatpush1.msra.mxu0 0.0
      %5862 = vmatprep.subr.mxu0 0.0
      %5863 = vmatpush1.msra.mxu0 0.0
      %5864 = vmatprep.subr.mxu0 0.0
      %5865 = vmatpush1.msra.mxu0 0.0
      %5866 = vmatprep.subr.mxu0 0.0
      %5867 = vmatpush1.msra.mxu0 0.0
      %5868 = vmatprep.subr.mxu0 0.0
      %5869 = vmatpush1.msra.mxu0 0.0
      %5870 = vmatprep.subr.mxu0 0.0
      %5871 = vmatpush1.msra.mxu0 0.0
      %5872 = vmatprep.subr.mxu0 0.0
      %5873 = vmatpush1.msra.mxu0 0.0
      %5874 = vmatprep.subr.mxu0 0.0
      %5875 = vmatpush1.msra.mxu0 0.0
      %5876 = vmatprep.subr.mxu0 0.0
      %5877 = vmatpush1.msra.mxu0 0.0
      %5878 = vmatprep.subr.mxu0 0.0
      %5879 = vmatpush1.msra.mxu0 0.0
      %5880 = vmatprep.subr.mxu0 0.0
      %5881 = vmatpush1.msra.mxu0 0.0
      %5882 = vmatprep.subr.mxu0 0.0
      %5883 = vmatpush1.msra.mxu0 0.0
      %5884 = vmatprep.subr.mxu0 0.0
      %5885 = vmatpush1.msra.mxu0 0.0
      %5886 = vmatprep.subr.mxu0 0.0
      %5887 = vmatpush1.msra.mxu0 0.0
      %5888 = vmatprep.subr.mxu0 0.0
      %5889 = vmatpush1.msra.mxu0 0.0
      %5890 = vmatprep.subr.mxu0 0.0
      %5891 = vmatpush1.msra.mxu0 0.0
      %5892 = vmatprep.subr.mxu0 0.0
      %5893 = vmatpush1.msra.mxu0 0.0
      %5894 = vmatprep.subr.mxu0 0.0
      %5895 = vmatpush1.msra.mxu0 0.0
      %5896 = vmatprep.mubr.f32.mxu0 0.0
      %5897 = vmatmul.mubr.f32.gmra.mrb[0].mxu0 %v5806
      %v5898 = vpop.f32.mrb[0].mxu0
      %v5899 = vadd.f32 0.0, %v5898
      %v5900 = vpop.f32.mrb[0].mxu0
      %5901 = vmatprep.mubr.f32.mxu0 0.0
      %5902 = vmatmul.mubr.f32.gmra.mrb[0].mxu0 %v5809
      %v5903 = vpop.f32.mrb[0].mxu0
      %v5904 = vadd.f32 0.0, %v5903
      %v5905 = vpop.f32.mrb[0].mxu0
      %5906 = vmatprep.mubr.f32.mxu0 0.0
      %5907 = vmatmul.mubr.f32.gmra.mrb[0].mxu0 %v5812
      %v5908 = vpop.f32.mrb[0].mxu0
      %v5909 = vadd.f32 0.0, %v5908
      %v5910 = vpop.f32.mrb[0].mxu0
      %5911 = vmatprep.mubr.f32.mxu0 0.0
      %5912 = vmatmul.mubr.f32.gmra.mrb[0].mxu0 %v5815
      %v5913 = vpop.f32.mrb[0].mxu0
      %v5914 = vadd.f32 0.0, %v5913
      %v5915 = vpop.f32.mrb[0].mxu0
      %5916 = vmatprep.mubr.f32.mxu0 0.0
      %5917 = vmatmul.mubr.f32.gmra.mrb[0].mxu0 %v5818
      %v5918 = vpop.f32.mrb[0].mxu0
      %v5919 = vadd.f32 0.0, %v5918
      %v5920 = vpop.f32.mrb[0].mxu0
      %5921 = vmatprep.mubr.f32.mxu0 0.0
      %5922 = vmatmul.mubr.f32.gmra.mrb[0].mxu0 %v5821
      %v5923 = vpop.f32.mrb[0].mxu0
      %v5924 = vadd.f32 0.0, %v5923
      %v5925 = vpop.f32.mrb[0].mxu0
      %5926 = vmatprep.mubr.f32.mxu0 0.0
      %5927 = vmatmul.mubr.f32.gmra.mrb[0].mxu0 %v5824
      %v5928 = vpop.f32.mrb[0].mxu0
      %v5929 = vadd.f32 0.0, %v5928
      %v5930 = vpop.f32.mrb[0].mxu0
      %5931 = vmatprep.mubr.f32.mxu0 0.0
      %5932 = vmatmul.mubr.f32.gmra.mrb[0].mxu0 %v5827
      %v5933 = vpop.f32.mrb[0].mxu0
      %v5934 = vadd.f32 0.0, %v5933
      %v5935 = vpop.f32.mrb[0].mxu0
      %5936 = vdwg.mxu0
      %v5937 = vadd.f32 %v5794, %v5899
      %v5938 = vadd.f32 %v5795, %v5904
      %v5939 = vadd.f32 %v5796, %v5909
      %v5940 = vadd.f32 %v5797, %v5914
      %v5941 = vadd.f32 %v5798, %v5919
      %v5942 = vadd.f32 %v5799, %v5924
      %v5943 = vadd.f32 %v5800, %v5929
      %v5944 = vadd.f32 %v5801, %v5934
      %s5945 = scalar_lea.vmem %s4, 304
      %v5946 = vld [vmem:[%s5945] sm:$0xff]
      %v5947 = vld [vmem:[%s5945 + $0x8] sm:$0x3]
      %v5949 = vsel %vm3248, %v3005, 0
      %v5952 = vsel %vm3248, %v3010, 0
      %v5955 = vsel %vm3248, %v3015, 0
      %v5958 = vsel %vm3248, %v3020, 0
      %v5961 = vsel %vm3248, %v3025, 0
      %v5964 = vsel %vm3248, %v3030, 0
      %v5967 = vsel %vm3248, %v3035, 0
      %v5970 = vsel %vm3248, %v3040, 0
      %v5973 = vsel %vm3273, %v5947, 0
      %5975 = vmatprep.subr.mxu0 0.0
      %5976 = vmatpush1.msra.mxu0 %v5946
      %5977 = vmatprep.subr.mxu0 0.0
      %5978 = vmatpush1.msra.mxu0 %v5973
      %5979 = vmatprep.subr.mxu0 0.0
      %5980 = vmatpush1.msra.mxu0 0.0
      %5981 = vmatprep.subr.mxu0 0.0
      %5982 = vmatpush1.msra.mxu0 0.0
      %5983 = vmatprep.subr.mxu0 0.0
      %5984 = vmatpush1.msra.mxu0 0.0
      %5985 = vmatprep.subr.mxu0 0.0
      %5986 = vmatpush1.msra.mxu0 0.0
      %5987 = vmatprep.subr.mxu0 0.0
      %5988 = vmatpush1.msra.mxu0 0.0
      %5989 = vmatprep.subr.mxu0 0.0
      %5990 = vmatpush1.msra.mxu0 0.0
      %5991 = vmatprep.subr.mxu0 0.0
      %5992 = vmatpush1.msra.mxu0 0.0
      %5993 = vmatprep.subr.mxu0 0.0
      %5994 = vmatpush1.msra.mxu0 0.0
      %5995 = vmatprep.subr.mxu0 0.0
      %5996 = vmatpush1.msra.mxu0 0.0
      %5997 = vmatprep.subr.mxu0 0.0
      %5998 = vmatpush1.msra.mxu0 0.0
      %5999 = vmatprep.subr.mxu0 0.0
      %6000 = vmatpush1.msra.mxu0 0.0
      %6001 = vmatprep.subr.mxu0 0.0
      %6002 = vmatpush1.msra.mxu0 0.0
      %6003 = vmatprep.subr.mxu0 0.0
      %6004 = vmatpush1.msra.mxu0 0.0
      %6005 = vmatprep.subr.mxu0 0.0
      %6006 = vmatpush1.msra.mxu0 0.0
      %6007 = vmatprep.subr.mxu0 0.0
      %6008 = vmatpush1.msra.mxu0 0.0
      %6009 = vmatprep.subr.mxu0 0.0
      %6010 = vmatpush1.msra.mxu0 0.0
      %6011 = vmatprep.subr.mxu0 0.0
      %6012 = vmatpush1.msra.mxu0 0.0
      %6013 = vmatprep.subr.mxu0 0.0
      %6014 = vmatpush1.msra.mxu0 0.0
      %6015 = vmatprep.subr.mxu0 0.0
      %6016 = vmatpush1.msra.mxu0 0.0
      %6017 = vmatprep.subr.mxu0 0.0
      %6018 = vmatpush1.msra.mxu0 0.0
      %6019 = vmatprep.subr.mxu0 0.0
      %6020 = vmatpush1.msra.mxu0 0.0
      %6021 = vmatprep.subr.mxu0 0.0
      %6022 = vmatpush1.msra.mxu0 0.0
      %6023 = vmatprep.subr.mxu0 0.0
      %6024 = vmatpush1.msra.mxu0 0.0
      %6025 = vmatprep.subr.mxu0 0.0
      %6026 = vmatpush1.msra.mxu0 0.0
      %6027 = vmatprep.subr.mxu0 0.0
      %6028 = vmatpush1.msra.mxu0 0.0
      %6029 = vmatprep.subr.mxu0 0.0
      %6030 = vmatpush1.msra.mxu0 0.0
      %6031 = vmatprep.subr.mxu0 0.0
      %6032 = vmatpush1.msra.mxu0 0.0
      %6033 = vmatprep.subr.mxu0 0.0
      %6034 = vmatpush1.msra.mxu0 0.0
      %6035 = vmatprep.subr.mxu0 0.0
      %6036 = vmatpush1.msra.mxu0 0.0
      %6037 = vmatprep.subr.mxu0 0.0
      %6038 = vmatpush1.msra.mxu0 0.0
      %6039 = vmatprep.mubr.f32.mxu0 0.0
      %6040 = vmatmul.mubr.f32.gmra.mrb[0].mxu0 %v5949
      %v6041 = vpop.f32.mrb[0].mxu0
      %v6042 = vadd.f32 0.0, %v6041
      %v6043 = vpop.f32.mrb[0].mxu0
      %6044 = vmatprep.mubr.f32.mxu0 0.0
      %6045 = vmatmul.mubr.f32.gmra.mrb[0].mxu0 %v5952
      %v6046 = vpop.f32.mrb[0].mxu0
      %v6047 = vadd.f32 0.0, %v6046
      %v6048 = vpop.f32.mrb[0].mxu0
      %6049 = vmatprep.mubr.f32.mxu0 0.0
      %6050 = vmatmul.mubr.f32.gmra.mrb[0].mxu0 %v5955
      %v6051 = vpop.f32.mrb[0].mxu0
      %v6052 = vadd.f32 0.0, %v6051
      %v6053 = vpop.f32.mrb[0].mxu0
      %6054 = vmatprep.mubr.f32.mxu0 0.0
      %6055 = vmatmul.mubr.f32.gmra.mrb[0].mxu0 %v5958
      %v6056 = vpop.f32.mrb[0].mxu0
      %v6057 = vadd.f32 0.0, %v6056
      %v6058 = vpop.f32.mrb[0].mxu0
      %6059 = vmatprep.mubr.f32.mxu0 0.0
      %6060 = vmatmul.mubr.f32.gmra.mrb[0].mxu0 %v5961
      %v6061 = vpop.f32.mrb[0].mxu0
      %v6062 = vadd.f32 0.0, %v6061
      %v6063 = vpop.f32.mrb[0].mxu0
      %6064 = vmatprep.mubr.f32.mxu0 0.0
      %6065 = vmatmul.mubr.f32.gmra.mrb[0].mxu0 %v5964
      %v6066 = vpop.f32.mrb[0].mxu0
      %v6067 = vadd.f32 0.0, %v6066
      %v6068 = vpop.f32.mrb[0].mxu0
      %6069 = vmatprep.mubr.f32.mxu0 0.0
      %6070 = vmatmul.mubr.f32.gmra.mrb[0].mxu0 %v5967
      %v6071 = vpop.f32.mrb[0].mxu0
      %v6072 = vadd.f32 0.0, %v6071
      %v6073 = vpop.f32.mrb[0].mxu0
      %6074 = vmatprep.mubr.f32.mxu0 0.0
      %6075 = vmatmul.mubr.f32.gmra.mrb[0].mxu0 %v5970
      %v6076 = vpop.f32.mrb[0].mxu0
      %v6077 = vadd.f32 0.0, %v6076
      %v6078 = vpop.f32.mrb[0].mxu0
      %6079 = vdwg.mxu0
      %v6080 = vadd.f32 %v5937, %v6042
      %v6081 = vadd.f32 %v5938, %v6047
      %v6082 = vadd.f32 %v5939, %v6052
      %v6083 = vadd.f32 %v5940, %v6057
      %v6084 = vadd.f32 %v5941, %v6062
      %v6085 = vadd.f32 %v5942, %v6067
      %v6086 = vadd.f32 %v5943, %v6072
      %v6087 = vadd.f32 %v5944, %v6077
      %s6088 = scalar_lea.vmem %s4, 320
      %v6089 = vld [vmem:[%s6088] sm:$0xff]
      %v6090 = vld [vmem:[%s6088 + $0x8] sm:$0x3]
      %v6092 = vsel %vm3248, %v3045, 0
      %v6095 = vsel %vm3248, %v3050, 0
      %v6098 = vsel %vm3248, %v3055, 0
      %v6101 = vsel %vm3248, %v3060, 0
      %v6104 = vsel %vm3248, %v3065, 0
      %v6107 = vsel %vm3248, %v3070, 0
      %v6110 = vsel %vm3248, %v3075, 0
      %v6113 = vsel %vm3248, %v3080, 0
      %v6116 = vsel %vm3273, %v6090, 0
      %6118 = vmatprep.subr.mxu0 0.0
      %6119 = vmatpush1.msra.mxu0 %v6089
      %6120 = vmatprep.subr.mxu0 0.0
      %6121 = vmatpush1.msra.mxu0 %v6116
      %6122 = vmatprep.subr.mxu0 0.0
      %6123 = vmatpush1.msra.mxu0 0.0
      %6124 = vmatprep.subr.mxu0 0.0
      %6125 = vmatpush1.msra.mxu0 0.0
      %6126 = vmatprep.subr.mxu0 0.0
      %6127 = vmatpush1.msra.mxu0 0.0
      %6128 = vmatprep.subr.mxu0 0.0
      %6129 = vmatpush1.msra.mxu0 0.0
      %6130 = vmatprep.subr.mxu0 0.0
      %6131 = vmatpush1.msra.mxu0 0.0
      %6132 = vmatprep.subr.mxu0 0.0
      %6133 = vmatpush1.msra.mxu0 0.0
      %6134 = vmatprep.subr.mxu0 0.0
      %6135 = vmatpush1.msra.mxu0 0.0
      %6136 = vmatprep.subr.mxu0 0.0
      %6137 = vmatpush1.msra.mxu0 0.0
      %6138 = vmatprep.subr.mxu0 0.0
      %6139 = vmatpush1.msra.mxu0 0.0
      %6140 = vmatprep.subr.mxu0 0.0
      %6141 = vmatpush1.msra.mxu0 0.0
      %6142 = vmatprep.subr.mxu0 0.0
      %6143 = vmatpush1.msra.mxu0 0.0
      %6144 = vmatprep.subr.mxu0 0.0
      %6145 = vmatpush1.msra.mxu0 0.0
      %6146 = vmatprep.subr.mxu0 0.0
      %6147 = vmatpush1.msra.mxu0 0.0
      %6148 = vmatprep.subr.mxu0 0.0
      %6149 = vmatpush1.msra.mxu0 0.0
      %6150 = vmatprep.subr.mxu0 0.0
      %6151 = vmatpush1.msra.mxu0 0.0
      %6152 = vmatprep.subr.mxu0 0.0
      %6153 = vmatpush1.msra.mxu0 0.0
      %6154 = vmatprep.subr.mxu0 0.0
      %6155 = vmatpush1.msra.mxu0 0.0
      %6156 = vmatprep.subr.mxu0 0.0
      %6157 = vmatpush1.msra.mxu0 0.0
      %6158 = vmatprep.subr.mxu0 0.0
      %6159 = vmatpush1.msra.mxu0 0.0
      %6160 = vmatprep.subr.mxu0 0.0
      %6161 = vmatpush1.msra.mxu0 0.0
      %6162 = vmatprep.subr.mxu0 0.0
      %6163 = vmatpush1.msra.mxu0 0.0
      %6164 = vmatprep.subr.mxu0 0.0
      %6165 = vmatpush1.msra.mxu0 0.0
      %6166 = vmatprep.subr.mxu0 0.0
      %6167 = vmatpush1.msra.mxu0 0.0
      %6168 = vmatprep.subr.mxu0 0.0
      %6169 = vmatpush1.msra.mxu0 0.0
      %6170 = vmatprep.subr.mxu0 0.0
      %6171 = vmatpush1.msra.mxu0 0.0
      %6172 = vmatprep.subr.mxu0 0.0
      %6173 = vmatpush1.msra.mxu0 0.0
      %6174 = vmatprep.subr.mxu0 0.0
      %6175 = vmatpush1.msra.mxu0 0.0
      %6176 = vmatprep.subr.mxu0 0.0
      %6177 = vmatpush1.msra.mxu0 0.0
      %6178 = vmatprep.subr.mxu0 0.0
      %6179 = vmatpush1.msra.mxu0 0.0
      %6180 = vmatprep.subr.mxu0 0.0
      %6181 = vmatpush1.msra.mxu0 0.0
      %6182 = vmatprep.mubr.f32.mxu0 0.0
      %6183 = vmatmul.mubr.f32.gmra.mrb[0].mxu0 %v6092
      %v6184 = vpop.f32.mrb[0].mxu0
      %v6185 = vadd.f32 0.0, %v6184
      %v6186 = vpop.f32.mrb[0].mxu0
      %6187 = vmatprep.mubr.f32.mxu0 0.0
      %6188 = vmatmul.mubr.f32.gmra.mrb[0].mxu0 %v6095
      %v6189 = vpop.f32.mrb[0].mxu0
      %v6190 = vadd.f32 0.0, %v6189
      %v6191 = vpop.f32.mrb[0].mxu0
      %6192 = vmatprep.mubr.f32.mxu0 0.0
      %6193 = vmatmul.mubr.f32.gmra.mrb[0].mxu0 %v6098
      %v6194 = vpop.f32.mrb[0].mxu0
      %v6195 = vadd.f32 0.0, %v6194
      %v6196 = vpop.f32.mrb[0].mxu0
      %6197 = vmatprep.mubr.f32.mxu0 0.0
      %6198 = vmatmul.mubr.f32.gmra.mrb[0].mxu0 %v6101
      %v6199 = vpop.f32.mrb[0].mxu0
      %v6200 = vadd.f32 0.0, %v6199
      %v6201 = vpop.f32.mrb[0].mxu0
      %6202 = vmatprep.mubr.f32.mxu0 0.0
      %6203 = vmatmul.mubr.f32.gmra.mrb[0].mxu0 %v6104
      %v6204 = vpop.f32.mrb[0].mxu0
      %v6205 = vadd.f32 0.0, %v6204
      %v6206 = vpop.f32.mrb[0].mxu0
      %6207 = vmatprep.mubr.f32.mxu0 0.0
      %6208 = vmatmul.mubr.f32.gmra.mrb[0].mxu0 %v6107
      %v6209 = vpop.f32.mrb[0].mxu0
      %v6210 = vadd.f32 0.0, %v6209
      %v6211 = vpop.f32.mrb[0].mxu0
      %6212 = vmatprep.mubr.f32.mxu0 0.0
      %6213 = vmatmul.mubr.f32.gmra.mrb[0].mxu0 %v6110
      %v6214 = vpop.f32.mrb[0].mxu0
      %v6215 = vadd.f32 0.0, %v6214
      %v6216 = vpop.f32.mrb[0].mxu0
      %6217 = vmatprep.mubr.f32.mxu0 0.0
      %6218 = vmatmul.mubr.f32.gmra.mrb[0].mxu0 %v6113
      %v6219 = vpop.f32.mrb[0].mxu0
      %v6220 = vadd.f32 0.0, %v6219
      %v6221 = vpop.f32.mrb[0].mxu0
      %6222 = vdwg.mxu0
      %v6223 = vadd.f32 %v6080, %v6185
      %v6224 = vadd.f32 %v6081, %v6190
      %v6225 = vadd.f32 %v6082, %v6195
      %v6226 = vadd.f32 %v6083, %v6200
      %v6227 = vadd.f32 %v6084, %v6205
      %v6228 = vadd.f32 %v6085, %v6210
      %v6229 = vadd.f32 %v6086, %v6215
      %v6230 = vadd.f32 %v6087, %v6220
      %s6231 = scalar_lea.vmem %s4, 336
      %v6232 = vld [vmem:[%s6231] sm:$0xff]
      %v6233 = vld [vmem:[%s6231 + $0x8] sm:$0x3]
      %v6235 = vsel %vm3248, %v3085, 0
      %v6238 = vsel %vm3248, %v3090, 0
      %v6241 = vsel %vm3248, %v3095, 0
      %v6244 = vsel %vm3248, %v3100, 0
      %v6247 = vsel %vm3248, %v3105, 0
      %v6250 = vsel %vm3248, %v3110, 0
      %v6253 = vsel %vm3248, %v3115, 0
      %v6256 = vsel %vm3248, %v3120, 0
      %v6259 = vsel %vm3273, %v6233, 0
      %6261 = vmatprep.subr.mxu0 0.0
      %6262 = vmatpush1.msra.mxu0 %v6232
      %6263 = vmatprep.subr.mxu0 0.0
      %6264 = vmatpush1.msra.mxu0 %v6259
      %6265 = vmatprep.subr.mxu0 0.0
      %6266 = vmatpush1.msra.mxu0 0.0
      %6267 = vmatprep.subr.mxu0 0.0
      %6268 = vmatpush1.msra.mxu0 0.0
      %6269 = vmatprep.subr.mxu0 0.0
      %6270 = vmatpush1.msra.mxu0 0.0
      %6271 = vmatprep.subr.mxu0 0.0
      %6272 = vmatpush1.msra.mxu0 0.0
      %6273 = vmatprep.subr.mxu0 0.0
      %6274 = vmatpush1.msra.mxu0 0.0
      %6275 = vmatprep.subr.mxu0 0.0
      %6276 = vmatpush1.msra.mxu0 0.0
      %6277 = vmatprep.subr.mxu0 0.0
      %6278 = vmatpush1.msra.mxu0 0.0
      %6279 = vmatprep.subr.mxu0 0.0
      %6280 = vmatpush1.msra.mxu0 0.0
      %6281 = vmatprep.subr.mxu0 0.0
      %6282 = vmatpush1.msra.mxu0 0.0
      %6283 = vmatprep.subr.mxu0 0.0
      %6284 = vmatpush1.msra.mxu0 0.0
      %6285 = vmatprep.subr.mxu0 0.0
      %6286 = vmatpush1.msra.mxu0 0.0
      %6287 = vmatprep.subr.mxu0 0.0
      %6288 = vmatpush1.msra.mxu0 0.0
      %6289 = vmatprep.subr.mxu0 0.0
      %6290 = vmatpush1.msra.mxu0 0.0
      %6291 = vmatprep.subr.mxu0 0.0
      %6292 = vmatpush1.msra.mxu0 0.0
      %6293 = vmatprep.subr.mxu0 0.0
      %6294 = vmatpush1.msra.mxu0 0.0
      %6295 = vmatprep.subr.mxu0 0.0
      %6296 = vmatpush1.msra.mxu0 0.0
      %6297 = vmatprep.subr.mxu0 0.0
      %6298 = vmatpush1.msra.mxu0 0.0
      %6299 = vmatprep.subr.mxu0 0.0
      %6300 = vmatpush1.msra.mxu0 0.0
      %6301 = vmatprep.subr.mxu0 0.0
      %6302 = vmatpush1.msra.mxu0 0.0
      %6303 = vmatprep.subr.mxu0 0.0
      %6304 = vmatpush1.msra.mxu0 0.0
      %6305 = vmatprep.subr.mxu0 0.0
      %6306 = vmatpush1.msra.mxu0 0.0
      %6307 = vmatprep.subr.mxu0 0.0
      %6308 = vmatpush1.msra.mxu0 0.0
      %6309 = vmatprep.subr.mxu0 0.0
      %6310 = vmatpush1.msra.mxu0 0.0
      %6311 = vmatprep.subr.mxu0 0.0
      %6312 = vmatpush1.msra.mxu0 0.0
      %6313 = vmatprep.subr.mxu0 0.0
      %6314 = vmatpush1.msra.mxu0 0.0
      %6315 = vmatprep.subr.mxu0 0.0
      %6316 = vmatpush1.msra.mxu0 0.0
      %6317 = vmatprep.subr.mxu0 0.0
      %6318 = vmatpush1.msra.mxu0 0.0
      %6319 = vmatprep.subr.mxu0 0.0
      %6320 = vmatpush1.msra.mxu0 0.0
      %6321 = vmatprep.subr.mxu0 0.0
      %6322 = vmatpush1.msra.mxu0 0.0
      %6323 = vmatprep.subr.mxu0 0.0
      %6324 = vmatpush1.msra.mxu0 0.0
      %6325 = vmatprep.mubr.f32.mxu0 0.0
      %6326 = vmatmul.mubr.f32.gmra.mrb[0].mxu0 %v6235
      %v6327 = vpop.f32.mrb[0].mxu0
      %v6328 = vadd.f32 0.0, %v6327
      %v6329 = vpop.f32.mrb[0].mxu0
      %6330 = vmatprep.mubr.f32.mxu0 0.0
      %6331 = vmatmul.mubr.f32.gmra.mrb[0].mxu0 %v6238
      %v6332 = vpop.f32.mrb[0].mxu0
      %v6333 = vadd.f32 0.0, %v6332
      %v6334 = vpop.f32.mrb[0].mxu0
      %6335 = vmatprep.mubr.f32.mxu0 0.0
      %6336 = vmatmul.mubr.f32.gmra.mrb[0].mxu0 %v6241
      %v6337 = vpop.f32.mrb[0].mxu0
      %v6338 = vadd.f32 0.0, %v6337
      %v6339 = vpop.f32.mrb[0].mxu0
      %6340 = vmatprep.mubr.f32.mxu0 0.0
      %6341 = vmatmul.mubr.f32.gmra.mrb[0].mxu0 %v6244
      %v6342 = vpop.f32.mrb[0].mxu0
      %v6343 = vadd.f32 0.0, %v6342
      %v6344 = vpop.f32.mrb[0].mxu0
      %6345 = vmatprep.mubr.f32.mxu0 0.0
      %6346 = vmatmul.mubr.f32.gmra.mrb[0].mxu0 %v6247
      %v6347 = vpop.f32.mrb[0].mxu0
      %v6348 = vadd.f32 0.0, %v6347
      %v6349 = vpop.f32.mrb[0].mxu0
      %6350 = vmatprep.mubr.f32.mxu0 0.0
      %6351 = vmatmul.mubr.f32.gmra.mrb[0].mxu0 %v6250
      %v6352 = vpop.f32.mrb[0].mxu0
      %v6353 = vadd.f32 0.0, %v6352
      %v6354 = vpop.f32.mrb[0].mxu0
      %6355 = vmatprep.mubr.f32.mxu0 0.0
      %6356 = vmatmul.mubr.f32.gmra.mrb[0].mxu0 %v6253
      %v6357 = vpop.f32.mrb[0].mxu0
      %v6358 = vadd.f32 0.0, %v6357
      %v6359 = vpop.f32.mrb[0].mxu0
      %6360 = vmatprep.mubr.f32.mxu0 0.0
      %6361 = vmatmul.mubr.f32.gmra.mrb[0].mxu0 %v6256
      %v6362 = vpop.f32.mrb[0].mxu0
      %v6363 = vadd.f32 0.0, %v6362
      %v6364 = vpop.f32.mrb[0].mxu0
      %6365 = vdwg.mxu0
      %v6366 = vadd.f32 %v6223, %v6328
      %v6367 = vadd.f32 %v6224, %v6333
      %v6368 = vadd.f32 %v6225, %v6338
      %v6369 = vadd.f32 %v6226, %v6343
      %v6370 = vadd.f32 %v6227, %v6348
      %v6371 = vadd.f32 %v6228, %v6353
      %v6372 = vadd.f32 %v6229, %v6358
      %v6373 = vadd.f32 %v6230, %v6363
      %s6374 = scalar_lea.vmem %s4, 352
      %v6375 = vld [vmem:[%s6374] sm:$0xff]
      %v6376 = vld [vmem:[%s6374 + $0x8] sm:$0x3]
      %v6378 = vsel %vm3248, %v3125, 0
      %v6381 = vsel %vm3248, %v3130, 0
      %v6384 = vsel %vm3248, %v3135, 0
      %v6387 = vsel %vm3248, %v3140, 0
      %v6390 = vsel %vm3248, %v3145, 0
      %v6393 = vsel %vm3248, %v3150, 0
      %v6396 = vsel %vm3248, %v3155, 0
      %v6399 = vsel %vm3248, %v3160, 0
      %v6402 = vsel %vm3273, %v6376, 0
      %6404 = vmatprep.subr.mxu0 0.0
      %6405 = vmatpush1.msra.mxu0 %v6375
      %6406 = vmatprep.subr.mxu0 0.0
      %6407 = vmatpush1.msra.mxu0 %v6402
      %6408 = vmatprep.subr.mxu0 0.0
      %6409 = vmatpush1.msra.mxu0 0.0
      %6410 = vmatprep.subr.mxu0 0.0
      %6411 = vmatpush1.msra.mxu0 0.0
      %6412 = vmatprep.subr.mxu0 0.0
      %6413 = vmatpush1.msra.mxu0 0.0
      %6414 = vmatprep.subr.mxu0 0.0
      %6415 = vmatpush1.msra.mxu0 0.0
      %6416 = vmatprep.subr.mxu0 0.0
      %6417 = vmatpush1.msra.mxu0 0.0
      %6418 = vmatprep.subr.mxu0 0.0
      %6419 = vmatpush1.msra.mxu0 0.0
      %6420 = vmatprep.subr.mxu0 0.0
      %6421 = vmatpush1.msra.mxu0 0.0
      %6422 = vmatprep.subr.mxu0 0.0
      %6423 = vmatpush1.msra.mxu0 0.0
      %6424 = vmatprep.subr.mxu0 0.0
      %6425 = vmatpush1.msra.mxu0 0.0
      %6426 = vmatprep.subr.mxu0 0.0
      %6427 = vmatpush1.msra.mxu0 0.0
      %6428 = vmatprep.subr.mxu0 0.0
      %6429 = vmatpush1.msra.mxu0 0.0
      %6430 = vmatprep.subr.mxu0 0.0
      %6431 = vmatpush1.msra.mxu0 0.0
      %6432 = vmatprep.subr.mxu0 0.0
      %6433 = vmatpush1.msra.mxu0 0.0
      %6434 = vmatprep.subr.mxu0 0.0
      %6435 = vmatpush1.msra.mxu0 0.0
      %6436 = vmatprep.subr.mxu0 0.0
      %6437 = vmatpush1.msra.mxu0 0.0
      %6438 = vmatprep.subr.mxu0 0.0
      %6439 = vmatpush1.msra.mxu0 0.0
      %6440 = vmatprep.subr.mxu0 0.0
      %6441 = vmatpush1.msra.mxu0 0.0
      %6442 = vmatprep.subr.mxu0 0.0
      %6443 = vmatpush1.msra.mxu0 0.0
      %6444 = vmatprep.subr.mxu0 0.0
      %6445 = vmatpush1.msra.mxu0 0.0
      %6446 = vmatprep.subr.mxu0 0.0
      %6447 = vmatpush1.msra.mxu0 0.0
      %6448 = vmatprep.subr.mxu0 0.0
      %6449 = vmatpush1.msra.mxu0 0.0
      %6450 = vmatprep.subr.mxu0 0.0
      %6451 = vmatpush1.msra.mxu0 0.0
      %6452 = vmatprep.subr.mxu0 0.0
      %6453 = vmatpush1.msra.mxu0 0.0
      %6454 = vmatprep.subr.mxu0 0.0
      %6455 = vmatpush1.msra.mxu0 0.0
      %6456 = vmatprep.subr.mxu0 0.0
      %6457 = vmatpush1.msra.mxu0 0.0
      %6458 = vmatprep.subr.mxu0 0.0
      %6459 = vmatpush1.msra.mxu0 0.0
      %6460 = vmatprep.subr.mxu0 0.0
      %6461 = vmatpush1.msra.mxu0 0.0
      %6462 = vmatprep.subr.mxu0 0.0
      %6463 = vmatpush1.msra.mxu0 0.0
      %6464 = vmatprep.subr.mxu0 0.0
      %6465 = vmatpush1.msra.mxu0 0.0
      %6466 = vmatprep.subr.mxu0 0.0
      %6467 = vmatpush1.msra.mxu0 0.0
      %6468 = vmatprep.mubr.f32.mxu0 0.0
      %6469 = vmatmul.mubr.f32.gmra.mrb[0].mxu0 %v6378
      %v6470 = vpop.f32.mrb[0].mxu0
      %v6471 = vadd.f32 0.0, %v6470
      %v6472 = vpop.f32.mrb[0].mxu0
      %6473 = vmatprep.mubr.f32.mxu0 0.0
      %6474 = vmatmul.mubr.f32.gmra.mrb[0].mxu0 %v6381
      %v6475 = vpop.f32.mrb[0].mxu0
      %v6476 = vadd.f32 0.0, %v6475
      %v6477 = vpop.f32.mrb[0].mxu0
      %6478 = vmatprep.mubr.f32.mxu0 0.0
      %6479 = vmatmul.mubr.f32.gmra.mrb[0].mxu0 %v6384
      %v6480 = vpop.f32.mrb[0].mxu0
      %v6481 = vadd.f32 0.0, %v6480
      %v6482 = vpop.f32.mrb[0].mxu0
      %6483 = vmatprep.mubr.f32.mxu0 0.0
      %6484 = vmatmul.mubr.f32.gmra.mrb[0].mxu0 %v6387
      %v6485 = vpop.f32.mrb[0].mxu0
      %v6486 = vadd.f32 0.0, %v6485
      %v6487 = vpop.f32.mrb[0].mxu0
      %6488 = vmatprep.mubr.f32.mxu0 0.0
      %6489 = vmatmul.mubr.f32.gmra.mrb[0].mxu0 %v6390
      %v6490 = vpop.f32.mrb[0].mxu0
      %v6491 = vadd.f32 0.0, %v6490
      %v6492 = vpop.f32.mrb[0].mxu0
      %6493 = vmatprep.mubr.f32.mxu0 0.0
      %6494 = vmatmul.mubr.f32.gmra.mrb[0].mxu0 %v6393
      %v6495 = vpop.f32.mrb[0].mxu0
      %v6496 = vadd.f32 0.0, %v6495
      %v6497 = vpop.f32.mrb[0].mxu0
      %6498 = vmatprep.mubr.f32.mxu0 0.0
      %6499 = vmatmul.mubr.f32.gmra.mrb[0].mxu0 %v6396
      %v6500 = vpop.f32.mrb[0].mxu0
      %v6501 = vadd.f32 0.0, %v6500
      %v6502 = vpop.f32.mrb[0].mxu0
      %6503 = vmatprep.mubr.f32.mxu0 0.0
      %6504 = vmatmul.mubr.f32.gmra.mrb[0].mxu0 %v6399
      %v6505 = vpop.f32.mrb[0].mxu0
      %v6506 = vadd.f32 0.0, %v6505
      %v6507 = vpop.f32.mrb[0].mxu0
      %6508 = vdwg.mxu0
      %v6509 = vadd.f32 %v6366, %v6471
      %v6510 = vadd.f32 %v6367, %v6476
      %v6511 = vadd.f32 %v6368, %v6481
      %v6512 = vadd.f32 %v6369, %v6486
      %v6513 = vadd.f32 %v6370, %v6491
      %v6514 = vadd.f32 %v6371, %v6496
      %v6515 = vadd.f32 %v6372, %v6501
      %v6516 = vadd.f32 %v6373, %v6506
      %s6517 = scalar_lea.vmem %s4, 368
      %v6518 = vld [vmem:[%s6517] sm:$0xff]
      %v6519 = vld [vmem:[%s6517 + $0x8] sm:$0x3]
      %v6521 = vsel %vm3248, %v3165, 0
      %v6524 = vsel %vm3248, %v3170, 0
      %v6527 = vsel %vm3248, %v3175, 0
      %v6530 = vsel %vm3248, %v3180, 0
      %v6533 = vsel %vm3248, %v3185, 0
      %v6536 = vsel %vm3248, %v3190, 0
      %v6539 = vsel %vm3248, %v3195, 0
      %v6542 = vsel %vm3248, %v3200, 0
      %v6545 = vsel %vm3273, %v6519, 0
      %6547 = vmatprep.subr.mxu0 0.0
      %6548 = vmatpush1.msra.mxu0 %v6518
      %6549 = vmatprep.subr.mxu0 0.0
      %6550 = vmatpush1.msra.mxu0 %v6545
      %6551 = vmatprep.subr.mxu0 0.0
      %6552 = vmatpush1.msra.mxu0 0.0
      %6553 = vmatprep.subr.mxu0 0.0
      %6554 = vmatpush1.msra.mxu0 0.0
      %6555 = vmatprep.subr.mxu0 0.0
      %6556 = vmatpush1.msra.mxu0 0.0
      %6557 = vmatprep.subr.mxu0 0.0
      %6558 = vmatpush1.msra.mxu0 0.0
      %6559 = vmatprep.subr.mxu0 0.0
      %6560 = vmatpush1.msra.mxu0 0.0
      %6561 = vmatprep.subr.mxu0 0.0
      %6562 = vmatpush1.msra.mxu0 0.0
      %6563 = vmatprep.subr.mxu0 0.0
      %6564 = vmatpush1.msra.mxu0 0.0
      %6565 = vmatprep.subr.mxu0 0.0
      %6566 = vmatpush1.msra.mxu0 0.0
      %6567 = vmatprep.subr.mxu0 0.0
      %6568 = vmatpush1.msra.mxu0 0.0
      %6569 = vmatprep.subr.mxu0 0.0
      %6570 = vmatpush1.msra.mxu0 0.0
      %6571 = vmatprep.subr.mxu0 0.0
      %6572 = vmatpush1.msra.mxu0 0.0
      %6573 = vmatprep.subr.mxu0 0.0
      %6574 = vmatpush1.msra.mxu0 0.0
      %6575 = vmatprep.subr.mxu0 0.0
      %6576 = vmatpush1.msra.mxu0 0.0
      %6577 = vmatprep.subr.mxu0 0.0
      %6578 = vmatpush1.msra.mxu0 0.0
      %6579 = vmatprep.subr.mxu0 0.0
      %6580 = vmatpush1.msra.mxu0 0.0
      %6581 = vmatprep.subr.mxu0 0.0
      %6582 = vmatpush1.msra.mxu0 0.0
      %6583 = vmatprep.subr.mxu0 0.0
      %6584 = vmatpush1.msra.mxu0 0.0
      %6585 = vmatprep.subr.mxu0 0.0
      %6586 = vmatpush1.msra.mxu0 0.0
      %6587 = vmatprep.subr.mxu0 0.0
      %6588 = vmatpush1.msra.mxu0 0.0
      %6589 = vmatprep.subr.mxu0 0.0
      %6590 = vmatpush1.msra.mxu0 0.0
      %6591 = vmatprep.subr.mxu0 0.0
      %6592 = vmatpush1.msra.mxu0 0.0
      %6593 = vmatprep.subr.mxu0 0.0
      %6594 = vmatpush1.msra.mxu0 0.0
      %6595 = vmatprep.subr.mxu0 0.0
      %6596 = vmatpush1.msra.mxu0 0.0
      %6597 = vmatprep.subr.mxu0 0.0
      %6598 = vmatpush1.msra.mxu0 0.0
      %6599 = vmatprep.subr.mxu0 0.0
      %6600 = vmatpush1.msra.mxu0 0.0
      %6601 = vmatprep.subr.mxu0 0.0
      %6602 = vmatpush1.msra.mxu0 0.0
      %6603 = vmatprep.subr.mxu0 0.0
      %6604 = vmatpush1.msra.mxu0 0.0
      %6605 = vmatprep.subr.mxu0 0.0
      %6606 = vmatpush1.msra.mxu0 0.0
      %6607 = vmatprep.subr.mxu0 0.0
      %6608 = vmatpush1.msra.mxu0 0.0
      %6609 = vmatprep.subr.mxu0 0.0
      %6610 = vmatpush1.msra.mxu0 0.0
      %6611 = vmatprep.mubr.f32.mxu0 0.0
      %6612 = vmatmul.mubr.f32.gmra.mrb[0].mxu0 %v6521
      %v6613 = vpop.f32.mrb[0].mxu0
      %v6614 = vadd.f32 0.0, %v6613
      %v6615 = vpop.f32.mrb[0].mxu0
      %6616 = vmatprep.mubr.f32.mxu0 0.0
      %6617 = vmatmul.mubr.f32.gmra.mrb[0].mxu0 %v6524
      %v6618 = vpop.f32.mrb[0].mxu0
      %v6619 = vadd.f32 0.0, %v6618
      %v6620 = vpop.f32.mrb[0].mxu0
      %6621 = vmatprep.mubr.f32.mxu0 0.0
      %6622 = vmatmul.mubr.f32.gmra.mrb[0].mxu0 %v6527
      %v6623 = vpop.f32.mrb[0].mxu0
      %v6624 = vadd.f32 0.0, %v6623
      %v6625 = vpop.f32.mrb[0].mxu0
      %6626 = vmatprep.mubr.f32.mxu0 0.0
      %6627 = vmatmul.mubr.f32.gmra.mrb[0].mxu0 %v6530
      %v6628 = vpop.f32.mrb[0].mxu0
      %v6629 = vadd.f32 0.0, %v6628
      %v6630 = vpop.f32.mrb[0].mxu0
      %6631 = vmatprep.mubr.f32.mxu0 0.0
      %6632 = vmatmul.mubr.f32.gmra.mrb[0].mxu0 %v6533
      %v6633 = vpop.f32.mrb[0].mxu0
      %v6634 = vadd.f32 0.0, %v6633
      %v6635 = vpop.f32.mrb[0].mxu0
      %6636 = vmatprep.mubr.f32.mxu0 0.0
      %6637 = vmatmul.mubr.f32.gmra.mrb[0].mxu0 %v6536
      %v6638 = vpop.f32.mrb[0].mxu0
      %v6639 = vadd.f32 0.0, %v6638
      %v6640 = vpop.f32.mrb[0].mxu0
      %6641 = vmatprep.mubr.f32.mxu0 0.0
      %6642 = vmatmul.mubr.f32.gmra.mrb[0].mxu0 %v6539
      %v6643 = vpop.f32.mrb[0].mxu0
      %v6644 = vadd.f32 0.0, %v6643
      %v6645 = vpop.f32.mrb[0].mxu0
      %6646 = vmatprep.mubr.f32.mxu0 0.0
      %6647 = vmatmul.mubr.f32.gmra.mrb[0].mxu0 %v6542
      %v6648 = vpop.f32.mrb[0].mxu0
      %v6649 = vadd.f32 0.0, %v6648
      %v6650 = vpop.f32.mrb[0].mxu0
      %6651 = vdwg.mxu0
      %v6652 = vadd.f32 %v6509, %v6614
      %v6653 = vadd.f32 %v6510, %v6619
      %v6654 = vadd.f32 %v6511, %v6624
      %v6655 = vadd.f32 %v6512, %v6629
      %v6656 = vadd.f32 %v6513, %v6634
      %v6657 = vadd.f32 %v6514, %v6639
      %v6658 = vadd.f32 %v6515, %v6644
      %v6659 = vadd.f32 %v6516, %v6649
      %s6660 = scalar_lea.vmem %s4, 384
      %v6661 = vld [vmem:[%s6660] sm:$0xff]
      %v6662 = vld [vmem:[%s6660 + $0x8] sm:$0x3]
      %v6664 = vsel %vm3248, %v3205, 0
      %v6667 = vsel %vm3248, %v3210, 0
      %v6670 = vsel %vm3248, %v3215, 0
      %v6673 = vsel %vm3248, %v3220, 0
      %v6676 = vsel %vm3248, %v3225, 0
      %v6679 = vsel %vm3248, %v3230, 0
      %v6682 = vsel %vm3248, %v3235, 0
      %v6685 = vsel %vm3248, %v3240, 0
      %v6688 = vsel %vm3273, %v6662, 0
      %6690 = vmatprep.subr.mxu0 0.0
      %6691 = vmatpush1.msra.mxu0 %v6661
      %6692 = vmatprep.subr.mxu0 0.0
      %6693 = vmatpush1.msra.mxu0 %v6688
      %6694 = vmatprep.subr.mxu0 0.0
      %6695 = vmatpush1.msra.mxu0 0.0
      %6696 = vmatprep.subr.mxu0 0.0
      %6697 = vmatpush1.msra.mxu0 0.0
      %6698 = vmatprep.subr.mxu0 0.0
      %6699 = vmatpush1.msra.mxu0 0.0
      %6700 = vmatprep.subr.mxu0 0.0
      %6701 = vmatpush1.msra.mxu0 0.0
      %6702 = vmatprep.subr.mxu0 0.0
      %6703 = vmatpush1.msra.mxu0 0.0
      %6704 = vmatprep.subr.mxu0 0.0
      %6705 = vmatpush1.msra.mxu0 0.0
      %6706 = vmatprep.subr.mxu0 0.0
      %6707 = vmatpush1.msra.mxu0 0.0
      %6708 = vmatprep.subr.mxu0 0.0
      %6709 = vmatpush1.msra.mxu0 0.0
      %6710 = vmatprep.subr.mxu0 0.0
      %6711 = vmatpush1.msra.mxu0 0.0
      %6712 = vmatprep.subr.mxu0 0.0
      %6713 = vmatpush1.msra.mxu0 0.0
      %6714 = vmatprep.subr.mxu0 0.0
      %6715 = vmatpush1.msra.mxu0 0.0
      %6716 = vmatprep.subr.mxu0 0.0
      %6717 = vmatpush1.msra.mxu0 0.0
      %6718 = vmatprep.subr.mxu0 0.0
      %6719 = vmatpush1.msra.mxu0 0.0
      %6720 = vmatprep.subr.mxu0 0.0
      %6721 = vmatpush1.msra.mxu0 0.0
      %6722 = vmatprep.subr.mxu0 0.0
      %6723 = vmatpush1.msra.mxu0 0.0
      %6724 = vmatprep.subr.mxu0 0.0
      %6725 = vmatpush1.msra.mxu0 0.0
      %6726 = vmatprep.subr.mxu0 0.0
      %6727 = vmatpush1.msra.mxu0 0.0
      %6728 = vmatprep.subr.mxu0 0.0
      %6729 = vmatpush1.msra.mxu0 0.0
      %6730 = vmatprep.subr.mxu0 0.0
      %6731 = vmatpush1.msra.mxu0 0.0
      %6732 = vmatprep.subr.mxu0 0.0
      %6733 = vmatpush1.msra.mxu0 0.0
      %6734 = vmatprep.subr.mxu0 0.0
      %6735 = vmatpush1.msra.mxu0 0.0
      %6736 = vmatprep.subr.mxu0 0.0
      %6737 = vmatpush1.msra.mxu0 0.0
      %6738 = vmatprep.subr.mxu0 0.0
      %6739 = vmatpush1.msra.mxu0 0.0
      %6740 = vmatprep.subr.mxu0 0.0
      %6741 = vmatpush1.msra.mxu0 0.0
      %6742 = vmatprep.subr.mxu0 0.0
      %6743 = vmatpush1.msra.mxu0 0.0
      %6744 = vmatprep.subr.mxu0 0.0
      %6745 = vmatpush1.msra.mxu0 0.0
      %6746 = vmatprep.subr.mxu0 0.0
      %6747 = vmatpush1.msra.mxu0 0.0
      %6748 = vmatprep.subr.mxu0 0.0
      %6749 = vmatpush1.msra.mxu0 0.0
      %6750 = vmatprep.subr.mxu0 0.0
      %6751 = vmatpush1.msra.mxu0 0.0
      %6752 = vmatprep.subr.mxu0 0.0
      %6753 = vmatpush1.msra.mxu0 0.0
      %6754 = vmatprep.mubr.f32.mxu0 0.0
      %6755 = vmatmul.mubr.f32.gmra.mrb[0].mxu0 %v6664
      %v6756 = vpop.f32.mrb[0].mxu0
      %v6757 = vadd.f32 0.0, %v6756
      %v6758 = vpop.f32.mrb[0].mxu0
      %6759 = vmatprep.mubr.f32.mxu0 0.0
      %6760 = vmatmul.mubr.f32.gmra.mrb[0].mxu0 %v6667
      %v6761 = vpop.f32.mrb[0].mxu0
      %v6762 = vadd.f32 0.0, %v6761
      %v6763 = vpop.f32.mrb[0].mxu0
      %6764 = vmatprep.mubr.f32.mxu0 0.0
      %6765 = vmatmul.mubr.f32.gmra.mrb[0].mxu0 %v6670
      %v6766 = vpop.f32.mrb[0].mxu0
      %v6767 = vadd.f32 0.0, %v6766
      %v6768 = vpop.f32.mrb[0].mxu0
      %6769 = vmatprep.mubr.f32.mxu0 0.0
      %6770 = vmatmul.mubr.f32.gmra.mrb[0].mxu0 %v6673
      %v6771 = vpop.f32.mrb[0].mxu0
      %v6772 = vadd.f32 0.0, %v6771
      %v6773 = vpop.f32.mrb[0].mxu0
      %6774 = vmatprep.mubr.f32.mxu0 0.0
      %6775 = vmatmul.mubr.f32.gmra.mrb[0].mxu0 %v6676
      %v6776 = vpop.f32.mrb[0].mxu0
      %v6777 = vadd.f32 0.0, %v6776
      %v6778 = vpop.f32.mrb[0].mxu0
      %6779 = vmatprep.mubr.f32.mxu0 0.0
      %6780 = vmatmul.mubr.f32.gmra.mrb[0].mxu0 %v6679
      %v6781 = vpop.f32.mrb[0].mxu0
      %v6782 = vadd.f32 0.0, %v6781
      %v6783 = vpop.f32.mrb[0].mxu0
      %6784 = vmatprep.mubr.f32.mxu0 0.0
      %6785 = vmatmul.mubr.f32.gmra.mrb[0].mxu0 %v6682
      %v6786 = vpop.f32.mrb[0].mxu0
      %v6787 = vadd.f32 0.0, %v6786
      %v6788 = vpop.f32.mrb[0].mxu0
      %6789 = vmatprep.mubr.f32.mxu0 0.0
      %6790 = vmatmul.mubr.f32.gmra.mrb[0].mxu0 %v6685
      %v6791 = vpop.f32.mrb[0].mxu0
      %v6792 = vadd.f32 0.0, %v6791
      %v6793 = vpop.f32.mrb[0].mxu0
      %6794 = vdwg.mxu0
      %v6795 = vadd.f32 %v6652, %v6757
      %v6796 = vadd.f32 %v6653, %v6762
      %v6797 = vadd.f32 %v6654, %v6767
      %v6798 = vadd.f32 %v6655, %v6772
      %v6799 = vadd.f32 %v6656, %v6777
      %v6800 = vadd.f32 %v6657, %v6782
      %v6801 = vadd.f32 %v6658, %v6787
      %v6802 = vadd.f32 %v6659, %v6792
      %v6803 = vmax.f32 %v6795, %v6797
      %v6804 = vmax.f32 %v6796, %v6798
      %v6805 = vmax.f32 %v6799, %v6801
      %v6806 = vmax.f32 %v6800, %v6802
      %v6807 = vmax.f32 %v6803, %v6805
      %v6808 = vmax.f32 %v6804, %v6806
      %v6809 = vld [vmem:[%s5] sm:$0x1]
      %v6811 = vlaneseq
      %v6812 = vshrl.u32 %v6811, 7
      %v6813 = vsub.s32 0, %v6812
      %v6814 = vrot.slane %v6809, %v6813
      %v6816 = vadd.f32 %v6807, %v6814
      %v6817 = vadd.f32 %v6808, %v6814
      %v6818 = vmax.f32 %v6816, 0.0
      %v6819 = vmax.f32 %v6817, 0.0
      %v6820 = vlaneseq
      %v6821 = vshrl.u32 %v6820, 7
      %v6822 = vadd.s32 %v6821, 8
      %v6823 = vadd.s32 %v6821, 16
      %v6824 = vlaneseq
      %v6825 = vand.u32 %v6824, 127
      %v6826 = vadd.s32 %v6825, 128
      %v6827 = vadd.s32 %v6825, 256
      %v6828 = vshra.s32 %v6825, 4
      %v6829 = vshra.s32 %v6826, 4
      %v6830 = vshra.s32 %v6827, 4
      %vm6831 = vcmp.eq.s32.totalorder %v6828, %v6821
      %vm6832 = vcmp.eq.s32.totalorder %v6829, %v6821
      %vm6833 = vcmp.eq.s32.totalorder %v6830, %v6821
      %vm6834 = vcmp.eq.s32.totalorder %v6828, %v6822
      %vm6835 = vcmp.eq.s32.totalorder %v6829, %v6822
      %vm6836 = vcmp.eq.s32.totalorder %v6830, %v6822
      %vm6837 = vcmp.eq.s32.totalorder %v6828, %v6823
      %vm6838 = vcmp.eq.s32.totalorder %v6829, %v6823
      %vm6839 = vcmp.eq.s32.totalorder %v6830, %v6823
      %v6840 = vsel %vm6831, 1, 0
      %v6841 = vsel %vm6832, 1, 0
      %v6842 = vsel %vm6833, 1, 0
      %v6843 = vsel %vm6834, 1, 0
      %v6844 = vsel %vm6835, 1, 0
      %v6845 = vsel %vm6836, 1, 0
      %v6846 = vsel %vm6837, 1, 0
      %v6847 = vsel %vm6838, 1, 0
      %v6848 = vsel %vm6839, 1, 0
      %v6849 = vcvt.s32.f32 %v6840
      %v6850 = vcvt.s32.f32 %v6841
      %v6851 = vcvt.s32.f32 %v6842
      %v6852 = vcvt.s32.f32 %v6843
      %v6853 = vcvt.s32.f32 %v6844
      %v6854 = vcvt.s32.f32 %v6845
      %v6855 = vcvt.s32.f32 %v6846
      %v6856 = vcvt.s32.f32 %v6847
      %v6857 = vcvt.s32.f32 %v6848
      %v6858 = vand.u32 %v6825, 15
      %v6859 = vand.u32 %v6826, 15
      %v6860 = vand.u32 %v6827, 15
      %vm6861 = vcmp.eq.s32.totalorder %v6858, %v6821
      %vm6862 = vcmp.eq.s32.totalorder %v6859, %v6821
      %vm6863 = vcmp.eq.s32.totalorder %v6860, %v6821
      %vm6864 = vcmp.eq.s32.totalorder %v6858, %v6822
      %vm6865 = vcmp.eq.s32.totalorder %v6859, %v6822
      %vm6866 = vcmp.eq.s32.totalorder %v6860, %v6822
      %v6867 = vsel %vm6861, 1, 0
      %v6868 = vsel %vm6862, 1, 0
      %v6869 = vsel %vm6863, 1, 0
      %v6870 = vsel %vm6864, 1, 0
      %v6871 = vsel %vm6865, 1, 0
      %v6872 = vsel %vm6866, 1, 0
      %v6873 = vcvt.s32.f32 %v6867
      %v6874 = vcvt.s32.f32 %v6868
      %v6875 = vcvt.s32.f32 %v6869
      %v6876 = vcvt.s32.f32 %v6870
      %v6877 = vcvt.s32.f32 %v6871
      %v6878 = vcvt.s32.f32 %v6872
      %vm6879 = vcmask 162816
      %v6881 = vsel %vm6879, %v6818, 0
      %v6884 = vsel %vm6879, %v6819, 0
      %vm6886 = vcmask 1043456
      %v6888 = vsel %vm6886, %v6855, 0
      %v6891 = vsel %vm6886, %v6856, 0
      %v6894 = vsel %vm6886, %v6857, 0
      %6896 = vmatprep.subr.mxu0 %v6850
      %6897 = vmatpush1.msra.mxu0 %v6849
      %6898 = vmatprep.subr.mxu0 %v6853
      %6899 = vmatpush1.msra.mxu0 %v6852
      %6900 = vmatprep.subr.mxu0 %v6891
      %6901 = vmatpush1.msra.mxu0 %v6888
      %6902 = vmatprep.subr.mxu0 0.0
      %6903 = vmatpush1.msra.mxu0 0.0
      %6904 = vmatprep.subr.mxu0 0.0
      %6905 = vmatpush1.msra.mxu0 0.0
      %6906 = vmatprep.subr.mxu0 0.0
      %6907 = vmatpush1.msra.mxu0 0.0
      %6908 = vmatprep.subr.mxu0 0.0
      %6909 = vmatpush1.msra.mxu0 0.0
      %6910 = vmatprep.subr.mxu0 0.0
      %6911 = vmatpush1.msra.mxu0 0.0
      %6912 = vmatprep.subr.mxu0 0.0
      %6913 = vmatpush1.msra.mxu0 0.0
      %6914 = vmatprep.subr.mxu0 0.0
      %6915 = vmatpush1.msra.mxu0 0.0
      %6916 = vmatprep.subr.mxu0 0.0
      %6917 = vmatpush1.msra.mxu0 0.0
      %6918 = vmatprep.subr.mxu0 0.0
      %6919 = vmatpush1.msra.mxu0 0.0
      %6920 = vmatprep.subr.mxu0 0.0
      %6921 = vmatpush1.msra.mxu0 0.0
      %6922 = vmatprep.subr.mxu0 0.0
      %6923 = vmatpush1.msra.mxu0 0.0
      %6924 = vmatprep.subr.mxu0 0.0
      %6925 = vmatpush1.msra.mxu0 0.0
      %6926 = vmatprep.subr.mxu0 0.0
      %6927 = vmatpush1.msra.mxu0 0.0
      %6928 = vmatprep.subr.mxu0 0.0
      %6929 = vmatpush1.msra.mxu0 0.0
      %6930 = vmatprep.subr.mxu0 0.0
      %6931 = vmatpush1.msra.mxu0 0.0
      %6932 = vmatprep.subr.mxu0 0.0
      %6933 = vmatpush1.msra.mxu0 0.0
      %6934 = vmatprep.subr.mxu0 0.0
      %6935 = vmatpush1.msra.mxu0 0.0
      %6936 = vmatprep.subr.mxu0 0.0
      %6937 = vmatpush1.msra.mxu0 0.0
      %6938 = vmatprep.subr.mxu0 0.0
      %6939 = vmatpush1.msra.mxu0 0.0
      %6940 = vmatprep.subr.mxu0 0.0
      %6941 = vmatpush1.msra.mxu0 0.0
      %6942 = vmatprep.subr.mxu0 0.0
      %6943 = vmatpush1.msra.mxu0 0.0
      %6944 = vmatprep.subr.mxu0 0.0
      %6945 = vmatpush1.msra.mxu0 0.0
      %6946 = vmatprep.subr.mxu0 0.0
      %6947 = vmatpush1.msra.mxu0 0.0
      %6948 = vmatprep.subr.mxu0 0.0
      %6949 = vmatpush1.msra.mxu0 0.0
      %6950 = vmatprep.subr.mxu0 0.0
      %6951 = vmatpush1.msra.mxu0 0.0
      %6952 = vmatprep.subr.mxu0 0.0
      %6953 = vmatpush1.msra.mxu0 0.0
      %6954 = vmatprep.subr.mxu0 0.0
      %6955 = vmatpush1.msra.mxu0 0.0
      %6956 = vmatprep.subr.mxu0 0.0
      %6957 = vmatpush1.msra.mxu0 0.0
      %6958 = vmatprep.subr.mxu0 0.0
      %6959 = vmatpush1.msra.mxu0 0.0
      %6960 = vmatprep.mubr.f32.mxu0 0.0
      %6961 = vmatmul.mubr.f32.gmra.mrb[0].mxu0 %v6881
      %v6962 = vpop.f32.mrb[0].mxu0
      %v6963 = vadd.f32 0.0, %v6962
      %v6964 = vpop.f32.mrb[0].mxu0
      %v6965 = vadd.f32 0.0, %v6964
      %6966 = vmatprep.mubr.f32.mxu0 0.0
      %6967 = vmatmul.mubr.f32.gmra.mrb[0].mxu0 %v6884
      %v6968 = vpop.f32.mrb[0].mxu0
      %v6969 = vadd.f32 0.0, %v6968
      %v6970 = vpop.f32.mrb[0].mxu0
      %v6971 = vadd.f32 0.0, %v6970
      %6972 = vdwg.mxu0
      %6973 = vmatprep.subr.mxu0 0.0
      %6974 = vmatpush1.msra.mxu0 %v6851
      %6975 = vmatprep.subr.mxu0 0.0
      %6976 = vmatpush1.msra.mxu0 %v6854
      %6977 = vmatprep.subr.mxu0 0.0
      %6978 = vmatpush1.msra.mxu0 %v6894
      %6979 = vmatprep.subr.mxu0 0.0
      %6980 = vmatpush1.msra.mxu0 0.0
      %6981 = vmatprep.subr.mxu0 0.0
      %6982 = vmatpush1.msra.mxu0 0.0
      %6983 = vmatprep.subr.mxu0 0.0
      %6984 = vmatpush1.msra.mxu0 0.0
      %6985 = vmatprep.subr.mxu0 0.0
      %6986 = vmatpush1.msra.mxu0 0.0
      %6987 = vmatprep.subr.mxu0 0.0
      %6988 = vmatpush1.msra.mxu0 0.0
      %6989 = vmatprep.subr.mxu0 0.0
      %6990 = vmatpush1.msra.mxu0 0.0
      %6991 = vmatprep.subr.mxu0 0.0
      %6992 = vmatpush1.msra.mxu0 0.0
      %6993 = vmatprep.subr.mxu0 0.0
      %6994 = vmatpush1.msra.mxu0 0.0
      %6995 = vmatprep.subr.mxu0 0.0
      %6996 = vmatpush1.msra.mxu0 0.0
      %6997 = vmatprep.subr.mxu0 0.0
      %6998 = vmatpush1.msra.mxu0 0.0
      %6999 = vmatprep.subr.mxu0 0.0
      %7000 = vmatpush1.msra.mxu0 0.0
      %7001 = vmatprep.subr.mxu0 0.0
      %7002 = vmatpush1.msra.mxu0 0.0
      %7003 = vmatprep.subr.mxu0 0.0
      %7004 = vmatpush1.msra.mxu0 0.0
      %7005 = vmatprep.subr.mxu0 0.0
      %7006 = vmatpush1.msra.mxu0 0.0
      %7007 = vmatprep.subr.mxu0 0.0
      %7008 = vmatpush1.msra.mxu0 0.0
      %7009 = vmatprep.subr.mxu0 0.0
      %7010 = vmatpush1.msra.mxu0 0.0
      %7011 = vmatprep.subr.mxu0 0.0
      %7012 = vmatpush1.msra.mxu0 0.0
      %7013 = vmatprep.subr.mxu0 0.0
      %7014 = vmatpush1.msra.mxu0 0.0
      %7015 = vmatprep.subr.mxu0 0.0
      %7016 = vmatpush1.msra.mxu0 0.0
      %7017 = vmatprep.subr.mxu0 0.0
      %7018 = vmatpush1.msra.mxu0 0.0
      %7019 = vmatprep.subr.mxu0 0.0
      %7020 = vmatpush1.msra.mxu0 0.0
      %7021 = vmatprep.subr.mxu0 0.0
      %7022 = vmatpush1.msra.mxu0 0.0
      %7023 = vmatprep.subr.mxu0 0.0
      %7024 = vmatpush1.msra.mxu0 0.0
      %7025 = vmatprep.subr.mxu0 0.0
      %7026 = vmatpush1.msra.mxu0 0.0
      %7027 = vmatprep.subr.mxu0 0.0
      %7028 = vmatpush1.msra.mxu0 0.0
      %7029 = vmatprep.subr.mxu0 0.0
      %7030 = vmatpush1.msra.mxu0 0.0
      %7031 = vmatprep.subr.mxu0 0.0
      %7032 = vmatpush1.msra.mxu0 0.0
      %7033 = vmatprep.subr.mxu0 0.0
      %7034 = vmatpush1.msra.mxu0 0.0
      %7035 = vmatprep.subr.mxu0 0.0
      %7036 = vmatpush1.msra.mxu0 0.0
      %7037 = vmatprep.mubr.f32.mxu0 0.0
      %7038 = vmatmul.mubr.f32.gmra.mrb[0].mxu0 %v6881
      %v7039 = vpop.f32.mrb[0].mxu0
      %v7040 = vadd.f32 0.0, %v7039
      %v7041 = vpop.f32.mrb[0].mxu0
      %7042 = vmatprep.mubr.f32.mxu0 0.0
      %7043 = vmatmul.mubr.f32.gmra.mrb[0].mxu0 %v6884
      %v7044 = vpop.f32.mrb[0].mxu0
      %v7045 = vadd.f32 0.0, %v7044
      %v7046 = vpop.f32.mrb[0].mxu0
      %7047 = vdwg.mxu0
      %v7048 = vmul.f32 %v6963, %v6873
      %v7049 = vmul.f32 %v6965, %v6874
      %v7050 = vmul.f32 %v7040, %v6875
      %v7051 = vmul.f32 %v6969, %v6876
      %v7052 = vmul.f32 %v6971, %v6877
      %v7053 = vmul.f32 %v7045, %v6878
      %v7054 = vadd.f32 %v7048, %v7051
      %v7055 = vrot.slane %v7054, 4
      %v7056 = vadd.f32 %v7054, %v7055
      %v7057 = vrot.slane %v7056, 2
      %v7058 = vadd.f32 %v7056, %v7057
      %v7059 = vrot.slane %v7058, 1
      %v7060 = vadd.f32 %v7058, %v7059
      %v7061 = vadd.f32 %v7049, %v7052
      %v7062 = vrot.slane %v7061, 4
      %v7063 = vadd.f32 %v7061, %v7062
      %v7064 = vrot.slane %v7063, 2
      %v7065 = vadd.f32 %v7063, %v7064
      %v7066 = vrot.slane %v7065, 1
      %v7067 = vadd.f32 %v7065, %v7066
      %vm7068 = vcmask 523264
      %v7069 = vsel %vm7068, %v7050, 0.0
      %v7070 = vsel %vm7068, %v7053, 0.0
      %v7071 = vadd.f32 %v7069, %v7070
      %v7072 = vrot.slane %v7071, 4
      %v7073 = vadd.f32 %v7071, %v7072
      %v7074 = vrot.slane %v7073, 2
      %v7075 = vadd.f32 %v7073, %v7074
      %v7076 = vrot.slane %v7075, 1
      %v7077 = vadd.f32 %v7075, %v7076
      %v7078 = vld [vmem:[%s6] sm:$0xff]
      %v7079 = vld [vmem:[%s6 + $0x8] sm:$0xff]
      %v7080 = vld [vmem:[%s6 + $0x10] sm:$0xff]
      %v7081 = vld [vmem:[%s6 + $0x18] sm:$0xff]
      %v7082 = vld [vmem:[%s6 + $0x20] sm:$0xff]
      %v7083 = vld [vmem:[%s6 + $0x28] sm:$0xff]
      %v7084 = vld [vmem:[%s6 + $0x30] sm:$0xff]
      %v7085 = vld [vmem:[%s6 + $0x38] sm:$0xff]
      %v7086 = vld [vmem:[%s6 + $0x40] sm:$0xff]
      %v7087 = vld [vmem:[%s6 + $0x48] sm:$0xff]
      %v7088 = vld [vmem:[%s6 + $0x50] sm:$0xff]
      %v7089 = vld [vmem:[%s6 + $0x58] sm:$0xff]
      %v7090 = vld [vmem:[%s6 + $0x60] sm:$0xff]
      %v7091 = vld [vmem:[%s6 + $0x68] sm:$0xff]
      %v7092 = vld [vmem:[%s6 + $0x70] sm:$0xff]
      %v7093 = vld [vmem:[%s6 + $0x78] sm:$0xff]
      %v7094 = vld [vmem:[%s6 + $0x80] sm:$0xff]
      %v7095 = vld [vmem:[%s6 + $0x88] sm:$0xff]
      %v7096 = vld [vmem:[%s6 + $0x90] sm:$0xff]
      %v7097 = vld [vmem:[%s6 + $0x98] sm:$0xff]
      %v7098 = vld [vmem:[%s6 + $0xa0] sm:$0xff]
      %v7099 = vld [vmem:[%s6 + $0xa8] sm:$0xff]
      %v7100 = vld [vmem:[%s6 + $0xb0] sm:$0xff]
      %v7101 = vld [vmem:[%s6 + $0xb8] sm:$0xff]
      %v7102 = vld [vmem:[%s6 + $0xc0] sm:$0xff]
      %v7103 = vld [vmem:[%s6 + $0xc8] sm:$0xff]
      %v7104 = vld [vmem:[%s6 + $0xd0] sm:$0xff]
      %v7105 = vld [vmem:[%s6 + $0xd8] sm:$0xff]
      %v7106 = vld [vmem:[%s6 + $0xe0] sm:$0xff]
      %v7107 = vld [vmem:[%s6 + $0xe8] sm:$0xff]
      %v7108 = vld [vmem:[%s6 + $0xf0] sm:$0xff]
      %v7109 = vld [vmem:[%s6 + $0xf8] sm:$0xff]
      %v7110 = vld [vmem:[%s6 + $0x100] sm:$0xff]
      %v7111 = vld [vmem:[%s6 + $0x108] sm:$0xff]
      %v7112 = vld [vmem:[%s6 + $0x110] sm:$0xff]
      %v7113 = vld [vmem:[%s6 + $0x118] sm:$0xff]
      %v7114 = vld [vmem:[%s6 + $0x120] sm:$0xff]
      %v7115 = vld [vmem:[%s6 + $0x128] sm:$0xff]
      %v7116 = vld [vmem:[%s6 + $0x130] sm:$0xff]
      %v7117 = vld [vmem:[%s6 + $0x138] sm:$0xff]
      %v7118 = vld [vmem:[%s7] sm:$0x1]
      %v7120 = vsel %vm7068, %v7077, 0
      %7122 = vmatprep.subr.mxu0 0.0
      %7123 = vmatpush1.msra.mxu0 %v7078
      %7124 = vmatprep.subr.mxu0 0.0
      %7125 = vmatpush1.msra.mxu0 %v7079
      %7126 = vmatprep.subr.mxu0 0.0
      %7127 = vmatpush1.msra.mxu0 %v7080
      %7128 = vmatprep.subr.mxu0 0.0
      %7129 = vmatpush1.msra.mxu0 %v7081
      %7130 = vmatprep.subr.mxu0 0.0
      %7131 = vmatpush1.msra.mxu0 %v7082
      %7132 = vmatprep.subr.mxu0 0.0
      %7133 = vmatpush1.msra.mxu0 %v7083
      %7134 = vmatprep.subr.mxu0 0.0
      %7135 = vmatpush1.msra.mxu0 %v7084
      %7136 = vmatprep.subr.mxu0 0.0
      %7137 = vmatpush1.msra.mxu0 %v7085
      %7138 = vmatprep.subr.mxu0 0.0
      %7139 = vmatpush1.msra.mxu0 %v7086
      %7140 = vmatprep.subr.mxu0 0.0
      %7141 = vmatpush1.msra.mxu0 %v7087
      %7142 = vmatprep.subr.mxu0 0.0
      %7143 = vmatpush1.msra.mxu0 %v7088
      %7144 = vmatprep.subr.mxu0 0.0
      %7145 = vmatpush1.msra.mxu0 %v7089
      %7146 = vmatprep.subr.mxu0 0.0
      %7147 = vmatpush1.msra.mxu0 %v7090
      %7148 = vmatprep.subr.mxu0 0.0
      %7149 = vmatpush1.msra.mxu0 %v7091
      %7150 = vmatprep.subr.mxu0 0.0
      %7151 = vmatpush1.msra.mxu0 %v7092
      %7152 = vmatprep.subr.mxu0 0.0
      %7153 = vmatpush1.msra.mxu0 %v7093
      %7154 = vmatprep.subr.mxu0 0.0
      %7155 = vmatpush1.msra.mxu0 %v7094
      %7156 = vmatprep.subr.mxu0 0.0
      %7157 = vmatpush1.msra.mxu0 %v7095
      %7158 = vmatprep.subr.mxu0 0.0
      %7159 = vmatpush1.msra.mxu0 %v7096
      %7160 = vmatprep.subr.mxu0 0.0
      %7161 = vmatpush1.msra.mxu0 %v7097
      %7162 = vmatprep.subr.mxu0 0.0
      %7163 = vmatpush1.msra.mxu0 %v7098
      %7164 = vmatprep.subr.mxu0 0.0
      %7165 = vmatpush1.msra.mxu0 %v7099
      %7166 = vmatprep.subr.mxu0 0.0
      %7167 = vmatpush1.msra.mxu0 %v7100
      %7168 = vmatprep.subr.mxu0 0.0
      %7169 = vmatpush1.msra.mxu0 %v7101
      %7170 = vmatprep.subr.mxu0 0.0
      %7171 = vmatpush1.msra.mxu0 %v7102
      %7172 = vmatprep.subr.mxu0 0.0
      %7173 = vmatpush1.msra.mxu0 %v7103
      %7174 = vmatprep.subr.mxu0 0.0
      %7175 = vmatpush1.msra.mxu0 %v7104
      %7176 = vmatprep.subr.mxu0 0.0
      %7177 = vmatpush1.msra.mxu0 %v7105
      %7178 = vmatprep.subr.mxu0 0.0
      %7179 = vmatpush1.msra.mxu0 %v7106
      %7180 = vmatprep.subr.mxu0 0.0
      %7181 = vmatpush1.msra.mxu0 %v7107
      %7182 = vmatprep.subr.mxu0 0.0
      %7183 = vmatpush1.msra.mxu0 %v7108
      %7184 = vmatprep.subr.mxu0 0.0
      %7185 = vmatpush1.msra.mxu0 %v7109
      %7186 = vmatprep.mubr.f32.mxu0 %v7067
      %7187 = vmatmul.mubr.f32.gmra.mrb[0].mxu0 %v7060
      %v7188 = vpop.f32.mrb[0].mxu0
      %v7189 = vadd.f32 %v7118, %v7188
      %v7190 = vpop.f32.mrb[0].mxu0
      %7191 = vdwg.mxu0
      %7192 = vmatprep.subr.mxu0 0.0
      %7193 = vmatpush1.msra.mxu0 %v7110
      %7194 = vmatprep.subr.mxu0 0.0
      %7195 = vmatpush1.msra.mxu0 %v7111
      %7196 = vmatprep.subr.mxu0 0.0
      %7197 = vmatpush1.msra.mxu0 %v7112
      %7198 = vmatprep.subr.mxu0 0.0
      %7199 = vmatpush1.msra.mxu0 %v7113
      %7200 = vmatprep.subr.mxu0 0.0
      %7201 = vmatpush1.msra.mxu0 %v7114
      %7202 = vmatprep.subr.mxu0 0.0
      %7203 = vmatpush1.msra.mxu0 %v7115
      %7204 = vmatprep.subr.mxu0 0.0
      %7205 = vmatpush1.msra.mxu0 %v7116
      %7206 = vmatprep.subr.mxu0 0.0
      %7207 = vmatpush1.msra.mxu0 %v7117
      %7208 = vmatprep.subr.mxu0 0.0
      %7209 = vmatpush1.msra.mxu0 0.0
      %7210 = vmatprep.subr.mxu0 0.0
      %7211 = vmatpush1.msra.mxu0 0.0
      %7212 = vmatprep.subr.mxu0 0.0
      %7213 = vmatpush1.msra.mxu0 0.0
      %7214 = vmatprep.subr.mxu0 0.0
      %7215 = vmatpush1.msra.mxu0 0.0
      %7216 = vmatprep.subr.mxu0 0.0
      %7217 = vmatpush1.msra.mxu0 0.0
      %7218 = vmatprep.subr.mxu0 0.0
      %7219 = vmatpush1.msra.mxu0 0.0
      %7220 = vmatprep.subr.mxu0 0.0
      %7221 = vmatpush1.msra.mxu0 0.0
      %7222 = vmatprep.subr.mxu0 0.0
      %7223 = vmatpush1.msra.mxu0 0.0
      %7224 = vmatprep.subr.mxu0 0.0
      %7225 = vmatpush1.msra.mxu0 0.0
      %7226 = vmatprep.subr.mxu0 0.0
      %7227 = vmatpush1.msra.mxu0 0.0
      %7228 = vmatprep.subr.mxu0 0.0
      %7229 = vmatpush1.msra.mxu0 0.0
      %7230 = vmatprep.subr.mxu0 0.0
      %7231 = vmatpush1.msra.mxu0 0.0
      %7232 = vmatprep.subr.mxu0 0.0
      %7233 = vmatpush1.msra.mxu0 0.0
      %7234 = vmatprep.subr.mxu0 0.0
      %7235 = vmatpush1.msra.mxu0 0.0
      %7236 = vmatprep.subr.mxu0 0.0
      %7237 = vmatpush1.msra.mxu0 0.0
      %7238 = vmatprep.subr.mxu0 0.0
      %7239 = vmatpush1.msra.mxu0 0.0
      %7240 = vmatprep.subr.mxu0 0.0
      %7241 = vmatpush1.msra.mxu0 0.0
      %7242 = vmatprep.subr.mxu0 0.0
      %7243 = vmatpush1.msra.mxu0 0.0
      %7244 = vmatprep.subr.mxu0 0.0
      %7245 = vmatpush1.msra.mxu0 0.0
      %7246 = vmatprep.subr.mxu0 0.0
      %7247 = vmatpush1.msra.mxu0 0.0
      %7248 = vmatprep.subr.mxu0 0.0
      %7249 = vmatpush1.msra.mxu0 0.0
      %7250 = vmatprep.subr.mxu0 0.0
      %7251 = vmatpush1.msra.mxu0 0.0
      %7252 = vmatprep.subr.mxu0 0.0
      %7253 = vmatpush1.msra.mxu0 0.0
      %7254 = vmatprep.subr.mxu0 0.0
      %7255 = vmatpush1.msra.mxu0 0.0
      %7256 = vmatprep.mubr.f32.mxu0 0.0
      %7257 = vmatmul.mubr.f32.gmra.mrb[0].mxu0 %v7120
      %v7258 = vpop.f32.mrb[0].mxu0
      %v7259 = vadd.f32 %v7189, %v7258
      %v7260 = vpop.f32.mrb[0].mxu0
      %7261 = vdwg.mxu0
      %v7262 = vmax.f32 %v7259, 0.0
      %v7263 = vld [vmem:[%s8] sm:$0x1]
      %v7264 = vmul.f32 %v7262, %v7263
      %vm7265 = vcmask 401408
      %v7266 = vsel %vm7265, %v7264, 0.0
      %7267 = vadd.xlane.f32.xlu0 %v7266
      %v7268 = vpop.xlane.xlu0 %7267
      %v7269 = vld [vmem:[#allocation2] sm:$0x1]
      %v7270 = vadd.f32 %v7268, %v7269
      %v7271 = vtanh.pop %v7270
      %v7272 = vmul.f32 %v7271, 2.0
      %vm7273 = vcmask 0
      %7274 = vst.msk [vmem:[%s357] sm:$0x1] %vm7273, %v7272
      %p7275 = scmp.lt.s32.totalorder %s23, 1
      %s7276 = scalar_select %p7275, %s23, 1
      %s7277 = scalar_lea.vmem %s10, %s7276
      // Predicated region
      $region61: #{_lambda_.1} parent=59 // pred_check
        %p7278 = pneg %p256
      $region62: #{_lambda_.1} parent=59 // pred_check_branch
        %7280 = sbr.rel (%p7278) target = $region64
      $region63: #{_lambda_.1} parent=59 // pred_region
        _
      $region64: #{_lambda_.1} parent=59 // pred_fallthru
        _
    $region60: #{_lambda_.1} parent=5 // pred_fallthru
      _
    %p7281 = scmp.le.s32.totalorder 2, %s18
    // Predicated region
    $region65: #{_lambda_.1} parent=5 // pred_check
      %p7282 = pneg %p7281
    $region66: #{_lambda_.1} parent=5 // pred_check_branch
      %7284 = sbr.rel (%p7282) target = $region68
    $region67: #{_lambda_.1} parent=5 // pred_region
      %s7285 = ssub.s32 %s18, 2
      // Predicated region
      $region69: #{_lambda_.1} parent=67 // pred_check
        %p7286 = pneg %p262
      $region70: #{_lambda_.1} parent=67 // pred_check_branch
        %7288 = sbr.rel (%p7286) target = $region72
      $region71: #{_lambda_.1} parent=67 // pred_region
        %p7289 = scmp.lt.s32.totalorder %s24, 1
        %s7290 = scalar_select %p7289, %s24, 1
        %s7291 = scalar_lea.vmem %s10, %s7290
      $region72: #{_lambda_.1} parent=67 // pred_fallthru
        _
    $region68: #{_lambda_.1} parent=5 // pred_fallthru
      _
  $region6: #{_lambda_.1} parent=0 // loop_footer
    %s22 = sadd.s32 1, %s18
  $region7: #{_lambda_.1} parent=0 // loop_footer_branch
    %17 = sbr.rel target = $region3
  $region8: #{_lambda_.1} parent=0 // loop_exit
    _

</llo_original>
